<compile_context>
chip_gen: v5e
topology: v5e:2x2
jax: 0.10.0
libtpu: 0.0.40
codegen_flags: <defaults>
</compile_context>

<pallas_src>
import functools

import jax
import jax.numpy as jnp
from jax.experimental import pallas as pl
from jax.experimental.pallas import tpu as pltpu

# ----------------------------- config (small synthetic ViT) -----------------
C_IN = 3            # RGB (B04, B03, B02)
IMG = 16            # spatial size (real model: 384)
PATCH = 4           # patch size   (real model: 14)
DIM = 256           # embed dim    (real model: 1152)
HEADS = 2           # heads        (real model: 16)
HEAD_DIM = DIM // HEADS   # 128 -> per-head q/k/v slabs are lane-aligned.
# TODO(synk): real dh=72 is not 128-aligned; a real-checkpoint port would pad
# each head slab to 128 lanes (and the proj rows accordingly).
DEPTH = 2           # blocks       (real model: 27)
MLP = 4 * DIM       # mlp hidden
NUM_PATCHES = (IMG // PATCH) ** 2
LN_EPS = 1e-6

SIGLIP_MEAN = 0.5   # open_clip SigLIP preprocess Normalize(mean=.5, std=.5)
SIGLIP_STD = 0.5

# Token-count padding multiple. 8 is the sublane legality floor; at real scale
# (729 tokens) raise to 128/256 so M-tiling and megacore sharding kick in.
TOKEN_PAD_MULTIPLE = 8


def _round_up(x, m):
    return ((x + m - 1) // m) * m


def _tile(dim, desired, align):
    """Largest tile <= desired that divides `dim` and is a multiple of `align`,
    falling back to the full dimension (always legal for BlockSpec)."""
    if dim <= desired:
        return dim
    t = (desired // align) * align
    while t >= align:
        if dim % t == 0:
            return t
        t -= align
    return dim


def _chip_config():
    """Per-generation matmul tiling / weight buffering / VMEM limit."""
    cfg = dict(tm=256, tn=256, tk=512, wbuf=2, vmem=48 * 1024 * 1024)
    try:
        kind = jax.devices()[0].device_kind.lower()
    except Exception:
        return cfg
    if ('v5 lite' in kind) or ('v5e' in kind) or ('v5litepod' in kind):
        # v5e: 4x128x128 MXU -> 128-aligned tiles map natively; 128 MiB VMEM
        # lets us triple-buffer weights to hide DMA behind the slower MXU.
        cfg = dict(tm=128, tn=128, tk=512, wbuf=3, vmem=96 * 1024 * 1024)
    elif 'v6' in kind:
        # v6e: 128 MiB VMEM -> large K tiles + 3-deep weight buffering.
        cfg = dict(tm=256, tn=256, tk=1024, wbuf=3, vmem=96 * 1024 * 1024)
    elif ('v7' in kind) or ('7x' in kind):
        # v7x: only 64 MiB VMEM per TC -> modest tiles, double buffering.
        cfg = dict(tm=256, tn=256, tk=512, wbuf=2, vmem=40 * 1024 * 1024)
    return cfg


def _weight_spec(block_shape, index_map, nbuf):
    """Weight BlockSpec, optionally with deeper pipelining (v5e/v6e)."""
    if nbuf and nbuf > 2:
        try:
            return pl.BlockSpec(block_shape, index_map,
                                pipeline_mode=pl.Buffered(nbuf))
        except (TypeError, AttributeError):
            pass  # fall back to default double buffering
    return pl.BlockSpec(block_shape, index_map)


# ----------------------------- Pallas kernels -------------------------------
def _matmul_body(x_ref, w_ref, b_ref, res_ref, o_ref, acc_ref, activation):
    """Tiled matmul with f32 accumulator; bias / GELU / residual fused epilogue."""
    @pl.when(pl.program_id(2) == 0)
    def _():
        acc_ref[...] = jnp.zeros_like(acc_ref)

    acc_ref[...] += jnp.dot(x_ref[...].astype(w_ref.dtype), w_ref[...],
                            preferred_element_type=jnp.float32)

    @pl.when(pl.program_id(2) == pl.num_programs(2) - 1)
    def _():
        out = acc_ref[...] + b_ref[...].astype(jnp.float32)
        if activation == 'gelu':
            # TODO(synk): timm/SigLIP uses exact erf GELU; tanh approximation here.
            out = jax.nn.gelu(out, approximate=True)
        if res_ref is not None:
            out = out + res_ref[...].astype(jnp.float32)
        o_ref[...] = out.astype(o_ref.dtype)


def _ln_matmul_kernel(x_ref, g_ref, bln_ref, w_ref, b_ref, o_ref, xn_ref,
                      *, eps, activation):
    """Fused LayerNorm (f32) -> bf16 matmul -> bias (+GELU).

    The LN is computed once per M tile (j == 0) into a bf16 VMEM scratch and
    reused for every N tile (j axis is 'arbitrary')."""
    @pl.when(pl.program_id(1) == 0)
    def _():
        x = x_ref[...].astype(jnp.float32)
        mean = jnp.mean(x, axis=-1, keepdims=True)
        var = jnp.mean(jnp.square(x - mean), axis=-1, keepdims=True)
        y = (x - mean) * jax.lax.rsqrt(var + eps)
        xn_ref[...] = (y * g_ref[...] + bln_ref[...]).astype(xn_ref.dtype)

    acc = jnp.dot(xn_ref[...], w_ref[...], preferred_element_type=jnp.float32)
    acc = acc + b_ref[...].astype(jnp.float32)
    if activation == 'gelu':
        # TODO(synk): exact erf GELU in the reference; tanh approximation here.
        acc = jax.nn.gelu(acc, approximate=True)
    o_ref[...] = acc.astype(o_ref.dtype)


def _patch_embed_kernel(p_ref, w_ref, b_ref, pos_ref, o_ref):
    """Sentinel-2 scaling + SigLIP Normalize + patch matmul + bias + pos_embed."""
    x = p_ref[...].astype(jnp.float32)
    x = jnp.clip(2.5 * (x / 10000.0), 0.0, 1.0)      # Sentinel-2 -> [0, 1]
    x = (x - SIGLIP_MEAN) / SIGLIP_STD               # SigLIP Normalize(0.5, 0.5)
    acc = jnp.dot(x.astype(w_ref.dtype), w_ref[...],
                  preferred_element_type=jnp.float32)
    o_ref[...] = (acc + b_ref[...] + pos_ref[...]).astype(o_ref.dtype)


def _attn_proj_kernel(qkv_ref, pw_ref, pb_ref, res_ref, o_ref, acc_ref,
                      *, dh, n_valid, scale):
    """Self-attention for one (batch, head) grid point with the output
    projection + residual fused in (heads == K axis of the proj matmul)."""
    h = pl.program_id(1)

    @pl.when(h == 0)
    def _():
        acc_ref[...] = jnp.zeros_like(acc_ref)

    qkv = qkv_ref[0]                       # (N_pad, 3*dh): this head's q|k|v slab
    q = qkv[:, 0:dh]
    k = qkv[:, dh:2 * dh]
    v = qkv[:, 2 * dh:3 * dh]

    s = jax.lax.dot_general(q, k, (((1,), (1,)), ((), ())),
                            preferred_element_type=jnp.float32) * scale
    if n_valid < s.shape[-1]:              # mask padded key columns
        col = jax.lax.broadcasted_iota(jnp.int32, s.shape, 1)
        s = jnp.where(col < n_valid, s, -1e30)
    s = s - jnp.max(s, axis=-1, keepdims=True)
    p = jnp.exp(s)
    p = p / jnp.sum(p, axis=-1, keepdims=True)
    out_h = jnp.dot(p.astype(v.dtype), v, preferred_element_type=jnp.float32)

    # Fused output projection: accumulate out_h @ proj_w[h*dh:(h+1)*dh, :].
    acc_ref[...] += jnp.dot(out_h.astype(pw_ref.dtype), pw_ref[...],
                            preferred_element_type=jnp.float32)

    @pl.when(h == pl.num_programs(1) - 1)
    def _():
        out = (acc_ref[...] + pb_ref[...].astype(jnp.float32)
               + res_ref[0].astype(jnp.float32))
        o_ref[0] = out.astype(o_ref.dtype)


def _pool_attn_proj_kernel(q_ref, kv_ref, pw_ref, pb_ref, o_ref, acc_ref,
                           *, dh, n_valid, scale):
    """MAP attention pool (single latent query), one (batch, head) per grid
    point, with the pool output projection fused (heads == K axis)."""
    h = pl.program_id(1)

    @pl.when(h == 0)
    def _():
        acc_ref[...] = jnp.zeros_like(acc_ref)

    q = q_ref[0]                           # (1, dh)
    kv = kv_ref[0]                         # (N_pad, 2*dh): this head's k|v slab
    k = kv[:, 0:dh]
    v = kv[:, dh:2 * dh]

    s = jax.lax.dot_general(q, k, (((1,), (1,)), ((), ())),
                            preferred_element_type=jnp.float32) * scale
    if n_valid < s.shape[-1]:
        col = jax.lax.broadcasted_iota(jnp.int32, s.shape, 1)
        s = jnp.where(col < n_valid, s, -1e30)
    s = s - jnp.max(s, axis=-1, keepdims=True)
    p = jnp.exp(s)
    p = p / jnp.sum(p, axis=-1, keepdims=True)
    out_h = jnp.dot(p.astype(v.dtype), v, preferred_element_type=jnp.float32)

    acc_ref[...] += jnp.dot(out_h.astype(pw_ref.dtype), pw_ref[...],
                            preferred_element_type=jnp.float32)

    @pl.when(h == pl.num_programs(1) - 1)
    def _():
        o_ref[0] = (acc_ref[...] + pb_ref[...].astype(jnp.float32)
                    ).astype(o_ref.dtype)


# ----------------------------- Pallas wrappers -------------------------------
def pallas_matmul_bias(x, w, b, residual=None, activation=None,
                       out_dtype=jnp.bfloat16, cfg=None):
    """Tiled matmul: y = act(x @ w + b) [+ residual]."""
    cfg = cfg or _chip_config()
    M, K = x.shape
    K2, N = w.shape
    assert K == K2
    tm = _tile(M, cfg['tm'], 8)
    tn = _tile(N, cfg['tn'], 128)
    tk = _tile(K, cfg['tk'], 128)
    grid = (M // tm, N // tn, K // tk)

    in_specs = [pl.BlockSpec((tm, tk), lambda i, j, k: (i, k)),
                _weight_spec((tk, tn), lambda i, j, k: (k, j), cfg['wbuf']),
                pl.BlockSpec((1, tn), lambda i, j, k: (0, j))]
    args = [x, w, b.reshape(1, N).astype(jnp.float32)]

    if residual is not None:
        in_specs.append(pl.BlockSpec((tm, tn), lambda i, j, k: (i, j)))
        args.append(residual)

        def kernel(x_ref, w_ref, b_ref, r_ref, o_ref, acc_ref):
            _matmul_body(x_ref, w_ref, b_ref, r_ref, o_ref, acc_ref, activation)
    else:
        def kernel(x_ref, w_ref, b_ref, o_ref, acc_ref):
            _matmul_body(x_ref, w_ref, b_ref, None, o_ref, acc_ref, activation)

    return pl.pallas_call(
        kernel,
        out_shape=jax.ShapeDtypeStruct((M, N), out_dtype),
        grid_spec=pltpu.PrefetchScalarGridSpec(
            num_scalar_prefetch=0, grid=grid,
            in_specs=in_specs,
            out_specs=pl.BlockSpec((tm, tn), lambda i, j, k: (i, j)),
            scratch_shapes=[pltpu.VMEM((tm, tn), jnp.float32)]),
        compiler_params=pltpu.CompilerParams(
            dimension_semantics=("parallel", "parallel", "arbitrary"),
            vmem_limit_bytes=cfg['vmem']),
    )(*args)


def pallas_ln_matmul(x, gamma, beta, w, b, activation=None,
                     out_dtype=jnp.bfloat16, eps=LN_EPS, cfg=None):
    """Fused LayerNorm + matmul (full K per block; LN hoisted to per-M-tile)."""
    cfg = cfg or _chip_config()
    M, K = x.shape
    K2, N = w.shape
    assert K == K2
    tm = _tile(M, cfg['tm'], 8)
    tn = _tile(N, cfg['tn'], 128)
    grid = (M // tm, N // tn)

    kernel = functools.partial(_ln_matmul_kernel, eps=eps, activation=activation)
    return pl.pallas_call(
        kernel,
        out_shape=jax.ShapeDtypeStruct((M, N), out_dtype),
        grid_spec=pltpu.PrefetchScalarGridSpec(
            num_scalar_prefetch=0, grid=grid,
            in_specs=[pl.BlockSpec((tm, K), lambda i, j: (i, 0)),
                      pl.BlockSpec((1, K), lambda i, j: (0, 0)),
                      pl.BlockSpec((1, K), lambda i, j: (0, 0)),
                      _weight_spec((K, tn), lambda i, j: (0, j), cfg['wbuf']),
                      pl.BlockSpec((1, tn), lambda i, j: (0, j))],
            out_specs=pl.BlockSpec((tm, tn), lambda i, j: (i, j)),
            scratch_shapes=[pltpu.VMEM((tm, K), jnp.bfloat16)]),
        compiler_params=pltpu.CompilerParams(
            dimension_semantics=("parallel", "arbitrary"),
            vmem_limit_bytes=cfg['vmem']),
    )(x,
      gamma.reshape(1, K).astype(jnp.float32),
      beta.reshape(1, K).astype(jnp.float32),
      w,
      b.reshape(1, N).astype(jnp.float32))


def pallas_patch_embed(patches, w, b, pos, n_pad, cfg):
    """Fused Sentinel-2 preprocess + patch-embed matmul + bias + pos_embed,
    tiled over (row-tiles, d-tiles); pos selected via index_map modulo."""
    M, cpp = patches.shape                  # M = B * n_pad
    d = w.shape[1]
    tm = _tile(n_pad, cfg['tm'], 8)         # tm divides n_pad by construction
    tn = _tile(d, cfg['tn'], 128)
    blocks_per_img = n_pad // tm
    grid = (M // tm, d // tn)
    return pl.pallas_call(
        _patch_embed_kernel,
        out_shape=jax.ShapeDtypeStruct((M, d), jnp.bfloat16),
        grid_spec=pltpu.PrefetchScalarGridSpec(
            num_scalar_prefetch=0, grid=grid,
            in_specs=[pl.BlockSpec((tm, cpp), lambda i, j: (i, 0)),
                      _weight_spec((cpp, tn), lambda i, j: (0, j), cfg['wbuf']),
                      pl.BlockSpec((1, tn), lambda i, j: (0, j)),
                      pl.BlockSpec((tm, tn),
                                   lambda i, j: (i % blocks_per_img, j))],
            out_specs=pl.BlockSpec((tm, tn), lambda i, j: (i, j))),
        compiler_params=pltpu.CompilerParams(
            dimension_semantics=("parallel", "parallel"),
            vmem_limit_bytes=cfg['vmem']),
    )(patches, w, b.reshape(1, d).astype(jnp.float32), pos.astype(jnp.float32))


def pallas_self_attention_proj(qkv, res, proj_w, proj_b, batch, n_pad, n_valid,
                               d, heads, cfg):
    """qkv: (B*N_pad, 3D) head-major; res: (B*N_pad, D) bf16 residual stream.
    Returns proj(attn(qkv)) + res as (B*N_pad, D) bf16."""
    dh = d // heads
    qkv = qkv.reshape(batch, n_pad, 3 * d)
    res = res.reshape(batch, n_pad, d)
    kernel = functools.partial(_attn_proj_kernel, dh=dh, n_valid=n_valid,
                               scale=dh ** -0.5)
    out = pl.pallas_call(
        kernel,
        out_shape=jax.ShapeDtypeStruct((batch, n_pad, d), jnp.bfloat16),
        grid_spec=pltpu.PrefetchScalarGridSpec(
            num_scalar_prefetch=0, grid=(batch, heads),
            in_specs=[pl.BlockSpec((1, n_pad, 3 * dh), lambda b, h: (b, 0, h)),
                      pl.BlockSpec((dh, d), lambda b, h: (h, 0)),
                      pl.BlockSpec((1, d), lambda b, h: (0, 0)),
                      pl.BlockSpec((1, n_pad, d), lambda b, h: (b, 0, 0))],
            out_specs=pl.BlockSpec((1, n_pad, d), lambda b, h: (b, 0, 0)),
            scratch_shapes=[pltpu.VMEM((n_pad, d), jnp.float32)]),
        compiler_params=pltpu.CompilerParams(
            dimension_semantics=("parallel", "arbitrary"),
            vmem_limit_bytes=cfg['vmem']),
    )(qkv, proj_w, proj_b.reshape(1, d).astype(jnp.float32), res)
    return out.reshape(batch * n_pad, d)


def pallas_pool_attention_proj(q, kv, proj_w, proj_b, batch, n_pad, n_valid,
                               d, heads, cfg):
    """q: (B, D) latent queries; kv: (B*N_pad, 2D) head-major. Returns (B, D)."""
    dh = d // heads
    q = q.reshape(batch, 1, d)
    kv = kv.reshape(batch, n_pad, 2 * d)
    kernel = functools.partial(_pool_attn_proj_kernel, dh=dh, n_valid=n_valid,
                               scale=dh ** -0.5)
    out = pl.pallas_call(
        kernel,
        out_shape=jax.ShapeDtypeStruct((batch, 1, d), jnp.bfloat16),
        grid_spec=pltpu.PrefetchScalarGridSpec(
            num_scalar_prefetch=0, grid=(batch, heads),
            in_specs=[pl.BlockSpec((1, 1, dh), lambda b, h: (b, 0, h)),
                      pl.BlockSpec((1, n_pad, 2 * dh), lambda b, h: (b, 0, h)),
                      pl.BlockSpec((dh, d), lambda b, h: (h, 0)),
                      pl.BlockSpec((1, d), lambda b, h: (0, 0))],
            out_specs=pl.BlockSpec((1, 1, d), lambda b, h: (b, 0, 0)),
            scratch_shapes=[pltpu.VMEM((1, d), jnp.float32)]),
        compiler_params=pltpu.CompilerParams(
            dimension_semantics=("parallel", "arbitrary"),
            vmem_limit_bytes=cfg['vmem']),
    )(q, kv, proj_w, proj_b.reshape(1, d).astype(jnp.float32))
    return out.reshape(batch, d)


# ----------------------------- model glue ------------------------------------
def transformer_block(tok, p, batch, n_pad, n_valid, cfg):
    """tok: (B*N_pad, D) bf16 residual stream."""
    qkv = pallas_ln_matmul(tok, p['ln1_g'], p['ln1_b'], p['qkv_w'], p['qkv_b'],
                           out_dtype=jnp.bfloat16, cfg=cfg)          # (B*N, 3D)
    tok = pallas_self_attention_proj(qkv, tok, p['proj_w'], p['proj_b'],
                                     batch, n_pad, n_valid, DIM, HEADS, cfg)

    h = pallas_ln_matmul(tok, p['ln2_g'], p['ln2_b'], p['fc1_w'], p['fc1_b'],
                         activation='gelu', out_dtype=jnp.bfloat16, cfg=cfg)
    tok = pallas_matmul_bias(h, p['fc2_w'], p['fc2_b'], residual=tok,
                             out_dtype=jnp.bfloat16, cfg=cfg)
    return tok


def attention_pool(tok, norm_g, norm_b, p, batch, n_pad, n_valid, cfg):
    """timm AttentionPoolLatent (MAP head, latent_len=1); final ViT LN fused
    into the kv projection, pool proj fused into the pool-attention kernel."""
    kv = pallas_ln_matmul(tok, norm_g, norm_b, p['kv_w'], p['kv_b'],
                          out_dtype=jnp.bfloat16, cfg=cfg)           # (B*N, 2D)

    q_in = jnp.broadcast_to(p['latent'], (batch, DIM)).astype(jnp.bfloat16)
    q = pallas_matmul_bias(q_in, p['q_w'], p['q_b'],
                           out_dtype=jnp.bfloat16, cfg=cfg)          # (B, D)

    o = pallas_pool_attention_proj(q, kv, p['proj_w'], p['proj_b'],
                                   batch, n_pad, n_valid, DIM, HEADS, cfg)

    h = pallas_ln_matmul(o, p['ln_g'], p['ln_b'], p['fc1_w'], p['fc1_b'],
                         activation='gelu', out_dtype=jnp.bfloat16, cfg=cfg)
    emb = pallas_matmul_bias(h, p['fc2_w'], p['fc2_b'], residual=o,
                             out_dtype=jnp.float32, cfg=cfg)         # o + mlp(LN(o))
    return emb


def siglip_s2rgb_embed(x, params, cfg=None):
    """Forward pass of SigLIP_S2RGB_Embedder (synthetic weights)."""
    cfg = cfg or _chip_config()
    B, C, H, W = x.shape
    P = PATCH
    gh, gw = H // P, W // P
    n = gh * gw
    n_pad = _round_up(n, TOKEN_PAD_MULTIPLE)

    # Patch unfold on the RAW image (layout plumbing; the elementwise preprocess
    # commutes and is fused into the patch-embed kernel).
    patches = x.reshape(B, C, gh, P, gw, P).transpose(0, 2, 4, 1, 3, 5)
    patches = patches.reshape(B, n, C * P * P)
    pos = params['pos_embed']
    if n_pad != n:
        patches = jnp.pad(patches, ((0, 0), (0, n_pad - n), (0, 0)))
        pos = jnp.pad(pos, ((0, n_pad - n), (0, 0)))
    patches = patches.reshape(B * n_pad, C * P * P)

    # 1-2. Sentinel-2 normalize + SigLIP Normalize + 3a. patch embedding (fused).
    tok = pallas_patch_embed(patches, params['patch_w'], params['patch_b'],
                             pos, n_pad, cfg)                        # (B*N, D) bf16

    # 3b. Transformer blocks (pre-LN, LN fused into qkv / fc1 matmuls).
    for blk in params['blocks']:
        tok = transformer_block(tok, blk, B, n_pad, n, cfg)

    # 3c. Final LayerNorm (fused into pool kv) + MAP attention pooling.
    emb = attention_pool(tok, params['norm_g'], params['norm_b'],
                         params['pool'], B, n_pad, n, cfg)
    # open_clip encode_image(normalize=False): no L2 normalization of the output.
    return emb


# ----------------------------- deterministic params --------------------------
def _head_major_perm(d, heads, parts):
    """Column permutation mapping standard [p0(all heads) | p1(all heads) | ...]
    to head-major [head0: p0,p1,.. | head1: p0,p1,.. | ...] so each head's slab
    is contiguous and lane-aligned (selectable by a BlockSpec index_map)."""
    dh = d // heads
    idx = []
    for h in range(heads):
        for p in range(parts):
            start = p * d + h * dh
            idx.extend(range(start, start + dh))
    return jnp.asarray(idx, dtype=jnp.int32)


def init_params(key):
    keys = iter(jax.random.split(key, 128))

    def w(shape, scale=0.02):
        # Matmul weights stored in bf16 (MXU-friendly, halves HBM traffic).
        return (scale * jax.random.normal(next(keys), shape, jnp.float32)
                ).astype(jnp.bfloat16)

    def w32(shape, scale=0.02):
        return scale * jax.random.normal(next(keys), shape, jnp.float32)

    def zeros(nn):
        return jnp.zeros((nn,), jnp.float32)

    def ones(nn):
        return jnp.ones((nn,), jnp.float32)

    perm_qkv = _head_major_perm(DIM, HEADS, 3)
    perm_kv = _head_major_perm(DIM, HEADS, 2)

    params = {
        'patch_w': w((C_IN * PATCH * PATCH, DIM)),
        'patch_b': zeros(DIM),
        'pos_embed': w32((NUM_PATCHES, DIM)),
        'blocks': [],
        'norm_g': ones(DIM), 'norm_b': zeros(DIM),
    }
    for _ in range(DEPTH):
        qkv_w = w((DIM, 3 * DIM))          # standard [q | k | v] column layout
        qkv_b = zeros(3 * DIM)
        params['blocks'].append({
            'ln1_g': ones(DIM), 'ln1_b': zeros(DIM),
            # permuted to head-major so the attention kernel selects one head's
            # slab with a lane-aligned BlockSpec (same math as the original).
            'qkv_w': qkv_w[:, perm_qkv], 'qkv_b': qkv_b[perm_qkv],
            'proj_w': w((DIM, DIM)), 'proj_b': zeros(DIM),
            'ln2_g': ones(DIM), 'ln2_b': zeros(DIM),
            'fc1_w': w((DIM, MLP)), 'fc1_b': zeros(MLP),
            'fc2_w': w((MLP, DIM)), 'fc2_b': zeros(DIM),
        })
    kv_w = w((DIM, 2 * DIM))               # standard [k | v] column layout
    kv_b = zeros(2 * DIM)
    params['pool'] = {
        'latent': w32((1, DIM)),
        'q_w': w((DIM, DIM)), 'q_b': zeros(DIM),
        'kv_w': kv_w[:, perm_kv], 'kv_b': kv_b[perm_kv],
        'proj_w': w((DIM, DIM)), 'proj_b': zeros(DIM),
        'ln_g': ones(DIM), 'ln_b': zeros(DIM),
        'fc1_w': w((DIM, MLP)), 'fc1_b': zeros(MLP),
        'fc2_w': w((MLP, DIM)), 'fc2_b': zeros(DIM),
    }
    return params


# ----------------------------- main -------------------------------------------
if __name__ == "__main__":
    key = jax.random.PRNGKey(0)
    k_params, k_input = jax.random.split(key)

    B = 2
    # Synthetic Sentinel-2 reflectance-like values in [0, 10000].
    x = jax.random.uniform(k_input, (B, C_IN, IMG, IMG),
                           dtype=jnp.float32, minval=0.0, maxval=10000.0)
    params = init_params(k_params)

    emb = jax.jit(siglip_s2rgb_embed)(x, params)
    emb = jax.block_until_ready(emb)

    assert emb.shape == (B, DIM), emb.shape
    assert emb.dtype == jnp.float32
    assert bool(jnp.all(jnp.isfinite(emb)))
    print("KERNEL_OK")
</pallas_src>

<mosaic_0001>
module attributes {stable_mosaic.version = 11 : i64} {
  func.func @_ln_matmul_kernel(%arg0: i32, %arg1: i32, %arg2: memref<32x256xbf16, #tpu.memory_space<vmem>>, %arg3: memref<1x256xf32, #tpu.memory_space<vmem>>, %arg4: memref<1x256xf32, #tpu.memory_space<vmem>>, %arg5: memref<256x256xbf16, #tpu.memory_space<vmem>>, %arg6: memref<1x256xf32, #tpu.memory_space<vmem>>, %arg7: memref<32x256xbf16, #tpu.memory_space<vmem>>, %arg8: memref<32x256xbf16, #tpu.memory_space<vmem>>) attributes {dimension_semantics = [#tpu.dimension_semantics<parallel>, #tpu.dimension_semantics<arbitrary>], iteration_bounds = array<i64: 1, 3>, scalar_prefetch = 0 : i64, scratch_operands = 1 : i64, tpu.core_type = #tpu.core_type<tc>, window_params = [{transform_indices = @transform_0, window_bounds = array<i64: 32, 256>}, {pipeline_mode = #tpu.pipeline_mode<synchronous>, transform_indices = @transform_1, window_bounds = array<i64: 1, 256>}, {pipeline_mode = #tpu.pipeline_mode<synchronous>, transform_indices = @transform_2, window_bounds = array<i64: 1, 256>}, {transform_indices = @transform_3, window_bounds = array<i64: 256, 256>}, {transform_indices = @transform_4, window_bounds = array<i64: 1, 256>}, {transform_indices = @transform_5, window_bounds = array<i64: 32, 256>}]} {
    %c0_i32 = arith.constant 0 : i32
    %0 = arith.cmpi eq, %arg1, %c0_i32 : i32
    %1 = arith.extui %0 : i1 to i32
    %c0_i32_0 = arith.constant 0 : i32
    %2 = arith.cmpi ne, %1, %c0_i32_0 : i32
    scf.if %2 {
      %c0_8 = arith.constant 0 : index
      %c0_9 = arith.constant 0 : index
      %11 = vector.load %arg2[%c0_8, %c0_9] : memref<32x256xbf16, #tpu.memory_space<vmem>>, vector<32x256xbf16>
      %12 = arith.extf %11 : vector<32x256xbf16> to vector<32x256xf32>
      %cst_10 = arith.constant dense<0.000000e+00> : vector<32xf32>
      %13 = vector.multi_reduction <add>, %12, %cst_10 [1] : vector<32x256xf32> to vector<32xf32>
      %14 = vector.shape_cast %13 : vector<32xf32> to vector<32x1xf32>
      %cst_11 = arith.constant 2.560000e+02 : f32
      %15 = vector.broadcast %cst_11 : f32 to vector<32x1xf32>
      %16 = arith.divf %14, %15 : vector<32x1xf32>
      %17 = vector.broadcast %16 : vector<32x1xf32> to vector<32x256xf32>
      %18 = arith.subf %12, %17 : vector<32x256xf32>
      %19 = arith.mulf %18, %18 : vector<32x256xf32>
      %cst_12 = arith.constant dense<0.000000e+00> : vector<32xf32>
      %20 = vector.multi_reduction <add>, %19, %cst_12 [1] : vector<32x256xf32> to vector<32xf32>
      %21 = vector.shape_cast %20 : vector<32xf32> to vector<32x1xf32>
      %cst_13 = arith.constant 2.560000e+02 : f32
      %22 = vector.broadcast %cst_13 : f32 to vector<32x1xf32>
      %23 = arith.divf %21, %22 : vector<32x1xf32>
      %24 = vector.broadcast %16 : vector<32x1xf32> to vector<32x256xf32>
      %25 = arith.subf %12, %24 : vector<32x256xf32>
      %cst_14 = arith.constant 9.99999997E-7 : f32
      %26 = vector.broadcast %cst_14 : f32 to vector<32x1xf32>
      %27 = arith.addf %23, %26 : vector<32x1xf32>
      %28 = math.rsqrt %27 : vector<32x1xf32>
      %29 = vector.broadcast %28 : vector<32x1xf32> to vector<32x256xf32>
      %30 = arith.mulf %25, %29 : vector<32x256xf32>
      %c0_15 = arith.constant 0 : index
      %c0_16 = arith.constant 0 : index
      %31 = vector.load %arg3[%c0_15, %c0_16] : memref<1x256xf32, #tpu.memory_space<vmem>>, vector<1x256xf32>
      %32 = vector.broadcast %31 : vector<1x256xf32> to vector<32x256xf32>
      %33 = arith.mulf %30, %32 : vector<32x256xf32>
      %c0_17 = arith.constant 0 : index
      %c0_18 = arith.constant 0 : index
      %34 = vector.load %arg4[%c0_17, %c0_18] : memref<1x256xf32, #tpu.memory_space<vmem>>, vector<1x256xf32>
      %35 = vector.broadcast %34 : vector<1x256xf32> to vector<32x256xf32>
      %36 = arith.addf %33, %35 : vector<32x256xf32>
      %37 = arith.truncf %36 : vector<32x256xf32> to vector<32x256xbf16>
      %c0_19 = arith.constant 0 : index
      %c0_20 = arith.constant 0 : index
      %38 = vector.load %arg8[%c0_19, %c0_20] : memref<32x256xbf16, #tpu.memory_space<vmem>>, vector<32x256xbf16>
      tpu.vector_store %arg8[%c0_19, %c0_20], %37 {strides = array<i32>} : memref<32x256xbf16, #tpu.memory_space<vmem>>, vector<32x256xbf16>,
    } else {
    }
    %c0 = arith.constant 0 : index
    %c0_1 = arith.constant 0 : index
    %3 = vector.load %arg8[%c0, %c0_1] : memref<32x256xbf16, #tpu.memory_space<vmem>>, vector<32x256xbf16>
    %c0_2 = arith.constant 0 : index
    %c0_3 = arith.constant 0 : index
    %4 = vector.load %arg5[%c0_2, %c0_3] : memref<256x256xbf16, #tpu.memory_space<vmem>>, vector<256x256xbf16>
    %cst = arith.constant dense<0.000000e+00> : vector<32x256xf32>
    %5 = tpu.matmul %3, %4, %cst {dimension_numbers = #tpu.dot_dimension_numbers<[1], [0], [0], [1], [0, 0, 1, 1], [], []>} : vector<32x256xbf16>, vector<256x256xbf16>, vector<32x256xf32> -> vector<32x256xf32>
    %c0_4 = arith.constant 0 : index
    %c0_5 = arith.constant 0 : index
    %6 = vector.load %arg6[%c0_4, %c0_5] : memref<1x256xf32, #tpu.memory_space<vmem>>, vector<1x256xf32>
    %7 = vector.broadcast %6 : vector<1x256xf32> to vector<32x256xf32>
    %8 = arith.addf %5, %7 : vector<32x256xf32>
    %9 = arith.truncf %8 : vector<32x256xf32> to vector<32x256xbf16>
    %c0_6 = arith.constant 0 : index
    %c0_7 = arith.constant 0 : index
    %10 = vector.load %arg7[%c0_6, %c0_7] : memref<32x256xbf16, #tpu.memory_space<vmem>>, vector<32x256xbf16>
    tpu.vector_store %arg7[%c0_6, %c0_7], %9 {strides = array<i32>} : memref<32x256xbf16, #tpu.memory_space<vmem>>, vector<32x256xbf16>,
    return
  }
  func.func @transform_0(%arg0: i32, %arg1: i32) -> (i32, i32) {
    %c0_i32 = arith.constant 0 : i32
    %c0_i32_0 = arith.constant 0 : i32
    return %arg0, %c0_i32 : i32, i32
  }
  func.func @transform_1(%arg0: i32, %arg1: i32) -> (i32, i32) {
    %c0_i32 = arith.constant 0 : i32
    %c0_i32_0 = arith.constant 0 : i32
    %c0_i32_1 = arith.constant 0 : i32
    return %c0_i32, %c0_i32_0 : i32, i32
  }
  func.func @transform_2(%arg0: i32, %arg1: i32) -> (i32, i32) {
    %c0_i32 = arith.constant 0 : i32
    %c0_i32_0 = arith.constant 0 : i32
    %c0_i32_1 = arith.constant 0 : i32
    return %c0_i32, %c0_i32_0 : i32, i32
  }
  func.func @transform_3(%arg0: i32, %arg1: i32) -> (i32, i32) {
    %c0_i32 = arith.constant 0 : i32
    %c0_i32_0 = arith.constant 0 : i32
    return %c0_i32, %arg1 : i32, i32
  }
  func.func @transform_4(%arg0: i32, %arg1: i32) -> (i32, i32) {
    %c0_i32 = arith.constant 0 : i32
    %c0_i32_0 = arith.constant 0 : i32
    return %c0_i32, %arg1 : i32, i32
  }
  func.func @transform_5(%arg0: i32, %arg1: i32) -> (i32, i32) {
    %c0_i32 = arith.constant 0 : i32
    return %arg0, %arg1 : i32, i32
  }
}

module attributes {stable_mosaic.version = 11 : i64} {
  func.func @_attn_proj_kernel(%arg0: i32, %arg1: i32, %arg2: memref<1x16x384xbf16, #tpu.memory_space<vmem>>, %arg3: memref<128x256xbf16, #tpu.memory_space<vmem>>, %arg4: memref<1x256xf32, #tpu.memory_space<vmem>>, %arg5: memref<1x16x256xbf16, #tpu.memory_space<vmem>>, %arg6: memref<1x16x256xbf16, #tpu.memory_space<vmem>>, %arg7: memref<16x256xf32, #tpu.memory_space<vmem>>) attributes {dimension_semantics = [#tpu.dimension_semantics<parallel>, #tpu.dimension_semantics<arbitrary>], iteration_bounds = array<i64: 2, 2>, scalar_prefetch = 0 : i64, scratch_operands = 1 : i64, tpu.core_type = #tpu.core_type<tc>, window_params = [{transform_indices = @transform_0, window_bounds = array<i64: 1, 16, 384>}, {transform_indices = @transform_1, window_bounds = array<i64: 128, 256>}, {pipeline_mode = #tpu.pipeline_mode<synchronous>, transform_indices = @transform_2, window_bounds = array<i64: 1, 256>}, {transform_indices = @transform_3, window_bounds = array<i64: 1, 16, 256>}, {transform_indices = @transform_4, window_bounds = array<i64: 1, 16, 256>}]} {
    %c0_i32 = arith.constant 0 : i32
    %0 = arith.cmpi eq, %arg1, %c0_i32 : i32
    %1 = arith.extui %0 : i1 to i32
    %c0_i32_0 = arith.constant 0 : i32
    %2 = arith.cmpi ne, %1, %c0_i32_0 : i32
    scf.if %2 {
      %cst_15 = arith.constant 0.000000e+00 : f32
      %31 = vector.broadcast %cst_15 : f32 to vector<16x256xf32>
      %c0_16 = arith.constant 0 : index
      %c0_17 = arith.constant 0 : index
      %32 = vector.load %arg7[%c0_16, %c0_17] : memref<16x256xf32, #tpu.memory_space<vmem>>, vector<16x256xf32>
      tpu.vector_store %arg7[%c0_16, %c0_17], %31 {strides = array<i32>} : memref<16x256xf32, #tpu.memory_space<vmem>>, vector<16x256xf32>,
    } else {
    }
    %c0 = arith.constant 0 : index
    %c0_1 = arith.constant 0 : index
    %c0_2 = arith.constant 0 : index
    %3 = vector.load %arg2[%c0, %c0_1, %c0_2] : memref<1x16x384xbf16, #tpu.memory_space<vmem>>, vector<1x16x384xbf16>
    %4 = vector.shape_cast %3 : vector<1x16x384xbf16> to vector<16x384xbf16>
    %5 = vector.extract_strided_slice %4 {offsets = [0, 0], sizes = [16, 128], strides = [1, 1]} : vector<16x384xbf16> to vector<16x128xbf16>
    %6 = vector.extract_strided_slice %4 {offsets = [0, 128], sizes = [16, 128], strides = [1, 1]} : vector<16x384xbf16> to vector<16x128xbf16>
    %7 = vector.extract_strided_slice %4 {offsets = [0, 256], sizes = [16, 128], strides = [1, 1]} : vector<16x384xbf16> to vector<16x128xbf16>
    %cst = arith.constant dense<0.000000e+00> : vector<16x16xf32>
    %8 = tpu.matmul %5, %6, %cst {dimension_numbers = #tpu.dot_dimension_numbers<[1], [1], [0], [0], [0, 0, 1, 0], [], []>} : vector<16x128xbf16>, vector<16x128xbf16>, vector<16x16xf32> -> vector<16x16xf32>
    %cst_3 = arith.constant 0.0883883461 : f32
    %9 = vector.broadcast %cst_3 : f32 to vector<16x16xf32>
    %10 = arith.mulf %8, %9 : vector<16x16xf32>
    %cst_4 = arith.constant dense<0xFF800000> : vector<16xf32>
    %11 = vector.multi_reduction <maximumf>, %10, %cst_4 [1] : vector<16x16xf32> to vector<16xf32>
    %12 = vector.shape_cast %11 : vector<16xf32> to vector<16x1xf32>
    %13 = vector.broadcast %12 : vector<16x1xf32> to vector<16x16xf32>
    %14 = arith.subf %10, %13 : vector<16x16xf32>
    %15 = math.exp %14 : vector<16x16xf32>
    %cst_5 = arith.constant dense<0.000000e+00> : vector<16xf32>
    %16 = vector.multi_reduction <add>, %15, %cst_5 [1] : vector<16x16xf32> to vector<16xf32>
    %17 = vector.shape_cast %16 : vector<16xf32> to vector<16x1xf32>
    %18 = vector.broadcast %17 : vector<16x1xf32> to vector<16x16xf32>
    %19 = arith.divf %15, %18 : vector<16x16xf32>
    %20 = arith.truncf %19 : vector<16x16xf32> to vector<16x16xbf16>
    %cst_6 = arith.constant dense<0.000000e+00> : vector<16x128xf32>
    %21 = tpu.matmul %20, %7, %cst_6 {dimension_numbers = #tpu.dot_dimension_numbers<[1], [0], [0], [1], [0, 0, 1, 1], [], []>} : vector<16x16xbf16>, vector<16x128xbf16>, vector<16x128xf32> -> vector<16x128xf32>
    %c0_7 = arith.constant 0 : index
    %c0_8 = arith.constant 0 : index
    %22 = vector.load %arg7[%c0_7, %c0_8] : memref<16x256xf32, #tpu.memory_space<vmem>>, vector<16x256xf32>
    %23 = arith.truncf %21 : vector<16x128xf32> to vector<16x128xbf16>
    %c0_9 = arith.constant 0 : index
    %c0_10 = arith.constant 0 : index
    %24 = vector.load %arg3[%c0_9, %c0_10] : memref<128x256xbf16, #tpu.memory_space<vmem>>, vector<128x256xbf16>
    %cst_11 = arith.constant dense<0.000000e+00> : vector<16x256xf32>
    %25 = tpu.matmul %23, %24, %cst_11 {dimension_numbers = #tpu.dot_dimension_numbers<[1], [0], [0], [1], [0, 0, 1, 1], [], []>} : vector<16x128xbf16>, vector<128x256xbf16>, vector<16x256xf32> -> vector<16x256xf32>
    %26 = arith.addf %22, %25 : vector<16x256xf32>
    %c0_12 = arith.constant 0 : index
    %c0_13 = arith.constant 0 : index
    %27 = vector.load %arg7[%c0_12, %c0_13] : memref<16x256xf32, #tpu.memory_space<vmem>>, vector<16x256xf32>
    tpu.vector_store %arg7[%c0_12, %c0_13], %26 {strides = array<i32>} : memref<16x256xf32, #tpu.memory_space<vmem>>, vector<16x256xf32>,
    %c1_i32 = arith.constant 1 : i32
    %28 = arith.cmpi eq, %arg1, %c1_i32 : i32
    %29 = arith.extui %28 : i1 to i32
    %c0_i32_14 = arith.constant 0 : i32
    %30 = arith.cmpi ne, %29, %c0_i32_14 : i32
    scf.if %30 {
      %c0_15 = arith.constant 0 : index
      %c0_16 = arith.constant 0 : index
      %31 = vector.load %arg7[%c0_15, %c0_16] : memref<16x256xf32, #tpu.memory_space<vmem>>, vector<16x256xf32>
      %c0_17 = arith.constant 0 : index
      %c0_18 = arith.constant 0 : index
      %32 = vector.load %arg4[%c0_17, %c0_18] : memref<1x256xf32, #tpu.memory_space<vmem>>, vector<1x256xf32>
      %33 = vector.broadcast %32 : vector<1x256xf32> to vector<16x256xf32>
      %34 = arith.addf %31, %33 : vector<16x256xf32>
      %c0_19 = arith.constant 0 : index
      %c0_20 = arith.constant 0 : index
      %c0_21 = arith.constant 0 : index
      %35 = vector.load %arg5[%c0_19, %c0_20, %c0_21] : memref<1x16x256xbf16, #tpu.memory_space<vmem>>, vector<1x16x256xbf16>
      %36 = vector.shape_cast %35 : vector<1x16x256xbf16> to vector<16x256xbf16>
      %37 = arith.extf %36 : vector<16x256xbf16> to vector<16x256xf32>
      %38 = arith.addf %34, %37 : vector<16x256xf32>
      %39 = arith.truncf %38 : vector<16x256xf32> to vector<16x256xbf16>
      %c0_22 = arith.constant 0 : index
      %c0_23 = arith.constant 0 : index
      %c0_24 = arith.constant 0 : index
      %40 = vector.load %arg6[%c0_22, %c0_23, %c0_24] : memref<1x16x256xbf16, #tpu.memory_space<vmem>>, vector<1x16x256xbf16>
      %41 = vector.shape_cast %40 : vector<1x16x256xbf16> to vector<16x256xbf16>
      %42 = vector.shape_cast %39 : vector<16x256xbf16> to vector<1x16x256xbf16>
      tpu.vector_store %arg6[%c0_22, %c0_23, %c0_24], %42 {strides = array<i32>} : memref<1x16x256xbf16, #tpu.memory_space<vmem>>, vector<1x16x256xbf16>,
    } else {
    }
    return
  }
  func.func @transform_0(%arg0: i32, %arg1: i32) -> (i32, i32, i32) {
    %c0_i32 = arith.constant 0 : i32
    %c0_i32_0 = arith.constant 0 : i32
    return %arg0, %c0_i32, %arg1 : i32, i32, i32
  }
  func.func @transform_1(%arg0: i32, %arg1: i32) -> (i32, i32) {
    %c0_i32 = arith.constant 0 : i32
    %c0_i32_0 = arith.constant 0 : i32
    return %arg1, %c0_i32 : i32, i32
  }
  func.func @transform_2(%arg0: i32, %arg1: i32) -> (i32, i32) {
    %c0_i32 = arith.constant 0 : i32
    %c0_i32_0 = arith.constant 0 : i32
    %c0_i32_1 = arith.constant 0 : i32
    return %c0_i32, %c0_i32_0 : i32, i32
  }
  func.func @transform_3(%arg0: i32, %arg1: i32) -> (i32, i32, i32) {
    %c0_i32 = arith.constant 0 : i32
    %c0_i32_0 = arith.constant 0 : i32
    %c0_i32_1 = arith.constant 0 : i32
    return %arg0, %c0_i32, %c0_i32_0 : i32, i32, i32
  }
  func.func @transform_4(%arg0: i32, %arg1: i32) -> (i32, i32, i32) {
    %c0_i32 = arith.constant 0 : i32
    %c0_i32_0 = arith.constant 0 : i32
    %c0_i32_1 = arith.constant 0 : i32
    return %arg0, %c0_i32, %c0_i32_0 : i32, i32, i32
  }
}

module attributes {stable_mosaic.version = 11 : i64} {
  func.func @_ln_matmul_kernel(%arg0: i32, %arg1: i32, %arg2: memref<32x256xbf16, #tpu.memory_space<vmem>>, %arg3: memref<1x256xf32, #tpu.memory_space<vmem>>, %arg4: memref<1x256xf32, #tpu.memory_space<vmem>>, %arg5: memref<256x256xbf16, #tpu.memory_space<vmem>>, %arg6: memref<1x256xf32, #tpu.memory_space<vmem>>, %arg7: memref<32x256xbf16, #tpu.memory_space<vmem>>, %arg8: memref<32x256xbf16, #tpu.memory_space<vmem>>) attributes {dimension_semantics = [#tpu.dimension_semantics<parallel>, #tpu.dimension_semantics<arbitrary>], iteration_bounds = array<i64: 1, 4>, scalar_prefetch = 0 : i64, scratch_operands = 1 : i64, tpu.core_type = #tpu.core_type<tc>, window_params = [{transform_indices = @transform_0, window_bounds = array<i64: 32, 256>}, {pipeline_mode = #tpu.pipeline_mode<synchronous>, transform_indices = @transform_1, window_bounds = array<i64: 1, 256>}, {pipeline_mode = #tpu.pipeline_mode<synchronous>, transform_indices = @transform_2, window_bounds = array<i64: 1, 256>}, {transform_indices = @transform_3, window_bounds = array<i64: 256, 256>}, {transform_indices = @transform_4, window_bounds = array<i64: 1, 256>}, {transform_indices = @transform_5, window_bounds = array<i64: 32, 256>}]} {
    %c0_i32 = arith.constant 0 : i32
    %0 = arith.cmpi eq, %arg1, %c0_i32 : i32
    %1 = arith.extui %0 : i1 to i32
    %c0_i32_0 = arith.constant 0 : i32
    %2 = arith.cmpi ne, %1, %c0_i32_0 : i32
    scf.if %2 {
      %c0_12 = arith.constant 0 : index
      %c0_13 = arith.constant 0 : index
      %24 = vector.load %arg2[%c0_12, %c0_13] : memref<32x256xbf16, #tpu.memory_space<vmem>>, vector<32x256xbf16>
      %25 = arith.extf %24 : vector<32x256xbf16> to vector<32x256xf32>
      %cst_14 = arith.constant dense<0.000000e+00> : vector<32xf32>
      %26 = vector.multi_reduction <add>, %25, %cst_14 [1] : vector<32x256xf32> to vector<32xf32>
      %27 = vector.shape_cast %26 : vector<32xf32> to vector<32x1xf32>
      %cst_15 = arith.constant 2.560000e+02 : f32
      %28 = vector.broadcast %cst_15 : f32 to vector<32x1xf32>
      %29 = arith.divf %27, %28 : vector<32x1xf32>
      %30 = vector.broadcast %29 : vector<32x1xf32> to vector<32x256xf32>
      %31 = arith.subf %25, %30 : vector<32x256xf32>
      %32 = arith.mulf %31, %31 : vector<32x256xf32>
      %cst_16 = arith.constant dense<0.000000e+00> : vector<32xf32>
      %33 = vector.multi_reduction <add>, %32, %cst_16 [1] : vector<32x256xf32> to vector<32xf32>
      %34 = vector.shape_cast %33 : vector<32xf32> to vector<32x1xf32>
      %cst_17 = arith.constant 2.560000e+02 : f32
      %35 = vector.broadcast %cst_17 : f32 to vector<32x1xf32>
      %36 = arith.divf %34, %35 : vector<32x1xf32>
      %37 = vector.broadcast %29 : vector<32x1xf32> to vector<32x256xf32>
      %38 = arith.subf %25, %37 : vector<32x256xf32>
      %cst_18 = arith.constant 9.99999997E-7 : f32
      %39 = vector.broadcast %cst_18 : f32 to vector<32x1xf32>
      %40 = arith.addf %36, %39 : vector<32x1xf32>
      %41 = math.rsqrt %40 : vector<32x1xf32>
      %42 = vector.broadcast %41 : vector<32x1xf32> to vector<32x256xf32>
      %43 = arith.mulf %38, %42 : vector<32x256xf32>
      %c0_19 = arith.constant 0 : index
      %c0_20 = arith.constant 0 : index
      %44 = vector.load %arg3[%c0_19, %c0_20] : memref<1x256xf32, #tpu.memory_space<vmem>>, vector<1x256xf32>
      %45 = vector.broadcast %44 : vector<1x256xf32> to vector<32x256xf32>
      %46 = arith.mulf %43, %45 : vector<32x256xf32>
      %c0_21 = arith.constant 0 : index
      %c0_22 = arith.constant 0 : index
      %47 = vector.load %arg4[%c0_21, %c0_22] : memref<1x256xf32, #tpu.memory_space<vmem>>, vector<1x256xf32>
      %48 = vector.broadcast %47 : vector<1x256xf32> to vector<32x256xf32>
      %49 = arith.addf %46, %48 : vector<32x256xf32>
      %50 = arith.truncf %49 : vector<32x256xf32> to vector<32x256xbf16>
      %c0_23 = arith.constant 0 : index
      %c0_24 = arith.constant 0 : index
      %51 = vector.load %arg8[%c0_23, %c0_24] : memref<32x256xbf16, #tpu.memory_space<vmem>>, vector<32x256xbf16>
      tpu.vector_store %arg8[%c0_23, %c0_24], %50 {strides = array<i32>} : memref<32x256xbf16, #tpu.memory_space<vmem>>, vector<32x256xbf16>,
    } else {
    }
    %c0 = arith.constant 0 : index
    %c0_1 = arith.constant 0 : index
    %3 = vector.load %arg8[%c0, %c0_1] : memref<32x256xbf16, #tpu.memory_space<vmem>>, vector<32x256xbf16>
    %c0_2 = arith.constant 0 : index
    %c0_3 = arith.constant 0 : index
    %4 = vector.load %arg5[%c0_2, %c0_3] : memref<256x256xbf16, #tpu.memory_space<vmem>>, vector<256x256xbf16>
    %cst = arith.constant dense<0.000000e+00> : vector<32x256xf32>
    %5 = tpu.matmul %3, %4, %cst {dimension_numbers = #tpu.dot_dimension_numbers<[1], [0], [0], [1], [0, 0, 1, 1], [], []>} : vector<32x256xbf16>, vector<256x256xbf16>, vector<32x256xf32> -> vector<32x256xf32>
    %c0_4 = arith.constant 0 : index
    %c0_5 = arith.constant 0 : index
    %6 = vector.load %arg6[%c0_4, %c0_5] : memref<1x256xf32, #tpu.memory_space<vmem>>, vector<1x256xf32>
    %7 = vector.broadcast %6 : vector<1x256xf32> to vector<32x256xf32>
    %8 = arith.addf %5, %7 : vector<32x256xf32>
    %9 = arith.mulf %8, %8 : vector<32x256xf32>
    %10 = arith.mulf %8, %9 : vector<32x256xf32>
    %cst_6 = arith.constant 4.471500e-02 : f32
    %11 = vector.broadcast %cst_6 : f32 to vector<32x256xf32>
    %12 = arith.mulf %11, %10 : vector<32x256xf32>
    %13 = arith.addf %8, %12 : vector<32x256xf32>
    %cst_7 = arith.constant 0.797884583 : f32
    %14 = vector.broadcast %cst_7 : f32 to vector<32x256xf32>
    %15 = arith.mulf %14, %13 : vector<32x256xf32>
    %16 = math.tanh %15 : vector<32x256xf32>
    %cst_8 = arith.constant 1.000000e+00 : f32
    %17 = vector.broadcast %cst_8 : f32 to vector<32x256xf32>
    %18 = arith.addf %17, %16 : vector<32x256xf32>
    %cst_9 = arith.constant 5.000000e-01 : f32
    %19 = vector.broadcast %cst_9 : f32 to vector<32x256xf32>
    %20 = arith.mulf %19, %18 : vector<32x256xf32>
    %21 = arith.mulf %8, %20 : vector<32x256xf32>
    %22 = arith.truncf %21 : vector<32x256xf32> to vector<32x256xbf16>
    %c0_10 = arith.constant 0 : index
    %c0_11 = arith.constant 0 : index
    %23 = vector.load %arg7[%c0_10, %c0_11] : memref<32x256xbf16, #tpu.memory_space<vmem>>, vector<32x256xbf16>
    tpu.vector_store %arg7[%c0_10, %c0_11], %22 {strides = array<i32>} : memref<32x256xbf16, #tpu.memory_space<vmem>>, vector<32x256xbf16>,
    return
  }
  func.func @transform_0(%arg0: i32, %arg1: i32) -> (i32, i32) {
    %c0_i32 = arith.constant 0 : i32
    %c0_i32_0 = arith.constant 0 : i32
    return %arg0, %c0_i32 : i32, i32
  }
  func.func @transform_1(%arg0: i32, %arg1: i32) -> (i32, i32) {
    %c0_i32 = arith.constant 0 : i32
    %c0_i32_0 = arith.constant 0 : i32
    %c0_i32_1 = arith.constant 0 : i32
    return %c0_i32, %c0_i32_0 : i32, i32
  }
  func.func @transform_2(%arg0: i32, %arg1: i32) -> (i32, i32) {
    %c0_i32 = arith.constant 0 : i32
    %c0_i32_0 = arith.constant 0 : i32
    %c0_i32_1 = arith.constant 0 : i32
    return %c0_i32, %c0_i32_0 : i32, i32
  }
  func.func @transform_3(%arg0: i32, %arg1: i32) -> (i32, i32) {
    %c0_i32 = arith.constant 0 : i32
    %c0_i32_0 = arith.constant 0 : i32
    return %c0_i32, %arg1 : i32, i32
  }
  func.func @transform_4(%arg0: i32, %arg1: i32) -> (i32, i32) {
    %c0_i32 = arith.constant 0 : i32
    %c0_i32_0 = arith.constant 0 : i32
    return %c0_i32, %arg1 : i32, i32
  }
  func.func @transform_5(%arg0: i32, %arg1: i32) -> (i32, i32) {
    %c0_i32 = arith.constant 0 : i32
    return %arg0, %arg1 : i32, i32
  }
}

module attributes {stable_mosaic.version = 11 : i64} {
  func.func @_patch_embed_kernel(%arg0: i32, %arg1: i32, %arg2: memref<16x48xf32, #tpu.memory_space<vmem>>, %arg3: memref<48x256xbf16, #tpu.memory_space<vmem>>, %arg4: memref<1x256xf32, #tpu.memory_space<vmem>>, %arg5: memref<16x256xf32, #tpu.memory_space<vmem>>, %arg6: memref<16x256xbf16, #tpu.memory_space<vmem>>) attributes {dimension_semantics = [#tpu.dimension_semantics<parallel>, #tpu.dimension_semantics<parallel>], iteration_bounds = array<i64: 2, 1>, scalar_prefetch = 0 : i64, scratch_operands = 0 : i64, tpu.core_type = #tpu.core_type<tc>, window_params = [{transform_indices = @transform_0, window_bounds = array<i64: 16, 48>}, {transform_indices = @transform_1, window_bounds = array<i64: 48, 256>}, {transform_indices = @transform_2, window_bounds = array<i64: 1, 256>}, {transform_indices = @transform_3, window_bounds = array<i64: 16, 256>}, {transform_indices = @transform_4, window_bounds = array<i64: 16, 256>}]} {
    %c0 = arith.constant 0 : index
    %c0_0 = arith.constant 0 : index
    %0 = vector.load %arg2[%c0, %c0_0] : memref<16x48xf32, #tpu.memory_space<vmem>>, vector<16x48xf32>
    %cst = arith.constant 1.000000e+04 : f32
    %1 = vector.broadcast %cst : f32 to vector<16x48xf32>
    %2 = arith.divf %0, %1 : vector<16x48xf32>
    %cst_1 = arith.constant 2.500000e+00 : f32
    %3 = vector.broadcast %cst_1 : f32 to vector<16x48xf32>
    %4 = arith.mulf %3, %2 : vector<16x48xf32>
    %cst_2 = arith.constant 0.000000e+00 : f32
    %cst_3 = arith.constant 1.000000e+00 : f32
    %5 = vector.broadcast %cst_2 : f32 to vector<16x48xf32>
    %6 = arith.maximumf %5, %4 : vector<16x48xf32>
    %7 = vector.broadcast %cst_3 : f32 to vector<16x48xf32>
    %8 = arith.minimumf %7, %6 : vector<16x48xf32>
    %cst_4 = arith.constant 5.000000e-01 : f32
    %9 = vector.broadcast %cst_4 : f32 to vector<16x48xf32>
    %10 = arith.subf %8, %9 : vector<16x48xf32>
    %cst_5 = arith.constant 5.000000e-01 : f32
    %11 = vector.broadcast %cst_5 : f32 to vector<16x48xf32>
    %12 = arith.divf %10, %11 : vector<16x48xf32>
    %13 = arith.truncf %12 : vector<16x48xf32> to vector<16x48xbf16>
    %c0_6 = arith.constant 0 : index
    %c0_7 = arith.constant 0 : index
    %14 = vector.load %arg3[%c0_6, %c0_7] : memref<48x256xbf16, #tpu.memory_space<vmem>>, vector<48x256xbf16>
    %cst_8 = arith.constant dense<0.000000e+00> : vector<16x256xf32>
    %15 = tpu.matmul %13, %14, %cst_8 {dimension_numbers = #tpu.dot_dimension_numbers<[1], [0], [0], [1], [0, 0, 1, 1], [], []>} : vector<16x48xbf16>, vector<48x256xbf16>, vector<16x256xf32> -> vector<16x256xf32>
    %c0_9 = arith.constant 0 : index
    %c0_10 = arith.constant 0 : index
    %16 = vector.load %arg4[%c0_9, %c0_10] : memref<1x256xf32, #tpu.memory_space<vmem>>, vector<1x256xf32>
    %17 = vector.broadcast %16 : vector<1x256xf32> to vector<16x256xf32>
    %18 = arith.addf %15, %17 : vector<16x256xf32>
    %c0_11 = arith.constant 0 : index
    %c0_12 = arith.constant 0 : index
    %19 = vector.load %arg5[%c0_11, %c0_12] : memref<16x256xf32, #tpu.memory_space<vmem>>, vector<16x256xf32>
    %20 = arith.addf %18, %19 : vector<16x256xf32>
    %21 = arith.truncf %20 : vector<16x256xf32> to vector<16x256xbf16>
    %c0_13 = arith.constant 0 : index
    %c0_14 = arith.constant 0 : index
    %22 = vector.load %arg6[%c0_13, %c0_14] : memref<16x256xbf16, #tpu.memory_space<vmem>>, vector<16x256xbf16>
    tpu.vector_store %arg6[%c0_13, %c0_14], %21 {strides = array<i32>} : memref<16x256xbf16, #tpu.memory_space<vmem>>, vector<16x256xbf16>,
    return
  }
  func.func @transform_0(%arg0: i32, %arg1: i32) -> (i32, i32) {
    %c0_i32 = arith.constant 0 : i32
    %c0_i32_0 = arith.constant 0 : i32
    return %arg0, %c0_i32 : i32, i32
  }
  func.func @transform_1(%arg0: i32, %arg1: i32) -> (i32, i32) {
    %c0_i32 = arith.constant 0 : i32
    %c0_i32_0 = arith.constant 0 : i32
    return %c0_i32, %arg1 : i32, i32
  }
  func.func @transform_2(%arg0: i32, %arg1: i32) -> (i32, i32) {
    %c0_i32 = arith.constant 0 : i32
    %c0_i32_0 = arith.constant 0 : i32
    return %c0_i32, %arg1 : i32, i32
  }
  func.func @transform_3(%arg0: i32, %arg1: i32) -> (i32, i32) {
    %c1_i32 = arith.constant 1 : i32
    %c0_i32 = arith.constant 0 : i32
    %0 = arith.cmpi eq, %c1_i32, %c0_i32 : i32
    %c1_i32_0 = arith.constant 1 : i32
    %1 = arith.select %0, %c1_i32_0, %c1_i32 : i32
    %2 = arith.remsi %arg0, %1 : i32
    %c0_i32_1 = arith.constant 0 : i32
    %3 = arith.cmpi ne, %2, %c0_i32_1 : i32
    %c0_i32_2 = arith.constant 0 : i32
    %4 = arith.cmpi slt, %2, %c0_i32_2 : i32
    %c0_i32_3 = arith.constant 0 : i32
    %5 = arith.cmpi slt, %1, %c0_i32_3 : i32
    %6 = arith.xori %4, %5 : i1
    %7 = arith.andi %6, %3 : i1
    %8 = arith.addi %2, %1 : i32
    %9 = arith.select %7, %8, %2 : i32
    %c0_i32_4 = arith.constant 0 : i32
    return %9, %arg1 : i32, i32
  }
  func.func @transform_4(%arg0: i32, %arg1: i32) -> (i32, i32) {
    %c0_i32 = arith.constant 0 : i32
    return %arg0, %arg1 : i32, i32
  }
}

module attributes {stable_mosaic.version = 11 : i64} {
  func.func @kernel(%arg0: i32, %arg1: i32, %arg2: i32, %arg3: memref<32x512xbf16, #tpu.memory_space<vmem>>, %arg4: memref<512x256xbf16, #tpu.memory_space<vmem>>, %arg5: memref<1x256xf32, #tpu.memory_space<vmem>>, %arg6: memref<32x256xbf16, #tpu.memory_space<vmem>>, %arg7: memref<32x256xbf16, #tpu.memory_space<vmem>>, %arg8: memref<32x256xf32, #tpu.memory_space<vmem>>) attributes {dimension_semantics = [#tpu.dimension_semantics<parallel>, #tpu.dimension_semantics<parallel>, #tpu.dimension_semantics<arbitrary>], iteration_bounds = array<i64: 1, 1, 2>, scalar_prefetch = 0 : i64, scratch_operands = 1 : i64, tpu.core_type = #tpu.core_type<tc>, window_params = [{transform_indices = @transform_0, window_bounds = array<i64: 32, 512>}, {transform_indices = @transform_1, window_bounds = array<i64: 512, 256>}, {transform_indices = @transform_2, window_bounds = array<i64: 1, 256>}, {transform_indices = @transform_3, window_bounds = array<i64: 32, 256>}, {transform_indices = @transform_4, window_bounds = array<i64: 32, 256>}]} {
    %c0_i32 = arith.constant 0 : i32
    %0 = arith.cmpi eq, %arg2, %c0_i32 : i32
    %1 = arith.extui %0 : i1 to i32
    %c0_i32_0 = arith.constant 0 : i32
    %2 = arith.cmpi ne, %1, %c0_i32_0 : i32
    scf.if %2 {
      %cst_9 = arith.constant 0.000000e+00 : f32
      %12 = vector.broadcast %cst_9 : f32 to vector<32x256xf32>
      %c0_10 = arith.constant 0 : index
      %c0_11 = arith.constant 0 : index
      %13 = vector.load %arg8[%c0_10, %c0_11] : memref<32x256xf32, #tpu.memory_space<vmem>>, vector<32x256xf32>
      tpu.vector_store %arg8[%c0_10, %c0_11], %12 {strides = array<i32>} : memref<32x256xf32, #tpu.memory_space<vmem>>, vector<32x256xf32>,
    } else {
    }
    %c0 = arith.constant 0 : index
    %c0_1 = arith.constant 0 : index
    %3 = vector.load %arg8[%c0, %c0_1] : memref<32x256xf32, #tpu.memory_space<vmem>>, vector<32x256xf32>
    %c0_2 = arith.constant 0 : index
    %c0_3 = arith.constant 0 : index
    %4 = vector.load %arg3[%c0_2, %c0_3] : memref<32x512xbf16, #tpu.memory_space<vmem>>, vector<32x512xbf16>
    %c0_4 = arith.constant 0 : index
    %c0_5 = arith.constant 0 : index
    %5 = vector.load %arg4[%c0_4, %c0_5] : memref<512x256xbf16, #tpu.memory_space<vmem>>, vector<512x256xbf16>
    %cst = arith.constant dense<0.000000e+00> : vector<32x256xf32>
    %6 = tpu.matmul %4, %5, %cst {dimension_numbers = #tpu.dot_dimension_numbers<[1], [0], [0], [1], [0, 0, 1, 1], [], []>} : vector<32x512xbf16>, vector<512x256xbf16>, vector<32x256xf32> -> vector<32x256xf32>
    %7 = arith.addf %3, %6 : vector<32x256xf32>
    %c0_6 = arith.constant 0 : index
    %c0_7 = arith.constant 0 : index
    %8 = vector.load %arg8[%c0_6, %c0_7] : memref<32x256xf32, #tpu.memory_space<vmem>>, vector<32x256xf32>
    tpu.vector_store %arg8[%c0_6, %c0_7], %7 {strides = array<i32>} : memref<32x256xf32, #tpu.memory_space<vmem>>, vector<32x256xf32>,
    %c1_i32 = arith.constant 1 : i32
    %9 = arith.cmpi eq, %arg2, %c1_i32 : i32
    %10 = arith.extui %9 : i1 to i32
    %c0_i32_8 = arith.constant 0 : i32
    %11 = arith.cmpi ne, %10, %c0_i32_8 : i32
    scf.if %11 {
      %c0_9 = arith.constant 0 : index
      %c0_10 = arith.constant 0 : index
      %12 = vector.load %arg8[%c0_9, %c0_10] : memref<32x256xf32, #tpu.memory_space<vmem>>, vector<32x256xf32>
      %c0_11 = arith.constant 0 : index
      %c0_12 = arith.constant 0 : index
      %13 = vector.load %arg5[%c0_11, %c0_12] : memref<1x256xf32, #tpu.memory_space<vmem>>, vector<1x256xf32>
      %14 = vector.broadcast %13 : vector<1x256xf32> to vector<32x256xf32>
      %15 = arith.addf %12, %14 : vector<32x256xf32>
      %c0_13 = arith.constant 0 : index
      %c0_14 = arith.constant 0 : index
      %16 = vector.load %arg6[%c0_13, %c0_14] : memref<32x256xbf16, #tpu.memory_space<vmem>>, vector<32x256xbf16>
      %17 = arith.extf %16 : vector<32x256xbf16> to vector<32x256xf32>
      %18 = arith.addf %15, %17 : vector<32x256xf32>
      %19 = arith.truncf %18 : vector<32x256xf32> to vector<32x256xbf16>
      %c0_15 = arith.constant 0 : index
      %c0_16 = arith.constant 0 : index
      %20 = vector.load %arg7[%c0_15, %c0_16] : memref<32x256xbf16, #tpu.memory_space<vmem>>, vector<32x256xbf16>
      tpu.vector_store %arg7[%c0_15, %c0_16], %19 {strides = array<i32>} : memref<32x256xbf16, #tpu.memory_space<vmem>>, vector<32x256xbf16>,
    } else {
    }
    return
  }
  func.func @transform_0(%arg0: i32, %arg1: i32, %arg2: i32) -> (i32, i32) {
    %c0_i32 = arith.constant 0 : i32
    return %arg0, %arg2 : i32, i32
  }
  func.func @transform_1(%arg0: i32, %arg1: i32, %arg2: i32) -> (i32, i32) {
    %c0_i32 = arith.constant 0 : i32
    return %arg2, %arg1 : i32, i32
  }
  func.func @transform_2(%arg0: i32, %arg1: i32, %arg2: i32) -> (i32, i32) {
    %c0_i32 = arith.constant 0 : i32
    %c0_i32_0 = arith.constant 0 : i32
    return %c0_i32, %arg1 : i32, i32
  }
  func.func @transform_3(%arg0: i32, %arg1: i32, %arg2: i32) -> (i32, i32) {
    %c0_i32 = arith.constant 0 : i32
    return %arg0, %arg1 : i32, i32
  }
  func.func @transform_4(%arg0: i32, %arg1: i32, %arg2: i32) -> (i32, i32) {
    %c0_i32 = arith.constant 0 : i32
    return %arg0, %arg1 : i32, i32
  }
}

module attributes {stable_mosaic.version = 11 : i64} {
  func.func @_ln_matmul_kernel(%arg0: i32, %arg1: i32, %arg2: memref<32x256xbf16, #tpu.memory_space<vmem>>, %arg3: memref<1x256xf32, #tpu.memory_space<vmem>>, %arg4: memref<1x256xf32, #tpu.memory_space<vmem>>, %arg5: memref<256x256xbf16, #tpu.memory_space<vmem>>, %arg6: memref<1x256xf32, #tpu.memory_space<vmem>>, %arg7: memref<32x256xbf16, #tpu.memory_space<vmem>>, %arg8: memref<32x256xbf16, #tpu.memory_space<vmem>>) attributes {dimension_semantics = [#tpu.dimension_semantics<parallel>, #tpu.dimension_semantics<arbitrary>], iteration_bounds = array<i64: 1, 4>, scalar_prefetch = 0 : i64, scratch_operands = 1 : i64, tpu.core_type = #tpu.core_type<tc>, window_params = [{transform_indices = @transform_0, window_bounds = array<i64: 32, 256>}, {pipeline_mode = #tpu.pipeline_mode<synchronous>, transform_indices = @transform_1, window_bounds = array<i64: 1, 256>}, {pipeline_mode = #tpu.pipeline_mode<synchronous>, transform_indices = @transform_2, window_bounds = array<i64: 1, 256>}, {transform_indices = @transform_3, window_bounds = array<i64: 256, 256>}, {transform_indices = @transform_4, window_bounds = array<i64: 1, 256>}, {transform_indices = @transform_5, window_bounds = array<i64: 32, 256>}]} {
    %c0_i32 = arith.constant 0 : i32
    %0 = arith.cmpi eq, %arg1, %c0_i32 : i32
    %1 = arith.extui %0 : i1 to i32
    %c0_i32_0 = arith.constant 0 : i32
    %2 = arith.cmpi ne, %1, %c0_i32_0 : i32
    scf.if %2 {
      %c0_12 = arith.constant 0 : index
      %c0_13 = arith.constant 0 : index
      %24 = vector.load %arg2[%c0_12, %c0_13] : memref<32x256xbf16, #tpu.memory_space<vmem>>, vector<32x256xbf16>
      %25 = arith.extf %24 : vector<32x256xbf16> to vector<32x256xf32>
      %cst_14 = arith.constant dense<0.000000e+00> : vector<32xf32>
      %26 = vector.multi_reduction <add>, %25, %cst_14 [1] : vector<32x256xf32> to vector<32xf32>
      %27 = vector.shape_cast %26 : vector<32xf32> to vector<32x1xf32>
      %cst_15 = arith.constant 2.560000e+02 : f32
      %28 = vector.broadcast %cst_15 : f32 to vector<32x1xf32>
      %29 = arith.divf %27, %28 : vector<32x1xf32>
      %30 = vector.broadcast %29 : vector<32x1xf32> to vector<32x256xf32>
      %31 = arith.subf %25, %30 : vector<32x256xf32>
      %32 = arith.mulf %31, %31 : vector<32x256xf32>
      %cst_16 = arith.constant dense<0.000000e+00> : vector<32xf32>
      %33 = vector.multi_reduction <add>, %32, %cst_16 [1] : vector<32x256xf32> to vector<32xf32>
      %34 = vector.shape_cast %33 : vector<32xf32> to vector<32x1xf32>
      %cst_17 = arith.constant 2.560000e+02 : f32
      %35 = vector.broadcast %cst_17 : f32 to vector<32x1xf32>
      %36 = arith.divf %34, %35 : vector<32x1xf32>
      %37 = vector.broadcast %29 : vector<32x1xf32> to vector<32x256xf32>
      %38 = arith.subf %25, %37 : vector<32x256xf32>
      %cst_18 = arith.constant 9.99999997E-7 : f32
      %39 = vector.broadcast %cst_18 : f32 to vector<32x1xf32>
      %40 = arith.addf %36, %39 : vector<32x1xf32>
      %41 = math.rsqrt %40 : vector<32x1xf32>
      %42 = vector.broadcast %41 : vector<32x1xf32> to vector<32x256xf32>
      %43 = arith.mulf %38, %42 : vector<32x256xf32>
      %c0_19 = arith.constant 0 : index
      %c0_20 = arith.constant 0 : index
      %44 = vector.load %arg3[%c0_19, %c0_20] : memref<1x256xf32, #tpu.memory_space<vmem>>, vector<1x256xf32>
      %45 = vector.broadcast %44 : vector<1x256xf32> to vector<32x256xf32>
      %46 = arith.mulf %43, %45 : vector<32x256xf32>
      %c0_21 = arith.constant 0 : index
      %c0_22 = arith.constant 0 : index
      %47 = vector.load %arg4[%c0_21, %c0_22] : memref<1x256xf32, #tpu.memory_space<vmem>>, vector<1x256xf32>
      %48 = vector.broadcast %47 : vector<1x256xf32> to vector<32x256xf32>
      %49 = arith.addf %46, %48 : vector<32x256xf32>
      %50 = arith.truncf %49 : vector<32x256xf32> to vector<32x256xbf16>
      %c0_23 = arith.constant 0 : index
      %c0_24 = arith.constant 0 : index
      %51 = vector.load %arg8[%c0_23, %c0_24] : memref<32x256xbf16, #tpu.memory_space<vmem>>, vector<32x256xbf16>
      tpu.vector_store %arg8[%c0_23, %c0_24], %50 {strides = array<i32>} : memref<32x256xbf16, #tpu.memory_space<vmem>>, vector<32x256xbf16>,
    } else {
    }
    %c0 = arith.constant 0 : index
    %c0_1 = arith.constant 0 : index
    %3 = vector.load %arg8[%c0, %c0_1] : memref<32x256xbf16, #tpu.memory_space<vmem>>, vector<32x256xbf16>
    %c0_2 = arith.constant 0 : index
    %c0_3 = arith.constant 0 : index
    %4 = vector.load %arg5[%c0_2, %c0_3] : memref<256x256xbf16, #tpu.memory_space<vmem>>, vector<256x256xbf16>
    %cst = arith.constant dense<0.000000e+00> : vector<32x256xf32>
    %5 = tpu.matmul %3, %4, %cst {dimension_numbers = #tpu.dot_dimension_numbers<[1], [0], [0], [1], [0, 0, 1, 1], [], []>} : vector<32x256xbf16>, vector<256x256xbf16>, vector<32x256xf32> -> vector<32x256xf32>
    %c0_4 = arith.constant 0 : index
    %c0_5 = arith.constant 0 : index
    %6 = vector.load %arg6[%c0_4, %c0_5] : memref<1x256xf32, #tpu.memory_space<vmem>>, vector<1x256xf32>
    %7 = vector.broadcast %6 : vector<1x256xf32> to vector<32x256xf32>
    %8 = arith.addf %5, %7 : vector<32x256xf32>
    %9 = arith.mulf %8, %8 : vector<32x256xf32>
    %10 = arith.mulf %8, %9 : vector<32x256xf32>
    %cst_6 = arith.constant 4.471500e-02 : f32
    %11 = vector.broadcast %cst_6 : f32 to vector<32x256xf32>
    %12 = arith.mulf %11, %10 : vector<32x256xf32>
    %13 = arith.addf %8, %12 : vector<32x256xf32>
    %cst_7 = arith.constant 0.797884583 : f32
    %14 = vector.broadcast %cst_7 : f32 to vector<32x256xf32>
    %15 = arith.mulf %14, %13 : vector<32x256xf32>
    %16 = math.tanh %15 : vector<32x256xf32>
    %cst_8 = arith.constant 1.000000e+00 : f32
    %17 = vector.broadcast %cst_8 : f32 to vector<32x256xf32>
    %18 = arith.addf %17, %16 : vector<32x256xf32>
    %cst_9 = arith.constant 5.000000e-01 : f32
    %19 = vector.broadcast %cst_9 : f32 to vector<32x256xf32>
    %20 = arith.mulf %19, %18 : vector<32x256xf32>
    %21 = arith.mulf %8, %20 : vector<32x256xf32>
    %22 = arith.truncf %21 : vector<32x256xf32> to vector<32x256xbf16>
    %c0_10 = arith.constant 0 : index
    %c0_11 = arith.constant 0 : index
    %23 = vector.load %arg7[%c0_10, %c0_11] : memref<32x256xbf16, #tpu.memory_space<vmem>>, vector<32x256xbf16>
    tpu.vector_store %arg7[%c0_10, %c0_11], %22 {strides = array<i32>} : memref<32x256xbf16, #tpu.memory_space<vmem>>, vector<32x256xbf16>,
    return
  }
  func.func @transform_0(%arg0: i32, %arg1: i32) -> (i32, i32) {
    %c0_i32 = arith.constant 0 : i32
    %c0_i32_0 = arith.constant 0 : i32
    return %arg0, %c0_i32 : i32, i32
  }
  func.func @transform_1(%arg0: i32, %arg1: i32) -> (i32, i32) {
    %c0_i32 = arith.constant 0 : i32
    %c0_i32_0 = arith.constant 0 : i32
    %c0_i32_1 = arith.constant 0 : i32
    return %c0_i32, %c0_i32_0 : i32, i32
  }
  func.func @transform_2(%arg0: i32, %arg1: i32) -> (i32, i32) {
    %c0_i32 = arith.constant 0 : i32
    %c0_i32_0 = arith.constant 0 : i32
    %c0_i32_1 = arith.constant 0 : i32
    return %c0_i32, %c0_i32_0 : i32, i32
  }
  func.func @transform_3(%arg0: i32, %arg1: i32) -> (i32, i32) {
    %c0_i32 = arith.constant 0 : i32
    %c0_i32_0 = arith.constant 0 : i32
    return %c0_i32, %arg1 : i32, i32
  }
  func.func @transform_4(%arg0: i32, %arg1: i32) -> (i32, i32) {
    %c0_i32 = arith.constant 0 : i32
    %c0_i32_0 = arith.constant 0 : i32
    return %c0_i32, %arg1 : i32, i32
  }
  func.func @transform_5(%arg0: i32, %arg1: i32) -> (i32, i32) {
    %c0_i32 = arith.constant 0 : i32
    return %arg0, %arg1 : i32, i32
  }
}

module attributes {stable_mosaic.version = 11 : i64} {
  func.func @_ln_matmul_kernel(%arg0: i32, %arg1: i32, %arg2: memref<32x256xbf16, #tpu.memory_space<vmem>>, %arg3: memref<1x256xf32, #tpu.memory_space<vmem>>, %arg4: memref<1x256xf32, #tpu.memory_space<vmem>>, %arg5: memref<256x256xbf16, #tpu.memory_space<vmem>>, %arg6: memref<1x256xf32, #tpu.memory_space<vmem>>, %arg7: memref<32x256xbf16, #tpu.memory_space<vmem>>, %arg8: memref<32x256xbf16, #tpu.memory_space<vmem>>) attributes {dimension_semantics = [#tpu.dimension_semantics<parallel>, #tpu.dimension_semantics<arbitrary>], iteration_bounds = array<i64: 1, 2>, scalar_prefetch = 0 : i64, scratch_operands = 1 : i64, tpu.core_type = #tpu.core_type<tc>, window_params = [{transform_indices = @transform_0, window_bounds = array<i64: 32, 256>}, {pipeline_mode = #tpu.pipeline_mode<synchronous>, transform_indices = @transform_1, window_bounds = array<i64: 1, 256>}, {pipeline_mode = #tpu.pipeline_mode<synchronous>, transform_indices = @transform_2, window_bounds = array<i64: 1, 256>}, {transform_indices = @transform_3, window_bounds = array<i64: 256, 256>}, {transform_indices = @transform_4, window_bounds = array<i64: 1, 256>}, {transform_indices = @transform_5, window_bounds = array<i64: 32, 256>}]} {
    %c0_i32 = arith.constant 0 : i32
    %0 = arith.cmpi eq, %arg1, %c0_i32 : i32
    %1 = arith.extui %0 : i1 to i32
    %c0_i32_0 = arith.constant 0 : i32
    %2 = arith.cmpi ne, %1, %c0_i32_0 : i32
    scf.if %2 {
      %c0_8 = arith.constant 0 : index
      %c0_9 = arith.constant 0 : index
      %11 = vector.load %arg2[%c0_8, %c0_9] : memref<32x256xbf16, #tpu.memory_space<vmem>>, vector<32x256xbf16>
      %12 = arith.extf %11 : vector<32x256xbf16> to vector<32x256xf32>
      %cst_10 = arith.constant dense<0.000000e+00> : vector<32xf32>
      %13 = vector.multi_reduction <add>, %12, %cst_10 [1] : vector<32x256xf32> to vector<32xf32>
      %14 = vector.shape_cast %13 : vector<32xf32> to vector<32x1xf32>
      %cst_11 = arith.constant 2.560000e+02 : f32
      %15 = vector.broadcast %cst_11 : f32 to vector<32x1xf32>
      %16 = arith.divf %14, %15 : vector<32x1xf32>
      %17 = vector.broadcast %16 : vector<32x1xf32> to vector<32x256xf32>
      %18 = arith.subf %12, %17 : vector<32x256xf32>
      %19 = arith.mulf %18, %18 : vector<32x256xf32>
      %cst_12 = arith.constant dense<0.000000e+00> : vector<32xf32>
      %20 = vector.multi_reduction <add>, %19, %cst_12 [1] : vector<32x256xf32> to vector<32xf32>
      %21 = vector.shape_cast %20 : vector<32xf32> to vector<32x1xf32>
      %cst_13 = arith.constant 2.560000e+02 : f32
      %22 = vector.broadcast %cst_13 : f32 to vector<32x1xf32>
      %23 = arith.divf %21, %22 : vector<32x1xf32>
      %24 = vector.broadcast %16 : vector<32x1xf32> to vector<32x256xf32>
      %25 = arith.subf %12, %24 : vector<32x256xf32>
      %cst_14 = arith.constant 9.99999997E-7 : f32
      %26 = vector.broadcast %cst_14 : f32 to vector<32x1xf32>
      %27 = arith.addf %23, %26 : vector<32x1xf32>
      %28 = math.rsqrt %27 : vector<32x1xf32>
      %29 = vector.broadcast %28 : vector<32x1xf32> to vector<32x256xf32>
      %30 = arith.mulf %25, %29 : vector<32x256xf32>
      %c0_15 = arith.constant 0 : index
      %c0_16 = arith.constant 0 : index
      %31 = vector.load %arg3[%c0_15, %c0_16] : memref<1x256xf32, #tpu.memory_space<vmem>>, vector<1x256xf32>
      %32 = vector.broadcast %31 : vector<1x256xf32> to vector<32x256xf32>
      %33 = arith.mulf %30, %32 : vector<32x256xf32>
      %c0_17 = arith.constant 0 : index
      %c0_18 = arith.constant 0 : index
      %34 = vector.load %arg4[%c0_17, %c0_18] : memref<1x256xf32, #tpu.memory_space<vmem>>, vector<1x256xf32>
      %35 = vector.broadcast %34 : vector<1x256xf32> to vector<32x256xf32>
      %36 = arith.addf %33, %35 : vector<32x256xf32>
      %37 = arith.truncf %36 : vector<32x256xf32> to vector<32x256xbf16>
      %c0_19 = arith.constant 0 : index
      %c0_20 = arith.constant 0 : index
      %38 = vector.load %arg8[%c0_19, %c0_20] : memref<32x256xbf16, #tpu.memory_space<vmem>>, vector<32x256xbf16>
      tpu.vector_store %arg8[%c0_19, %c0_20], %37 {strides = array<i32>} : memref<32x256xbf16, #tpu.memory_space<vmem>>, vector<32x256xbf16>,
    } else {
    }
    %c0 = arith.constant 0 : index
    %c0_1 = arith.constant 0 : index
    %3 = vector.load %arg8[%c0, %c0_1] : memref<32x256xbf16, #tpu.memory_space<vmem>>, vector<32x256xbf16>
    %c0_2 = arith.constant 0 : index
    %c0_3 = arith.constant 0 : index
    %4 = vector.load %arg5[%c0_2, %c0_3] : memref<256x256xbf16, #tpu.memory_space<vmem>>, vector<256x256xbf16>
    %cst = arith.constant dense<0.000000e+00> : vector<32x256xf32>
    %5 = tpu.matmul %3, %4, %cst {dimension_numbers = #tpu.dot_dimension_numbers<[1], [0], [0], [1], [0, 0, 1, 1], [], []>} : vector<32x256xbf16>, vector<256x256xbf16>, vector<32x256xf32> -> vector<32x256xf32>
    %c0_4 = arith.constant 0 : index
    %c0_5 = arith.constant 0 : index
    %6 = vector.load %arg6[%c0_4, %c0_5] : memref<1x256xf32, #tpu.memory_space<vmem>>, vector<1x256xf32>
    %7 = vector.broadcast %6 : vector<1x256xf32> to vector<32x256xf32>
    %8 = arith.addf %5, %7 : vector<32x256xf32>
    %9 = arith.truncf %8 : vector<32x256xf32> to vector<32x256xbf16>
    %c0_6 = arith.constant 0 : index
    %c0_7 = arith.constant 0 : index
    %10 = vector.load %arg7[%c0_6, %c0_7] : memref<32x256xbf16, #tpu.memory_space<vmem>>, vector<32x256xbf16>
    tpu.vector_store %arg7[%c0_6, %c0_7], %9 {strides = array<i32>} : memref<32x256xbf16, #tpu.memory_space<vmem>>, vector<32x256xbf16>,
    return
  }
  func.func @transform_0(%arg0: i32, %arg1: i32) -> (i32, i32) {
    %c0_i32 = arith.constant 0 : i32
    %c0_i32_0 = arith.constant 0 : i32
    return %arg0, %c0_i32 : i32, i32
  }
  func.func @transform_1(%arg0: i32, %arg1: i32) -> (i32, i32) {
    %c0_i32 = arith.constant 0 : i32
    %c0_i32_0 = arith.constant 0 : i32
    %c0_i32_1 = arith.constant 0 : i32
    return %c0_i32, %c0_i32_0 : i32, i32
  }
  func.func @transform_2(%arg0: i32, %arg1: i32) -> (i32, i32) {
    %c0_i32 = arith.constant 0 : i32
    %c0_i32_0 = arith.constant 0 : i32
    %c0_i32_1 = arith.constant 0 : i32
    return %c0_i32, %c0_i32_0 : i32, i32
  }
  func.func @transform_3(%arg0: i32, %arg1: i32) -> (i32, i32) {
    %c0_i32 = arith.constant 0 : i32
    %c0_i32_0 = arith.constant 0 : i32
    return %c0_i32, %arg1 : i32, i32
  }
  func.func @transform_4(%arg0: i32, %arg1: i32) -> (i32, i32) {
    %c0_i32 = arith.constant 0 : i32
    %c0_i32_0 = arith.constant 0 : i32
    return %c0_i32, %arg1 : i32, i32
  }
  func.func @transform_5(%arg0: i32, %arg1: i32) -> (i32, i32) {
    %c0_i32 = arith.constant 0 : i32
    return %arg0, %arg1 : i32, i32
  }
}

module attributes {stable_mosaic.version = 11 : i64} {
  func.func @kernel(%arg0: i32, %arg1: i32, %arg2: i32, %arg3: memref<2x256xbf16, #tpu.memory_space<vmem>>, %arg4: memref<256x256xbf16, #tpu.memory_space<vmem>>, %arg5: memref<1x256xf32, #tpu.memory_space<vmem>>, %arg6: memref<2x256xbf16, #tpu.memory_space<vmem>>, %arg7: memref<2x256xf32, #tpu.memory_space<vmem>>) attributes {dimension_semantics = [#tpu.dimension_semantics<parallel>, #tpu.dimension_semantics<parallel>, #tpu.dimension_semantics<arbitrary>], iteration_bounds = array<i64: 1, 1, 1>, scalar_prefetch = 0 : i64, scratch_operands = 1 : i64, tpu.core_type = #tpu.core_type<tc>, window_params = [{transform_indices = @transform_0, window_bounds = array<i64: 2, 256>}, {transform_indices = @transform_1, window_bounds = array<i64: 256, 256>}, {transform_indices = @transform_2, window_bounds = array<i64: 1, 256>}, {transform_indices = @transform_3, window_bounds = array<i64: 2, 256>}]} {
    %c0_i32 = arith.constant 0 : i32
    %0 = arith.cmpi eq, %arg2, %c0_i32 : i32
    %1 = arith.extui %0 : i1 to i32
    %c0_i32_0 = arith.constant 0 : i32
    %2 = arith.cmpi ne, %1, %c0_i32_0 : i32
    scf.if %2 {
      %cst_10 = arith.constant 0.000000e+00 : f32
      %12 = vector.broadcast %cst_10 : f32 to vector<2x256xf32>
      %c0_11 = arith.constant 0 : index
      %c0_12 = arith.constant 0 : index
      %13 = vector.load %arg7[%c0_11, %c0_12] : memref<2x256xf32, #tpu.memory_space<vmem>>, vector<2x256xf32>
      tpu.vector_store %arg7[%c0_11, %c0_12], %12 {strides = array<i32>} : memref<2x256xf32, #tpu.memory_space<vmem>>, vector<2x256xf32>,
    } else {
    }
    %c0 = arith.constant 0 : index
    %c0_1 = arith.constant 0 : index
    %3 = vector.load %arg7[%c0, %c0_1] : memref<2x256xf32, #tpu.memory_space<vmem>>, vector<2x256xf32>
    %c0_2 = arith.constant 0 : index
    %c0_3 = arith.constant 0 : index
    %4 = vector.load %arg3[%c0_2, %c0_3] : memref<2x256xbf16, #tpu.memory_space<vmem>>, vector<2x256xbf16>
    %c0_4 = arith.constant 0 : index
    %c0_5 = arith.constant 0 : index
    %5 = vector.load %arg4[%c0_4, %c0_5] : memref<256x256xbf16, #tpu.memory_space<vmem>>, vector<256x256xbf16>
    %cst = arith.constant dense<0.000000e+00> : vector<2x256xf32>
    %6 = tpu.matmul %4, %5, %cst {dimension_numbers = #tpu.dot_dimension_numbers<[1], [0], [0], [1], [0, 0, 1, 1], [], []>} : vector<2x256xbf16>, vector<256x256xbf16>, vector<2x256xf32> -> vector<2x256xf32>
    %7 = arith.addf %3, %6 : vector<2x256xf32>
    %c0_6 = arith.constant 0 : index
    %c0_7 = arith.constant 0 : index
    %8 = vector.load %arg7[%c0_6, %c0_7] : memref<2x256xf32, #tpu.memory_space<vmem>>, vector<2x256xf32>
    tpu.vector_store %arg7[%c0_6, %c0_7], %7 {strides = array<i32>} : memref<2x256xf32, #tpu.memory_space<vmem>>, vector<2x256xf32>,
    %c0_i32_8 = arith.constant 0 : i32
    %9 = arith.cmpi eq, %arg2, %c0_i32_8 : i32
    %10 = arith.extui %9 : i1 to i32
    %c0_i32_9 = arith.constant 0 : i32
    %11 = arith.cmpi ne, %10, %c0_i32_9 : i32
    scf.if %11 {
      %c0_10 = arith.constant 0 : index
      %c0_11 = arith.constant 0 : index
      %12 = vector.load %arg7[%c0_10, %c0_11] : memref<2x256xf32, #tpu.memory_space<vmem>>, vector<2x256xf32>
      %c0_12 = arith.constant 0 : index
      %c0_13 = arith.constant 0 : index
      %13 = vector.load %arg5[%c0_12, %c0_13] : memref<1x256xf32, #tpu.memory_space<vmem>>, vector<1x256xf32>
      %14 = vector.broadcast %13 : vector<1x256xf32> to vector<2x256xf32>
      %15 = arith.addf %12, %14 : vector<2x256xf32>
      %16 = arith.truncf %15 : vector<2x256xf32> to vector<2x256xbf16>
      %c0_14 = arith.constant 0 : index
      %c0_15 = arith.constant 0 : index
      %17 = vector.load %arg6[%c0_14, %c0_15] : memref<2x256xbf16, #tpu.memory_space<vmem>>, vector<2x256xbf16>
      tpu.vector_store %arg6[%c0_14, %c0_15], %16 {strides = array<i32>} : memref<2x256xbf16, #tpu.memory_space<vmem>>, vector<2x256xbf16>,
    } else {
    }
    return
  }
  func.func @transform_0(%arg0: i32, %arg1: i32, %arg2: i32) -> (i32, i32) {
    %c0_i32 = arith.constant 0 : i32
    return %arg0, %arg2 : i32, i32
  }
  func.func @transform_1(%arg0: i32, %arg1: i32, %arg2: i32) -> (i32, i32) {
    %c0_i32 = arith.constant 0 : i32
    return %arg2, %arg1 : i32, i32
  }
  func.func @transform_2(%arg0: i32, %arg1: i32, %arg2: i32) -> (i32, i32) {
    %c0_i32 = arith.constant 0 : i32
    %c0_i32_0 = arith.constant 0 : i32
    return %c0_i32, %arg1 : i32, i32
  }
  func.func @transform_3(%arg0: i32, %arg1: i32, %arg2: i32) -> (i32, i32) {
    %c0_i32 = arith.constant 0 : i32
    return %arg0, %arg1 : i32, i32
  }
}

module attributes {stable_mosaic.version = 11 : i64} {
  func.func @_pool_attn_proj_kernel(%arg0: i32, %arg1: i32, %arg2: memref<1x1x128xbf16, #tpu.memory_space<vmem>>, %arg3: memref<1x16x256xbf16, #tpu.memory_space<vmem>>, %arg4: memref<128x256xbf16, #tpu.memory_space<vmem>>, %arg5: memref<1x256xf32, #tpu.memory_space<vmem>>, %arg6: memref<1x1x256xbf16, #tpu.memory_space<vmem>>, %arg7: memref<1x256xf32, #tpu.memory_space<vmem>>) attributes {dimension_semantics = [#tpu.dimension_semantics<parallel>, #tpu.dimension_semantics<arbitrary>], iteration_bounds = array<i64: 2, 2>, scalar_prefetch = 0 : i64, scratch_operands = 1 : i64, tpu.core_type = #tpu.core_type<tc>, window_params = [{transform_indices = @transform_0, window_bounds = array<i64: 1, 1, 128>}, {transform_indices = @transform_1, window_bounds = array<i64: 1, 16, 256>}, {transform_indices = @transform_2, window_bounds = array<i64: 128, 256>}, {pipeline_mode = #tpu.pipeline_mode<synchronous>, transform_indices = @transform_3, window_bounds = array<i64: 1, 256>}, {transform_indices = @transform_4, window_bounds = array<i64: 1, 1, 256>}]} {
    %c0_i32 = arith.constant 0 : i32
    %0 = arith.cmpi eq, %arg1, %c0_i32 : i32
    %1 = arith.extui %0 : i1 to i32
    %c0_i32_0 = arith.constant 0 : i32
    %2 = arith.cmpi ne, %1, %c0_i32_0 : i32
    scf.if %2 {
      %cst_18 = arith.constant 0.000000e+00 : f32
      %32 = vector.broadcast %cst_18 : f32 to vector<1x256xf32>
      %c0_19 = arith.constant 0 : index
      %c0_20 = arith.constant 0 : index
      %33 = vector.load %arg7[%c0_19, %c0_20] : memref<1x256xf32, #tpu.memory_space<vmem>>, vector<1x256xf32>
      tpu.vector_store %arg7[%c0_19, %c0_20], %32 {strides = array<i32>} : memref<1x256xf32, #tpu.memory_space<vmem>>, vector<1x256xf32>,
    } else {
    }
    %c0 = arith.constant 0 : index
    %c0_1 = arith.constant 0 : index
    %c0_2 = arith.constant 0 : index
    %3 = vector.load %arg2[%c0, %c0_1, %c0_2] : memref<1x1x128xbf16, #tpu.memory_space<vmem>>, vector<1x1x128xbf16>
    %4 = vector.shape_cast %3 : vector<1x1x128xbf16> to vector<1x128xbf16>
    %c0_3 = arith.constant 0 : index
    %c0_4 = arith.constant 0 : index
    %c0_5 = arith.constant 0 : index
    %5 = vector.load %arg3[%c0_3, %c0_4, %c0_5] : memref<1x16x256xbf16, #tpu.memory_space<vmem>>, vector<1x16x256xbf16>
    %6 = vector.shape_cast %5 : vector<1x16x256xbf16> to vector<16x256xbf16>
    %7 = vector.extract_strided_slice %6 {offsets = [0, 0], sizes = [16, 128], strides = [1, 1]} : vector<16x256xbf16> to vector<16x128xbf16>
    %8 = vector.extract_strided_slice %6 {offsets = [0, 128], sizes = [16, 128], strides = [1, 1]} : vector<16x256xbf16> to vector<16x128xbf16>
    %cst = arith.constant dense<0.000000e+00> : vector<1x16xf32>
    %9 = tpu.matmul %4, %7, %cst {dimension_numbers = #tpu.dot_dimension_numbers<[1], [1], [0], [0], [0, 0, 1, 0], [], []>} : vector<1x128xbf16>, vector<16x128xbf16>, vector<1x16xf32> -> vector<1x16xf32>
    %cst_6 = arith.constant 0.0883883461 : f32
    %10 = vector.broadcast %cst_6 : f32 to vector<1x16xf32>
    %11 = arith.mulf %9, %10 : vector<1x16xf32>
    %cst_7 = arith.constant dense<0xFF800000> : vector<1xf32>
    %12 = vector.multi_reduction <maximumf>, %11, %cst_7 [1] : vector<1x16xf32> to vector<1xf32>
    %13 = vector.shape_cast %12 : vector<1xf32> to vector<1x1xf32>
    %14 = vector.broadcast %13 : vector<1x1xf32> to vector<1x16xf32>
    %15 = arith.subf %11, %14 : vector<1x16xf32>
    %16 = math.exp %15 : vector<1x16xf32>
    %cst_8 = arith.constant dense<0.000000e+00> : vector<1xf32>
    %17 = vector.multi_reduction <add>, %16, %cst_8 [1] : vector<1x16xf32> to vector<1xf32>
    %18 = vector.shape_cast %17 : vector<1xf32> to vector<1x1xf32>
    %19 = vector.broadcast %18 : vector<1x1xf32> to vector<1x16xf32>
    %20 = arith.divf %16, %19 : vector<1x16xf32>
    %21 = arith.truncf %20 : vector<1x16xf32> to vector<1x16xbf16>
    %cst_9 = arith.constant dense<0.000000e+00> : vector<1x128xf32>
    %22 = tpu.matmul %21, %8, %cst_9 {dimension_numbers = #tpu.dot_dimension_numbers<[1], [0], [0], [1], [0, 0, 1, 1], [], []>} : vector<1x16xbf16>, vector<16x128xbf16>, vector<1x128xf32> -> vector<1x128xf32>
    %c0_10 = arith.constant 0 : index
    %c0_11 = arith.constant 0 : index
    %23 = vector.load %arg7[%c0_10, %c0_11] : memref<1x256xf32, #tpu.memory_space<vmem>>, vector<1x256xf32>
    %24 = arith.truncf %22 : vector<1x128xf32> to vector<1x128xbf16>
    %c0_12 = arith.constant 0 : index
    %c0_13 = arith.constant 0 : index
    %25 = vector.load %arg4[%c0_12, %c0_13] : memref<128x256xbf16, #tpu.memory_space<vmem>>, vector<128x256xbf16>
    %cst_14 = arith.constant dense<0.000000e+00> : vector<1x256xf32>
    %26 = tpu.matmul %24, %25, %cst_14 {dimension_numbers = #tpu.dot_dimension_numbers<[1], [0], [0], [1], [0, 0, 1, 1], [], []>} : vector<1x128xbf16>, vector<128x256xbf16>, vector<1x256xf32> -> vector<1x256xf32>
    %27 = arith.addf %23, %26 : vector<1x256xf32>
    %c0_15 = arith.constant 0 : index
    %c0_16 = arith.constant 0 : index
    %28 = vector.load %arg7[%c0_15, %c0_16] : memref<1x256xf32, #tpu.memory_space<vmem>>, vector<1x256xf32>
    tpu.vector_store %arg7[%c0_15, %c0_16], %27 {strides = array<i32>} : memref<1x256xf32, #tpu.memory_space<vmem>>, vector<1x256xf32>,
    %c1_i32 = arith.constant 1 : i32
    %29 = arith.cmpi eq, %arg1, %c1_i32 : i32
    %30 = arith.extui %29 : i1 to i32
    %c0_i32_17 = arith.constant 0 : i32
    %31 = arith.cmpi ne, %30, %c0_i32_17 : i32
    scf.if %31 {
      %c0_18 = arith.constant 0 : index
      %c0_19 = arith.constant 0 : index
      %32 = vector.load %arg7[%c0_18, %c0_19] : memref<1x256xf32, #tpu.memory_space<vmem>>, vector<1x256xf32>
      %c0_20 = arith.constant 0 : index
      %c0_21 = arith.constant 0 : index
      %33 = vector.load %arg5[%c0_20, %c0_21] : memref<1x256xf32, #tpu.memory_space<vmem>>, vector<1x256xf32>
      %34 = arith.addf %32, %33 : vector<1x256xf32>
      %35 = arith.truncf %34 : vector<1x256xf32> to vector<1x256xbf16>
      %c0_22 = arith.constant 0 : index
      %c0_23 = arith.constant 0 : index
      %c0_24 = arith.constant 0 : index
      %36 = vector.load %arg6[%c0_22, %c0_23, %c0_24] : memref<1x1x256xbf16, #tpu.memory_space<vmem>>, vector<1x1x256xbf16>
      %37 = vector.shape_cast %36 : vector<1x1x256xbf16> to vector<1x256xbf16>
      %38 = vector.shape_cast %35 : vector<1x256xbf16> to vector<1x1x256xbf16>
      tpu.vector_store %arg6[%c0_22, %c0_23, %c0_24], %38 {strides = array<i32>} : memref<1x1x256xbf16, #tpu.memory_space<vmem>>, vector<1x1x256xbf16>,
    } else {
    }
    return
  }
  func.func @transform_0(%arg0: i32, %arg1: i32) -> (i32, i32, i32) {
    %c0_i32 = arith.constant 0 : i32
    %c0_i32_0 = arith.constant 0 : i32
    return %arg0, %c0_i32, %arg1 : i32, i32, i32
  }
  func.func @transform_1(%arg0: i32, %arg1: i32) -> (i32, i32, i32) {
    %c0_i32 = arith.constant 0 : i32
    %c0_i32_0 = arith.constant 0 : i32
    return %arg0, %c0_i32, %arg1 : i32, i32, i32
  }
  func.func @transform_2(%arg0: i32, %arg1: i32) -> (i32, i32) {
    %c0_i32 = arith.constant 0 : i32
    %c0_i32_0 = arith.constant 0 : i32
    return %arg1, %c0_i32 : i32, i32
  }
  func.func @transform_3(%arg0: i32, %arg1: i32) -> (i32, i32) {
    %c0_i32 = arith.constant 0 : i32
    %c0_i32_0 = arith.constant 0 : i32
    %c0_i32_1 = arith.constant 0 : i32
    return %c0_i32, %c0_i32_0 : i32, i32
  }
  func.func @transform_4(%arg0: i32, %arg1: i32) -> (i32, i32, i32) {
    %c0_i32 = arith.constant 0 : i32
    %c0_i32_0 = arith.constant 0 : i32
    %c0_i32_1 = arith.constant 0 : i32
    return %arg0, %c0_i32, %c0_i32_0 : i32, i32, i32
  }
}

module attributes {stable_mosaic.version = 11 : i64} {
  func.func @_ln_matmul_kernel(%arg0: i32, %arg1: i32, %arg2: memref<2x256xbf16, #tpu.memory_space<vmem>>, %arg3: memref<1x256xf32, #tpu.memory_space<vmem>>, %arg4: memref<1x256xf32, #tpu.memory_space<vmem>>, %arg5: memref<256x256xbf16, #tpu.memory_space<vmem>>, %arg6: memref<1x256xf32, #tpu.memory_space<vmem>>, %arg7: memref<2x256xbf16, #tpu.memory_space<vmem>>, %arg8: memref<2x256xbf16, #tpu.memory_space<vmem>>) attributes {dimension_semantics = [#tpu.dimension_semantics<parallel>, #tpu.dimension_semantics<arbitrary>], iteration_bounds = array<i64: 1, 4>, scalar_prefetch = 0 : i64, scratch_operands = 1 : i64, tpu.core_type = #tpu.core_type<tc>, window_params = [{transform_indices = @transform_0, window_bounds = array<i64: 2, 256>}, {pipeline_mode = #tpu.pipeline_mode<synchronous>, transform_indices = @transform_1, window_bounds = array<i64: 1, 256>}, {pipeline_mode = #tpu.pipeline_mode<synchronous>, transform_indices = @transform_2, window_bounds = array<i64: 1, 256>}, {transform_indices = @transform_3, window_bounds = array<i64: 256, 256>}, {transform_indices = @transform_4, window_bounds = array<i64: 1, 256>}, {transform_indices = @transform_5, window_bounds = array<i64: 2, 256>}]} {
    %c0_i32 = arith.constant 0 : i32
    %0 = arith.cmpi eq, %arg1, %c0_i32 : i32
    %1 = arith.extui %0 : i1 to i32
    %c0_i32_0 = arith.constant 0 : i32
    %2 = arith.cmpi ne, %1, %c0_i32_0 : i32
    scf.if %2 {
      %c0_12 = arith.constant 0 : index
      %c0_13 = arith.constant 0 : index
      %24 = vector.load %arg2[%c0_12, %c0_13] : memref<2x256xbf16, #tpu.memory_space<vmem>>, vector<2x256xbf16>
      %25 = arith.extf %24 : vector<2x256xbf16> to vector<2x256xf32>
      %cst_14 = arith.constant dense<0.000000e+00> : vector<2xf32>
      %26 = vector.multi_reduction <add>, %25, %cst_14 [1] : vector<2x256xf32> to vector<2xf32>
      %27 = vector.shape_cast %26 : vector<2xf32> to vector<2x1xf32>
      %cst_15 = arith.constant 2.560000e+02 : f32
      %28 = vector.broadcast %cst_15 : f32 to vector<2x1xf32>
      %29 = arith.divf %27, %28 : vector<2x1xf32>
      %30 = vector.broadcast %29 : vector<2x1xf32> to vector<2x256xf32>
      %31 = arith.subf %25, %30 : vector<2x256xf32>
      %32 = arith.mulf %31, %31 : vector<2x256xf32>
      %cst_16 = arith.constant dense<0.000000e+00> : vector<2xf32>
      %33 = vector.multi_reduction <add>, %32, %cst_16 [1] : vector<2x256xf32> to vector<2xf32>
      %34 = vector.shape_cast %33 : vector<2xf32> to vector<2x1xf32>
      %cst_17 = arith.constant 2.560000e+02 : f32
      %35 = vector.broadcast %cst_17 : f32 to vector<2x1xf32>
      %36 = arith.divf %34, %35 : vector<2x1xf32>
      %37 = vector.broadcast %29 : vector<2x1xf32> to vector<2x256xf32>
      %38 = arith.subf %25, %37 : vector<2x256xf32>
      %cst_18 = arith.constant 9.99999997E-7 : f32
      %39 = vector.broadcast %cst_18 : f32 to vector<2x1xf32>
      %40 = arith.addf %36, %39 : vector<2x1xf32>
      %41 = math.rsqrt %40 : vector<2x1xf32>
      %42 = vector.broadcast %41 : vector<2x1xf32> to vector<2x256xf32>
      %43 = arith.mulf %38, %42 : vector<2x256xf32>
      %c0_19 = arith.constant 0 : index
      %c0_20 = arith.constant 0 : index
      %44 = vector.load %arg3[%c0_19, %c0_20] : memref<1x256xf32, #tpu.memory_space<vmem>>, vector<1x256xf32>
      %45 = vector.broadcast %44 : vector<1x256xf32> to vector<2x256xf32>
      %46 = arith.mulf %43, %45 : vector<2x256xf32>
      %c0_21 = arith.constant 0 : index
      %c0_22 = arith.constant 0 : index
      %47 = vector.load %arg4[%c0_21, %c0_22] : memref<1x256xf32, #tpu.memory_space<vmem>>, vector<1x256xf32>
      %48 = vector.broadcast %47 : vector<1x256xf32> to vector<2x256xf32>
      %49 = arith.addf %46, %48 : vector<2x256xf32>
      %50 = arith.truncf %49 : vector<2x256xf32> to vector<2x256xbf16>
      %c0_23 = arith.constant 0 : index
      %c0_24 = arith.constant 0 : index
      %51 = vector.load %arg8[%c0_23, %c0_24] : memref<2x256xbf16, #tpu.memory_space<vmem>>, vector<2x256xbf16>
      tpu.vector_store %arg8[%c0_23, %c0_24], %50 {strides = array<i32>} : memref<2x256xbf16, #tpu.memory_space<vmem>>, vector<2x256xbf16>,
    } else {
    }
    %c0 = arith.constant 0 : index
    %c0_1 = arith.constant 0 : index
    %3 = vector.load %arg8[%c0, %c0_1] : memref<2x256xbf16, #tpu.memory_space<vmem>>, vector<2x256xbf16>
    %c0_2 = arith.constant 0 : index
    %c0_3 = arith.constant 0 : index
    %4 = vector.load %arg5[%c0_2, %c0_3] : memref<256x256xbf16, #tpu.memory_space<vmem>>, vector<256x256xbf16>
    %cst = arith.constant dense<0.000000e+00> : vector<2x256xf32>
    %5 = tpu.matmul %3, %4, %cst {dimension_numbers = #tpu.dot_dimension_numbers<[1], [0], [0], [1], [0, 0, 1, 1], [], []>} : vector<2x256xbf16>, vector<256x256xbf16>, vector<2x256xf32> -> vector<2x256xf32>
    %c0_4 = arith.constant 0 : index
    %c0_5 = arith.constant 0 : index
    %6 = vector.load %arg6[%c0_4, %c0_5] : memref<1x256xf32, #tpu.memory_space<vmem>>, vector<1x256xf32>
    %7 = vector.broadcast %6 : vector<1x256xf32> to vector<2x256xf32>
    %8 = arith.addf %5, %7 : vector<2x256xf32>
    %9 = arith.mulf %8, %8 : vector<2x256xf32>
    %10 = arith.mulf %8, %9 : vector<2x256xf32>
    %cst_6 = arith.constant 4.471500e-02 : f32
    %11 = vector.broadcast %cst_6 : f32 to vector<2x256xf32>
    %12 = arith.mulf %11, %10 : vector<2x256xf32>
    %13 = arith.addf %8, %12 : vector<2x256xf32>
    %cst_7 = arith.constant 0.797884583 : f32
    %14 = vector.broadcast %cst_7 : f32 to vector<2x256xf32>
    %15 = arith.mulf %14, %13 : vector<2x256xf32>
    %16 = math.tanh %15 : vector<2x256xf32>
    %cst_8 = arith.constant 1.000000e+00 : f32
    %17 = vector.broadcast %cst_8 : f32 to vector<2x256xf32>
    %18 = arith.addf %17, %16 : vector<2x256xf32>
    %cst_9 = arith.constant 5.000000e-01 : f32
    %19 = vector.broadcast %cst_9 : f32 to vector<2x256xf32>
    %20 = arith.mulf %19, %18 : vector<2x256xf32>
    %21 = arith.mulf %8, %20 : vector<2x256xf32>
    %22 = arith.truncf %21 : vector<2x256xf32> to vector<2x256xbf16>
    %c0_10 = arith.constant 0 : index
    %c0_11 = arith.constant 0 : index
    %23 = vector.load %arg7[%c0_10, %c0_11] : memref<2x256xbf16, #tpu.memory_space<vmem>>, vector<2x256xbf16>
    tpu.vector_store %arg7[%c0_10, %c0_11], %22 {strides = array<i32>} : memref<2x256xbf16, #tpu.memory_space<vmem>>, vector<2x256xbf16>,
    return
  }
  func.func @transform_0(%arg0: i32, %arg1: i32) -> (i32, i32) {
    %c0_i32 = arith.constant 0 : i32
    %c0_i32_0 = arith.constant 0 : i32
    return %arg0, %c0_i32 : i32, i32
  }
  func.func @transform_1(%arg0: i32, %arg1: i32) -> (i32, i32) {
    %c0_i32 = arith.constant 0 : i32
    %c0_i32_0 = arith.constant 0 : i32
    %c0_i32_1 = arith.constant 0 : i32
    return %c0_i32, %c0_i32_0 : i32, i32
  }
  func.func @transform_2(%arg0: i32, %arg1: i32) -> (i32, i32) {
    %c0_i32 = arith.constant 0 : i32
    %c0_i32_0 = arith.constant 0 : i32
    %c0_i32_1 = arith.constant 0 : i32
    return %c0_i32, %c0_i32_0 : i32, i32
  }
  func.func @transform_3(%arg0: i32, %arg1: i32) -> (i32, i32) {
    %c0_i32 = arith.constant 0 : i32
    %c0_i32_0 = arith.constant 0 : i32
    return %c0_i32, %arg1 : i32, i32
  }
  func.func @transform_4(%arg0: i32, %arg1: i32) -> (i32, i32) {
    %c0_i32 = arith.constant 0 : i32
    %c0_i32_0 = arith.constant 0 : i32
    return %c0_i32, %arg1 : i32, i32
  }
  func.func @transform_5(%arg0: i32, %arg1: i32) -> (i32, i32) {
    %c0_i32 = arith.constant 0 : i32
    return %arg0, %arg1 : i32, i32
  }
}

module attributes {stable_mosaic.version = 11 : i64} {
  func.func @kernel(%arg0: i32, %arg1: i32, %arg2: i32, %arg3: memref<2x512xbf16, #tpu.memory_space<vmem>>, %arg4: memref<512x256xbf16, #tpu.memory_space<vmem>>, %arg5: memref<1x256xf32, #tpu.memory_space<vmem>>, %arg6: memref<2x256xbf16, #tpu.memory_space<vmem>>, %arg7: memref<2x256xf32, #tpu.memory_space<vmem>>, %arg8: memref<2x256xf32, #tpu.memory_space<vmem>>) attributes {dimension_semantics = [#tpu.dimension_semantics<parallel>, #tpu.dimension_semantics<parallel>, #tpu.dimension_semantics<arbitrary>], iteration_bounds = array<i64: 1, 1, 2>, scalar_prefetch = 0 : i64, scratch_operands = 1 : i64, tpu.core_type = #tpu.core_type<tc>, window_params = [{transform_indices = @transform_0, window_bounds = array<i64: 2, 512>}, {transform_indices = @transform_1, window_bounds = array<i64: 512, 256>}, {transform_indices = @transform_2, window_bounds = array<i64: 1, 256>}, {transform_indices = @transform_3, window_bounds = array<i64: 2, 256>}, {transform_indices = @transform_4, window_bounds = array<i64: 2, 256>}]} {
    %c0_i32 = arith.constant 0 : i32
    %0 = arith.cmpi eq, %arg2, %c0_i32 : i32
    %1 = arith.extui %0 : i1 to i32
    %c0_i32_0 = arith.constant 0 : i32
    %2 = arith.cmpi ne, %1, %c0_i32_0 : i32
    scf.if %2 {
      %cst_9 = arith.constant 0.000000e+00 : f32
      %12 = vector.broadcast %cst_9 : f32 to vector<2x256xf32>
      %c0_10 = arith.constant 0 : index
      %c0_11 = arith.constant 0 : index
      %13 = vector.load %arg8[%c0_10, %c0_11] : memref<2x256xf32, #tpu.memory_space<vmem>>, vector<2x256xf32>
      tpu.vector_store %arg8[%c0_10, %c0_11], %12 {strides = array<i32>} : memref<2x256xf32, #tpu.memory_space<vmem>>, vector<2x256xf32>,
    } else {
    }
    %c0 = arith.constant 0 : index
    %c0_1 = arith.constant 0 : index
    %3 = vector.load %arg8[%c0, %c0_1] : memref<2x256xf32, #tpu.memory_space<vmem>>, vector<2x256xf32>
    %c0_2 = arith.constant 0 : index
    %c0_3 = arith.constant 0 : index
    %4 = vector.load %arg3[%c0_2, %c0_3] : memref<2x512xbf16, #tpu.memory_space<vmem>>, vector<2x512xbf16>
    %c0_4 = arith.constant 0 : index
    %c0_5 = arith.constant 0 : index
    %5 = vector.load %arg4[%c0_4, %c0_5] : memref<512x256xbf16, #tpu.memory_space<vmem>>, vector<512x256xbf16>
    %cst = arith.constant dense<0.000000e+00> : vector<2x256xf32>
    %6 = tpu.matmul %4, %5, %cst {dimension_numbers = #tpu.dot_dimension_numbers<[1], [0], [0], [1], [0, 0, 1, 1], [], []>} : vector<2x512xbf16>, vector<512x256xbf16>, vector<2x256xf32> -> vector<2x256xf32>
    %7 = arith.addf %3, %6 : vector<2x256xf32>
    %c0_6 = arith.constant 0 : index
    %c0_7 = arith.constant 0 : index
    %8 = vector.load %arg8[%c0_6, %c0_7] : memref<2x256xf32, #tpu.memory_space<vmem>>, vector<2x256xf32>
    tpu.vector_store %arg8[%c0_6, %c0_7], %7 {strides = array<i32>} : memref<2x256xf32, #tpu.memory_space<vmem>>, vector<2x256xf32>,
    %c1_i32 = arith.constant 1 : i32
    %9 = arith.cmpi eq, %arg2, %c1_i32 : i32
    %10 = arith.extui %9 : i1 to i32
    %c0_i32_8 = arith.constant 0 : i32
    %11 = arith.cmpi ne, %10, %c0_i32_8 : i32
    scf.if %11 {
      %c0_9 = arith.constant 0 : index
      %c0_10 = arith.constant 0 : index
      %12 = vector.load %arg8[%c0_9, %c0_10] : memref<2x256xf32, #tpu.memory_space<vmem>>, vector<2x256xf32>
      %c0_11 = arith.constant 0 : index
      %c0_12 = arith.constant 0 : index
      %13 = vector.load %arg5[%c0_11, %c0_12] : memref<1x256xf32, #tpu.memory_space<vmem>>, vector<1x256xf32>
      %14 = vector.broadcast %13 : vector<1x256xf32> to vector<2x256xf32>
      %15 = arith.addf %12, %14 : vector<2x256xf32>
      %c0_13 = arith.constant 0 : index
      %c0_14 = arith.constant 0 : index
      %16 = vector.load %arg6[%c0_13, %c0_14] : memref<2x256xbf16, #tpu.memory_space<vmem>>, vector<2x256xbf16>
      %17 = arith.extf %16 : vector<2x256xbf16> to vector<2x256xf32>
      %18 = arith.addf %15, %17 : vector<2x256xf32>
      %c0_15 = arith.constant 0 : index
      %c0_16 = arith.constant 0 : index
      %19 = vector.load %arg7[%c0_15, %c0_16] : memref<2x256xf32, #tpu.memory_space<vmem>>, vector<2x256xf32>
      tpu.vector_store %arg7[%c0_15, %c0_16], %18 {strides = array<i32>} : memref<2x256xf32, #tpu.memory_space<vmem>>, vector<2x256xf32>,
    } else {
    }
    return
  }
  func.func @transform_0(%arg0: i32, %arg1: i32, %arg2: i32) -> (i32, i32) {
    %c0_i32 = arith.constant 0 : i32
    return %arg0, %arg2 : i32, i32
  }
  func.func @transform_1(%arg0: i32, %arg1: i32, %arg2: i32) -> (i32, i32) {
    %c0_i32 = arith.constant 0 : i32
    return %arg2, %arg1 : i32, i32
  }
  func.func @transform_2(%arg0: i32, %arg1: i32, %arg2: i32) -> (i32, i32) {
    %c0_i32 = arith.constant 0 : i32
    %c0_i32_0 = arith.constant 0 : i32
    return %c0_i32, %arg1 : i32, i32
  }
  func.func @transform_3(%arg0: i32, %arg1: i32, %arg2: i32) -> (i32, i32) {
    %c0_i32 = arith.constant 0 : i32
    return %arg0, %arg1 : i32, i32
  }
  func.func @transform_4(%arg0: i32, %arg1: i32, %arg2: i32) -> (i32, i32) {
    %c0_i32 = arith.constant 0 : i32
    return %arg0, %arg1 : i32, i32
  }
}

</mosaic_0001>

<llo_original>
// kernel: siglip_s2rgb_embed.14
$region0: #{siglip_s2rgb_embed.14}
  #allocation0 [shape = 'u32[]', space=smem, size = 0x4, offset = 0x4, fixed_abs, tag = 'smem constant byte address 0x4 - core index']
  #allocation1 [shape = 'u32[72,128]{1,0:T(1,128)}', space=vmem, size = 0x9000, scoped, tag = 'internal scratch']
  %s0 = inlined_call_operand.vmem [shape: f32[32,48], index: 0, kind: input, shape index: {}]
  %s1 = inlined_call_operand.vmem [shape: bf16[48,256], index: 1, kind: input, shape index: {}]
  %s2 = inlined_call_operand.vmem [shape: f32[1,256], index: 2, kind: input, shape index: {}]
  %s3 = inlined_call_operand.vmem [shape: f32[16,256], index: 3, kind: input, shape index: {}]
  %s4 = inlined_call_operand.vmem [shape: bf16[32,256], index: 4, kind: output, shape index: {}]
  %s5 = sld [smem:[#allocation0]]
  $region49: #{siglip_s2rgb_embed.14} parent=0
    _
  %s7 = ssub.s32 1, %s5
  %s8 = scalar_select 0, %s7, %s5
  loop: start=0, step=1, limit=4
  $region2: #{siglip_s2rgb_embed.14} parent=0 // loop_pre_header
    _
  $region3: #{siglip_s2rgb_embed.14} parent=0 // loop_header
    %s10 = sphi 0, %s14
    %p11 = scmp.ge.s32.totalorder %s10, 4
    %s17 = sphi 0, %s29
    %s18 = sphi 0, %s25
    %s19 = sphi 0, %s17
    %s20 = sphi 0, %s18
    %s21 = sphi 0, %s19
    %s22 = sphi 0, %s20
    %s32 = sphi 0, %s34
    %s35 = sphi 0, %s32
    %s36 = sphi 0, %s35
    %s52 = sphi 0, %s36
    %s58 = sphi 0, %s60
    %s61 = sphi 0, %s58
    %s62 = sphi 0, %s61
    %s78 = sphi 0, %s62
    %s84 = sphi 0, %s86
    %s87 = sphi 0, %s84
    %s88 = sphi 0, %s87
    %s104 = sphi 0, %s88
    %s110 = sphi 0, %s112
    %s113 = sphi 0, %s110
    %s114 = sphi 0, %s113
    %s130 = sphi 0, %s114
    %s138 = sphi 0, %s140
    %s141 = sphi 0, %s138
    %s142 = sphi 0, %s141
    %s158 = sphi 0, %s142
  $region4: #{siglip_s2rgb_embed.14} parent=0 // loop_header_branch
    %13 = sbr.rel (%p11) target = $region8
  $region5: #{siglip_s2rgb_embed.14} parent=0 // loop_body
    %s15 = ssub.s32 %s10, 1
    %s16 = ssub.s32 %s10, 2
    %s23 = sadd.s32 1, %s18
    %p24 = scmp.ge.s32.totalorder %s23, 1
    %s25 = scalar_select %p24, 0, %s23
    %s26 = sadd.s32 1, %s17
    %s27 = scalar_select %p24, %s26, %s17
    %p28 = scmp.ge.s32.totalorder %s27, 2
    %s29 = scalar_select %p28, 0, %s27
    %s30 = ssub.s32 %s17, %s29
    %p31 = scmp.eq.s32.totalorder %s30, 0
    %s33 = sadd.s32 %s32, 1
    %s34 = scalar_select %p31, %s32, %s33
    %p37 = pneg %p31
    %p38 = scmp.eq.s32.totalorder %s10, 1
    %p39 = por %p37, %p38
    %p40 = scmp.ne.s32.totalorder %s32, %s35
    %p41 = scmp.eq.s32.totalorder %s10, 0
    %p42 = por %p40, %p41
    %p43 = scmp.ne.s32.totalorder %s32, %s35
    %p44 = scmp.eq.s32.totalorder %s15, 1
    %p45 = por %p43, %p44
    %p46 = scmp.ne.s32.totalorder %s35, %s36
    %p47 = scmp.eq.s32.totalorder %s15, 0
    %p48 = por %p46, %p47
    %p49 = scmp.ne.s32.totalorder %s35, %s36
    %p50 = scmp.eq.s32.totalorder %s16, 1
    %p51 = por %p49, %p50
    %p53 = scmp.ne.s32.totalorder %s36, %s52
    %p54 = scmp.eq.s32.totalorder %s16, 0
    %p55 = por %p53, %p54
    %s56 = ssub.s32 %s18, %s25
    %p57 = scmp.eq.s32.totalorder %s56, 0
    %s59 = sadd.s32 %s58, 1
    %s60 = scalar_select %p57, %s58, %s59
    %p63 = pneg %p57
    %p64 = scmp.eq.s32.totalorder %s10, 1
    %p65 = por %p63, %p64
    %p66 = scmp.ne.s32.totalorder %s58, %s61
    %p67 = scmp.eq.s32.totalorder %s10, 0
    %p68 = por %p66, %p67
    %p69 = scmp.ne.s32.totalorder %s58, %s61
    %p70 = scmp.eq.s32.totalorder %s15, 1
    %p71 = por %p69, %p70
    %p72 = scmp.ne.s32.totalorder %s61, %s62
    %p73 = scmp.eq.s32.totalorder %s15, 0
    %p74 = por %p72, %p73
    %p75 = scmp.ne.s32.totalorder %s61, %s62
    %p76 = scmp.eq.s32.totalorder %s16, 1
    %p77 = por %p75, %p76
    %p79 = scmp.ne.s32.totalorder %s62, %s78
    %p80 = scmp.eq.s32.totalorder %s16, 0
    %p81 = por %p79, %p80
    %s82 = ssub.s32 %s18, %s25
    %p83 = scmp.eq.s32.totalorder %s82, 0
    %s85 = sadd.s32 %s84, 1
    %s86 = scalar_select %p83, %s84, %s85
    %p89 = pneg %p83
    %p90 = scmp.eq.s32.totalorder %s10, 1
    %p91 = por %p89, %p90
    %p92 = scmp.ne.s32.totalorder %s84, %s87
    %p93 = scmp.eq.s32.totalorder %s10, 0
    %p94 = por %p92, %p93
    %p95 = scmp.ne.s32.totalorder %s84, %s87
    %p96 = scmp.eq.s32.totalorder %s15, 1
    %p97 = por %p95, %p96
    %p98 = scmp.ne.s32.totalorder %s87, %s88
    %p99 = scmp.eq.s32.totalorder %s15, 0
    %p100 = por %p98, %p99
    %p101 = scmp.ne.s32.totalorder %s87, %s88
    %p102 = scmp.eq.s32.totalorder %s16, 1
    %p103 = por %p101, %p102
    %p105 = scmp.ne.s32.totalorder %s88, %s104
    %p106 = scmp.eq.s32.totalorder %s16, 0
    %p107 = por %p105, %p106
    %s108 = ssub.s32 %s18, %s25
    %p109 = scmp.eq.s32.totalorder %s108, 0
    %s111 = sadd.s32 %s110, 1
    %s112 = scalar_select %p109, %s110, %s111
    %p115 = pneg %p109
    %p116 = scmp.eq.s32.totalorder %s10, 1
    %p117 = por %p115, %p116
    %p118 = scmp.ne.s32.totalorder %s110, %s113
    %p119 = scmp.eq.s32.totalorder %s10, 0
    %p120 = por %p118, %p119
    %p121 = scmp.ne.s32.totalorder %s110, %s113
    %p122 = scmp.eq.s32.totalorder %s15, 1
    %p123 = por %p121, %p122
    %p124 = scmp.ne.s32.totalorder %s113, %s114
    %p125 = scmp.eq.s32.totalorder %s15, 0
    %p126 = por %p124, %p125
    %p127 = scmp.ne.s32.totalorder %s113, %s114
    %p128 = scmp.eq.s32.totalorder %s16, 1
    %p129 = por %p127, %p128
    %p131 = scmp.ne.s32.totalorder %s114, %s130
    %p132 = scmp.eq.s32.totalorder %s16, 0
    %p133 = por %p131, %p132
    %s134 = ssub.s32 %s17, %s29
    %s135 = ssub.s32 %s18, %s25
    %s136 = sor.u32 %s134, %s135
    %p137 = scmp.eq.s32.totalorder %s136, 0
    %s139 = sadd.s32 %s138, 1
    %s140 = scalar_select %p137, %s138, %s139
    %p143 = pneg %p137
    %p144 = scmp.eq.s32.totalorder %s10, 1
    %p145 = por %p143, %p144
    %p146 = scmp.ne.s32.totalorder %s138, %s141
    %p147 = scmp.eq.s32.totalorder %s10, 0
    %p148 = por %p146, %p147
    %p149 = scmp.ne.s32.totalorder %s138, %s141
    %p150 = scmp.eq.s32.totalorder %s15, 1
    %p151 = por %p149, %p150
    %p152 = scmp.ne.s32.totalorder %s141, %s142
    %p153 = scmp.eq.s32.totalorder %s15, 0
    %p154 = por %p152, %p153
    %p155 = scmp.ne.s32.totalorder %s141, %s142
    %p156 = scmp.eq.s32.totalorder %s16, 1
    %p157 = por %p155, %p156
    %p159 = scmp.ne.s32.totalorder %s142, %s158
    %p160 = scmp.eq.s32.totalorder %s16, 0
    %p161 = por %p159, %p160
    %p162 = scmp.le.s32.totalorder 1, %s10
    %p163 = scmp.lt.s32.totalorder %s10, 3
    %p164 = pnand %p162, %p163
    %p165 = pneg %p164
    // Predicated region
    $region9: #{siglip_s2rgb_embed.14} parent=5 // pred_check
      _
    $region10: #{siglip_s2rgb_embed.14} parent=5 // pred_check_branch
      %167 = sbr.rel (%p164) target = $region12
    $region11: #{siglip_s2rgb_embed.14} parent=5 // pred_region
      %s168 = ssub.s32 %s10, 1
      // Predicated region
      $region13: #{siglip_s2rgb_embed.14} parent=11 // pred_check
        %p169 = pneg %p74
      $region14: #{siglip_s2rgb_embed.14} parent=11 // pred_check_branch
        %171 = sbr.rel (%p169) target = $region16
      $region15: #{siglip_s2rgb_embed.14} parent=11 // pred_region
        %s172 = smul.u32 2, %s20
        %p173 = scmp.lt.s32.totalorder %s172, 1
        %s174 = scalar_select %p173, %s172, 1
        %s175 = smul.addr %s174, 4
        %s176 = scalar_lea.vmem %s1, %s175
        %s177 = smul.u32 2, %s20
      $region16: #{siglip_s2rgb_embed.14} parent=11 // pred_fallthru
        _
      // Predicated region
      $region17: #{siglip_s2rgb_embed.14} parent=11 // pred_check
        %p178 = pneg %p100
      $region18: #{siglip_s2rgb_embed.14} parent=11 // pred_check_branch
        %180 = sbr.rel (%p178) target = $region20
      $region19: #{siglip_s2rgb_embed.14} parent=11 // pred_region
        %s181 = smul.u32 2, %s20
        %p182 = scmp.lt.s32.totalorder %s181, 1
        %s183 = scalar_select %p182, %s181, 1
        %s184 = scalar_lea.vmem %s2, %s183
        %s185 = smul.u32 2, %s20
      $region20: #{siglip_s2rgb_embed.14} parent=11 // pred_fallthru
        _
      // Predicated region
      $region21: #{siglip_s2rgb_embed.14} parent=11 // pred_check
        %p186 = pneg %p126
      $region22: #{siglip_s2rgb_embed.14} parent=11 // pred_check_branch
        %188 = sbr.rel (%p186) target = $region24
      $region23: #{siglip_s2rgb_embed.14} parent=11 // pred_region
        %s189 = smul.u32 2, %s20
        %p190 = scmp.lt.s32.totalorder %s189, 1
        %s191 = scalar_select %p190, %s189, 1
        %s192 = smul.addr %s191, 8
        %s193 = scalar_lea.vmem %s3, %s192
        %s194 = smul.u32 2, %s20
      $region24: #{siglip_s2rgb_embed.14} parent=11 // pred_fallthru
        _
    $region12: #{siglip_s2rgb_embed.14} parent=5 // pred_fallthru
      _
    %p195 = scmp.lt.s32.totalorder %s10, 2
    // Predicated region
    $region25: #{siglip_s2rgb_embed.14} parent=5 // pred_check
      %p196 = pneg %p195
    $region26: #{siglip_s2rgb_embed.14} parent=5 // pred_check_branch
      %198 = sbr.rel (%p196) target = $region28
    $region27: #{siglip_s2rgb_embed.14} parent=5 // pred_region
      // Predicated region
      $region29: #{siglip_s2rgb_embed.14} parent=27 // pred_check
        %p199 = pneg %p42
      $region30: #{siglip_s2rgb_embed.14} parent=27 // pred_check_branch
        %201 = sbr.rel (%p199) target = $region32
      $region31: #{siglip_s2rgb_embed.14} parent=27 // pred_region
        %s202 = smul.u32 2, %s17
        %p203 = scmp.lt.s32.totalorder %s202, 3
        %s204 = scalar_select %p203, %s202, 3
        %s205 = smul.addr %s204, 8
        %s206 = scalar_lea.vmem %s0, %s205
        %s207 = smul.u32 2, %s17
      $region32: #{siglip_s2rgb_embed.14} parent=27 // pred_fallthru
        _
    $region28: #{siglip_s2rgb_embed.14} parent=5 // pred_fallthru
      _
    %p208 = scmp.le.s32.totalorder 1, %s10
    %p209 = scmp.lt.s32.totalorder %s10, 3
    %p210 = pnand %p208, %p209
    %p211 = pneg %p210
    // Predicated region
    $region33: #{siglip_s2rgb_embed.14} parent=5 // pred_check
      _
    $region34: #{siglip_s2rgb_embed.14} parent=5 // pred_check_branch
      %213 = sbr.rel (%p210) target = $region36
    $region35: #{siglip_s2rgb_embed.14} parent=5 // pred_region
      %s214 = ssub.s32 %s10, 1
      %s215 = smul.u32 2, %s19
      %p216 = scmp.lt.s32.totalorder %s215, 3
      %s217 = scalar_select %p216, %s215, 3
      %s218 = smul.addr %s217, 8
      %s219 = scalar_lea.vmem %s0, %s218
      %p220 = pneg %p48
      %p221 = pneg %p45
      %s222 = smul.u32 2, %s20
      %p223 = scmp.lt.s32.totalorder %s222, 1
      %s224 = scalar_select %p223, %s222, 1
      %s225 = smul.addr %s224, 4
      %s226 = scalar_lea.vmem %s1, %s225
      %p227 = pneg %p74
      %p228 = pneg %p71
      %s229 = smul.u32 2, %s20
      %p230 = scmp.lt.s32.totalorder %s229, 1
      %s231 = scalar_select %p230, %s229, 1
      %s232 = scalar_lea.vmem %s2, %s231
      %p233 = pneg %p100
      %p234 = pneg %p97
      %s235 = smul.u32 2, %s20
      %p236 = scmp.lt.s32.totalorder %s235, 1
      %s237 = scalar_select %p236, %s235, 1
      %s238 = smul.addr %s237, 8
      %s239 = scalar_lea.vmem %s3, %s238
      %p240 = pneg %p126
      %p241 = pneg %p123
      %p242 = pneg %p154
      %p243 = pneg %p151
      %s244 = smul.u32 2, %s19
      %s245 = smul.u32 2, %s20
      %p246 = scmp.lt.s32.totalorder %s244, 3
      %s247 = scalar_select %p246, %s244, 3
      %p248 = scmp.lt.s32.totalorder %s245, 1
      %s249 = scalar_select %p248, %s245, 1
      %s250 = smul.addr %s247, 2
      %s251 = sadd.s32 %s249, %s250
      %s252 = smul.addr %s251, 4
      %s253 = scalar_lea.vmem %s4, %s252
      %s254 = smul.u32 2, %s19
      %p255 = scmp.lt.s32.totalorder %s254, 3
      %s256 = scalar_select %p255, %s254, 3
      %s257 = smul.addr %s256, 8
      %s258 = scalar_lea.vmem %s0, %s257
      %s259 = smul.u32 2, %s19
      %s260 = smul.u32 2, %s20
      %p261 = scmp.lt.s32.totalorder %s260, 1
      %s262 = scalar_select %p261, %s260, 1
      %s263 = smul.addr %s262, 4
      %s264 = scalar_lea.vmem %s1, %s263
      %s265 = smul.u32 2, %s20
      %s266 = smul.u32 2, %s20
      %p267 = scmp.lt.s32.totalorder %s266, 1
      %s268 = scalar_select %p267, %s266, 1
      %s269 = scalar_lea.vmem %s2, %s268
      %s270 = smul.u32 2, %s20
      %s271 = smul.u32 2, %s20
      %p272 = scmp.lt.s32.totalorder %s271, 1
      %s273 = scalar_select %p272, %s271, 1
      %s274 = smul.addr %s273, 8
      %s275 = scalar_lea.vmem %s3, %s274
      %s276 = smul.u32 2, %s20
      %s277 = smul.u32 2, %s19
      %s278 = smul.u32 2, %s20
      %p279 = scmp.lt.s32.totalorder %s277, 3
      %s280 = scalar_select %p279, %s277, 3
      %p281 = scmp.lt.s32.totalorder %s278, 1
      %s282 = scalar_select %p281, %s278, 1
      %s283 = smul.addr %s280, 2
      %s284 = sadd.s32 %s282, %s283
      %s285 = smul.addr %s284, 4
      %s286 = scalar_lea.vmem %s4, %s285
      %s287 = smul.u32 2, %s19
      %s288 = smul.u32 2, %s20
      %v290 = vld [vmem:[%s258] sm:$0xff]
      %v291 = vld [vmem:[%s258 + $0x8] sm:$0xff]
      %v292 = vrcp.pop 10000.0
      %v293 = vmul.f32 10000.0, %v292
      %v294 = vsub.f32 1.0, %v293
      %v295 = vmul.f32 %v292, %v294
      %v296 = vadd.f32 %v292, %v295
      %vm297 = vweird.f32 %v292
      %v298 = vsel %vm297, %v292, %v296
      %v299 = vmul.f32 %v290, %v298
      %v300 = vmul.f32 %v291, %v298
      %v301 = vmul.f32 %v299, 2.5
      %v302 = vmul.f32 %v300, 2.5
      %v303 = vmax.f32 %v301, 0.0
      %v304 = vmax.f32 %v302, 0.0
      %v305 = vmin.f32 %v303, 1.0
      %v306 = vmin.f32 %v304, 1.0
      %v307 = vsub.f32 %v305, 0.5
      %v308 = vsub.f32 %v306, 0.5
      %v309 = vrcp.pop 0.5
      %v310 = vmul.f32 0.5, %v309
      %v311 = vsub.f32 1.0, %v310
      %v312 = vmul.f32 %v309, %v311
      %v313 = vadd.f32 %v309, %v312
      %vm314 = vweird.f32 %v309
      %v315 = vsel %vm314, %v309, %v313
      %v316 = vmul.f32 %v307, %v315
      %v317 = vmul.f32 %v308, %v315
      %v318 = vpack.c.bf16 %v317, %v316
      %v319 = vld [vmem:[%s264] sm:$0xff]
      %v320 = vld [vmem:[%s264 + $0x8] sm:$0xff]
      %v321 = vld [vmem:[%s264 + $0x10] sm:$0xff]
      %v322 = vld [vmem:[%s264 + $0x18] sm:$0xff]
      %v323 = vld [vmem:[%s264 + $0x20] sm:$0xff]
      %v324 = vld [vmem:[%s264 + $0x28] sm:$0xff]
      %v325 = vld [vmem:[%s269] sm:$0x3]
      %v327 = vperm.slane %v325, 0
      %v328 = vperm.slane %v325, 1
      %v337 = vunpack.c.l.b16 %v319
      %v338 = vunpack.c.h.b16 %v319
      %v339 = vunpack.c.l.b16 %v320
      %v340 = vunpack.c.h.b16 %v320
      %v341 = vunpack.c.l.b16 %v321
      %v342 = vunpack.c.h.b16 %v321
      %v343 = vunpack.c.l.b16 %v322
      %v344 = vunpack.c.h.b16 %v322
      %v345 = vunpack.c.l.b16 %v323
      %v346 = vunpack.c.h.b16 %v323
      %v347 = vunpack.c.l.b16 %v324
      %v348 = vunpack.c.h.b16 %v324
      %v349 = vpack.c.b16 %v339, %v337
      %v350 = vpack.c.b16 %v340, %v338
      %v351 = vpack.c.b16 %v343, %v341
      %v352 = vpack.c.b16 %v344, %v342
      %v353 = vpack.c.b16 %v347, %v345
      %v354 = vpack.c.b16 %v348, %v346
      %vm361 = vcmask 392192
      %v363 = vsel %vm361, %v318, 0
      %365 = vmatpush.bf16.msra.mxu0 0
      %366 = vmatpush.bf16.msra.mxu0 0
      %367 = vmatpush.bf16.msra.mxu0 0
      %368 = vmatpush.bf16.msra.mxu0 0
      %369 = vmatpush.bf16.msra.mxu0 0
      %370 = vmatpush.bf16.msra.mxu0 %v353
      %371 = vmatpush.bf16.msra.mxu0 %v351
      %372 = vmatpush.bf16.msra.mxu0 %v349
      %373 = vmatmul.bf16.gmra.mxu0 %v363
      %v374 = vpop.f32.mrf.mxu0
      %v375 = vadd.f32 %v327, %v374
      %v376 = vpop.f32.mrf.mxu0
      %v377 = vadd.f32 %v327, %v376
      %378 = vdwg.mxu0
      %379 = vmatpush.bf16.msra.mxu0 0
      %380 = vmatpush.bf16.msra.mxu0 0
      %381 = vmatpush.bf16.msra.mxu0 0
      %382 = vmatpush.bf16.msra.mxu0 0
      %383 = vmatpush.bf16.msra.mxu0 0
      %384 = vmatpush.bf16.msra.mxu0 %v354
      %385 = vmatpush.bf16.msra.mxu0 %v352
      %386 = vmatpush.bf16.msra.mxu0 %v350
      %387 = vmatmul.bf16.gmra.mxu0 %v363
      %v388 = vpop.f32.mrf.mxu0
      %v389 = vadd.f32 %v328, %v388
      %v390 = vpop.f32.mrf.mxu0
      %v391 = vadd.f32 %v328, %v390
      %392 = vdwg.mxu0
      %v393 = vld [vmem:[%s275] sm:$0xff]
      %v394 = vld [vmem:[%s275 + $0x8] sm:$0xff]
      %v395 = vld [vmem:[%s275 + $0x10] sm:$0xff]
      %v396 = vld [vmem:[%s275 + $0x18] sm:$0xff]
      %v397 = vadd.f32 %v375, %v393
      %v398 = vadd.f32 %v389, %v394
      %v399 = vadd.f32 %v377, %v395
      %v400 = vadd.f32 %v391, %v396
      %v401 = vpack.c.bf16 %v398, %v397
      %v402 = vpack.c.bf16 %v400, %v399
      %403 = vst [vmem:[%s286] sm:$0xff] %v401
      %404 = vst [vmem:[%s286 + $0x8] sm:$0xff] %v402
      %s405 = smul.u32 2, %s19
      %s406 = smul.u32 2, %s20
      %p407 = scmp.lt.s32.totalorder %s405, 3
      %s408 = scalar_select %p407, %s405, 3
      %p409 = scmp.lt.s32.totalorder %s406, 1
      %s410 = scalar_select %p409, %s406, 1
      %s411 = smul.addr %s408, 2
      %s412 = sadd.s32 %s410, %s411
      %s413 = smul.addr %s412, 4
      %s414 = scalar_lea.vmem %s4, %s413
      // Predicated region
      $region37: #{siglip_s2rgb_embed.14} parent=35 // pred_check
        %p415 = pneg %p151
      $region38: #{siglip_s2rgb_embed.14} parent=35 // pred_check_branch
        %417 = sbr.rel (%p415) target = $region40
      $region39: #{siglip_s2rgb_embed.14} parent=35 // pred_region
        %s418 = smul.u32 2, %s19
        %s419 = smul.u32 2, %s20
      $region40: #{siglip_s2rgb_embed.14} parent=35 // pred_fallthru
        _
    $region36: #{siglip_s2rgb_embed.14} parent=5 // pred_fallthru
      _
    %p420 = scmp.le.s32.totalorder 2, %s10
    // Predicated region
    $region41: #{siglip_s2rgb_embed.14} parent=5 // pred_check
      %p421 = pneg %p420
    $region42: #{siglip_s2rgb_embed.14} parent=5 // pred_check_branch
      %423 = sbr.rel (%p421) target = $region44
    $region43: #{siglip_s2rgb_embed.14} parent=5 // pred_region
      %s424 = ssub.s32 %s10, 2
      // Predicated region
      $region45: #{siglip_s2rgb_embed.14} parent=43 // pred_check
        %p425 = pneg %p157
      $region46: #{siglip_s2rgb_embed.14} parent=43 // pred_check_branch
        %427 = sbr.rel (%p425) target = $region48
      $region47: #{siglip_s2rgb_embed.14} parent=43 // pred_region
        %s428 = smul.u32 2, %s21
        %s429 = smul.u32 2, %s22
        %p430 = scmp.lt.s32.totalorder %s428, 3
        %s431 = scalar_select %p430, %s428, 3
        %p432 = scmp.lt.s32.totalorder %s429, 1
        %s433 = scalar_select %p432, %s429, 1
        %s434 = smul.addr %s431, 2
        %s435 = sadd.s32 %s433, %s434
        %s436 = smul.addr %s435, 4
        %s437 = scalar_lea.vmem %s4, %s436
      $region48: #{siglip_s2rgb_embed.14} parent=43 // pred_fallthru
        _
    $region44: #{siglip_s2rgb_embed.14} parent=5 // pred_fallthru
      _
  $region6: #{siglip_s2rgb_embed.14} parent=0 // loop_footer
    %s14 = sadd.s32 1, %s10
  $region7: #{siglip_s2rgb_embed.14} parent=0 // loop_footer_branch
    %9 = sbr.rel target = $region3
  $region8: #{siglip_s2rgb_embed.14} parent=0 // loop_exit
    _

// kernel: siglip_s2rgb_embed.16
$region0: #{siglip_s2rgb_embed.16}
  #allocation0 [shape = 'u32[]', space=smem, size = 0x4, offset = 0x4, fixed_abs, tag = 'smem constant byte address 0x4 - core index']
  #allocation1 [shape = 'u32[72,128]{1,0:T(1,128)}', space=vmem, size = 0x9000, scoped, tag = 'internal scratch']
  #allocation2 [shape = 'f32[16,256]{1,0:T(8,128)}', space=vmem, size = 0x4000, scoped, tag = 'scratch operand']
  %s0 = inlined_call_operand.vmem [shape: bf16[2,16,768], index: 0, kind: input, shape index: {}]
  %s1 = inlined_call_operand.hbm [shape: bf16[256,256], index: 1, kind: input, shape index: {}]
  %s2 = inlined_call_operand.vmem [shape: f32[1,256], index: 2, kind: input, shape index: {}]
  %s3 = inlined_call_operand.vmem [shape: bf16[2,16,256], index: 3, kind: input, shape index: {}]
  %s4 = inlined_call_operand.vmem [shape: bf16[2,16,256], index: 4, kind: output, shape index: {}]
  %s5 = sld [smem:[#allocation0]]
  $region87: #{siglip_s2rgb_embed.16} parent=0
    _
  %s7 = ssub.s32 1, %s5
  %s8 = scalar_select 0, %s7, %s5
  $region1: #{siglip_s2rgb_embed.16} parent=0
    #allocation3 [shape = 'u8[24576]{0}', space=vmem, size = 0x6000, scoped, tag = 'input window, operand 0']
    #allocation4 [shape = 'u8[131072]{0}', space=vmem, size = 0x20000, scoped, tag = 'input window, operand 1']
    #allocation5 [shape = 's32[2]{0}', space=sflag, size = 0x8, scoped, tag = 'scoped memory for siglip_s2rgb_embed.16']
    %9 = vsyncpa [#allocation5], 0
    %s10 = scalar_lea.sflag [#allocation5], 1
    %11 = vsyncpa %s10, 0
    loop: start=0, step=1, limit=6
    $region2: #{siglip_s2rgb_embed.16} parent=1 // loop_pre_header
      _
    $region3: #{siglip_s2rgb_embed.16} parent=1 // loop_header
      %s13 = sphi 0, %s17
      %p14 = scmp.ge.s32.totalorder %s13, 6
      %s20 = sphi 0, %s32
      %s21 = sphi 0, %s28
      %s22 = sphi 0, %s20
      %s23 = sphi 0, %s21
      %s24 = sphi 0, %s22
      %s25 = sphi 0, %s23
      %s37 = sphi 0, %s39
      %s40 = sphi 0, %s37
      %s41 = sphi 0, %s40
      %s57 = sphi 0, %s41
      %s63 = sphi 0, %s65
      %s66 = sphi 0, %s63
      %s67 = sphi 0, %s66
      %s83 = sphi 0, %s67
      %s87 = sphi 0, %s87
      %s89 = sphi 0, %s87
      %s90 = sphi 0, %s89
      %s104 = sphi 0, %s90
      %s110 = sphi 0, %s112
      %s113 = sphi 0, %s110
      %s114 = sphi 0, %s113
      %s130 = sphi 0, %s114
      %s136 = sphi 0, %s138
      %s139 = sphi 0, %s136
      %s140 = sphi 0, %s139
      %s156 = sphi 0, %s140
    $region4: #{siglip_s2rgb_embed.16} parent=1 // loop_header_branch
      %16 = sbr.rel (%p14) target = $region8
    $region5: #{siglip_s2rgb_embed.16} parent=1 // loop_body
      %s18 = ssub.s32 %s13, 1
      %s19 = ssub.s32 %s13, 2
      %s26 = sadd.s32 1, %s21
      %p27 = scmp.ge.s32.totalorder %s26, 2
      %s28 = scalar_select %p27, 0, %s26
      %s29 = sadd.s32 1, %s20
      %s30 = scalar_select %p27, %s29, %s20
      %p31 = scmp.ge.s32.totalorder %s30, 2
      %s32 = scalar_select %p31, 0, %s30
      %s33 = ssub.s32 %s20, %s32
      %s34 = ssub.s32 %s21, %s28
      %s35 = sor.u32 %s33, %s34
      %p36 = scmp.eq.s32.totalorder %s35, 0
      %s38 = sadd.s32 %s37, 1
      %s39 = scalar_select %p36, %s37, %s38
      %p42 = pneg %p36
      %p43 = scmp.eq.s32.totalorder %s13, 3
      %p44 = por %p42, %p43
      %p45 = scmp.ne.s32.totalorder %s37, %s40
      %p46 = scmp.eq.s32.totalorder %s13, 0
      %p47 = por %p45, %p46
      %p48 = scmp.ne.s32.totalorder %s37, %s40
      %p49 = scmp.eq.s32.totalorder %s18, 3
      %p50 = por %p48, %p49
      %p51 = scmp.ne.s32.totalorder %s40, %s41
      %p52 = scmp.eq.s32.totalorder %s18, 0
      %p53 = por %p51, %p52
      %p54 = scmp.ne.s32.totalorder %s40, %s41
      %p55 = scmp.eq.s32.totalorder %s19, 3
      %p56 = por %p54, %p55
      %p58 = scmp.ne.s32.totalorder %s41, %s57
      %p59 = scmp.eq.s32.totalorder %s19, 0
      %p60 = por %p58, %p59
      %s61 = ssub.s32 %s21, %s28
      %p62 = scmp.eq.s32.totalorder %s61, 0
      %s64 = sadd.s32 %s63, 1
      %s65 = scalar_select %p62, %s63, %s64
      %p68 = pneg %p62
      %p69 = scmp.eq.s32.totalorder %s13, 3
      %p70 = por %p68, %p69
      %p71 = scmp.ne.s32.totalorder %s63, %s66
      %p72 = scmp.eq.s32.totalorder %s13, 0
      %p73 = por %p71, %p72
      %p74 = scmp.ne.s32.totalorder %s63, %s66
      %p75 = scmp.eq.s32.totalorder %s18, 3
      %p76 = por %p74, %p75
      %p77 = scmp.ne.s32.totalorder %s66, %s67
      %p78 = scmp.eq.s32.totalorder %s18, 0
      %p79 = por %p77, %p78
      %p80 = scmp.ne.s32.totalorder %s66, %s67
      %p81 = scmp.eq.s32.totalorder %s19, 3
      %p82 = por %p80, %p81
      %p84 = scmp.ne.s32.totalorder %s67, %s83
      %p85 = scmp.eq.s32.totalorder %s19, 0
      %p86 = por %p84, %p85
      %s88 = sadd.s32 %s87, 1
      %p91 = scmp.eq.s32.totalorder %s13, 3
      %p92 = scmp.ne.s32.totalorder %s87, %s89
      %p93 = scmp.eq.s32.totalorder %s13, 0
      %p94 = por %p92, %p93
      %p95 = scmp.ne.s32.totalorder %s87, %s89
      %p96 = scmp.eq.s32.totalorder %s18, 3
      %p97 = por %p95, %p96
      %p98 = scmp.ne.s32.totalorder %s89, %s90
      %p99 = scmp.eq.s32.totalorder %s18, 0
      %p100 = por %p98, %p99
      %p101 = scmp.ne.s32.totalorder %s89, %s90
      %p102 = scmp.eq.s32.totalorder %s19, 3
      %p103 = por %p101, %p102
      %p105 = scmp.ne.s32.totalorder %s90, %s104
      %p106 = scmp.eq.s32.totalorder %s19, 0
      %p107 = por %p105, %p106
      %s108 = ssub.s32 %s20, %s32
      %p109 = scmp.eq.s32.totalorder %s108, 0
      %s111 = sadd.s32 %s110, 1
      %s112 = scalar_select %p109, %s110, %s111
      %p115 = pneg %p109
      %p116 = scmp.eq.s32.totalorder %s13, 3
      %p117 = por %p115, %p116
      %p118 = scmp.ne.s32.totalorder %s110, %s113
      %p119 = scmp.eq.s32.totalorder %s13, 0
      %p120 = por %p118, %p119
      %p121 = scmp.ne.s32.totalorder %s110, %s113
      %p122 = scmp.eq.s32.totalorder %s18, 3
      %p123 = por %p121, %p122
      %p124 = scmp.ne.s32.totalorder %s113, %s114
      %p125 = scmp.eq.s32.totalorder %s18, 0
      %p126 = por %p124, %p125
      %p127 = scmp.ne.s32.totalorder %s113, %s114
      %p128 = scmp.eq.s32.totalorder %s19, 3
      %p129 = por %p127, %p128
      %p131 = scmp.ne.s32.totalorder %s114, %s130
      %p132 = scmp.eq.s32.totalorder %s19, 0
      %p133 = por %p131, %p132
      %s134 = ssub.s32 %s20, %s32
      %p135 = scmp.eq.s32.totalorder %s134, 0
      %s137 = sadd.s32 %s136, 1
      %s138 = scalar_select %p135, %s136, %s137
      %p141 = pneg %p135
      %p142 = scmp.eq.s32.totalorder %s13, 3
      %p143 = por %p141, %p142
      %p144 = scmp.ne.s32.totalorder %s136, %s139
      %p145 = scmp.eq.s32.totalorder %s13, 0
      %p146 = por %p144, %p145
      %p147 = scmp.ne.s32.totalorder %s136, %s139
      %p148 = scmp.eq.s32.totalorder %s18, 3
      %p149 = por %p147, %p148
      %p150 = scmp.ne.s32.totalorder %s139, %s140
      %p151 = scmp.eq.s32.totalorder %s18, 0
      %p152 = por %p150, %p151
      %p153 = scmp.ne.s32.totalorder %s139, %s140
      %p154 = scmp.eq.s32.totalorder %s19, 3
      %p155 = por %p153, %p154
      %p157 = scmp.ne.s32.totalorder %s140, %s156
      %p158 = scmp.eq.s32.totalorder %s19, 0
      %p159 = por %p157, %p158
      %p160 = scmp.le.s32.totalorder 1, %s13
      %p161 = scmp.lt.s32.totalorder %s13, 5
      %p162 = pnand %p160, %p161
      %p163 = pneg %p162
      // Predicated region
      $region9: #{siglip_s2rgb_embed.16} parent=5 // pred_check
        _
      $region10: #{siglip_s2rgb_embed.16} parent=5 // pred_check_branch
        %165 = sbr.rel (%p162) target = $region12
      $region11: #{siglip_s2rgb_embed.16} parent=5 // pred_region
        %s166 = ssub.s32 %s13, 1
        // Predicated region
        $region13: #{siglip_s2rgb_embed.16} parent=11 // pred_check
          %p167 = pneg %p100
        $region14: #{siglip_s2rgb_embed.16} parent=11 // pred_check_branch
          %169 = sbr.rel (%p167) target = $region16
        $region15: #{siglip_s2rgb_embed.16} parent=11 // pred_region
          _
        $region16: #{siglip_s2rgb_embed.16} parent=11 // pred_fallthru
          _
      $region12: #{siglip_s2rgb_embed.16} parent=5 // pred_fallthru
        _
      %p170 = scmp.lt.s32.totalorder %s13, 4
      // Predicated region
      $region17: #{siglip_s2rgb_embed.16} parent=5 // pred_check
        %p171 = pneg %p170
      $region18: #{siglip_s2rgb_embed.16} parent=5 // pred_check_branch
        %173 = sbr.rel (%p171) target = $region20
      $region19: #{siglip_s2rgb_embed.16} parent=5 // pred_region
        // Predicated region
        $region21: #{siglip_s2rgb_embed.16} parent=19 // pred_check
          %p174 = pneg %p47
        $region22: #{siglip_s2rgb_embed.16} parent=19 // pred_check_branch
          %176 = sbr.rel (%p174) target = $region24
        $region23: #{siglip_s2rgb_embed.16} parent=19 // pred_region
          %s177 = sand.u32 %s37, 1
          %s178 = sand.u32 %s37, 1
          %s179 = smul.addr %s178, 24
          %s180 = scalar_lea.vmem [#allocation3], %s179
          %s181 = smul.u32 3, %s21
          %s182 = smul.addr %s20, 12
          %s183 = sadd.s32 %s181, %s182
          %s184 = smul.addr %s183, 4
          %s185 = scalar_lea.vmem %s0, %s184
          // Predicated region
          $region25: #{siglip_s2rgb_embed.16} parent=23 // pred_check
            _
          $region26: #{siglip_s2rgb_embed.16} parent=23 // pred_check_branch
            %187 = sbr.rel (0) target = $region28
          $region27: #{siglip_s2rgb_embed.16} parent=23 // pred_region
            // Predicated region
            $region29: #{siglip_s2rgb_embed.16} parent=27 // pred_check
              _
            $region30: #{siglip_s2rgb_embed.16} parent=27 // pred_check_branch
              %189 = sbr.rel (0) target = $region32
            $region31: #{siglip_s2rgb_embed.16} parent=27 // pred_region
              %s190 = scalar_lea.vmem %s185, 8
              %s191 = scalar_lea.vmem %s180, 8 [#allocation3]
              loop: start=0, step=1, limit=1
              $region33: #{siglip_s2rgb_embed.16} parent=31 // loop_pre_header
                _
              $region34: #{siglip_s2rgb_embed.16} parent=31 // loop_header
                %s193 = sphi 0, %s197
                %p194 = scmp.ge.s32.totalorder %s193, 1
                %s198 = sphi %s185, %s185
                %s199 = sphi %s180, %s180
              $region35: #{siglip_s2rgb_embed.16} parent=31 // loop_header_branch
                %196 = sbr.rel (%p194) target = $region39
              $region36: #{siglip_s2rgb_embed.16} parent=31 // loop_body
                %v200 = vld [vmem:[%s198] sm:$0xff]
                %201 = vst [vmem:[%s199] sm:$0xff] %v200
                %v202 = vld [vmem:[%s198 + $0x18] sm:$0xff]
                %203 = vst [vmem:[%s199 + $0xc] sm:$0xff] %v202
              $region37: #{siglip_s2rgb_embed.16} parent=31 // loop_footer
                %s197 = sadd.s32 1, %s193
              $region38: #{siglip_s2rgb_embed.16} parent=31 // loop_footer_branch
                %192 = sbr.rel target = $region34
              $region39: #{siglip_s2rgb_embed.16} parent=31 // loop_exit
                _
              %s205 = ssub.s32 16, 1
              loop: start=0, step=1, limit=1
              $region40: #{siglip_s2rgb_embed.16} parent=31 // loop_pre_header
                _
              $region41: #{siglip_s2rgb_embed.16} parent=31 // loop_header
                %s207 = sphi 0, %s211
                %p208 = scmp.ge.s32.totalorder %s207, 1
                %s212 = sphi %s190, %s190
                %s213 = sphi %s191, %s191
              $region42: #{siglip_s2rgb_embed.16} parent=31 // loop_header_branch
                %210 = sbr.rel (%p208) target = $region46
              $region43: #{siglip_s2rgb_embed.16} parent=31 // loop_body
                %v214 = vld [vmem:[%s212] sm:%s205]
                %215 = vst [vmem:[%s213] sm:%s205] %v214
                %v216 = vld [vmem:[%s212 + $0x18] sm:%s205]
                %217 = vst [vmem:[%s213 + $0xc] sm:%s205] %v216
              $region44: #{siglip_s2rgb_embed.16} parent=31 // loop_footer
                %s211 = sadd.s32 1, %s207
              $region45: #{siglip_s2rgb_embed.16} parent=31 // loop_footer_branch
                %206 = sbr.rel target = $region41
              $region46: #{siglip_s2rgb_embed.16} parent=31 // loop_exit
                _
            $region32: #{siglip_s2rgb_embed.16} parent=27 // pred_fallthru
              _
          $region28: #{siglip_s2rgb_embed.16} parent=23 // pred_fallthru
            _
          %218 = vnop
        $region24: #{siglip_s2rgb_embed.16} parent=19 // pred_fallthru
          _
        // Predicated region
        $region47: #{siglip_s2rgb_embed.16} parent=19 // pred_check
          %p219 = pneg %p73
        $region48: #{siglip_s2rgb_embed.16} parent=19 // pred_check_branch
          %221 = sbr.rel (%p219) target = $region50
        $region49: #{siglip_s2rgb_embed.16} parent=19 // pred_region
          %s222 = sand.u32 %s63, 1
          %s223 = scalar_lea.sflag [#allocation5], %s222
          %s224 = sand.u32 %s63, 1
          %s225 = smul.addr %s224, 128
          %s226 = scalar_lea.vmem [#allocation4], %s225
          %s227 = smul.u32 16, %s21
          %229 = vsyncadd %s223, 0
          %s230 = smul.addr %s227, 2
          %s231 = smul.addr %s230, 4
          %s232 = scalar_lea.hbm %s1, %s231
          %s233 = sshll.u32 %s232, 4
          %s234 = int_to_ptr.hbm [resolvable:$true] %s233
          %s235 = sshll.u32 %s226, 4
          %s236 = int_to_ptr.vmem [resolvable:$true] %s235
          %241 = dma.hbm_to_vmem [thread:$0]  %s234, 2048, %s236, %s223, 128, 128, 8
        $region50: #{siglip_s2rgb_embed.16} parent=19 // pred_fallthru
          _
        // Predicated region
        $region51: #{siglip_s2rgb_embed.16} parent=19 // pred_check
          %p242 = pneg %p120
        $region52: #{siglip_s2rgb_embed.16} parent=19 // pred_check_branch
          %244 = sbr.rel (%p242) target = $region54
        $region53: #{siglip_s2rgb_embed.16} parent=19 // pred_region
          %p245 = scmp.lt.s32.totalorder %s20, 1
          %s246 = scalar_select %p245, %s20, 1
          %s247 = smul.addr %s246, 4
          %s248 = smul.addr %s247, 4
          %s249 = scalar_lea.vmem %s3, %s248
        $region54: #{siglip_s2rgb_embed.16} parent=19 // pred_fallthru
          _
      $region20: #{siglip_s2rgb_embed.16} parent=5 // pred_fallthru
        _
      %p250 = scmp.le.s32.totalorder 1, %s13
      %p251 = scmp.lt.s32.totalorder %s13, 5
      %p252 = pnand %p250, %p251
      %p253 = pneg %p252
      // Predicated region
      $region55: #{siglip_s2rgb_embed.16} parent=5 // pred_check
        _
      $region56: #{siglip_s2rgb_embed.16} parent=5 // pred_check_branch
        %255 = sbr.rel (%p252) target = $region58
      $region57: #{siglip_s2rgb_embed.16} parent=5 // pred_region
        %s256 = ssub.s32 %s13, 1
        %s257 = sand.u32 %s40, 1
        %s258 = sand.u32 %s40, 1
        %s259 = smul.addr %s258, 24
        %s260 = scalar_lea.vmem [#allocation3], %s259
        // Predicated region
        $region59: #{siglip_s2rgb_embed.16} parent=57 // pred_check
          %p261 = pneg %p53
        $region60: #{siglip_s2rgb_embed.16} parent=57 // pred_check_branch
          %263 = sbr.rel (%p261) target = $region62
        $region61: #{siglip_s2rgb_embed.16} parent=57 // pred_region
          _
        $region62: #{siglip_s2rgb_embed.16} parent=57 // pred_fallthru
          _
        %s264 = sand.u32 %s66, 1
        %s265 = scalar_lea.sflag [#allocation5], %s264
        %s266 = sand.u32 %s66, 1
        %s267 = smul.addr %s266, 128
        %s268 = scalar_lea.vmem [#allocation4], %s267
        // Predicated region
        $region63: #{siglip_s2rgb_embed.16} parent=57 // pred_check
          %p269 = pneg %p79
        $region64: #{siglip_s2rgb_embed.16} parent=57 // pred_check_branch
          %271 = sbr.rel (%p269) target = $region66
        $region65: #{siglip_s2rgb_embed.16} parent=57 // pred_region
          %273 = dma.done %s265, 2048
        $region66: #{siglip_s2rgb_embed.16} parent=57 // pred_fallthru
          _
        %s274 = sand.u32 %s40, 1
        %s275 = sand.u32 %s40, 1
        %s276 = smul.addr %s275, 24
        %s277 = scalar_lea.vmem [#allocation3], %s276
        %p278 = pneg %p53
        %p279 = pneg %p50
        %s280 = sand.u32 %s66, 1
        %s281 = scalar_lea.sflag [#allocation5], %s280
        %s282 = sand.u32 %s66, 1
        %s283 = smul.addr %s282, 128
        %s284 = scalar_lea.vmem [#allocation4], %s283
        %p285 = pneg %p79
        %p286 = pneg %p76
        %p287 = pneg %p100
        %p288 = pneg %p97
        %p289 = scmp.lt.s32.totalorder %s22, 1
        %s290 = scalar_select %p289, %s22, 1
        %s291 = smul.addr %s290, 4
        %s292 = smul.addr %s291, 4
        %s293 = scalar_lea.vmem %s3, %s292
        %p294 = pneg %p126
        %p295 = pneg %p123
        %p296 = pneg %p152
        %p297 = pneg %p149
        %p298 = scmp.lt.s32.totalorder %s22, 1
        %s299 = scalar_select %p298, %s22, 1
        %s300 = smul.addr %s299, 4
        %s301 = smul.addr %s300, 4
        %s302 = scalar_lea.vmem %s4, %s301
        %s303 = smul.u32 3, %s23
        %s304 = smul.u32 16, %s23
        %p305 = scmp.lt.s32.totalorder %s22, 1
        %s306 = scalar_select %p305, %s22, 1
        %s307 = smul.addr %s306, 4
        %s308 = smul.addr %s307, 4
        %s309 = scalar_lea.vmem %s3, %s308
        %p310 = scmp.lt.s32.totalorder %s22, 1
        %s311 = scalar_select %p310, %s22, 1
        %s312 = smul.addr %s311, 4
        %s313 = smul.addr %s312, 4
        %s314 = scalar_lea.vmem %s4, %s313
        %p316 = scmp.eq.s32.totalorder %s23, 0
        // Predicated region
        $region67: #{siglip_s2rgb_embed.16} parent=57 // pred_check
          %p317 = pneg %p316
        $region68: #{siglip_s2rgb_embed.16} parent=57 // pred_check_branch
          %319 = sbr.rel (%p317) target = $region70
        $region69: #{siglip_s2rgb_embed.16} parent=57 // pred_region
          %320 = vst [vmem:[#allocation2] sm:$0xff] 0.0
          %321 = vst [vmem:[#allocation2 + $0x8] sm:$0xff] 0.0
          %322 = vst [vmem:[#allocation2 + $0x10] sm:$0xff] 0.0
          %323 = vst [vmem:[#allocation2 + $0x18] sm:$0xff] 0.0
        $region70: #{siglip_s2rgb_embed.16} parent=57 // pred_fallthru
          _
        %v324 = vld [vmem:[%s260] sm:$0xff]
        %v325 = vld [vmem:[%s260 + $0x8] sm:$0xf]
        %v326 = vld [vmem:[%s260 + $0xc] sm:$0xff]
        %v327 = vld [vmem:[%s260 + $0x14] sm:$0xf]
        %v330 = vunpack.c.l.b16 %v324
        %v331 = vunpack.c.l.b16 %v326
        %v332 = vpack.c.b16 %v331, %v330
        %v334 = vunpack.c.h.b16 %v324
        %v335 = vunpack.c.h.b16 %v326
        %v336 = vpack.c.b16 %v335, %v334
        %338 = vmatpush.bf16.xpose.msra.mxu0 0
        %339 = vmatpush.bf16.xpose.msra.mxu0 0
        %340 = vmatpush.bf16.xpose.msra.mxu0 0
        %341 = vmatpush.bf16.xpose.msra.mxu0 0
        %342 = vmatpush.bf16.xpose.msra.mxu0 0
        %343 = vmatpush.bf16.xpose.msra.mxu0 0
        %344 = vmatpush.bf16.xpose.msra.mxu0 0
        %345 = vmatpush.bf16.xpose.msra.mxu0 %v336
        %346 = vmatmul.bf16.gmra.mxu0 %v332
        %v347 = vpop.f32.mrf.mxu0
        %v348 = vadd.f32 0.0, %v347
        %v349 = vpop.f32.mrf.mxu0
        %v350 = vadd.f32 0.0, %v349
        %351 = vdwg.mxu0
        %v352 = vmul.f32 %v348, 0.088388346
        %v353 = vmul.f32 %v350, 0.088388346
        %vm354 = vcmask 130048
        %v355 = vsel %vm354, %v352, -inf
        %356 = vmax.xlane.f32.xlu0 %v355
        %v357 = vpop.xlane.xlu0 %356
        %v358 = vsel %vm354, %v353, -inf
        %359 = vmax.xlane.f32.xlu0 %v358
        %v360 = vpop.xlane.xlu0 %359
        %v361 = vsub.f32 %v352, %v357
        %v362 = vsub.f32 %v353, %v360
        %v363 = vmul.f32 %v361, 1.442695
        %v364 = vpow.pop %v363
        %v365 = vmul.f32 %v362, 1.442695
        %v366 = vpow.pop %v365
        %v367 = vsel %vm354, %v364, 0.0
        %368 = vadd.xlane.f32.xlu0 %v367
        %v369 = vpop.xlane.xlu0 %368
        %v370 = vsel %vm354, %v366, 0.0
        %371 = vadd.xlane.f32.xlu0 %v370
        %v372 = vpop.xlane.xlu0 %371
        %v373 = vrcp.pop %v369
        %v374 = vmul.f32 %v369, %v373
        %v375 = vsub.f32 1.0, %v374
        %v376 = vmul.f32 %v373, %v375
        %v377 = vadd.f32 %v373, %v376
        %vm378 = vweird.f32 %v369
        %vm379 = vweird.f32 %v373
        %vm380 = vmor %vm378, %vm379
        %v381 = vsel %vm380, %v373, %v377
        %v382 = vand.u32 2147483647, %v369
        %vm383 = vcmp.eq.f32.partialorder %v382, 8.507059e+37
        %v384 = vand.u32 %v369, 2147483648
        %v385 = vor.u32 1.1754944e-38, %v384
        %v386 = vsel %vm383, %v385, %v381
        %v387 = vmul.f32 %v364, %v386
        %v388 = vrcp.pop %v372
        %v389 = vmul.f32 %v372, %v388
        %v390 = vsub.f32 1.0, %v389
        %v391 = vmul.f32 %v388, %v390
        %v392 = vadd.f32 %v388, %v391
        %vm393 = vweird.f32 %v372
        %vm394 = vweird.f32 %v388
        %vm395 = vmor %vm393, %vm394
        %v396 = vsel %vm395, %v388, %v392
        %v397 = vand.u32 2147483647, %v372
        %vm398 = vcmp.eq.f32.partialorder %v397, 8.507059e+37
        %v399 = vand.u32 %v372, 2147483648
        %v400 = vor.u32 1.1754944e-38, %v399
        %v401 = vsel %vm398, %v400, %v396
        %v402 = vmul.f32 %v366, %v401
        %v403 = vpack.c.bf16 %v402, %v387
        %v406 = vunpack.c.l.b16 %v325
        %v407 = vunpack.c.l.b16 %v327
        %v408 = vpack.c.b16 %v407, %v406
        %v411 = vsel %vm354, %v403, 0
        %413 = vmatpush.bf16.msra.mxu0 0
        %414 = vmatpush.bf16.msra.mxu0 0
        %415 = vmatpush.bf16.msra.mxu0 0
        %416 = vmatpush.bf16.msra.mxu0 0
        %417 = vmatpush.bf16.msra.mxu0 0
        %418 = vmatpush.bf16.msra.mxu0 0
        %419 = vmatpush.bf16.msra.mxu0 0
        %420 = vmatpush.bf16.msra.mxu0 %v408
        %421 = vmatmul.bf16.gmra.mxu0 %v411
        %v422 = vpop.f32.mrf.mxu0
        %v423 = vadd.f32 0.0, %v422
        %v424 = vpop.f32.mrf.mxu0
        %v425 = vadd.f32 0.0, %v424
        %426 = vdwg.mxu0
        %v427 = vld [vmem:[#allocation2] sm:$0xff]
        %v428 = vld [vmem:[#allocation2 + $0x8] sm:$0xff]
        %v429 = vld [vmem:[#allocation2 + $0x10] sm:$0xff]
        %v430 = vld [vmem:[#allocation2 + $0x18] sm:$0xff]
        %v431 = vpack.c.bf16 %v425, %v423
        %v432 = vld [vmem:[%s268] sm:$0xff]
        %v433 = vld [vmem:[%s268 + $0x8] sm:$0xff]
        %v434 = vld [vmem:[%s268 + $0x10] sm:$0xff]
        %v435 = vld [vmem:[%s268 + $0x18] sm:$0xff]
        %v436 = vld [vmem:[%s268 + $0x20] sm:$0xff]
        %v437 = vld [vmem:[%s268 + $0x28] sm:$0xff]
        %v438 = vld [vmem:[%s268 + $0x30] sm:$0xff]
        %v439 = vld [vmem:[%s268 + $0x38] sm:$0xff]
        %v440 = vld [vmem:[%s268 + $0x40] sm:$0xff]
        %v441 = vld [vmem:[%s268 + $0x48] sm:$0xff]
        %v442 = vld [vmem:[%s268 + $0x50] sm:$0xff]
        %v443 = vld [vmem:[%s268 + $0x58] sm:$0xff]
        %v444 = vld [vmem:[%s268 + $0x60] sm:$0xff]
        %v445 = vld [vmem:[%s268 + $0x68] sm:$0xff]
        %v446 = vld [vmem:[%s268 + $0x70] sm:$0xff]
        %v447 = vld [vmem:[%s268 + $0x78] sm:$0xff]
        %v464 = vunpack.c.l.b16 %v432
        %v465 = vunpack.c.h.b16 %v432
        %v466 = vunpack.c.l.b16 %v433
        %v467 = vunpack.c.h.b16 %v433
        %v468 = vunpack.c.l.b16 %v434
        %v469 = vunpack.c.h.b16 %v434
        %v470 = vunpack.c.l.b16 %v435
        %v471 = vunpack.c.h.b16 %v435
        %v472 = vunpack.c.l.b16 %v436
        %v473 = vunpack.c.h.b16 %v436
        %v474 = vunpack.c.l.b16 %v437
        %v475 = vunpack.c.h.b16 %v437
        %v476 = vunpack.c.l.b16 %v438
        %v477 = vunpack.c.h.b16 %v438
        %v478 = vunpack.c.l.b16 %v439
        %v479 = vunpack.c.h.b16 %v439
        %v480 = vunpack.c.l.b16 %v440
        %v481 = vunpack.c.h.b16 %v440
        %v482 = vunpack.c.l.b16 %v441
        %v483 = vunpack.c.h.b16 %v441
        %v484 = vunpack.c.l.b16 %v442
        %v485 = vunpack.c.h.b16 %v442
        %v486 = vunpack.c.l.b16 %v443
        %v487 = vunpack.c.h.b16 %v443
        %v488 = vunpack.c.l.b16 %v444
        %v489 = vunpack.c.h.b16 %v444
        %v490 = vunpack.c.l.b16 %v445
        %v491 = vunpack.c.h.b16 %v445
        %v492 = vunpack.c.l.b16 %v446
        %v493 = vunpack.c.h.b16 %v446
        %v494 = vunpack.c.l.b16 %v447
        %v495 = vunpack.c.h.b16 %v447
        %v496 = vpack.c.b16 %v466, %v464
        %v497 = vpack.c.b16 %v467, %v465
        %v498 = vpack.c.b16 %v470, %v468
        %v499 = vpack.c.b16 %v471, %v469
        %v500 = vpack.c.b16 %v474, %v472
        %v501 = vpack.c.b16 %v475, %v473
        %v502 = vpack.c.b16 %v478, %v476
        %v503 = vpack.c.b16 %v479, %v477
        %v504 = vpack.c.b16 %v482, %v480
        %v505 = vpack.c.b16 %v483, %v481
        %v506 = vpack.c.b16 %v486, %v484
        %v507 = vpack.c.b16 %v487, %v485
        %v508 = vpack.c.b16 %v490, %v488
        %v509 = vpack.c.b16 %v491, %v489
        %v510 = vpack.c.b16 %v494, %v492
        %v511 = vpack.c.b16 %v495, %v493
        %528 = vmatpush.bf16.msra.mxu0 %v510
        %529 = vmatpush.bf16.msra.mxu0 %v508
        %530 = vmatpush.bf16.msra.mxu0 %v506
        %531 = vmatpush.bf16.msra.mxu0 %v504
        %532 = vmatpush.bf16.msra.mxu0 %v502
        %533 = vmatpush.bf16.msra.mxu0 %v500
        %534 = vmatpush.bf16.msra.mxu0 %v498
        %535 = vmatpush.bf16.msra.mxu0 %v496
        %536 = vmatmul.bf16.gmra.mxu0 %v431
        %v537 = vpop.f32.mrf.mxu0
        %v538 = vadd.f32 0.0, %v537
        %v539 = vpop.f32.mrf.mxu0
        %v540 = vadd.f32 0.0, %v539
        %541 = vdwg.mxu0
        %542 = vmatpush.bf16.msra.mxu0 %v511
        %543 = vmatpush.bf16.msra.mxu0 %v509
        %544 = vmatpush.bf16.msra.mxu0 %v507
        %545 = vmatpush.bf16.msra.mxu0 %v505
        %546 = vmatpush.bf16.msra.mxu0 %v503
        %547 = vmatpush.bf16.msra.mxu0 %v501
        %548 = vmatpush.bf16.msra.mxu0 %v499
        %549 = vmatpush.bf16.msra.mxu0 %v497
        %550 = vmatmul.bf16.gmra.mxu0 %v431
        %v551 = vpop.f32.mrf.mxu0
        %v552 = vadd.f32 0.0, %v551
        %v553 = vpop.f32.mrf.mxu0
        %v554 = vadd.f32 0.0, %v553
        %555 = vdwg.mxu0
        %v556 = vadd.f32 %v427, %v538
        %v557 = vadd.f32 %v428, %v552
        %v558 = vadd.f32 %v429, %v540
        %v559 = vadd.f32 %v430, %v554
        %560 = vst [vmem:[#allocation2] sm:$0xff] %v556
        %561 = vst [vmem:[#allocation2 + $0x8] sm:$0xff] %v557
        %562 = vst [vmem:[#allocation2 + $0x10] sm:$0xff] %v558
        %563 = vst [vmem:[#allocation2 + $0x18] sm:$0xff] %v559
        %p564 = scmp.eq.s32.totalorder %s23, 1
        // Predicated region
        $region71: #{siglip_s2rgb_embed.16} parent=57 // pred_check
          %p565 = pneg %p564
        $region72: #{siglip_s2rgb_embed.16} parent=57 // pred_check_branch
          %567 = sbr.rel (%p565) target = $region74
        $region73: #{siglip_s2rgb_embed.16} parent=57 // pred_region
          %v568 = vld [vmem:[#allocation2] sm:$0xff]
          %v569 = vld [vmem:[#allocation2 + $0x8] sm:$0xff]
          %v570 = vld [vmem:[#allocation2 + $0x10] sm:$0xff]
          %v571 = vld [vmem:[#allocation2 + $0x18] sm:$0xff]
          %v572 = vld [vmem:[%s2] sm:$0x3]
          %v574 = vperm.slane %v572, 0
          %v575 = vperm.slane %v572, 1
          %v578 = vadd.f32 %v568, %v574
          %v579 = vadd.f32 %v569, %v575
          %v580 = vadd.f32 %v570, %v574
          %v581 = vadd.f32 %v571, %v575
          %v582 = vld [vmem:[%s309] sm:$0xff]
          %v583 = vld [vmem:[%s309 + $0x8] sm:$0xff]
          %v584 = vunpack.c.l.bf16 %v582
          %v585 = vunpack.c.h.bf16 %v582
          %v586 = vunpack.c.l.bf16 %v583
          %v587 = vunpack.c.h.bf16 %v583
          %v588 = vadd.f32 %v578, %v584
          %v589 = vadd.f32 %v579, %v585
          %v590 = vadd.f32 %v580, %v586
          %v591 = vadd.f32 %v581, %v587
          %v592 = vpack.c.bf16 %v589, %v588
          %v593 = vpack.c.bf16 %v591, %v590
          %594 = vst [vmem:[%s314] sm:$0xff] %v592
          %595 = vst [vmem:[%s314 + $0x8] sm:$0xff] %v593
        $region74: #{siglip_s2rgb_embed.16} parent=57 // pred_fallthru
          _
        %p596 = scmp.lt.s32.totalorder %s22, 1
        %s597 = scalar_select %p596, %s22, 1
        %s598 = smul.addr %s597, 4
        %s599 = smul.addr %s598, 4
        %s600 = scalar_lea.vmem %s4, %s599
        // Predicated region
        $region75: #{siglip_s2rgb_embed.16} parent=57 // pred_check
          %p601 = pneg %p149
        $region76: #{siglip_s2rgb_embed.16} parent=57 // pred_check_branch
          %603 = sbr.rel (%p601) target = $region78
        $region77: #{siglip_s2rgb_embed.16} parent=57 // pred_region
          _
        $region78: #{siglip_s2rgb_embed.16} parent=57 // pred_fallthru
          _
      $region58: #{siglip_s2rgb_embed.16} parent=5 // pred_fallthru
        _
      %p604 = scmp.le.s32.totalorder 2, %s13
      // Predicated region
      $region79: #{siglip_s2rgb_embed.16} parent=5 // pred_check
        %p605 = pneg %p604
      $region80: #{siglip_s2rgb_embed.16} parent=5 // pred_check_branch
        %607 = sbr.rel (%p605) target = $region82
      $region81: #{siglip_s2rgb_embed.16} parent=5 // pred_region
        %s608 = ssub.s32 %s13, 2
        // Predicated region
        $region83: #{siglip_s2rgb_embed.16} parent=81 // pred_check
          %p609 = pneg %p155
        $region84: #{siglip_s2rgb_embed.16} parent=81 // pred_check_branch
          %611 = sbr.rel (%p609) target = $region86
        $region85: #{siglip_s2rgb_embed.16} parent=81 // pred_region
          %p612 = scmp.lt.s32.totalorder %s24, 1
          %s613 = scalar_select %p612, %s24, 1
          %s614 = smul.addr %s613, 4
          %s615 = smul.addr %s614, 4
          %s616 = scalar_lea.vmem %s4, %s615
        $region86: #{siglip_s2rgb_embed.16} parent=81 // pred_fallthru
          _
      $region82: #{siglip_s2rgb_embed.16} parent=5 // pred_fallthru
        _
    $region6: #{siglip_s2rgb_embed.16} parent=1 // loop_footer
      %s17 = sadd.s32 1, %s13
    $region7: #{siglip_s2rgb_embed.16} parent=1 // loop_footer_branch
      %12 = sbr.rel target = $region3
    $region8: #{siglip_s2rgb_embed.16} parent=1 // loop_exit
      _
    %617 = vsyncpa [#allocation5], 1
    %s618 = scalar_lea.sflag [#allocation5], 1
    %619 = vsyncpa %s618, 1

// kernel: siglip_s2rgb_embed.15
$region0: #{siglip_s2rgb_embed.15}
  #allocation0 [shape = 'u32[]', space=smem, size = 0x4, offset = 0x4, fixed_abs, tag = 'smem constant byte address 0x4 - core index']
  #allocation1 [shape = 'u32[72,128]{1,0:T(1,128)}', space=vmem, size = 0x9000, scoped, tag = 'internal scratch']
  #allocation2 [shape = 'bf16[32,256]{1,0:T(8,128)(2,1)}', space=vmem, size = 0x4000, scoped, tag = 'scratch operand']
  %s0 = inlined_call_operand.vmem [shape: bf16[32,256], index: 0, kind: input, shape index: {}]
  %s1 = inlined_call_operand.vmem [shape: f32[1,256], index: 1, kind: input, shape index: {}]
  %s2 = inlined_call_operand.vmem [shape: f32[1,256], index: 2, kind: input, shape index: {}]
  %s3 = inlined_call_operand.hbm [shape: bf16[256,768], index: 3, kind: input, shape index: {}]
  %s4 = inlined_call_operand.vmem [shape: f32[1,768], index: 4, kind: input, shape index: {}]
  %s5 = inlined_call_operand.vmem [shape: bf16[32,768], index: 5, kind: output, shape index: {}]
  %s6 = sld [smem:[#allocation0]]
  $region95: #{siglip_s2rgb_embed.15} parent=0
    _
  %s8 = ssub.s32 1, %s6
  %s9 = scalar_select 0, %s8, %s6
  $region1: #{siglip_s2rgb_embed.15} parent=0
    #allocation3 [shape = 'u8[262144]{0}', space=vmem, size = 0x40000, scoped, tag = 'input window, operand 3']
    #allocation4 [shape = 's32[2]{0}', space=sflag, size = 0x8, scoped, tag = 'scoped memory for siglip_s2rgb_embed.15']
    #allocation5 [shape = 'u8[32768]{0}', space=vmem, size = 0x8000, scoped, tag = 'output window, operand 0']
    %10 = vsyncpa [#allocation4], 0
    %s11 = scalar_lea.sflag [#allocation4], 1
    %12 = vsyncpa %s11, 0
    loop: start=0, step=1, limit=5
    $region2: #{siglip_s2rgb_embed.15} parent=1 // loop_pre_header
      _
    $region3: #{siglip_s2rgb_embed.15} parent=1 // loop_header
      %s14 = sphi 0, %s18
      %p15 = scmp.ge.s32.totalorder %s14, 5
      %s21 = sphi 0, %s33
      %s22 = sphi 0, %s29
      %s23 = sphi 0, %s21
      %s24 = sphi 0, %s22
      %s25 = sphi 0, %s23
      %s26 = sphi 0, %s24
      %s36 = sphi 0, %s38
      %s39 = sphi 0, %s36
      %s40 = sphi 0, %s39
      %s56 = sphi 0, %s40
      %s60 = sphi 0, %s60
      %s62 = sphi 0, %s60
      %s63 = sphi 0, %s62
      %s77 = sphi 0, %s63
      %s81 = sphi 0, %s81
      %s83 = sphi 0, %s81
      %s84 = sphi 0, %s83
      %s98 = sphi 0, %s84
      %s104 = sphi 0, %s106
      %s107 = sphi 0, %s104
      %s108 = sphi 0, %s107
      %s124 = sphi 0, %s108
      %s130 = sphi 0, %s132
      %s133 = sphi 0, %s130
      %s134 = sphi 0, %s133
      %s150 = sphi 0, %s134
      %s158 = sphi 0, %s160
      %s161 = sphi 0, %s158
      %s162 = sphi 0, %s161
      %s178 = sphi 0, %s162
    $region4: #{siglip_s2rgb_embed.15} parent=1 // loop_header_branch
      %17 = sbr.rel (%p15) target = $region8
    $region5: #{siglip_s2rgb_embed.15} parent=1 // loop_body
      %s19 = ssub.s32 %s14, 1
      %s20 = ssub.s32 %s14, 2
      %s27 = sadd.s32 1, %s22
      %p28 = scmp.ge.s32.totalorder %s27, 3
      %s29 = scalar_select %p28, 0, %s27
      %s30 = sadd.s32 1, %s21
      %s31 = scalar_select %p28, %s30, %s21
      %p32 = scmp.ge.s32.totalorder %s31, 1
      %s33 = scalar_select %p32, 0, %s31
      %s34 = ssub.s32 %s21, %s33
      %p35 = scmp.eq.s32.totalorder %s34, 0
      %s37 = sadd.s32 %s36, 1
      %s38 = scalar_select %p35, %s36, %s37
      %p41 = pneg %p35
      %p42 = scmp.eq.s32.totalorder %s14, 2
      %p43 = por %p41, %p42
      %p44 = scmp.ne.s32.totalorder %s36, %s39
      %p45 = scmp.eq.s32.totalorder %s14, 0
      %p46 = por %p44, %p45
      %p47 = scmp.ne.s32.totalorder %s36, %s39
      %p48 = scmp.eq.s32.totalorder %s19, 2
      %p49 = por %p47, %p48
      %p50 = scmp.ne.s32.totalorder %s39, %s40
      %p51 = scmp.eq.s32.totalorder %s19, 0
      %p52 = por %p50, %p51
      %p53 = scmp.ne.s32.totalorder %s39, %s40
      %p54 = scmp.eq.s32.totalorder %s20, 2
      %p55 = por %p53, %p54
      %p57 = scmp.ne.s32.totalorder %s40, %s56
      %p58 = scmp.eq.s32.totalorder %s20, 0
      %p59 = por %p57, %p58
      %s61 = sadd.s32 %s60, 1
      %p64 = scmp.eq.s32.totalorder %s14, 2
      %p65 = scmp.ne.s32.totalorder %s60, %s62
      %p66 = scmp.eq.s32.totalorder %s14, 0
      %p67 = por %p65, %p66
      %p68 = scmp.ne.s32.totalorder %s60, %s62
      %p69 = scmp.eq.s32.totalorder %s19, 2
      %p70 = por %p68, %p69
      %p71 = scmp.ne.s32.totalorder %s62, %s63
      %p72 = scmp.eq.s32.totalorder %s19, 0
      %p73 = por %p71, %p72
      %p74 = scmp.ne.s32.totalorder %s62, %s63
      %p75 = scmp.eq.s32.totalorder %s20, 2
      %p76 = por %p74, %p75
      %p78 = scmp.ne.s32.totalorder %s63, %s77
      %p79 = scmp.eq.s32.totalorder %s20, 0
      %p80 = por %p78, %p79
      %s82 = sadd.s32 %s81, 1
      %p85 = scmp.eq.s32.totalorder %s14, 2
      %p86 = scmp.ne.s32.totalorder %s81, %s83
      %p87 = scmp.eq.s32.totalorder %s14, 0
      %p88 = por %p86, %p87
      %p89 = scmp.ne.s32.totalorder %s81, %s83
      %p90 = scmp.eq.s32.totalorder %s19, 2
      %p91 = por %p89, %p90
      %p92 = scmp.ne.s32.totalorder %s83, %s84
      %p93 = scmp.eq.s32.totalorder %s19, 0
      %p94 = por %p92, %p93
      %p95 = scmp.ne.s32.totalorder %s83, %s84
      %p96 = scmp.eq.s32.totalorder %s20, 2
      %p97 = por %p95, %p96
      %p99 = scmp.ne.s32.totalorder %s84, %s98
      %p100 = scmp.eq.s32.totalorder %s20, 0
      %p101 = por %p99, %p100
      %s102 = ssub.s32 %s22, %s29
      %p103 = scmp.eq.s32.totalorder %s102, 0
      %s105 = sadd.s32 %s104, 1
      %s106 = scalar_select %p103, %s104, %s105
      %p109 = pneg %p103
      %p110 = scmp.eq.s32.totalorder %s14, 2
      %p111 = por %p109, %p110
      %p112 = scmp.ne.s32.totalorder %s104, %s107
      %p113 = scmp.eq.s32.totalorder %s14, 0
      %p114 = por %p112, %p113
      %p115 = scmp.ne.s32.totalorder %s104, %s107
      %p116 = scmp.eq.s32.totalorder %s19, 2
      %p117 = por %p115, %p116
      %p118 = scmp.ne.s32.totalorder %s107, %s108
      %p119 = scmp.eq.s32.totalorder %s19, 0
      %p120 = por %p118, %p119
      %p121 = scmp.ne.s32.totalorder %s107, %s108
      %p122 = scmp.eq.s32.totalorder %s20, 2
      %p123 = por %p121, %p122
      %p125 = scmp.ne.s32.totalorder %s108, %s124
      %p126 = scmp.eq.s32.totalorder %s20, 0
      %p127 = por %p125, %p126
      %s128 = ssub.s32 %s22, %s29
      %p129 = scmp.eq.s32.totalorder %s128, 0
      %s131 = sadd.s32 %s130, 1
      %s132 = scalar_select %p129, %s130, %s131
      %p135 = pneg %p129
      %p136 = scmp.eq.s32.totalorder %s14, 2
      %p137 = por %p135, %p136
      %p138 = scmp.ne.s32.totalorder %s130, %s133
      %p139 = scmp.eq.s32.totalorder %s14, 0
      %p140 = por %p138, %p139
      %p141 = scmp.ne.s32.totalorder %s130, %s133
      %p142 = scmp.eq.s32.totalorder %s19, 2
      %p143 = por %p141, %p142
      %p144 = scmp.ne.s32.totalorder %s133, %s134
      %p145 = scmp.eq.s32.totalorder %s19, 0
      %p146 = por %p144, %p145
      %p147 = scmp.ne.s32.totalorder %s133, %s134
      %p148 = scmp.eq.s32.totalorder %s20, 2
      %p149 = por %p147, %p148
      %p151 = scmp.ne.s32.totalorder %s134, %s150
      %p152 = scmp.eq.s32.totalorder %s20, 0
      %p153 = por %p151, %p152
      %s154 = ssub.s32 %s21, %s33
      %s155 = ssub.s32 %s22, %s29
      %s156 = sor.u32 %s154, %s155
      %p157 = scmp.eq.s32.totalorder %s156, 0
      %s159 = sadd.s32 %s158, 1
      %s160 = scalar_select %p157, %s158, %s159
      %p163 = pneg %p157
      %p164 = scmp.eq.s32.totalorder %s14, 2
      %p165 = por %p163, %p164
      %p166 = scmp.ne.s32.totalorder %s158, %s161
      %p167 = scmp.eq.s32.totalorder %s14, 0
      %p168 = por %p166, %p167
      %p169 = scmp.ne.s32.totalorder %s158, %s161
      %p170 = scmp.eq.s32.totalorder %s19, 2
      %p171 = por %p169, %p170
      %p172 = scmp.ne.s32.totalorder %s161, %s162
      %p173 = scmp.eq.s32.totalorder %s19, 0
      %p174 = por %p172, %p173
      %p175 = scmp.ne.s32.totalorder %s161, %s162
      %p176 = scmp.eq.s32.totalorder %s20, 2
      %p177 = por %p175, %p176
      %p179 = scmp.ne.s32.totalorder %s162, %s178
      %p180 = scmp.eq.s32.totalorder %s20, 0
      %p181 = por %p179, %p180
      %p182 = scmp.le.s32.totalorder 1, %s14
      %p183 = scmp.lt.s32.totalorder %s14, 4
      %p184 = pnand %p182, %p183
      %p185 = pneg %p184
      // Predicated region
      $region9: #{siglip_s2rgb_embed.15} parent=5 // pred_check
        _
      $region10: #{siglip_s2rgb_embed.15} parent=5 // pred_check_branch
        %187 = sbr.rel (%p184) target = $region12
      $region11: #{siglip_s2rgb_embed.15} parent=5 // pred_region
        %s188 = ssub.s32 %s14, 1
        // Predicated region
        $region13: #{siglip_s2rgb_embed.15} parent=11 // pred_check
          %p189 = pneg %p52
        $region14: #{siglip_s2rgb_embed.15} parent=11 // pred_check_branch
          %191 = sbr.rel (%p189) target = $region16
        $region15: #{siglip_s2rgb_embed.15} parent=11 // pred_region
          %s192 = smul.u32 4, %s23
          %p193 = scmp.lt.s32.totalorder %s192, 3
          %s194 = scalar_select %p193, %s192, 3
          %s195 = smul.addr %s194, 2
          %s196 = smul.addr %s195, 4
          %s197 = scalar_lea.vmem %s0, %s196
          %s198 = smul.u32 4, %s23
        $region16: #{siglip_s2rgb_embed.15} parent=11 // pred_fallthru
          _
        // Predicated region
        $region17: #{siglip_s2rgb_embed.15} parent=11 // pred_check
          %p199 = pneg %p73
        $region18: #{siglip_s2rgb_embed.15} parent=11 // pred_check_branch
          %201 = sbr.rel (%p199) target = $region20
        $region19: #{siglip_s2rgb_embed.15} parent=11 // pred_region
          _
        $region20: #{siglip_s2rgb_embed.15} parent=11 // pred_fallthru
          _
        // Predicated region
        $region21: #{siglip_s2rgb_embed.15} parent=11 // pred_check
          %p202 = pneg %p94
        $region22: #{siglip_s2rgb_embed.15} parent=11 // pred_check_branch
          %204 = sbr.rel (%p202) target = $region24
        $region23: #{siglip_s2rgb_embed.15} parent=11 // pred_region
          _
        $region24: #{siglip_s2rgb_embed.15} parent=11 // pred_fallthru
          _
      $region12: #{siglip_s2rgb_embed.15} parent=5 // pred_fallthru
        _
      %p205 = scmp.lt.s32.totalorder %s14, 3
      // Predicated region
      $region25: #{siglip_s2rgb_embed.15} parent=5 // pred_check
        %p206 = pneg %p205
      $region26: #{siglip_s2rgb_embed.15} parent=5 // pred_check_branch
        %208 = sbr.rel (%p206) target = $region28
      $region27: #{siglip_s2rgb_embed.15} parent=5 // pred_region
        // Predicated region
        $region29: #{siglip_s2rgb_embed.15} parent=27 // pred_check
          %p209 = pneg %p114
        $region30: #{siglip_s2rgb_embed.15} parent=27 // pred_check_branch
          %211 = sbr.rel (%p209) target = $region32
        $region31: #{siglip_s2rgb_embed.15} parent=27 // pred_region
          %s212 = sand.u32 %s104, 1
          %s213 = scalar_lea.sflag [#allocation4], %s212
          %s214 = sand.u32 %s104, 1
          %s215 = smul.addr %s214, 256
          %s216 = scalar_lea.vmem [#allocation3], %s215
          %s217 = smul.u32 2, %s22
          %219 = vsyncadd %s213, 0
          %s220 = smul.addr %s217, 4
          %s221 = scalar_lea.hbm %s3, %s220
          %s222 = sshll.u32 %s221, 4
          %s223 = int_to_ptr.hbm [resolvable:$true] %s222
          %s224 = sshll.u32 %s216, 4
          %s225 = int_to_ptr.vmem [resolvable:$true] %s224
          %230 = dma.hbm_to_vmem [thread:$0]  %s223, 4096, %s225, %s213, 384, 128, 8
        $region32: #{siglip_s2rgb_embed.15} parent=27 // pred_fallthru
          _
        // Predicated region
        $region33: #{siglip_s2rgb_embed.15} parent=27 // pred_check
          %p231 = pneg %p140
        $region34: #{siglip_s2rgb_embed.15} parent=27 // pred_check_branch
          %233 = sbr.rel (%p231) target = $region36
        $region35: #{siglip_s2rgb_embed.15} parent=27 // pred_region
          %s234 = smul.u32 2, %s22
          %p235 = scmp.lt.s32.totalorder %s234, 5
          %s236 = scalar_select %p235, %s234, 5
          %s237 = scalar_lea.vmem %s4, %s236
          %s238 = smul.u32 2, %s22
        $region36: #{siglip_s2rgb_embed.15} parent=27 // pred_fallthru
          _
      $region28: #{siglip_s2rgb_embed.15} parent=5 // pred_fallthru
        _
      %p239 = scmp.le.s32.totalorder 1, %s14
      %p240 = scmp.lt.s32.totalorder %s14, 4
      %p241 = pnand %p239, %p240
      %p242 = pneg %p241
      // Predicated region
      $region37: #{siglip_s2rgb_embed.15} parent=5 // pred_check
        _
      $region38: #{siglip_s2rgb_embed.15} parent=5 // pred_check_branch
        %244 = sbr.rel (%p241) target = $region40
      $region39: #{siglip_s2rgb_embed.15} parent=5 // pred_region
        %s245 = ssub.s32 %s14, 1
        %s246 = sand.u32 %s107, 1
        %s247 = scalar_lea.sflag [#allocation4], %s246
        %s248 = sand.u32 %s107, 1
        %s249 = smul.addr %s248, 256
        %s250 = scalar_lea.vmem [#allocation3], %s249
        // Predicated region
        $region41: #{siglip_s2rgb_embed.15} parent=39 // pred_check
          %p251 = pneg %p120
        $region42: #{siglip_s2rgb_embed.15} parent=39 // pred_check_branch
          %253 = sbr.rel (%p251) target = $region44
        $region43: #{siglip_s2rgb_embed.15} parent=39 // pred_region
          %255 = dma.done %s247, 4096
        $region44: #{siglip_s2rgb_embed.15} parent=39 // pred_fallthru
          _
        %s256 = smul.u32 4, %s23
        %p257 = scmp.lt.s32.totalorder %s256, 3
        %s258 = scalar_select %p257, %s256, 3
        %s259 = smul.addr %s258, 2
        %s260 = smul.addr %s259, 4
        %s261 = scalar_lea.vmem %s0, %s260
        %p262 = pneg %p52
        %p263 = pneg %p49
        %p264 = pneg %p73
        %p265 = pneg %p70
        %p266 = pneg %p94
        %p267 = pneg %p91
        %s268 = sand.u32 %s107, 1
        %s269 = scalar_lea.sflag [#allocation4], %s268
        %s270 = sand.u32 %s107, 1
        %s271 = smul.addr %s270, 256
        %s272 = scalar_lea.vmem [#allocation3], %s271
        %p273 = pneg %p120
        %p274 = pneg %p117
        %s275 = smul.u32 2, %s24
        %p276 = scmp.lt.s32.totalorder %s275, 5
        %s277 = scalar_select %p276, %s275, 5
        %s278 = scalar_lea.vmem %s4, %s277
        %p279 = pneg %p146
        %p280 = pneg %p143
        %p281 = pneg %p174
        %p282 = pneg %p171
        %s283 = sand.u32 %s161, 1
        %s284 = sand.u32 %s161, 1
        %s285 = smul.addr %s284, 32
        %s286 = scalar_lea.vmem [#allocation5], %s285
        %s287 = smul.u32 4, %s23
        %p288 = scmp.lt.s32.totalorder %s287, 3
        %s289 = scalar_select %p288, %s287, 3
        %s290 = smul.addr %s289, 2
        %s291 = smul.addr %s290, 4
        %s292 = scalar_lea.vmem %s0, %s291
        %s293 = smul.u32 4, %s23
        %s294 = smul.u32 2, %s24
        %s295 = smul.u32 2, %s24
        %p296 = scmp.lt.s32.totalorder %s295, 5
        %s297 = scalar_select %p296, %s295, 5
        %s298 = scalar_lea.vmem %s4, %s297
        %s299 = smul.u32 2, %s24
        %s300 = smul.u32 4, %s23
        %s301 = smul.u32 2, %s24
        %p302 = scmp.eq.s32.totalorder %s24, 0
        // Predicated region
        $region45: #{siglip_s2rgb_embed.15} parent=39 // pred_check
          %p303 = pneg %p302
        $region46: #{siglip_s2rgb_embed.15} parent=39 // pred_check_branch
          %305 = sbr.rel (%p303) target = $region48
        $region47: #{siglip_s2rgb_embed.15} parent=39 // pred_region
          %v306 = vld [vmem:[%s292] sm:$0xff]
          %v307 = vld [vmem:[%s292 + $0x8] sm:$0xff]
          %v308 = vld [vmem:[%s292 + $0x10] sm:$0xff]
          %v309 = vld [vmem:[%s292 + $0x18] sm:$0xff]
          %v310 = vunpack.c.l.bf16 %v306
          %v311 = vunpack.c.h.bf16 %v306
          %v312 = vunpack.c.l.bf16 %v307
          %v313 = vunpack.c.h.bf16 %v307
          %v314 = vunpack.c.l.bf16 %v308
          %v315 = vunpack.c.h.bf16 %v308
          %v316 = vunpack.c.l.bf16 %v309
          %v317 = vunpack.c.h.bf16 %v309
          %v318 = vadd.f32 %v310, %v311
          %319 = vadd.xlane.f32.xlu0 %v318
          %v320 = vpop.xlane.xlu0 %319
          %v321 = vadd.f32 %v312, %v313
          %322 = vadd.xlane.f32.xlu0 %v321
          %v323 = vpop.xlane.xlu0 %322
          %v324 = vadd.f32 %v314, %v315
          %325 = vadd.xlane.f32.xlu0 %v324
          %v326 = vpop.xlane.xlu0 %325
          %v327 = vadd.f32 %v316, %v317
          %328 = vadd.xlane.f32.xlu0 %v327
          %v329 = vpop.xlane.xlu0 %328
          %v330 = vrcp.pop 256.0
          %v331 = vmul.f32 256.0, %v330
          %v332 = vsub.f32 1.0, %v331
          %v333 = vmul.f32 %v330, %v332
          %v334 = vadd.f32 %v330, %v333
          %vm335 = vweird.f32 %v330
          %v336 = vsel %vm335, %v330, %v334
          %v337 = vmul.f32 %v320, %v336
          %v338 = vmul.f32 %v323, %v336
          %v339 = vmul.f32 %v326, %v336
          %v340 = vmul.f32 %v329, %v336
          %v341 = vsub.f32 %v310, %v337
          %v342 = vsub.f32 %v311, %v337
          %v343 = vsub.f32 %v312, %v338
          %v344 = vsub.f32 %v313, %v338
          %v345 = vsub.f32 %v314, %v339
          %v346 = vsub.f32 %v315, %v339
          %v347 = vsub.f32 %v316, %v340
          %v348 = vsub.f32 %v317, %v340
          %v349 = vmul.f32 %v341, %v341
          %v350 = vmul.f32 %v342, %v342
          %v351 = vmul.f32 %v343, %v343
          %v352 = vmul.f32 %v344, %v344
          %v353 = vmul.f32 %v345, %v345
          %v354 = vmul.f32 %v346, %v346
          %v355 = vmul.f32 %v347, %v347
          %v356 = vmul.f32 %v348, %v348
          %v357 = vadd.f32 %v349, %v350
          %358 = vadd.xlane.f32.xlu0 %v357
          %v359 = vpop.xlane.xlu0 %358
          %v360 = vadd.f32 %v351, %v352
          %361 = vadd.xlane.f32.xlu0 %v360
          %v362 = vpop.xlane.xlu0 %361
          %v363 = vadd.f32 %v353, %v354
          %364 = vadd.xlane.f32.xlu0 %v363
          %v365 = vpop.xlane.xlu0 %364
          %v366 = vadd.f32 %v355, %v356
          %367 = vadd.xlane.f32.xlu0 %v366
          %v368 = vpop.xlane.xlu0 %367
          %v369 = vmul.f32 %v359, %v336
          %v370 = vmul.f32 %v362, %v336
          %v371 = vmul.f32 %v365, %v336
          %v372 = vmul.f32 %v368, %v336
          %v373 = vadd.f32 %v369, 1e-06
          %v374 = vadd.f32 %v370, 1e-06
          %v375 = vadd.f32 %v371, 1e-06
          %v376 = vadd.f32 %v372, 1e-06
          %v377 = vrsqrt.pop %v373
          %v378 = vmul.f32 %v377, %v373
          %v379 = vmul.f32 %v378, %v377
          %v380 = vmul.f32 0.5, %v379
          %v381 = vsub.f32 1.5, %v380
          %v382 = vmul.f32 %v377, %v381
          %vm383 = vweird.f32 %v373
          %vm384 = vweird.f32 %v377
          %vm385 = vmor %vm383, %vm384
          %v386 = vsel %vm385, %v377, %v382
          %v387 = vrsqrt.pop %v374
          %v388 = vmul.f32 %v387, %v374
          %v389 = vmul.f32 %v388, %v387
          %v390 = vmul.f32 0.5, %v389
          %v391 = vsub.f32 1.5, %v390
          %v392 = vmul.f32 %v387, %v391
          %vm393 = vweird.f32 %v374
          %vm394 = vweird.f32 %v387
          %vm395 = vmor %vm393, %vm394
          %v396 = vsel %vm395, %v387, %v392
          %v397 = vrsqrt.pop %v375
          %v398 = vmul.f32 %v397, %v375
          %v399 = vmul.f32 %v398, %v397
          %v400 = vmul.f32 0.5, %v399
          %v401 = vsub.f32 1.5, %v400
          %v402 = vmul.f32 %v397, %v401
          %vm403 = vweird.f32 %v375
          %vm404 = vweird.f32 %v397
          %vm405 = vmor %vm403, %vm404
          %v406 = vsel %vm405, %v397, %v402
          %v407 = vrsqrt.pop %v376
          %v408 = vmul.f32 %v407, %v376
          %v409 = vmul.f32 %v408, %v407
          %v410 = vmul.f32 0.5, %v409
          %v411 = vsub.f32 1.5, %v410
          %v412 = vmul.f32 %v407, %v411
          %vm413 = vweird.f32 %v376
          %vm414 = vweird.f32 %v407
          %vm415 = vmor %vm413, %vm414
          %v416 = vsel %vm415, %v407, %v412
          %v417 = vmul.f32 %v341, %v386
          %v418 = vmul.f32 %v342, %v386
          %v419 = vmul.f32 %v343, %v396
          %v420 = vmul.f32 %v344, %v396
          %v421 = vmul.f32 %v345, %v406
          %v422 = vmul.f32 %v346, %v406
          %v423 = vmul.f32 %v347, %v416
          %v424 = vmul.f32 %v348, %v416
          %v425 = vld [vmem:[%s1] sm:$0x3]
          %v427 = vperm.slane %v425, 0
          %v428 = vperm.slane %v425, 1
          %v431 = vmul.f32 %v417, %v427
          %v432 = vmul.f32 %v418, %v428
          %v433 = vmul.f32 %v419, %v427
          %v434 = vmul.f32 %v420, %v428
          %v435 = vmul.f32 %v421, %v427
          %v436 = vmul.f32 %v422, %v428
          %v437 = vmul.f32 %v423, %v427
          %v438 = vmul.f32 %v424, %v428
          %v439 = vld [vmem:[%s2] sm:$0x3]
          %v441 = vperm.slane %v439, 0
          %v442 = vperm.slane %v439, 1
          %v445 = vadd.f32 %v431, %v441
          %v446 = vadd.f32 %v432, %v442
          %v447 = vadd.f32 %v433, %v441
          %v448 = vadd.f32 %v434, %v442
          %v449 = vadd.f32 %v435, %v441
          %v450 = vadd.f32 %v436, %v442
          %v451 = vadd.f32 %v437, %v441
          %v452 = vadd.f32 %v438, %v442
          %v453 = vpack.c.bf16 %v446, %v445
          %v454 = vpack.c.bf16 %v448, %v447
          %v455 = vpack.c.bf16 %v450, %v449
          %v456 = vpack.c.bf16 %v452, %v451
          %457 = vst [vmem:[#allocation2] sm:$0xff] %v453
          %458 = vst [vmem:[#allocation2 + $0x8] sm:$0xff] %v454
          %459 = vst [vmem:[#allocation2 + $0x10] sm:$0xff] %v455
          %460 = vst [vmem:[#allocation2 + $0x18] sm:$0xff] %v456
        $region48: #{siglip_s2rgb_embed.15} parent=39 // pred_fallthru
          _
        %v461 = vld [vmem:[#allocation2] sm:$0xff]
        %v462 = vld [vmem:[#allocation2 + $0x8] sm:$0xff]
        %v463 = vld [vmem:[#allocation2 + $0x10] sm:$0xff]
        %v464 = vld [vmem:[#allocation2 + $0x18] sm:$0xff]
        %v465 = vld [vmem:[%s250] sm:$0xff]
        %v466 = vld [vmem:[%s250 + $0x8] sm:$0xff]
        %v467 = vld [vmem:[%s250 + $0x10] sm:$0xff]
        %v468 = vld [vmem:[%s250 + $0x18] sm:$0xff]
        %v469 = vld [vmem:[%s250 + $0x20] sm:$0xff]
        %v470 = vld [vmem:[%s250 + $0x28] sm:$0xff]
        %v471 = vld [vmem:[%s250 + $0x30] sm:$0xff]
        %v472 = vld [vmem:[%s250 + $0x38] sm:$0xff]
        %v473 = vld [vmem:[%s250 + $0x40] sm:$0xff]
        %v474 = vld [vmem:[%s250 + $0x48] sm:$0xff]
        %v475 = vld [vmem:[%s250 + $0x50] sm:$0xff]
        %v476 = vld [vmem:[%s250 + $0x58] sm:$0xff]
        %v477 = vld [vmem:[%s250 + $0x60] sm:$0xff]
        %v478 = vld [vmem:[%s250 + $0x68] sm:$0xff]
        %v479 = vld [vmem:[%s250 + $0x70] sm:$0xff]
        %v480 = vld [vmem:[%s250 + $0x78] sm:$0xff]
        %v481 = vld [vmem:[%s250 + $0x80] sm:$0xff]
        %v482 = vld [vmem:[%s250 + $0x88] sm:$0xff]
        %v483 = vld [vmem:[%s250 + $0x90] sm:$0xff]
        %v484 = vld [vmem:[%s250 + $0x98] sm:$0xff]
        %v485 = vld [vmem:[%s250 + $0xa0] sm:$0xff]
        %v486 = vld [vmem:[%s250 + $0xa8] sm:$0xff]
        %v487 = vld [vmem:[%s250 + $0xb0] sm:$0xff]
        %v488 = vld [vmem:[%s250 + $0xb8] sm:$0xff]
        %v489 = vld [vmem:[%s250 + $0xc0] sm:$0xff]
        %v490 = vld [vmem:[%s250 + $0xc8] sm:$0xff]
        %v491 = vld [vmem:[%s250 + $0xd0] sm:$0xff]
        %v492 = vld [vmem:[%s250 + $0xd8] sm:$0xff]
        %v493 = vld [vmem:[%s250 + $0xe0] sm:$0xff]
        %v494 = vld [vmem:[%s250 + $0xe8] sm:$0xff]
        %v495 = vld [vmem:[%s250 + $0xf0] sm:$0xff]
        %v496 = vld [vmem:[%s250 + $0xf8] sm:$0xff]
        %v497 = vld [vmem:[%s298] sm:$0x3]
        %v499 = vperm.slane %v497, 0
        %v500 = vperm.slane %v497, 1
        %v507 = vunpack.c.l.b16 %v461
        %v508 = vunpack.c.h.b16 %v461
        %v509 = vunpack.c.l.b16 %v462
        %v510 = vunpack.c.h.b16 %v462
        %v511 = vunpack.c.l.b16 %v463
        %v512 = vunpack.c.h.b16 %v463
        %v513 = vunpack.c.l.b16 %v464
        %v514 = vunpack.c.h.b16 %v464
        %v515 = vpack.c.b16 %v509, %v507
        %v516 = vpack.c.b16 %v510, %v508
        %v517 = vpack.c.b16 %v513, %v511
        %v518 = vpack.c.b16 %v514, %v512
        %v555 = vunpack.c.l.b16 %v465
        %v556 = vunpack.c.h.b16 %v465
        %v557 = vunpack.c.l.b16 %v466
        %v558 = vunpack.c.h.b16 %v466
        %v559 = vunpack.c.l.b16 %v467
        %v560 = vunpack.c.h.b16 %v467
        %v561 = vunpack.c.l.b16 %v468
        %v562 = vunpack.c.h.b16 %v468
        %v563 = vunpack.c.l.b16 %v469
        %v564 = vunpack.c.h.b16 %v469
        %v565 = vunpack.c.l.b16 %v470
        %v566 = vunpack.c.h.b16 %v470
        %v567 = vunpack.c.l.b16 %v471
        %v568 = vunpack.c.h.b16 %v471
        %v569 = vunpack.c.l.b16 %v472
        %v570 = vunpack.c.h.b16 %v472
        %v571 = vunpack.c.l.b16 %v473
        %v572 = vunpack.c.h.b16 %v473
        %v573 = vunpack.c.l.b16 %v474
        %v574 = vunpack.c.h.b16 %v474
        %v575 = vunpack.c.l.b16 %v475
        %v576 = vunpack.c.h.b16 %v475
        %v577 = vunpack.c.l.b16 %v476
        %v578 = vunpack.c.h.b16 %v476
        %v579 = vunpack.c.l.b16 %v477
        %v580 = vunpack.c.h.b16 %v477
        %v581 = vunpack.c.l.b16 %v478
        %v582 = vunpack.c.h.b16 %v478
        %v583 = vunpack.c.l.b16 %v479
        %v584 = vunpack.c.h.b16 %v479
        %v585 = vunpack.c.l.b16 %v480
        %v586 = vunpack.c.h.b16 %v480
        %v587 = vunpack.c.l.b16 %v481
        %v588 = vunpack.c.h.b16 %v481
        %v589 = vunpack.c.l.b16 %v482
        %v590 = vunpack.c.h.b16 %v482
        %v591 = vunpack.c.l.b16 %v483
        %v592 = vunpack.c.h.b16 %v483
        %v593 = vunpack.c.l.b16 %v484
        %v594 = vunpack.c.h.b16 %v484
        %v595 = vunpack.c.l.b16 %v485
        %v596 = vunpack.c.h.b16 %v485
        %v597 = vunpack.c.l.b16 %v486
        %v598 = vunpack.c.h.b16 %v486
        %v599 = vunpack.c.l.b16 %v487
        %v600 = vunpack.c.h.b16 %v487
        %v601 = vunpack.c.l.b16 %v488
        %v602 = vunpack.c.h.b16 %v488
        %v603 = vunpack.c.l.b16 %v489
        %v604 = vunpack.c.h.b16 %v489
        %v605 = vunpack.c.l.b16 %v490
        %v606 = vunpack.c.h.b16 %v490
        %v607 = vunpack.c.l.b16 %v491
        %v608 = vunpack.c.h.b16 %v491
        %v609 = vunpack.c.l.b16 %v492
        %v610 = vunpack.c.h.b16 %v492
        %v611 = vunpack.c.l.b16 %v493
        %v612 = vunpack.c.h.b16 %v493
        %v613 = vunpack.c.l.b16 %v494
        %v614 = vunpack.c.h.b16 %v494
        %v615 = vunpack.c.l.b16 %v495
        %v616 = vunpack.c.h.b16 %v495
        %v617 = vunpack.c.l.b16 %v496
        %v618 = vunpack.c.h.b16 %v496
        %v619 = vpack.c.b16 %v557, %v555
        %v620 = vpack.c.b16 %v558, %v556
        %v621 = vpack.c.b16 %v561, %v559
        %v622 = vpack.c.b16 %v562, %v560
        %v623 = vpack.c.b16 %v565, %v563
        %v624 = vpack.c.b16 %v566, %v564
        %v625 = vpack.c.b16 %v569, %v567
        %v626 = vpack.c.b16 %v570, %v568
        %v627 = vpack.c.b16 %v573, %v571
        %v628 = vpack.c.b16 %v574, %v572
        %v629 = vpack.c.b16 %v577, %v575
        %v630 = vpack.c.b16 %v578, %v576
        %v631 = vpack.c.b16 %v581, %v579
        %v632 = vpack.c.b16 %v582, %v580
        %v633 = vpack.c.b16 %v585, %v583
        %v634 = vpack.c.b16 %v586, %v584
        %v635 = vpack.c.b16 %v589, %v587
        %v636 = vpack.c.b16 %v590, %v588
        %v637 = vpack.c.b16 %v593, %v591
        %v638 = vpack.c.b16 %v594, %v592
        %v639 = vpack.c.b16 %v597, %v595
        %v640 = vpack.c.b16 %v598, %v596
        %v641 = vpack.c.b16 %v601, %v599
        %v642 = vpack.c.b16 %v602, %v600
        %v643 = vpack.c.b16 %v605, %v603
        %v644 = vpack.c.b16 %v606, %v604
        %v645 = vpack.c.b16 %v609, %v607
        %v646 = vpack.c.b16 %v610, %v608
        %v647 = vpack.c.b16 %v613, %v611
        %v648 = vpack.c.b16 %v614, %v612
        %v649 = vpack.c.b16 %v617, %v615
        %v650 = vpack.c.b16 %v618, %v616
        %683 = vmatpush.bf16.msra.mxu0 %v633
        %684 = vmatpush.bf16.msra.mxu0 %v631
        %685 = vmatpush.bf16.msra.mxu0 %v629
        %686 = vmatpush.bf16.msra.mxu0 %v627
        %687 = vmatpush.bf16.msra.mxu0 %v625
        %688 = vmatpush.bf16.msra.mxu0 %v623
        %689 = vmatpush.bf16.msra.mxu0 %v621
        %690 = vmatpush.bf16.msra.mxu0 %v619
        %691 = vmatmul.bf16.gmra.mxu0 %v515
        %v692 = vpop.f32.mrf.mxu0
        %v693 = vadd.f32 %v499, %v692
        %v694 = vpop.f32.mrf.mxu0
        %v695 = vadd.f32 %v499, %v694
        %696 = vmatmul.bf16.gmra.mxu0 %v517
        %v697 = vpop.f32.mrf.mxu0
        %v698 = vadd.f32 %v499, %v697
        %v699 = vpop.f32.mrf.mxu0
        %v700 = vadd.f32 %v499, %v699
        %701 = vdwg.mxu0
        %702 = vmatpush.bf16.msra.mxu0 %v649
        %703 = vmatpush.bf16.msra.mxu0 %v647
        %704 = vmatpush.bf16.msra.mxu0 %v645
        %705 = vmatpush.bf16.msra.mxu0 %v643
        %706 = vmatpush.bf16.msra.mxu0 %v641
        %707 = vmatpush.bf16.msra.mxu0 %v639
        %708 = vmatpush.bf16.msra.mxu0 %v637
        %709 = vmatpush.bf16.msra.mxu0 %v635
        %710 = vmatmul.bf16.gmra.mxu0 %v516
        %v711 = vpop.f32.mrf.mxu0
        %v712 = vadd.f32 %v693, %v711
        %v713 = vpop.f32.mrf.mxu0
        %v714 = vadd.f32 %v695, %v713
        %715 = vmatmul.bf16.gmra.mxu0 %v518
        %v716 = vpop.f32.mrf.mxu0
        %v717 = vadd.f32 %v698, %v716
        %v718 = vpop.f32.mrf.mxu0
        %v719 = vadd.f32 %v700, %v718
        %720 = vdwg.mxu0
        %721 = vmatpush.bf16.msra.mxu0 %v634
        %722 = vmatpush.bf16.msra.mxu0 %v632
        %723 = vmatpush.bf16.msra.mxu0 %v630
        %724 = vmatpush.bf16.msra.mxu0 %v628
        %725 = vmatpush.bf16.msra.mxu0 %v626
        %726 = vmatpush.bf16.msra.mxu0 %v624
        %727 = vmatpush.bf16.msra.mxu0 %v622
        %728 = vmatpush.bf16.msra.mxu0 %v620
        %729 = vmatmul.bf16.gmra.mxu0 %v515
        %v730 = vpop.f32.mrf.mxu0
        %v731 = vadd.f32 %v500, %v730
        %v732 = vpop.f32.mrf.mxu0
        %v733 = vadd.f32 %v500, %v732
        %734 = vmatmul.bf16.gmra.mxu0 %v517
        %v735 = vpop.f32.mrf.mxu0
        %v736 = vadd.f32 %v500, %v735
        %v737 = vpop.f32.mrf.mxu0
        %v738 = vadd.f32 %v500, %v737
        %739 = vdwg.mxu0
        %740 = vmatpush.bf16.msra.mxu0 %v650
        %741 = vmatpush.bf16.msra.mxu0 %v648
        %742 = vmatpush.bf16.msra.mxu0 %v646
        %743 = vmatpush.bf16.msra.mxu0 %v644
        %744 = vmatpush.bf16.msra.mxu0 %v642
        %745 = vmatpush.bf16.msra.mxu0 %v640
        %746 = vmatpush.bf16.msra.mxu0 %v638
        %747 = vmatpush.bf16.msra.mxu0 %v636
        %748 = vmatmul.bf16.gmra.mxu0 %v516
        %v749 = vpop.f32.mrf.mxu0
        %v750 = vadd.f32 %v731, %v749
        %v751 = vpop.f32.mrf.mxu0
        %v752 = vadd.f32 %v733, %v751
        %753 = vmatmul.bf16.gmra.mxu0 %v518
        %v754 = vpop.f32.mrf.mxu0
        %v755 = vadd.f32 %v736, %v754
        %v756 = vpop.f32.mrf.mxu0
        %v757 = vadd.f32 %v738, %v756
        %758 = vdwg.mxu0
        %v759 = vpack.c.bf16 %v750, %v712
        %v760 = vpack.c.bf16 %v752, %v714
        %v761 = vpack.c.bf16 %v755, %v717
        %v762 = vpack.c.bf16 %v757, %v719
        %763 = vst [vmem:[%s286] sm:$0xff] %v759
        %764 = vst [vmem:[%s286 + $0x8] sm:$0xff] %v760
        %765 = vst [vmem:[%s286 + $0x10] sm:$0xff] %v761
        %766 = vst [vmem:[%s286 + $0x18] sm:$0xff] %v762
        %s767 = sand.u32 %s161, 1
        %s768 = sand.u32 %s161, 1
        %s769 = smul.addr %s768, 32
        %s770 = scalar_lea.vmem [#allocation5], %s769
        // Predicated region
        $region49: #{siglip_s2rgb_embed.15} parent=39 // pred_check
          %p771 = pneg %p171
        $region50: #{siglip_s2rgb_embed.15} parent=39 // pred_check_branch
          %773 = sbr.rel (%p771) target = $region52
        $region51: #{siglip_s2rgb_embed.15} parent=39 // pred_region
          %s774 = smul.u32 4, %s23
          %s775 = smul.u32 2, %s24
          %s776 = smul.addr %s774, 6
          %s777 = sadd.s32 %s775, %s776
          %s778 = smul.addr %s777, 4
          %s779 = scalar_lea.vmem %s5, %s778
          // Predicated region
          $region53: #{siglip_s2rgb_embed.15} parent=51 // pred_check
            _
          $region54: #{siglip_s2rgb_embed.15} parent=51 // pred_check_branch
            %781 = sbr.rel (0) target = $region56
          $region55: #{siglip_s2rgb_embed.15} parent=51 // pred_region
            // Predicated region
            $region57: #{siglip_s2rgb_embed.15} parent=55 // pred_check
              _
            $region58: #{siglip_s2rgb_embed.15} parent=55 // pred_check_branch
              %783 = sbr.rel (0) target = $region60
            $region59: #{siglip_s2rgb_embed.15} parent=55 // pred_region
              // Predicated region
              $region72: #{siglip_s2rgb_embed.15} parent=59 // pred_check
                _
              $region73: #{siglip_s2rgb_embed.15} parent=59 // pred_check_branch
                %805 = sbr.rel (0) target = $region75
              $region74: #{siglip_s2rgb_embed.15} parent=59 // pred_region
                loop: start=0, step=1, limit=1
                $region76: #{siglip_s2rgb_embed.15} parent=74 // loop_pre_header
                  _
                $region77: #{siglip_s2rgb_embed.15} parent=74 // loop_header
                  %s807 = sphi 0, %s811
                  %p808 = scmp.ge.s32.totalorder %s807, 1
                  %s812 = sphi %s770, %s770
                  %s813 = sphi %s779, %s779
                $region78: #{siglip_s2rgb_embed.15} parent=74 // loop_header_branch
                  %810 = sbr.rel (%p808) target = $region82
                $region79: #{siglip_s2rgb_embed.15} parent=74 // loop_body
                  %v814 = vld [vmem:[%s812] sm:$0xff]
                  %815 = vst [vmem:[%s813] sm:$0xff] %v814
                  %v816 = vld [vmem:[%s812 + $0x8] sm:$0xff]
                  %817 = vst [vmem:[%s813 + $0x18] sm:$0xff] %v816
                  %v818 = vld [vmem:[%s812 + $0x10] sm:$0xff]
                  %819 = vst [vmem:[%s813 + $0x30] sm:$0xff] %v818
                  %v820 = vld [vmem:[%s812 + $0x18] sm:$0xff]
                  %821 = vst [vmem:[%s813 + $0x48] sm:$0xff] %v820
                $region80: #{siglip_s2rgb_embed.15} parent=74 // loop_footer
                  %s811 = sadd.s32 1, %s807
                $region81: #{siglip_s2rgb_embed.15} parent=74 // loop_footer_branch
                  %806 = sbr.rel target = $region77
                $region82: #{siglip_s2rgb_embed.15} parent=74 // loop_exit
                  _
              $region75: #{siglip_s2rgb_embed.15} parent=59 // pred_fallthru
                _
              // Predicated region
              $region83: #{siglip_s2rgb_embed.15} parent=59 // pred_check
                _
              $region84: #{siglip_s2rgb_embed.15} parent=59 // pred_check_branch
                %823 = sbr.rel target = $region86
              $region85: #{siglip_s2rgb_embed.15} parent=59 // pred_region
                _
              $region86: #{siglip_s2rgb_embed.15} parent=59 // pred_fallthru
                _
            $region60: #{siglip_s2rgb_embed.15} parent=55 // pred_fallthru
              _
            // Predicated region
            $region61: #{siglip_s2rgb_embed.15} parent=55 // pred_check
              _
            $region62: #{siglip_s2rgb_embed.15} parent=55 // pred_check_branch
              %785 = sbr.rel target = $region64
            $region63: #{siglip_s2rgb_embed.15} parent=55 // pred_region
              %s787 = ssub.s32 256, 1
              loop: start=0, step=1, limit=1
              $region65: #{siglip_s2rgb_embed.15} parent=63 // loop_pre_header
                _
              $region66: #{siglip_s2rgb_embed.15} parent=63 // loop_header
                %s789 = sphi 0, %s793
                %p790 = scmp.ge.s32.totalorder %s789, 1
                %s794 = sphi %s770, %s770
                %s795 = sphi %s779, %s779
              $region67: #{siglip_s2rgb_embed.15} parent=63 // loop_header_branch
                %792 = sbr.rel (%p790) target = $region71
              $region68: #{siglip_s2rgb_embed.15} parent=63 // loop_body
                %v796 = vld [vmem:[%s794] sm:%s787]
                %797 = vst [vmem:[%s795] sm:%s787] %v796
                %v798 = vld [vmem:[%s794 + $0x8] sm:%s787]
                %799 = vst [vmem:[%s795 + $0x18] sm:%s787] %v798
                %v800 = vld [vmem:[%s794 + $0x10] sm:%s787]
                %801 = vst [vmem:[%s795 + $0x30] sm:%s787] %v800
                %v802 = vld [vmem:[%s794 + $0x18] sm:%s787]
                %803 = vst [vmem:[%s795 + $0x48] sm:%s787] %v802
              $region69: #{siglip_s2rgb_embed.15} parent=63 // loop_footer
                %s793 = sadd.s32 1, %s789
              $region70: #{siglip_s2rgb_embed.15} parent=63 // loop_footer_branch
                %788 = sbr.rel target = $region66
              $region71: #{siglip_s2rgb_embed.15} parent=63 // loop_exit
                _
            $region64: #{siglip_s2rgb_embed.15} parent=55 // pred_fallthru
              _
          $region56: #{siglip_s2rgb_embed.15} parent=51 // pred_fallthru
            _
          %824 = vnop
        $region52: #{siglip_s2rgb_embed.15} parent=39 // pred_fallthru
          _
      $region40: #{siglip_s2rgb_embed.15} parent=5 // pred_fallthru
        _
      %p825 = scmp.le.s32.totalorder 2, %s14
      // Predicated region
      $region87: #{siglip_s2rgb_embed.15} parent=5 // pred_check
        %p826 = pneg %p825
      $region88: #{siglip_s2rgb_embed.15} parent=5 // pred_check_branch
        %828 = sbr.rel (%p826) target = $region90
      $region89: #{siglip_s2rgb_embed.15} parent=5 // pred_region
        %s829 = ssub.s32 %s14, 2
        // Predicated region
        $region91: #{siglip_s2rgb_embed.15} parent=89 // pred_check
          %p830 = pneg %p177
        $region92: #{siglip_s2rgb_embed.15} parent=89 // pred_check_branch
          %832 = sbr.rel (%p830) target = $region94
        $region93: #{siglip_s2rgb_embed.15} parent=89 // pred_region
          %s833 = sand.u32 %s162, 1
          %s834 = sand.u32 %s162, 1
          %s835 = smul.addr %s834, 32
          %s836 = scalar_lea.vmem [#allocation5], %s835
        $region94: #{siglip_s2rgb_embed.15} parent=89 // pred_fallthru
          _
      $region90: #{siglip_s2rgb_embed.15} parent=5 // pred_fallthru
        _
    $region6: #{siglip_s2rgb_embed.15} parent=1 // loop_footer
      %s18 = sadd.s32 1, %s14
    $region7: #{siglip_s2rgb_embed.15} parent=1 // loop_footer_branch
      %13 = sbr.rel target = $region3
    $region8: #{siglip_s2rgb_embed.15} parent=1 // loop_exit
      _
    %837 = vsyncpa [#allocation4], 1
    %s838 = scalar_lea.sflag [#allocation4], 1
    %839 = vsyncpa %s838, 1

// kernel: siglip_s2rgb_embed.17
$region0: #{siglip_s2rgb_embed.17}
  #allocation0 [shape = 'u32[]', space=smem, size = 0x4, offset = 0x4, fixed_abs, tag = 'smem constant byte address 0x4 - core index']
  #allocation1 [shape = 'u32[72,128]{1,0:T(1,128)}', space=vmem, size = 0x9000, scoped, tag = 'internal scratch']
  #allocation2 [shape = 'bf16[32,256]{1,0:T(8,128)(2,1)}', space=vmem, size = 0x4000, scoped, tag = 'scratch operand']
  %s0 = inlined_call_operand.vmem [shape: bf16[32,256], index: 0, kind: input, shape index: {}]
  %s1 = inlined_call_operand.vmem [shape: f32[1,256], index: 1, kind: input, shape index: {}]
  %s2 = inlined_call_operand.vmem [shape: f32[1,256], index: 2, kind: input, shape index: {}]
  %s3 = inlined_call_operand.vmem [shape: bf16[256,1024], index: 3, kind: input, shape index: {}]
  %s4 = inlined_call_operand.vmem [shape: f32[1,1024], index: 4, kind: input, shape index: {}]
  %s5 = inlined_call_operand.vmem [shape: bf16[32,1024], index: 5, kind: output, shape index: {}]
  %s6 = sld [smem:[#allocation0]]
  $region129: #{siglip_s2rgb_embed.17} parent=0
    _
  %s8 = ssub.s32 1, %s6
  %s9 = scalar_select 0, %s8, %s6
  $region1: #{siglip_s2rgb_embed.17} parent=0
    #allocation3 [shape = 'u8[262144]{0}', space=vmem, size = 0x40000, scoped, tag = 'input window, operand 3']
    #allocation4 [shape = 'u8[32768]{0}', space=vmem, size = 0x8000, scoped, tag = 'output window, operand 0']
    loop: start=0, step=1, limit=6
    $region2: #{siglip_s2rgb_embed.17} parent=1 // loop_pre_header
      _
    $region3: #{siglip_s2rgb_embed.17} parent=1 // loop_header
      %s11 = sphi 0, %s15
      %p12 = scmp.ge.s32.totalorder %s11, 6
      %s18 = sphi 0, %s30
      %s19 = sphi 0, %s26
      %s20 = sphi 0, %s18
      %s21 = sphi 0, %s19
      %s22 = sphi 0, %s20
      %s23 = sphi 0, %s21
      %s33 = sphi 0, %s35
      %s36 = sphi 0, %s33
      %s37 = sphi 0, %s36
      %s53 = sphi 0, %s37
      %s57 = sphi 0, %s57
      %s59 = sphi 0, %s57
      %s60 = sphi 0, %s59
      %s74 = sphi 0, %s60
      %s78 = sphi 0, %s78
      %s80 = sphi 0, %s78
      %s81 = sphi 0, %s80
      %s95 = sphi 0, %s81
      %s101 = sphi 0, %s103
      %s104 = sphi 0, %s101
      %s105 = sphi 0, %s104
      %s121 = sphi 0, %s105
      %s127 = sphi 0, %s129
      %s130 = sphi 0, %s127
      %s131 = sphi 0, %s130
      %s147 = sphi 0, %s131
      %s155 = sphi 0, %s157
      %s158 = sphi 0, %s155
      %s159 = sphi 0, %s158
      %s175 = sphi 0, %s159
    $region4: #{siglip_s2rgb_embed.17} parent=1 // loop_header_branch
      %14 = sbr.rel (%p12) target = $region8
    $region5: #{siglip_s2rgb_embed.17} parent=1 // loop_body
      %s16 = ssub.s32 %s11, 1
      %s17 = ssub.s32 %s11, 2
      %s24 = sadd.s32 1, %s19
      %p25 = scmp.ge.s32.totalorder %s24, 4
      %s26 = scalar_select %p25, 0, %s24
      %s27 = sadd.s32 1, %s18
      %s28 = scalar_select %p25, %s27, %s18
      %p29 = scmp.ge.s32.totalorder %s28, 1
      %s30 = scalar_select %p29, 0, %s28
      %s31 = ssub.s32 %s18, %s30
      %p32 = scmp.eq.s32.totalorder %s31, 0
      %s34 = sadd.s32 %s33, 1
      %s35 = scalar_select %p32, %s33, %s34
      %p38 = pneg %p32
      %p39 = scmp.eq.s32.totalorder %s11, 3
      %p40 = por %p38, %p39
      %p41 = scmp.ne.s32.totalorder %s33, %s36
      %p42 = scmp.eq.s32.totalorder %s11, 0
      %p43 = por %p41, %p42
      %p44 = scmp.ne.s32.totalorder %s33, %s36
      %p45 = scmp.eq.s32.totalorder %s16, 3
      %p46 = por %p44, %p45
      %p47 = scmp.ne.s32.totalorder %s36, %s37
      %p48 = scmp.eq.s32.totalorder %s16, 0
      %p49 = por %p47, %p48
      %p50 = scmp.ne.s32.totalorder %s36, %s37
      %p51 = scmp.eq.s32.totalorder %s17, 3
      %p52 = por %p50, %p51
      %p54 = scmp.ne.s32.totalorder %s37, %s53
      %p55 = scmp.eq.s32.totalorder %s17, 0
      %p56 = por %p54, %p55
      %s58 = sadd.s32 %s57, 1
      %p61 = scmp.eq.s32.totalorder %s11, 3
      %p62 = scmp.ne.s32.totalorder %s57, %s59
      %p63 = scmp.eq.s32.totalorder %s11, 0
      %p64 = por %p62, %p63
      %p65 = scmp.ne.s32.totalorder %s57, %s59
      %p66 = scmp.eq.s32.totalorder %s16, 3
      %p67 = por %p65, %p66
      %p68 = scmp.ne.s32.totalorder %s59, %s60
      %p69 = scmp.eq.s32.totalorder %s16, 0
      %p70 = por %p68, %p69
      %p71 = scmp.ne.s32.totalorder %s59, %s60
      %p72 = scmp.eq.s32.totalorder %s17, 3
      %p73 = por %p71, %p72
      %p75 = scmp.ne.s32.totalorder %s60, %s74
      %p76 = scmp.eq.s32.totalorder %s17, 0
      %p77 = por %p75, %p76
      %s79 = sadd.s32 %s78, 1
      %p82 = scmp.eq.s32.totalorder %s11, 3
      %p83 = scmp.ne.s32.totalorder %s78, %s80
      %p84 = scmp.eq.s32.totalorder %s11, 0
      %p85 = por %p83, %p84
      %p86 = scmp.ne.s32.totalorder %s78, %s80
      %p87 = scmp.eq.s32.totalorder %s16, 3
      %p88 = por %p86, %p87
      %p89 = scmp.ne.s32.totalorder %s80, %s81
      %p90 = scmp.eq.s32.totalorder %s16, 0
      %p91 = por %p89, %p90
      %p92 = scmp.ne.s32.totalorder %s80, %s81
      %p93 = scmp.eq.s32.totalorder %s17, 3
      %p94 = por %p92, %p93
      %p96 = scmp.ne.s32.totalorder %s81, %s95
      %p97 = scmp.eq.s32.totalorder %s17, 0
      %p98 = por %p96, %p97
      %s99 = ssub.s32 %s19, %s26
      %p100 = scmp.eq.s32.totalorder %s99, 0
      %s102 = sadd.s32 %s101, 1
      %s103 = scalar_select %p100, %s101, %s102
      %p106 = pneg %p100
      %p107 = scmp.eq.s32.totalorder %s11, 3
      %p108 = por %p106, %p107
      %p109 = scmp.ne.s32.totalorder %s101, %s104
      %p110 = scmp.eq.s32.totalorder %s11, 0
      %p111 = por %p109, %p110
      %p112 = scmp.ne.s32.totalorder %s101, %s104
      %p113 = scmp.eq.s32.totalorder %s16, 3
      %p114 = por %p112, %p113
      %p115 = scmp.ne.s32.totalorder %s104, %s105
      %p116 = scmp.eq.s32.totalorder %s16, 0
      %p117 = por %p115, %p116
      %p118 = scmp.ne.s32.totalorder %s104, %s105
      %p119 = scmp.eq.s32.totalorder %s17, 3
      %p120 = por %p118, %p119
      %p122 = scmp.ne.s32.totalorder %s105, %s121
      %p123 = scmp.eq.s32.totalorder %s17, 0
      %p124 = por %p122, %p123
      %s125 = ssub.s32 %s19, %s26
      %p126 = scmp.eq.s32.totalorder %s125, 0
      %s128 = sadd.s32 %s127, 1
      %s129 = scalar_select %p126, %s127, %s128
      %p132 = pneg %p126
      %p133 = scmp.eq.s32.totalorder %s11, 3
      %p134 = por %p132, %p133
      %p135 = scmp.ne.s32.totalorder %s127, %s130
      %p136 = scmp.eq.s32.totalorder %s11, 0
      %p137 = por %p135, %p136
      %p138 = scmp.ne.s32.totalorder %s127, %s130
      %p139 = scmp.eq.s32.totalorder %s16, 3
      %p140 = por %p138, %p139
      %p141 = scmp.ne.s32.totalorder %s130, %s131
      %p142 = scmp.eq.s32.totalorder %s16, 0
      %p143 = por %p141, %p142
      %p144 = scmp.ne.s32.totalorder %s130, %s131
      %p145 = scmp.eq.s32.totalorder %s17, 3
      %p146 = por %p144, %p145
      %p148 = scmp.ne.s32.totalorder %s131, %s147
      %p149 = scmp.eq.s32.totalorder %s17, 0
      %p150 = por %p148, %p149
      %s151 = ssub.s32 %s18, %s30
      %s152 = ssub.s32 %s19, %s26
      %s153 = sor.u32 %s151, %s152
      %p154 = scmp.eq.s32.totalorder %s153, 0
      %s156 = sadd.s32 %s155, 1
      %s157 = scalar_select %p154, %s155, %s156
      %p160 = pneg %p154
      %p161 = scmp.eq.s32.totalorder %s11, 3
      %p162 = por %p160, %p161
      %p163 = scmp.ne.s32.totalorder %s155, %s158
      %p164 = scmp.eq.s32.totalorder %s11, 0
      %p165 = por %p163, %p164
      %p166 = scmp.ne.s32.totalorder %s155, %s158
      %p167 = scmp.eq.s32.totalorder %s16, 3
      %p168 = por %p166, %p167
      %p169 = scmp.ne.s32.totalorder %s158, %s159
      %p170 = scmp.eq.s32.totalorder %s16, 0
      %p171 = por %p169, %p170
      %p172 = scmp.ne.s32.totalorder %s158, %s159
      %p173 = scmp.eq.s32.totalorder %s17, 3
      %p174 = por %p172, %p173
      %p176 = scmp.ne.s32.totalorder %s159, %s175
      %p177 = scmp.eq.s32.totalorder %s17, 0
      %p178 = por %p176, %p177
      %p179 = scmp.le.s32.totalorder 1, %s11
      %p180 = scmp.lt.s32.totalorder %s11, 5
      %p181 = pnand %p179, %p180
      %p182 = pneg %p181
      // Predicated region
      $region9: #{siglip_s2rgb_embed.17} parent=5 // pred_check
        _
      $region10: #{siglip_s2rgb_embed.17} parent=5 // pred_check_branch
        %184 = sbr.rel (%p181) target = $region12
      $region11: #{siglip_s2rgb_embed.17} parent=5 // pred_region
        %s185 = ssub.s32 %s11, 1
        // Predicated region
        $region13: #{siglip_s2rgb_embed.17} parent=11 // pred_check
          %p186 = pneg %p49
        $region14: #{siglip_s2rgb_embed.17} parent=11 // pred_check_branch
          %188 = sbr.rel (%p186) target = $region16
        $region15: #{siglip_s2rgb_embed.17} parent=11 // pred_region
          %s189 = smul.u32 4, %s20
          %p190 = scmp.lt.s32.totalorder %s189, 3
          %s191 = scalar_select %p190, %s189, 3
          %s192 = smul.addr %s191, 2
          %s193 = smul.addr %s192, 4
          %s194 = scalar_lea.vmem %s0, %s193
          %s195 = smul.u32 4, %s20
        $region16: #{siglip_s2rgb_embed.17} parent=11 // pred_fallthru
          _
        // Predicated region
        $region17: #{siglip_s2rgb_embed.17} parent=11 // pred_check
          %p196 = pneg %p70
        $region18: #{siglip_s2rgb_embed.17} parent=11 // pred_check_branch
          %198 = sbr.rel (%p196) target = $region20
        $region19: #{siglip_s2rgb_embed.17} parent=11 // pred_region
          _
        $region20: #{siglip_s2rgb_embed.17} parent=11 // pred_fallthru
          _
        // Predicated region
        $region21: #{siglip_s2rgb_embed.17} parent=11 // pred_check
          %p199 = pneg %p91
        $region22: #{siglip_s2rgb_embed.17} parent=11 // pred_check_branch
          %201 = sbr.rel (%p199) target = $region24
        $region23: #{siglip_s2rgb_embed.17} parent=11 // pred_region
          _
        $region24: #{siglip_s2rgb_embed.17} parent=11 // pred_fallthru
          _
      $region12: #{siglip_s2rgb_embed.17} parent=5 // pred_fallthru
        _
      %p202 = scmp.lt.s32.totalorder %s11, 4
      // Predicated region
      $region25: #{siglip_s2rgb_embed.17} parent=5 // pred_check
        %p203 = pneg %p202
      $region26: #{siglip_s2rgb_embed.17} parent=5 // pred_check_branch
        %205 = sbr.rel (%p203) target = $region28
      $region27: #{siglip_s2rgb_embed.17} parent=5 // pred_region
        // Predicated region
        $region29: #{siglip_s2rgb_embed.17} parent=27 // pred_check
          %p206 = pneg %p111
        $region30: #{siglip_s2rgb_embed.17} parent=27 // pred_check_branch
          %208 = sbr.rel (%p206) target = $region32
        $region31: #{siglip_s2rgb_embed.17} parent=27 // pred_region
          %s209 = sand.u32 %s101, 1
          %s210 = sand.u32 %s101, 1
          %s211 = smul.addr %s210, 256
          %s212 = scalar_lea.vmem [#allocation3], %s211
          %s213 = smul.u32 2, %s19
          %s214 = smul.addr %s213, 4
          %s215 = scalar_lea.vmem %s3, %s214
          // Predicated region
          $region33: #{siglip_s2rgb_embed.17} parent=31 // pred_check
            _
          $region34: #{siglip_s2rgb_embed.17} parent=31 // pred_check_branch
            %217 = sbr.rel (0) target = $region36
          $region35: #{siglip_s2rgb_embed.17} parent=31 // pred_region
            // Predicated region
            $region37: #{siglip_s2rgb_embed.17} parent=35 // pred_check
              _
            $region38: #{siglip_s2rgb_embed.17} parent=35 // pred_check_branch
              %219 = sbr.rel (0) target = $region40
            $region39: #{siglip_s2rgb_embed.17} parent=35 // pred_region
              // Predicated region
              $region52: #{siglip_s2rgb_embed.17} parent=39 // pred_check
                _
              $region53: #{siglip_s2rgb_embed.17} parent=39 // pred_check_branch
                %297 = sbr.rel (0) target = $region55
              $region54: #{siglip_s2rgb_embed.17} parent=39 // pred_region
                loop: start=0, step=1, limit=1
                $region56: #{siglip_s2rgb_embed.17} parent=54 // loop_pre_header
                  _
                $region57: #{siglip_s2rgb_embed.17} parent=54 // loop_header
                  %s299 = sphi 0, %s303
                  %p300 = scmp.ge.s32.totalorder %s299, 1
                  %s304 = sphi %s215, %s215
                  %s305 = sphi %s212, %s212
                $region58: #{siglip_s2rgb_embed.17} parent=54 // loop_header_branch
                  %302 = sbr.rel (%p300) target = $region62
                $region59: #{siglip_s2rgb_embed.17} parent=54 // loop_body
                  %v306 = vld [vmem:[%s304] sm:$0xff]
                  %307 = vst [vmem:[%s305] sm:$0xff] %v306
                  %v308 = vld [vmem:[%s304 + $0x20] sm:$0xff]
                  %309 = vst [vmem:[%s305 + $0x8] sm:$0xff] %v308
                  %v310 = vld [vmem:[%s304 + $0x40] sm:$0xff]
                  %311 = vst [vmem:[%s305 + $0x10] sm:$0xff] %v310
                  %v312 = vld [vmem:[%s304 + $0x60] sm:$0xff]
                  %313 = vst [vmem:[%s305 + $0x18] sm:$0xff] %v312
                  %v314 = vld [vmem:[%s304 + $0x80] sm:$0xff]
                  %315 = vst [vmem:[%s305 + $0x20] sm:$0xff] %v314
                  %v316 = vld [vmem:[%s304 + $0xa0] sm:$0xff]
                  %317 = vst [vmem:[%s305 + $0x28] sm:$0xff] %v316
                  %v318 = vld [vmem:[%s304 + $0xc0] sm:$0xff]
                  %319 = vst [vmem:[%s305 + $0x30] sm:$0xff] %v318
                  %v320 = vld [vmem:[%s304 + $0xe0] sm:$0xff]
                  %321 = vst [vmem:[%s305 + $0x38] sm:$0xff] %v320
                  %v322 = vld [vmem:[%s304 + $0x100] sm:$0xff]
                  %323 = vst [vmem:[%s305 + $0x40] sm:$0xff] %v322
                  %v324 = vld [vmem:[%s304 + $0x120] sm:$0xff]
                  %325 = vst [vmem:[%s305 + $0x48] sm:$0xff] %v324
                  %v326 = vld [vmem:[%s304 + $0x140] sm:$0xff]
                  %327 = vst [vmem:[%s305 + $0x50] sm:$0xff] %v326
                  %v328 = vld [vmem:[%s304 + $0x160] sm:$0xff]
                  %329 = vst [vmem:[%s305 + $0x58] sm:$0xff] %v328
                  %v330 = vld [vmem:[%s304 + $0x180] sm:$0xff]
                  %331 = vst [vmem:[%s305 + $0x60] sm:$0xff] %v330
                  %v332 = vld [vmem:[%s304 + $0x1a0] sm:$0xff]
                  %333 = vst [vmem:[%s305 + $0x68] sm:$0xff] %v332
                  %v334 = vld [vmem:[%s304 + $0x1c0] sm:$0xff]
                  %335 = vst [vmem:[%s305 + $0x70] sm:$0xff] %v334
                  %v336 = vld [vmem:[%s304 + $0x1e0] sm:$0xff]
                  %337 = vst [vmem:[%s305 + $0x78] sm:$0xff] %v336
                  %v338 = vld [vmem:[%s304 + $0x200] sm:$0xff]
                  %339 = vst [vmem:[%s305 + $0x80] sm:$0xff] %v338
                  %v340 = vld [vmem:[%s304 + $0x220] sm:$0xff]
                  %341 = vst [vmem:[%s305 + $0x88] sm:$0xff] %v340
                  %v342 = vld [vmem:[%s304 + $0x240] sm:$0xff]
                  %343 = vst [vmem:[%s305 + $0x90] sm:$0xff] %v342
                  %v344 = vld [vmem:[%s304 + $0x260] sm:$0xff]
                  %345 = vst [vmem:[%s305 + $0x98] sm:$0xff] %v344
                  %v346 = vld [vmem:[%s304 + $0x280] sm:$0xff]
                  %347 = vst [vmem:[%s305 + $0xa0] sm:$0xff] %v346
                  %v348 = vld [vmem:[%s304 + $0x2a0] sm:$0xff]
                  %349 = vst [vmem:[%s305 + $0xa8] sm:$0xff] %v348
                  %v350 = vld [vmem:[%s304 + $0x2c0] sm:$0xff]
                  %351 = vst [vmem:[%s305 + $0xb0] sm:$0xff] %v350
                  %v352 = vld [vmem:[%s304 + $0x2e0] sm:$0xff]
                  %353 = vst [vmem:[%s305 + $0xb8] sm:$0xff] %v352
                  %v354 = vld [vmem:[%s304 + $0x300] sm:$0xff]
                  %355 = vst [vmem:[%s305 + $0xc0] sm:$0xff] %v354
                  %v356 = vld [vmem:[%s304 + $0x320] sm:$0xff]
                  %357 = vst [vmem:[%s305 + $0xc8] sm:$0xff] %v356
                  %v358 = vld [vmem:[%s304 + $0x340] sm:$0xff]
                  %359 = vst [vmem:[%s305 + $0xd0] sm:$0xff] %v358
                  %v360 = vld [vmem:[%s304 + $0x360] sm:$0xff]
                  %361 = vst [vmem:[%s305 + $0xd8] sm:$0xff] %v360
                  %v362 = vld [vmem:[%s304 + $0x380] sm:$0xff]
                  %363 = vst [vmem:[%s305 + $0xe0] sm:$0xff] %v362
                  %v364 = vld [vmem:[%s304 + $0x3a0] sm:$0xff]
                  %365 = vst [vmem:[%s305 + $0xe8] sm:$0xff] %v364
                  %v366 = vld [vmem:[%s304 + $0x3c0] sm:$0xff]
                  %367 = vst [vmem:[%s305 + $0xf0] sm:$0xff] %v366
                  %v368 = vld [vmem:[%s304 + $0x3e0] sm:$0xff]
                  %369 = vst [vmem:[%s305 + $0xf8] sm:$0xff] %v368
                $region60: #{siglip_s2rgb_embed.17} parent=54 // loop_footer
                  %s303 = sadd.s32 1, %s299
                $region61: #{siglip_s2rgb_embed.17} parent=54 // loop_footer_branch
                  %298 = sbr.rel target = $region57
                $region62: #{siglip_s2rgb_embed.17} parent=54 // loop_exit
                  _
              $region55: #{siglip_s2rgb_embed.17} parent=39 // pred_fallthru
                _
              // Predicated region
              $region63: #{siglip_s2rgb_embed.17} parent=39 // pred_check
                _
              $region64: #{siglip_s2rgb_embed.17} parent=39 // pred_check_branch
                %371 = sbr.rel target = $region66
              $region65: #{siglip_s2rgb_embed.17} parent=39 // pred_region
                _
              $region66: #{siglip_s2rgb_embed.17} parent=39 // pred_fallthru
                _
            $region40: #{siglip_s2rgb_embed.17} parent=35 // pred_fallthru
              _
            // Predicated region
            $region41: #{siglip_s2rgb_embed.17} parent=35 // pred_check
              _
            $region42: #{siglip_s2rgb_embed.17} parent=35 // pred_check_branch
              %221 = sbr.rel target = $region44
            $region43: #{siglip_s2rgb_embed.17} parent=35 // pred_region
              %s223 = ssub.s32 256, 1
              loop: start=0, step=1, limit=1
              $region45: #{siglip_s2rgb_embed.17} parent=43 // loop_pre_header
                _
              $region46: #{siglip_s2rgb_embed.17} parent=43 // loop_header
                %s225 = sphi 0, %s229
                %p226 = scmp.ge.s32.totalorder %s225, 1
                %s230 = sphi %s215, %s215
                %s231 = sphi %s212, %s212
              $region47: #{siglip_s2rgb_embed.17} parent=43 // loop_header_branch
                %228 = sbr.rel (%p226) target = $region51
              $region48: #{siglip_s2rgb_embed.17} parent=43 // loop_body
                %v232 = vld [vmem:[%s230] sm:%s223]
                %233 = vst [vmem:[%s231] sm:%s223] %v232
                %v234 = vld [vmem:[%s230 + $0x20] sm:%s223]
                %235 = vst [vmem:[%s231 + $0x8] sm:%s223] %v234
                %v236 = vld [vmem:[%s230 + $0x40] sm:%s223]
                %237 = vst [vmem:[%s231 + $0x10] sm:%s223] %v236
                %v238 = vld [vmem:[%s230 + $0x60] sm:%s223]
                %239 = vst [vmem:[%s231 + $0x18] sm:%s223] %v238
                %v240 = vld [vmem:[%s230 + $0x80] sm:%s223]
                %241 = vst [vmem:[%s231 + $0x20] sm:%s223] %v240
                %v242 = vld [vmem:[%s230 + $0xa0] sm:%s223]
                %243 = vst [vmem:[%s231 + $0x28] sm:%s223] %v242
                %v244 = vld [vmem:[%s230 + $0xc0] sm:%s223]
                %245 = vst [vmem:[%s231 + $0x30] sm:%s223] %v244
                %v246 = vld [vmem:[%s230 + $0xe0] sm:%s223]
                %247 = vst [vmem:[%s231 + $0x38] sm:%s223] %v246
                %v248 = vld [vmem:[%s230 + $0x100] sm:%s223]
                %249 = vst [vmem:[%s231 + $0x40] sm:%s223] %v248
                %v250 = vld [vmem:[%s230 + $0x120] sm:%s223]
                %251 = vst [vmem:[%s231 + $0x48] sm:%s223] %v250
                %v252 = vld [vmem:[%s230 + $0x140] sm:%s223]
                %253 = vst [vmem:[%s231 + $0x50] sm:%s223] %v252
                %v254 = vld [vmem:[%s230 + $0x160] sm:%s223]
                %255 = vst [vmem:[%s231 + $0x58] sm:%s223] %v254
                %v256 = vld [vmem:[%s230 + $0x180] sm:%s223]
                %257 = vst [vmem:[%s231 + $0x60] sm:%s223] %v256
                %v258 = vld [vmem:[%s230 + $0x1a0] sm:%s223]
                %259 = vst [vmem:[%s231 + $0x68] sm:%s223] %v258
                %v260 = vld [vmem:[%s230 + $0x1c0] sm:%s223]
                %261 = vst [vmem:[%s231 + $0x70] sm:%s223] %v260
                %v262 = vld [vmem:[%s230 + $0x1e0] sm:%s223]
                %263 = vst [vmem:[%s231 + $0x78] sm:%s223] %v262
                %v264 = vld [vmem:[%s230 + $0x200] sm:%s223]
                %265 = vst [vmem:[%s231 + $0x80] sm:%s223] %v264
                %v266 = vld [vmem:[%s230 + $0x220] sm:%s223]
                %267 = vst [vmem:[%s231 + $0x88] sm:%s223] %v266
                %v268 = vld [vmem:[%s230 + $0x240] sm:%s223]
                %269 = vst [vmem:[%s231 + $0x90] sm:%s223] %v268
                %v270 = vld [vmem:[%s230 + $0x260] sm:%s223]
                %271 = vst [vmem:[%s231 + $0x98] sm:%s223] %v270
                %v272 = vld [vmem:[%s230 + $0x280] sm:%s223]
                %273 = vst [vmem:[%s231 + $0xa0] sm:%s223] %v272
                %v274 = vld [vmem:[%s230 + $0x2a0] sm:%s223]
                %275 = vst [vmem:[%s231 + $0xa8] sm:%s223] %v274
                %v276 = vld [vmem:[%s230 + $0x2c0] sm:%s223]
                %277 = vst [vmem:[%s231 + $0xb0] sm:%s223] %v276
                %v278 = vld [vmem:[%s230 + $0x2e0] sm:%s223]
                %279 = vst [vmem:[%s231 + $0xb8] sm:%s223] %v278
                %v280 = vld [vmem:[%s230 + $0x300] sm:%s223]
                %281 = vst [vmem:[%s231 + $0xc0] sm:%s223] %v280
                %v282 = vld [vmem:[%s230 + $0x320] sm:%s223]
                %283 = vst [vmem:[%s231 + $0xc8] sm:%s223] %v282
                %v284 = vld [vmem:[%s230 + $0x340] sm:%s223]
                %285 = vst [vmem:[%s231 + $0xd0] sm:%s223] %v284
                %v286 = vld [vmem:[%s230 + $0x360] sm:%s223]
                %287 = vst [vmem:[%s231 + $0xd8] sm:%s223] %v286
                %v288 = vld [vmem:[%s230 + $0x380] sm:%s223]
                %289 = vst [vmem:[%s231 + $0xe0] sm:%s223] %v288
                %v290 = vld [vmem:[%s230 + $0x3a0] sm:%s223]
                %291 = vst [vmem:[%s231 + $0xe8] sm:%s223] %v290
                %v292 = vld [vmem:[%s230 + $0x3c0] sm:%s223]
                %293 = vst [vmem:[%s231 + $0xf0] sm:%s223] %v292
                %v294 = vld [vmem:[%s230 + $0x3e0] sm:%s223]
                %295 = vst [vmem:[%s231 + $0xf8] sm:%s223] %v294
              $region49: #{siglip_s2rgb_embed.17} parent=43 // loop_footer
                %s229 = sadd.s32 1, %s225
              $region50: #{siglip_s2rgb_embed.17} parent=43 // loop_footer_branch
                %224 = sbr.rel target = $region46
              $region51: #{siglip_s2rgb_embed.17} parent=43 // loop_exit
                _
            $region44: #{siglip_s2rgb_embed.17} parent=35 // pred_fallthru
              _
          $region36: #{siglip_s2rgb_embed.17} parent=31 // pred_fallthru
            _
          %372 = vnop
        $region32: #{siglip_s2rgb_embed.17} parent=27 // pred_fallthru
          _
        // Predicated region
        $region67: #{siglip_s2rgb_embed.17} parent=27 // pred_check
          %p373 = pneg %p137
        $region68: #{siglip_s2rgb_embed.17} parent=27 // pred_check_branch
          %375 = sbr.rel (%p373) target = $region70
        $region69: #{siglip_s2rgb_embed.17} parent=27 // pred_region
          %s376 = smul.u32 2, %s19
          %p377 = scmp.lt.s32.totalorder %s376, 7
          %s378 = scalar_select %p377, %s376, 7
          %s379 = scalar_lea.vmem %s4, %s378
          %s380 = smul.u32 2, %s19
        $region70: #{siglip_s2rgb_embed.17} parent=27 // pred_fallthru
          _
      $region28: #{siglip_s2rgb_embed.17} parent=5 // pred_fallthru
        _
      %p381 = scmp.le.s32.totalorder 1, %s11
      %p382 = scmp.lt.s32.totalorder %s11, 5
      %p383 = pnand %p381, %p382
      %p384 = pneg %p383
      // Predicated region
      $region71: #{siglip_s2rgb_embed.17} parent=5 // pred_check
        _
      $region72: #{siglip_s2rgb_embed.17} parent=5 // pred_check_branch
        %386 = sbr.rel (%p383) target = $region74
      $region73: #{siglip_s2rgb_embed.17} parent=5 // pred_region
        %s387 = ssub.s32 %s11, 1
        %s388 = sand.u32 %s104, 1
        %s389 = sand.u32 %s104, 1
        %s390 = smul.addr %s389, 256
        %s391 = scalar_lea.vmem [#allocation3], %s390
        // Predicated region
        $region75: #{siglip_s2rgb_embed.17} parent=73 // pred_check
          %p392 = pneg %p117
        $region76: #{siglip_s2rgb_embed.17} parent=73 // pred_check_branch
          %394 = sbr.rel (%p392) target = $region78
        $region77: #{siglip_s2rgb_embed.17} parent=73 // pred_region
          _
        $region78: #{siglip_s2rgb_embed.17} parent=73 // pred_fallthru
          _
        %s395 = smul.u32 4, %s20
        %p396 = scmp.lt.s32.totalorder %s395, 3
        %s397 = scalar_select %p396, %s395, 3
        %s398 = smul.addr %s397, 2
        %s399 = smul.addr %s398, 4
        %s400 = scalar_lea.vmem %s0, %s399
        %p401 = pneg %p49
        %p402 = pneg %p46
        %p403 = pneg %p70
        %p404 = pneg %p67
        %p405 = pneg %p91
        %p406 = pneg %p88
        %s407 = sand.u32 %s104, 1
        %s408 = sand.u32 %s104, 1
        %s409 = smul.addr %s408, 256
        %s410 = scalar_lea.vmem [#allocation3], %s409
        %p411 = pneg %p117
        %p412 = pneg %p114
        %s413 = smul.u32 2, %s21
        %p414 = scmp.lt.s32.totalorder %s413, 7
        %s415 = scalar_select %p414, %s413, 7
        %s416 = scalar_lea.vmem %s4, %s415
        %p417 = pneg %p143
        %p418 = pneg %p140
        %p419 = pneg %p171
        %p420 = pneg %p168
        %s421 = sand.u32 %s158, 1
        %s422 = sand.u32 %s158, 1
        %s423 = smul.addr %s422, 32
        %s424 = scalar_lea.vmem [#allocation4], %s423
        %s425 = smul.u32 4, %s20
        %p426 = scmp.lt.s32.totalorder %s425, 3
        %s427 = scalar_select %p426, %s425, 3
        %s428 = smul.addr %s427, 2
        %s429 = smul.addr %s428, 4
        %s430 = scalar_lea.vmem %s0, %s429
        %s431 = smul.u32 4, %s20
        %s432 = smul.u32 2, %s21
        %s433 = smul.u32 2, %s21
        %p434 = scmp.lt.s32.totalorder %s433, 7
        %s435 = scalar_select %p434, %s433, 7
        %s436 = scalar_lea.vmem %s4, %s435
        %s437 = smul.u32 2, %s21
        %s438 = smul.u32 4, %s20
        %s439 = smul.u32 2, %s21
        %p440 = scmp.eq.s32.totalorder %s21, 0
        // Predicated region
        $region79: #{siglip_s2rgb_embed.17} parent=73 // pred_check
          %p441 = pneg %p440
        $region80: #{siglip_s2rgb_embed.17} parent=73 // pred_check_branch
          %443 = sbr.rel (%p441) target = $region82
        $region81: #{siglip_s2rgb_embed.17} parent=73 // pred_region
          %v444 = vld [vmem:[%s430] sm:$0xff]
          %v445 = vld [vmem:[%s430 + $0x8] sm:$0xff]
          %v446 = vld [vmem:[%s430 + $0x10] sm:$0xff]
          %v447 = vld [vmem:[%s430 + $0x18] sm:$0xff]
          %v448 = vunpack.c.l.bf16 %v444
          %v449 = vunpack.c.h.bf16 %v444
          %v450 = vunpack.c.l.bf16 %v445
          %v451 = vunpack.c.h.bf16 %v445
          %v452 = vunpack.c.l.bf16 %v446
          %v453 = vunpack.c.h.bf16 %v446
          %v454 = vunpack.c.l.bf16 %v447
          %v455 = vunpack.c.h.bf16 %v447
          %v456 = vadd.f32 %v448, %v449
          %457 = vadd.xlane.f32.xlu0 %v456
          %v458 = vpop.xlane.xlu0 %457
          %v459 = vadd.f32 %v450, %v451
          %460 = vadd.xlane.f32.xlu0 %v459
          %v461 = vpop.xlane.xlu0 %460
          %v462 = vadd.f32 %v452, %v453
          %463 = vadd.xlane.f32.xlu0 %v462
          %v464 = vpop.xlane.xlu0 %463
          %v465 = vadd.f32 %v454, %v455
          %466 = vadd.xlane.f32.xlu0 %v465
          %v467 = vpop.xlane.xlu0 %466
          %v468 = vrcp.pop 256.0
          %v469 = vmul.f32 256.0, %v468
          %v470 = vsub.f32 1.0, %v469
          %v471 = vmul.f32 %v468, %v470
          %v472 = vadd.f32 %v468, %v471
          %vm473 = vweird.f32 %v468
          %v474 = vsel %vm473, %v468, %v472
          %v475 = vmul.f32 %v458, %v474
          %v476 = vmul.f32 %v461, %v474
          %v477 = vmul.f32 %v464, %v474
          %v478 = vmul.f32 %v467, %v474
          %v479 = vsub.f32 %v448, %v475
          %v480 = vsub.f32 %v449, %v475
          %v481 = vsub.f32 %v450, %v476
          %v482 = vsub.f32 %v451, %v476
          %v483 = vsub.f32 %v452, %v477
          %v484 = vsub.f32 %v453, %v477
          %v485 = vsub.f32 %v454, %v478
          %v486 = vsub.f32 %v455, %v478
          %v487 = vmul.f32 %v479, %v479
          %v488 = vmul.f32 %v480, %v480
          %v489 = vmul.f32 %v481, %v481
          %v490 = vmul.f32 %v482, %v482
          %v491 = vmul.f32 %v483, %v483
          %v492 = vmul.f32 %v484, %v484
          %v493 = vmul.f32 %v485, %v485
          %v494 = vmul.f32 %v486, %v486
          %v495 = vadd.f32 %v487, %v488
          %496 = vadd.xlane.f32.xlu0 %v495
          %v497 = vpop.xlane.xlu0 %496
          %v498 = vadd.f32 %v489, %v490
          %499 = vadd.xlane.f32.xlu0 %v498
          %v500 = vpop.xlane.xlu0 %499
          %v501 = vadd.f32 %v491, %v492
          %502 = vadd.xlane.f32.xlu0 %v501
          %v503 = vpop.xlane.xlu0 %502
          %v504 = vadd.f32 %v493, %v494
          %505 = vadd.xlane.f32.xlu0 %v504
          %v506 = vpop.xlane.xlu0 %505
          %v507 = vmul.f32 %v497, %v474
          %v508 = vmul.f32 %v500, %v474
          %v509 = vmul.f32 %v503, %v474
          %v510 = vmul.f32 %v506, %v474
          %v511 = vadd.f32 %v507, 1e-06
          %v512 = vadd.f32 %v508, 1e-06
          %v513 = vadd.f32 %v509, 1e-06
          %v514 = vadd.f32 %v510, 1e-06
          %v515 = vrsqrt.pop %v511
          %v516 = vmul.f32 %v515, %v511
          %v517 = vmul.f32 %v516, %v515
          %v518 = vmul.f32 0.5, %v517
          %v519 = vsub.f32 1.5, %v518
          %v520 = vmul.f32 %v515, %v519
          %vm521 = vweird.f32 %v511
          %vm522 = vweird.f32 %v515
          %vm523 = vmor %vm521, %vm522
          %v524 = vsel %vm523, %v515, %v520
          %v525 = vrsqrt.pop %v512
          %v526 = vmul.f32 %v525, %v512
          %v527 = vmul.f32 %v526, %v525
          %v528 = vmul.f32 0.5, %v527
          %v529 = vsub.f32 1.5, %v528
          %v530 = vmul.f32 %v525, %v529
          %vm531 = vweird.f32 %v512
          %vm532 = vweird.f32 %v525
          %vm533 = vmor %vm531, %vm532
          %v534 = vsel %vm533, %v525, %v530
          %v535 = vrsqrt.pop %v513
          %v536 = vmul.f32 %v535, %v513
          %v537 = vmul.f32 %v536, %v535
          %v538 = vmul.f32 0.5, %v537
          %v539 = vsub.f32 1.5, %v538
          %v540 = vmul.f32 %v535, %v539
          %vm541 = vweird.f32 %v513
          %vm542 = vweird.f32 %v535
          %vm543 = vmor %vm541, %vm542
          %v544 = vsel %vm543, %v535, %v540
          %v545 = vrsqrt.pop %v514
          %v546 = vmul.f32 %v545, %v514
          %v547 = vmul.f32 %v546, %v545
          %v548 = vmul.f32 0.5, %v547
          %v549 = vsub.f32 1.5, %v548
          %v550 = vmul.f32 %v545, %v549
          %vm551 = vweird.f32 %v514
          %vm552 = vweird.f32 %v545
          %vm553 = vmor %vm551, %vm552
          %v554 = vsel %vm553, %v545, %v550
          %v555 = vmul.f32 %v479, %v524
          %v556 = vmul.f32 %v480, %v524
          %v557 = vmul.f32 %v481, %v534
          %v558 = vmul.f32 %v482, %v534
          %v559 = vmul.f32 %v483, %v544
          %v560 = vmul.f32 %v484, %v544
          %v561 = vmul.f32 %v485, %v554
          %v562 = vmul.f32 %v486, %v554
          %v563 = vld [vmem:[%s1] sm:$0x3]
          %v565 = vperm.slane %v563, 0
          %v566 = vperm.slane %v563, 1
          %v569 = vmul.f32 %v555, %v565
          %v570 = vmul.f32 %v556, %v566
          %v571 = vmul.f32 %v557, %v565
          %v572 = vmul.f32 %v558, %v566
          %v573 = vmul.f32 %v559, %v565
          %v574 = vmul.f32 %v560, %v566
          %v575 = vmul.f32 %v561, %v565
          %v576 = vmul.f32 %v562, %v566
          %v577 = vld [vmem:[%s2] sm:$0x3]
          %v579 = vperm.slane %v577, 0
          %v580 = vperm.slane %v577, 1
          %v583 = vadd.f32 %v569, %v579
          %v584 = vadd.f32 %v570, %v580
          %v585 = vadd.f32 %v571, %v579
          %v586 = vadd.f32 %v572, %v580
          %v587 = vadd.f32 %v573, %v579
          %v588 = vadd.f32 %v574, %v580
          %v589 = vadd.f32 %v575, %v579
          %v590 = vadd.f32 %v576, %v580
          %v591 = vpack.c.bf16 %v584, %v583
          %v592 = vpack.c.bf16 %v586, %v585
          %v593 = vpack.c.bf16 %v588, %v587
          %v594 = vpack.c.bf16 %v590, %v589
          %595 = vst [vmem:[#allocation2] sm:$0xff] %v591
          %596 = vst [vmem:[#allocation2 + $0x8] sm:$0xff] %v592
          %597 = vst [vmem:[#allocation2 + $0x10] sm:$0xff] %v593
          %598 = vst [vmem:[#allocation2 + $0x18] sm:$0xff] %v594
        $region82: #{siglip_s2rgb_embed.17} parent=73 // pred_fallthru
          _
        %v599 = vld [vmem:[#allocation2] sm:$0xff]
        %v600 = vld [vmem:[#allocation2 + $0x8] sm:$0xff]
        %v601 = vld [vmem:[#allocation2 + $0x10] sm:$0xff]
        %v602 = vld [vmem:[#allocation2 + $0x18] sm:$0xff]
        %v603 = vld [vmem:[%s391] sm:$0xff]
        %v604 = vld [vmem:[%s391 + $0x8] sm:$0xff]
        %v605 = vld [vmem:[%s391 + $0x10] sm:$0xff]
        %v606 = vld [vmem:[%s391 + $0x18] sm:$0xff]
        %v607 = vld [vmem:[%s391 + $0x20] sm:$0xff]
        %v608 = vld [vmem:[%s391 + $0x28] sm:$0xff]
        %v609 = vld [vmem:[%s391 + $0x30] sm:$0xff]
        %v610 = vld [vmem:[%s391 + $0x38] sm:$0xff]
        %v611 = vld [vmem:[%s391 + $0x40] sm:$0xff]
        %v612 = vld [vmem:[%s391 + $0x48] sm:$0xff]
        %v613 = vld [vmem:[%s391 + $0x50] sm:$0xff]
        %v614 = vld [vmem:[%s391 + $0x58] sm:$0xff]
        %v615 = vld [vmem:[%s391 + $0x60] sm:$0xff]
        %v616 = vld [vmem:[%s391 + $0x68] sm:$0xff]
        %v617 = vld [vmem:[%s391 + $0x70] sm:$0xff]
        %v618 = vld [vmem:[%s391 + $0x78] sm:$0xff]
        %v619 = vld [vmem:[%s391 + $0x80] sm:$0xff]
        %v620 = vld [vmem:[%s391 + $0x88] sm:$0xff]
        %v621 = vld [vmem:[%s391 + $0x90] sm:$0xff]
        %v622 = vld [vmem:[%s391 + $0x98] sm:$0xff]
        %v623 = vld [vmem:[%s391 + $0xa0] sm:$0xff]
        %v624 = vld [vmem:[%s391 + $0xa8] sm:$0xff]
        %v625 = vld [vmem:[%s391 + $0xb0] sm:$0xff]
        %v626 = vld [vmem:[%s391 + $0xb8] sm:$0xff]
        %v627 = vld [vmem:[%s391 + $0xc0] sm:$0xff]
        %v628 = vld [vmem:[%s391 + $0xc8] sm:$0xff]
        %v629 = vld [vmem:[%s391 + $0xd0] sm:$0xff]
        %v630 = vld [vmem:[%s391 + $0xd8] sm:$0xff]
        %v631 = vld [vmem:[%s391 + $0xe0] sm:$0xff]
        %v632 = vld [vmem:[%s391 + $0xe8] sm:$0xff]
        %v633 = vld [vmem:[%s391 + $0xf0] sm:$0xff]
        %v634 = vld [vmem:[%s391 + $0xf8] sm:$0xff]
        %v635 = vld [vmem:[%s436] sm:$0x3]
        %v637 = vperm.slane %v635, 0
        %v638 = vperm.slane %v635, 1
        %v645 = vunpack.c.l.b16 %v599
        %v646 = vunpack.c.h.b16 %v599
        %v647 = vunpack.c.l.b16 %v600
        %v648 = vunpack.c.h.b16 %v600
        %v649 = vunpack.c.l.b16 %v601
        %v650 = vunpack.c.h.b16 %v601
        %v651 = vunpack.c.l.b16 %v602
        %v652 = vunpack.c.h.b16 %v602
        %v653 = vpack.c.b16 %v647, %v645
        %v654 = vpack.c.b16 %v648, %v646
        %v655 = vpack.c.b16 %v651, %v649
        %v656 = vpack.c.b16 %v652, %v650
        %v693 = vunpack.c.l.b16 %v603
        %v694 = vunpack.c.h.b16 %v603
        %v695 = vunpack.c.l.b16 %v604
        %v696 = vunpack.c.h.b16 %v604
        %v697 = vunpack.c.l.b16 %v605
        %v698 = vunpack.c.h.b16 %v605
        %v699 = vunpack.c.l.b16 %v606
        %v700 = vunpack.c.h.b16 %v606
        %v701 = vunpack.c.l.b16 %v607
        %v702 = vunpack.c.h.b16 %v607
        %v703 = vunpack.c.l.b16 %v608
        %v704 = vunpack.c.h.b16 %v608
        %v705 = vunpack.c.l.b16 %v609
        %v706 = vunpack.c.h.b16 %v609
        %v707 = vunpack.c.l.b16 %v610
        %v708 = vunpack.c.h.b16 %v610
        %v709 = vunpack.c.l.b16 %v611
        %v710 = vunpack.c.h.b16 %v611
        %v711 = vunpack.c.l.b16 %v612
        %v712 = vunpack.c.h.b16 %v612
        %v713 = vunpack.c.l.b16 %v613
        %v714 = vunpack.c.h.b16 %v613
        %v715 = vunpack.c.l.b16 %v614
        %v716 = vunpack.c.h.b16 %v614
        %v717 = vunpack.c.l.b16 %v615
        %v718 = vunpack.c.h.b16 %v615
        %v719 = vunpack.c.l.b16 %v616
        %v720 = vunpack.c.h.b16 %v616
        %v721 = vunpack.c.l.b16 %v617
        %v722 = vunpack.c.h.b16 %v617
        %v723 = vunpack.c.l.b16 %v618
        %v724 = vunpack.c.h.b16 %v618
        %v725 = vunpack.c.l.b16 %v619
        %v726 = vunpack.c.h.b16 %v619
        %v727 = vunpack.c.l.b16 %v620
        %v728 = vunpack.c.h.b16 %v620
        %v729 = vunpack.c.l.b16 %v621
        %v730 = vunpack.c.h.b16 %v621
        %v731 = vunpack.c.l.b16 %v622
        %v732 = vunpack.c.h.b16 %v622
        %v733 = vunpack.c.l.b16 %v623
        %v734 = vunpack.c.h.b16 %v623
        %v735 = vunpack.c.l.b16 %v624
        %v736 = vunpack.c.h.b16 %v624
        %v737 = vunpack.c.l.b16 %v625
        %v738 = vunpack.c.h.b16 %v625
        %v739 = vunpack.c.l.b16 %v626
        %v740 = vunpack.c.h.b16 %v626
        %v741 = vunpack.c.l.b16 %v627
        %v742 = vunpack.c.h.b16 %v627
        %v743 = vunpack.c.l.b16 %v628
        %v744 = vunpack.c.h.b16 %v628
        %v745 = vunpack.c.l.b16 %v629
        %v746 = vunpack.c.h.b16 %v629
        %v747 = vunpack.c.l.b16 %v630
        %v748 = vunpack.c.h.b16 %v630
        %v749 = vunpack.c.l.b16 %v631
        %v750 = vunpack.c.h.b16 %v631
        %v751 = vunpack.c.l.b16 %v632
        %v752 = vunpack.c.h.b16 %v632
        %v753 = vunpack.c.l.b16 %v633
        %v754 = vunpack.c.h.b16 %v633
        %v755 = vunpack.c.l.b16 %v634
        %v756 = vunpack.c.h.b16 %v634
        %v757 = vpack.c.b16 %v695, %v693
        %v758 = vpack.c.b16 %v696, %v694
        %v759 = vpack.c.b16 %v699, %v697
        %v760 = vpack.c.b16 %v700, %v698
        %v761 = vpack.c.b16 %v703, %v701
        %v762 = vpack.c.b16 %v704, %v702
        %v763 = vpack.c.b16 %v707, %v705
        %v764 = vpack.c.b16 %v708, %v706
        %v765 = vpack.c.b16 %v711, %v709
        %v766 = vpack.c.b16 %v712, %v710
        %v767 = vpack.c.b16 %v715, %v713
        %v768 = vpack.c.b16 %v716, %v714
        %v769 = vpack.c.b16 %v719, %v717
        %v770 = vpack.c.b16 %v720, %v718
        %v771 = vpack.c.b16 %v723, %v721
        %v772 = vpack.c.b16 %v724, %v722
        %v773 = vpack.c.b16 %v727, %v725
        %v774 = vpack.c.b16 %v728, %v726
        %v775 = vpack.c.b16 %v731, %v729
        %v776 = vpack.c.b16 %v732, %v730
        %v777 = vpack.c.b16 %v735, %v733
        %v778 = vpack.c.b16 %v736, %v734
        %v779 = vpack.c.b16 %v739, %v737
        %v780 = vpack.c.b16 %v740, %v738
        %v781 = vpack.c.b16 %v743, %v741
        %v782 = vpack.c.b16 %v744, %v742
        %v783 = vpack.c.b16 %v747, %v745
        %v784 = vpack.c.b16 %v748, %v746
        %v785 = vpack.c.b16 %v751, %v749
        %v786 = vpack.c.b16 %v752, %v750
        %v787 = vpack.c.b16 %v755, %v753
        %v788 = vpack.c.b16 %v756, %v754
        %821 = vmatpush.bf16.msra.mxu0 %v771
        %822 = vmatpush.bf16.msra.mxu0 %v769
        %823 = vmatpush.bf16.msra.mxu0 %v767
        %824 = vmatpush.bf16.msra.mxu0 %v765
        %825 = vmatpush.bf16.msra.mxu0 %v763
        %826 = vmatpush.bf16.msra.mxu0 %v761
        %827 = vmatpush.bf16.msra.mxu0 %v759
        %828 = vmatpush.bf16.msra.mxu0 %v757
        %829 = vmatmul.bf16.gmra.mxu0 %v653
        %v830 = vpop.f32.mrf.mxu0
        %v831 = vadd.f32 %v637, %v830
        %v832 = vpop.f32.mrf.mxu0
        %v833 = vadd.f32 %v637, %v832
        %834 = vmatmul.bf16.gmra.mxu0 %v655
        %v835 = vpop.f32.mrf.mxu0
        %v836 = vadd.f32 %v637, %v835
        %v837 = vpop.f32.mrf.mxu0
        %v838 = vadd.f32 %v637, %v837
        %839 = vdwg.mxu0
        %840 = vmatpush.bf16.msra.mxu0 %v787
        %841 = vmatpush.bf16.msra.mxu0 %v785
        %842 = vmatpush.bf16.msra.mxu0 %v783
        %843 = vmatpush.bf16.msra.mxu0 %v781
        %844 = vmatpush.bf16.msra.mxu0 %v779
        %845 = vmatpush.bf16.msra.mxu0 %v777
        %846 = vmatpush.bf16.msra.mxu0 %v775
        %847 = vmatpush.bf16.msra.mxu0 %v773
        %848 = vmatmul.bf16.gmra.mxu0 %v654
        %v849 = vpop.f32.mrf.mxu0
        %v850 = vadd.f32 %v831, %v849
        %v851 = vpop.f32.mrf.mxu0
        %v852 = vadd.f32 %v833, %v851
        %853 = vmatmul.bf16.gmra.mxu0 %v656
        %v854 = vpop.f32.mrf.mxu0
        %v855 = vadd.f32 %v836, %v854
        %v856 = vpop.f32.mrf.mxu0
        %v857 = vadd.f32 %v838, %v856
        %858 = vdwg.mxu0
        %859 = vmatpush.bf16.msra.mxu0 %v772
        %860 = vmatpush.bf16.msra.mxu0 %v770
        %861 = vmatpush.bf16.msra.mxu0 %v768
        %862 = vmatpush.bf16.msra.mxu0 %v766
        %863 = vmatpush.bf16.msra.mxu0 %v764
        %864 = vmatpush.bf16.msra.mxu0 %v762
        %865 = vmatpush.bf16.msra.mxu0 %v760
        %866 = vmatpush.bf16.msra.mxu0 %v758
        %867 = vmatmul.bf16.gmra.mxu0 %v653
        %v868 = vpop.f32.mrf.mxu0
        %v869 = vadd.f32 %v638, %v868
        %v870 = vpop.f32.mrf.mxu0
        %v871 = vadd.f32 %v638, %v870
        %872 = vmatmul.bf16.gmra.mxu0 %v655
        %v873 = vpop.f32.mrf.mxu0
        %v874 = vadd.f32 %v638, %v873
        %v875 = vpop.f32.mrf.mxu0
        %v876 = vadd.f32 %v638, %v875
        %877 = vdwg.mxu0
        %878 = vmatpush.bf16.msra.mxu0 %v788
        %879 = vmatpush.bf16.msra.mxu0 %v786
        %880 = vmatpush.bf16.msra.mxu0 %v784
        %881 = vmatpush.bf16.msra.mxu0 %v782
        %882 = vmatpush.bf16.msra.mxu0 %v780
        %883 = vmatpush.bf16.msra.mxu0 %v778
        %884 = vmatpush.bf16.msra.mxu0 %v776
        %885 = vmatpush.bf16.msra.mxu0 %v774
        %886 = vmatmul.bf16.gmra.mxu0 %v654
        %v887 = vpop.f32.mrf.mxu0
        %v888 = vadd.f32 %v869, %v887
        %v889 = vpop.f32.mrf.mxu0
        %v890 = vadd.f32 %v871, %v889
        %891 = vmatmul.bf16.gmra.mxu0 %v656
        %v892 = vpop.f32.mrf.mxu0
        %v893 = vadd.f32 %v874, %v892
        %v894 = vpop.f32.mrf.mxu0
        %v895 = vadd.f32 %v876, %v894
        %896 = vdwg.mxu0
        %v897 = vmul.f32 %v850, %v850
        %v898 = vmul.f32 %v888, %v888
        %v899 = vmul.f32 %v852, %v852
        %v900 = vmul.f32 %v890, %v890
        %v901 = vmul.f32 %v855, %v855
        %v902 = vmul.f32 %v893, %v893
        %v903 = vmul.f32 %v857, %v857
        %v904 = vmul.f32 %v895, %v895
        %v905 = vmul.f32 %v850, %v897
        %v906 = vmul.f32 %v888, %v898
        %v907 = vmul.f32 %v852, %v899
        %v908 = vmul.f32 %v890, %v900
        %v909 = vmul.f32 %v855, %v901
        %v910 = vmul.f32 %v893, %v902
        %v911 = vmul.f32 %v857, %v903
        %v912 = vmul.f32 %v895, %v904
        %v913 = vmul.f32 %v905, 0.044715
        %v914 = vmul.f32 %v906, 0.044715
        %v915 = vmul.f32 %v907, 0.044715
        %v916 = vmul.f32 %v908, 0.044715
        %v917 = vmul.f32 %v909, 0.044715
        %v918 = vmul.f32 %v910, 0.044715
        %v919 = vmul.f32 %v911, 0.044715
        %v920 = vmul.f32 %v912, 0.044715
        %v921 = vadd.f32 %v850, %v913
        %v922 = vadd.f32 %v888, %v914
        %v923 = vadd.f32 %v852, %v915
        %v924 = vadd.f32 %v890, %v916
        %v925 = vadd.f32 %v855, %v917
        %v926 = vadd.f32 %v893, %v918
        %v927 = vadd.f32 %v857, %v919
        %v928 = vadd.f32 %v895, %v920
        %v929 = vmul.f32 %v921, 0.7978846
        %v930 = vmul.f32 %v922, 0.7978846
        %v931 = vmul.f32 %v923, 0.7978846
        %v932 = vmul.f32 %v924, 0.7978846
        %v933 = vmul.f32 %v925, 0.7978846
        %v934 = vmul.f32 %v926, 0.7978846
        %v935 = vmul.f32 %v927, 0.7978846
        %v936 = vmul.f32 %v928, 0.7978846
        %v937 = vtanh.pop %v929
        %v938 = vtanh.pop %v930
        %v939 = vtanh.pop %v931
        %v940 = vtanh.pop %v932
        %v941 = vtanh.pop %v933
        %v942 = vtanh.pop %v934
        %v943 = vtanh.pop %v935
        %v944 = vtanh.pop %v936
        %v945 = vadd.f32 %v937, 1.0
        %v946 = vadd.f32 %v938, 1.0
        %v947 = vadd.f32 %v939, 1.0
        %v948 = vadd.f32 %v940, 1.0
        %v949 = vadd.f32 %v941, 1.0
        %v950 = vadd.f32 %v942, 1.0
        %v951 = vadd.f32 %v943, 1.0
        %v952 = vadd.f32 %v944, 1.0
        %v953 = vmul.f32 %v945, 0.5
        %v954 = vmul.f32 %v946, 0.5
        %v955 = vmul.f32 %v947, 0.5
        %v956 = vmul.f32 %v948, 0.5
        %v957 = vmul.f32 %v949, 0.5
        %v958 = vmul.f32 %v950, 0.5
        %v959 = vmul.f32 %v951, 0.5
        %v960 = vmul.f32 %v952, 0.5
        %v961 = vmul.f32 %v850, %v953
        %v962 = vmul.f32 %v888, %v954
        %v963 = vmul.f32 %v852, %v955
        %v964 = vmul.f32 %v890, %v956
        %v965 = vmul.f32 %v855, %v957
        %v966 = vmul.f32 %v893, %v958
        %v967 = vmul.f32 %v857, %v959
        %v968 = vmul.f32 %v895, %v960
        %v969 = vpack.c.bf16 %v962, %v961
        %v970 = vpack.c.bf16 %v964, %v963
        %v971 = vpack.c.bf16 %v966, %v965
        %v972 = vpack.c.bf16 %v968, %v967
        %973 = vst [vmem:[%s424] sm:$0xff] %v969
        %974 = vst [vmem:[%s424 + $0x8] sm:$0xff] %v970
        %975 = vst [vmem:[%s424 + $0x10] sm:$0xff] %v971
        %976 = vst [vmem:[%s424 + $0x18] sm:$0xff] %v972
        %s977 = sand.u32 %s158, 1
        %s978 = sand.u32 %s158, 1
        %s979 = smul.addr %s978, 32
        %s980 = scalar_lea.vmem [#allocation4], %s979
        // Predicated region
        $region83: #{siglip_s2rgb_embed.17} parent=73 // pred_check
          %p981 = pneg %p168
        $region84: #{siglip_s2rgb_embed.17} parent=73 // pred_check_branch
          %983 = sbr.rel (%p981) target = $region86
        $region85: #{siglip_s2rgb_embed.17} parent=73 // pred_region
          %s984 = smul.u32 4, %s20
          %s985 = smul.u32 2, %s21
          %s986 = smul.addr %s984, 8
          %s987 = sadd.s32 %s985, %s986
          %s988 = smul.addr %s987, 4
          %s989 = scalar_lea.vmem %s5, %s988
          // Predicated region
          $region87: #{siglip_s2rgb_embed.17} parent=85 // pred_check
            _
          $region88: #{siglip_s2rgb_embed.17} parent=85 // pred_check_branch
            %991 = sbr.rel (0) target = $region90
          $region89: #{siglip_s2rgb_embed.17} parent=85 // pred_region
            // Predicated region
            $region91: #{siglip_s2rgb_embed.17} parent=89 // pred_check
              _
            $region92: #{siglip_s2rgb_embed.17} parent=89 // pred_check_branch
              %993 = sbr.rel (0) target = $region94
            $region93: #{siglip_s2rgb_embed.17} parent=89 // pred_region
              // Predicated region
              $region106: #{siglip_s2rgb_embed.17} parent=93 // pred_check
                _
              $region107: #{siglip_s2rgb_embed.17} parent=93 // pred_check_branch
                %1015 = sbr.rel (0) target = $region109
              $region108: #{siglip_s2rgb_embed.17} parent=93 // pred_region
                loop: start=0, step=1, limit=1
                $region110: #{siglip_s2rgb_embed.17} parent=108 // loop_pre_header
                  _
                $region111: #{siglip_s2rgb_embed.17} parent=108 // loop_header
                  %s1017 = sphi 0, %s1021
                  %p1018 = scmp.ge.s32.totalorder %s1017, 1
                  %s1022 = sphi %s980, %s980
                  %s1023 = sphi %s989, %s989
                $region112: #{siglip_s2rgb_embed.17} parent=108 // loop_header_branch
                  %1020 = sbr.rel (%p1018) target = $region116
                $region113: #{siglip_s2rgb_embed.17} parent=108 // loop_body
                  %v1024 = vld [vmem:[%s1022] sm:$0xff]
                  %1025 = vst [vmem:[%s1023] sm:$0xff] %v1024
                  %v1026 = vld [vmem:[%s1022 + $0x8] sm:$0xff]
                  %1027 = vst [vmem:[%s1023 + $0x20] sm:$0xff] %v1026
                  %v1028 = vld [vmem:[%s1022 + $0x10] sm:$0xff]
                  %1029 = vst [vmem:[%s1023 + $0x40] sm:$0xff] %v1028
                  %v1030 = vld [vmem:[%s1022 + $0x18] sm:$0xff]
                  %1031 = vst [vmem:[%s1023 + $0x60] sm:$0xff] %v1030
                $region114: #{siglip_s2rgb_embed.17} parent=108 // loop_footer
                  %s1021 = sadd.s32 1, %s1017
                $region115: #{siglip_s2rgb_embed.17} parent=108 // loop_footer_branch
                  %1016 = sbr.rel target = $region111
                $region116: #{siglip_s2rgb_embed.17} parent=108 // loop_exit
                  _
              $region109: #{siglip_s2rgb_embed.17} parent=93 // pred_fallthru
                _
              // Predicated region
              $region117: #{siglip_s2rgb_embed.17} parent=93 // pred_check
                _
              $region118: #{siglip_s2rgb_embed.17} parent=93 // pred_check_branch
                %1033 = sbr.rel target = $region120
              $region119: #{siglip_s2rgb_embed.17} parent=93 // pred_region
                _
              $region120: #{siglip_s2rgb_embed.17} parent=93 // pred_fallthru
                _
            $region94: #{siglip_s2rgb_embed.17} parent=89 // pred_fallthru
              _
            // Predicated region
            $region95: #{siglip_s2rgb_embed.17} parent=89 // pred_check
              _
            $region96: #{siglip_s2rgb_embed.17} parent=89 // pred_check_branch
              %995 = sbr.rel target = $region98
            $region97: #{siglip_s2rgb_embed.17} parent=89 // pred_region
              %s997 = ssub.s32 256, 1
              loop: start=0, step=1, limit=1
              $region99: #{siglip_s2rgb_embed.17} parent=97 // loop_pre_header
                _
              $region100: #{siglip_s2rgb_embed.17} parent=97 // loop_header
                %s999 = sphi 0, %s1003
                %p1000 = scmp.ge.s32.totalorder %s999, 1
                %s1004 = sphi %s980, %s980
                %s1005 = sphi %s989, %s989
              $region101: #{siglip_s2rgb_embed.17} parent=97 // loop_header_branch
                %1002 = sbr.rel (%p1000) target = $region105
              $region102: #{siglip_s2rgb_embed.17} parent=97 // loop_body
                %v1006 = vld [vmem:[%s1004] sm:%s997]
                %1007 = vst [vmem:[%s1005] sm:%s997] %v1006
                %v1008 = vld [vmem:[%s1004 + $0x8] sm:%s997]
                %1009 = vst [vmem:[%s1005 + $0x20] sm:%s997] %v1008
                %v1010 = vld [vmem:[%s1004 + $0x10] sm:%s997]
                %1011 = vst [vmem:[%s1005 + $0x40] sm:%s997] %v1010
                %v1012 = vld [vmem:[%s1004 + $0x18] sm:%s997]
                %1013 = vst [vmem:[%s1005 + $0x60] sm:%s997] %v1012
              $region103: #{siglip_s2rgb_embed.17} parent=97 // loop_footer
                %s1003 = sadd.s32 1, %s999
              $region104: #{siglip_s2rgb_embed.17} parent=97 // loop_footer_branch
                %998 = sbr.rel target = $region100
              $region105: #{siglip_s2rgb_embed.17} parent=97 // loop_exit
                _
            $region98: #{siglip_s2rgb_embed.17} parent=89 // pred_fallthru
              _
          $region90: #{siglip_s2rgb_embed.17} parent=85 // pred_fallthru
            _
          %1034 = vnop
        $region86: #{siglip_s2rgb_embed.17} parent=73 // pred_fallthru
          _
      $region74: #{siglip_s2rgb_embed.17} parent=5 // pred_fallthru
        _
      %p1035 = scmp.le.s32.totalorder 2, %s11
      // Predicated region
      $region121: #{siglip_s2rgb_embed.17} parent=5 // pred_check
        %p1036 = pneg %p1035
      $region122: #{siglip_s2rgb_embed.17} parent=5 // pred_check_branch
        %1038 = sbr.rel (%p1036) target = $region124
      $region123: #{siglip_s2rgb_embed.17} parent=5 // pred_region
        %s1039 = ssub.s32 %s11, 2
        // Predicated region
        $region125: #{siglip_s2rgb_embed.17} parent=123 // pred_check
          %p1040 = pneg %p174
        $region126: #{siglip_s2rgb_embed.17} parent=123 // pred_check_branch
          %1042 = sbr.rel (%p1040) target = $region128
        $region127: #{siglip_s2rgb_embed.17} parent=123 // pred_region
          %s1043 = sand.u32 %s159, 1
          %s1044 = sand.u32 %s159, 1
          %s1045 = smul.addr %s1044, 32
          %s1046 = scalar_lea.vmem [#allocation4], %s1045
        $region128: #{siglip_s2rgb_embed.17} parent=123 // pred_fallthru
          _
      $region124: #{siglip_s2rgb_embed.17} parent=5 // pred_fallthru
        _
    $region6: #{siglip_s2rgb_embed.17} parent=1 // loop_footer
      %s15 = sadd.s32 1, %s11
    $region7: #{siglip_s2rgb_embed.17} parent=1 // loop_footer_branch
      %10 = sbr.rel target = $region3
    $region8: #{siglip_s2rgb_embed.17} parent=1 // loop_exit
      _

// kernel: siglip_s2rgb_embed.23
$region0: #{siglip_s2rgb_embed.23}
  #allocation0 [shape = 'u32[]', space=smem, size = 0x4, offset = 0x4, fixed_abs, tag = 'smem constant byte address 0x4 - core index']
  #allocation1 [shape = 'u32[72,128]{1,0:T(1,128)}', space=vmem, size = 0x9000, scoped, tag = 'internal scratch']
  #allocation2 [shape = 'bf16[32,256]{1,0:T(8,128)(2,1)}', space=vmem, size = 0x4000, scoped, tag = 'scratch operand']
  %s0 = inlined_call_operand.vmem [shape: bf16[32,256], index: 0, kind: input, shape index: {}]
  %s1 = inlined_call_operand.vmem [shape: f32[1,256], index: 1, kind: input, shape index: {}]
  %s2 = inlined_call_operand.vmem [shape: f32[1,256], index: 2, kind: input, shape index: {}]
  %s3 = inlined_call_operand.vmem [shape: bf16[256,512], index: 3, kind: input, shape index: {}]
  %s4 = inlined_call_operand.vmem [shape: f32[1,512], index: 4, kind: input, shape index: {}]
  %s5 = inlined_call_operand.vmem [shape: bf16[32,512], index: 5, kind: output, shape index: {}]
  %s6 = sld [smem:[#allocation0]]
  $region129: #{siglip_s2rgb_embed.23} parent=0
    _
  %s8 = ssub.s32 1, %s6
  %s9 = scalar_select 0, %s8, %s6
  $region1: #{siglip_s2rgb_embed.23} parent=0
    #allocation3 [shape = 'u8[262144]{0}', space=vmem, size = 0x40000, scoped, tag = 'input window, operand 3']
    #allocation4 [shape = 'u8[32768]{0}', space=vmem, size = 0x8000, scoped, tag = 'output window, operand 0']
    loop: start=0, step=1, limit=4
    $region2: #{siglip_s2rgb_embed.23} parent=1 // loop_pre_header
      _
    $region3: #{siglip_s2rgb_embed.23} parent=1 // loop_header
      %s11 = sphi 0, %s15
      %p12 = scmp.ge.s32.totalorder %s11, 4
      %s18 = sphi 0, %s30
      %s19 = sphi 0, %s26
      %s20 = sphi 0, %s18
      %s21 = sphi 0, %s19
      %s22 = sphi 0, %s20
      %s23 = sphi 0, %s21
      %s33 = sphi 0, %s35
      %s36 = sphi 0, %s33
      %s37 = sphi 0, %s36
      %s53 = sphi 0, %s37
      %s57 = sphi 0, %s57
      %s59 = sphi 0, %s57
      %s60 = sphi 0, %s59
      %s74 = sphi 0, %s60
      %s78 = sphi 0, %s78
      %s80 = sphi 0, %s78
      %s81 = sphi 0, %s80
      %s95 = sphi 0, %s81
      %s101 = sphi 0, %s103
      %s104 = sphi 0, %s101
      %s105 = sphi 0, %s104
      %s121 = sphi 0, %s105
      %s127 = sphi 0, %s129
      %s130 = sphi 0, %s127
      %s131 = sphi 0, %s130
      %s147 = sphi 0, %s131
      %s155 = sphi 0, %s157
      %s158 = sphi 0, %s155
      %s159 = sphi 0, %s158
      %s175 = sphi 0, %s159
    $region4: #{siglip_s2rgb_embed.23} parent=1 // loop_header_branch
      %14 = sbr.rel (%p12) target = $region8
    $region5: #{siglip_s2rgb_embed.23} parent=1 // loop_body
      %s16 = ssub.s32 %s11, 1
      %s17 = ssub.s32 %s11, 2
      %s24 = sadd.s32 1, %s19
      %p25 = scmp.ge.s32.totalorder %s24, 2
      %s26 = scalar_select %p25, 0, %s24
      %s27 = sadd.s32 1, %s18
      %s28 = scalar_select %p25, %s27, %s18
      %p29 = scmp.ge.s32.totalorder %s28, 1
      %s30 = scalar_select %p29, 0, %s28
      %s31 = ssub.s32 %s18, %s30
      %p32 = scmp.eq.s32.totalorder %s31, 0
      %s34 = sadd.s32 %s33, 1
      %s35 = scalar_select %p32, %s33, %s34
      %p38 = pneg %p32
      %p39 = scmp.eq.s32.totalorder %s11, 1
      %p40 = por %p38, %p39
      %p41 = scmp.ne.s32.totalorder %s33, %s36
      %p42 = scmp.eq.s32.totalorder %s11, 0
      %p43 = por %p41, %p42
      %p44 = scmp.ne.s32.totalorder %s33, %s36
      %p45 = scmp.eq.s32.totalorder %s16, 1
      %p46 = por %p44, %p45
      %p47 = scmp.ne.s32.totalorder %s36, %s37
      %p48 = scmp.eq.s32.totalorder %s16, 0
      %p49 = por %p47, %p48
      %p50 = scmp.ne.s32.totalorder %s36, %s37
      %p51 = scmp.eq.s32.totalorder %s17, 1
      %p52 = por %p50, %p51
      %p54 = scmp.ne.s32.totalorder %s37, %s53
      %p55 = scmp.eq.s32.totalorder %s17, 0
      %p56 = por %p54, %p55
      %s58 = sadd.s32 %s57, 1
      %p61 = scmp.eq.s32.totalorder %s11, 1
      %p62 = scmp.ne.s32.totalorder %s57, %s59
      %p63 = scmp.eq.s32.totalorder %s11, 0
      %p64 = por %p62, %p63
      %p65 = scmp.ne.s32.totalorder %s57, %s59
      %p66 = scmp.eq.s32.totalorder %s16, 1
      %p67 = por %p65, %p66
      %p68 = scmp.ne.s32.totalorder %s59, %s60
      %p69 = scmp.eq.s32.totalorder %s16, 0
      %p70 = por %p68, %p69
      %p71 = scmp.ne.s32.totalorder %s59, %s60
      %p72 = scmp.eq.s32.totalorder %s17, 1
      %p73 = por %p71, %p72
      %p75 = scmp.ne.s32.totalorder %s60, %s74
      %p76 = scmp.eq.s32.totalorder %s17, 0
      %p77 = por %p75, %p76
      %s79 = sadd.s32 %s78, 1
      %p82 = scmp.eq.s32.totalorder %s11, 1
      %p83 = scmp.ne.s32.totalorder %s78, %s80
      %p84 = scmp.eq.s32.totalorder %s11, 0
      %p85 = por %p83, %p84
      %p86 = scmp.ne.s32.totalorder %s78, %s80
      %p87 = scmp.eq.s32.totalorder %s16, 1
      %p88 = por %p86, %p87
      %p89 = scmp.ne.s32.totalorder %s80, %s81
      %p90 = scmp.eq.s32.totalorder %s16, 0
      %p91 = por %p89, %p90
      %p92 = scmp.ne.s32.totalorder %s80, %s81
      %p93 = scmp.eq.s32.totalorder %s17, 1
      %p94 = por %p92, %p93
      %p96 = scmp.ne.s32.totalorder %s81, %s95
      %p97 = scmp.eq.s32.totalorder %s17, 0
      %p98 = por %p96, %p97
      %s99 = ssub.s32 %s19, %s26
      %p100 = scmp.eq.s32.totalorder %s99, 0
      %s102 = sadd.s32 %s101, 1
      %s103 = scalar_select %p100, %s101, %s102
      %p106 = pneg %p100
      %p107 = scmp.eq.s32.totalorder %s11, 1
      %p108 = por %p106, %p107
      %p109 = scmp.ne.s32.totalorder %s101, %s104
      %p110 = scmp.eq.s32.totalorder %s11, 0
      %p111 = por %p109, %p110
      %p112 = scmp.ne.s32.totalorder %s101, %s104
      %p113 = scmp.eq.s32.totalorder %s16, 1
      %p114 = por %p112, %p113
      %p115 = scmp.ne.s32.totalorder %s104, %s105
      %p116 = scmp.eq.s32.totalorder %s16, 0
      %p117 = por %p115, %p116
      %p118 = scmp.ne.s32.totalorder %s104, %s105
      %p119 = scmp.eq.s32.totalorder %s17, 1
      %p120 = por %p118, %p119
      %p122 = scmp.ne.s32.totalorder %s105, %s121
      %p123 = scmp.eq.s32.totalorder %s17, 0
      %p124 = por %p122, %p123
      %s125 = ssub.s32 %s19, %s26
      %p126 = scmp.eq.s32.totalorder %s125, 0
      %s128 = sadd.s32 %s127, 1
      %s129 = scalar_select %p126, %s127, %s128
      %p132 = pneg %p126
      %p133 = scmp.eq.s32.totalorder %s11, 1
      %p134 = por %p132, %p133
      %p135 = scmp.ne.s32.totalorder %s127, %s130
      %p136 = scmp.eq.s32.totalorder %s11, 0
      %p137 = por %p135, %p136
      %p138 = scmp.ne.s32.totalorder %s127, %s130
      %p139 = scmp.eq.s32.totalorder %s16, 1
      %p140 = por %p138, %p139
      %p141 = scmp.ne.s32.totalorder %s130, %s131
      %p142 = scmp.eq.s32.totalorder %s16, 0
      %p143 = por %p141, %p142
      %p144 = scmp.ne.s32.totalorder %s130, %s131
      %p145 = scmp.eq.s32.totalorder %s17, 1
      %p146 = por %p144, %p145
      %p148 = scmp.ne.s32.totalorder %s131, %s147
      %p149 = scmp.eq.s32.totalorder %s17, 0
      %p150 = por %p148, %p149
      %s151 = ssub.s32 %s18, %s30
      %s152 = ssub.s32 %s19, %s26
      %s153 = sor.u32 %s151, %s152
      %p154 = scmp.eq.s32.totalorder %s153, 0
      %s156 = sadd.s32 %s155, 1
      %s157 = scalar_select %p154, %s155, %s156
      %p160 = pneg %p154
      %p161 = scmp.eq.s32.totalorder %s11, 1
      %p162 = por %p160, %p161
      %p163 = scmp.ne.s32.totalorder %s155, %s158
      %p164 = scmp.eq.s32.totalorder %s11, 0
      %p165 = por %p163, %p164
      %p166 = scmp.ne.s32.totalorder %s155, %s158
      %p167 = scmp.eq.s32.totalorder %s16, 1
      %p168 = por %p166, %p167
      %p169 = scmp.ne.s32.totalorder %s158, %s159
      %p170 = scmp.eq.s32.totalorder %s16, 0
      %p171 = por %p169, %p170
      %p172 = scmp.ne.s32.totalorder %s158, %s159
      %p173 = scmp.eq.s32.totalorder %s17, 1
      %p174 = por %p172, %p173
      %p176 = scmp.ne.s32.totalorder %s159, %s175
      %p177 = scmp.eq.s32.totalorder %s17, 0
      %p178 = por %p176, %p177
      %p179 = scmp.le.s32.totalorder 1, %s11
      %p180 = scmp.lt.s32.totalorder %s11, 3
      %p181 = pnand %p179, %p180
      %p182 = pneg %p181
      // Predicated region
      $region9: #{siglip_s2rgb_embed.23} parent=5 // pred_check
        _
      $region10: #{siglip_s2rgb_embed.23} parent=5 // pred_check_branch
        %184 = sbr.rel (%p181) target = $region12
      $region11: #{siglip_s2rgb_embed.23} parent=5 // pred_region
        %s185 = ssub.s32 %s11, 1
        // Predicated region
        $region13: #{siglip_s2rgb_embed.23} parent=11 // pred_check
          %p186 = pneg %p49
        $region14: #{siglip_s2rgb_embed.23} parent=11 // pred_check_branch
          %188 = sbr.rel (%p186) target = $region16
        $region15: #{siglip_s2rgb_embed.23} parent=11 // pred_region
          %s189 = smul.u32 4, %s20
          %p190 = scmp.lt.s32.totalorder %s189, 3
          %s191 = scalar_select %p190, %s189, 3
          %s192 = smul.addr %s191, 2
          %s193 = smul.addr %s192, 4
          %s194 = scalar_lea.vmem %s0, %s193
          %s195 = smul.u32 4, %s20
        $region16: #{siglip_s2rgb_embed.23} parent=11 // pred_fallthru
          _
        // Predicated region
        $region17: #{siglip_s2rgb_embed.23} parent=11 // pred_check
          %p196 = pneg %p70
        $region18: #{siglip_s2rgb_embed.23} parent=11 // pred_check_branch
          %198 = sbr.rel (%p196) target = $region20
        $region19: #{siglip_s2rgb_embed.23} parent=11 // pred_region
          _
        $region20: #{siglip_s2rgb_embed.23} parent=11 // pred_fallthru
          _
        // Predicated region
        $region21: #{siglip_s2rgb_embed.23} parent=11 // pred_check
          %p199 = pneg %p91
        $region22: #{siglip_s2rgb_embed.23} parent=11 // pred_check_branch
          %201 = sbr.rel (%p199) target = $region24
        $region23: #{siglip_s2rgb_embed.23} parent=11 // pred_region
          _
        $region24: #{siglip_s2rgb_embed.23} parent=11 // pred_fallthru
          _
      $region12: #{siglip_s2rgb_embed.23} parent=5 // pred_fallthru
        _
      %p202 = scmp.lt.s32.totalorder %s11, 2
      // Predicated region
      $region25: #{siglip_s2rgb_embed.23} parent=5 // pred_check
        %p203 = pneg %p202
      $region26: #{siglip_s2rgb_embed.23} parent=5 // pred_check_branch
        %205 = sbr.rel (%p203) target = $region28
      $region27: #{siglip_s2rgb_embed.23} parent=5 // pred_region
        // Predicated region
        $region29: #{siglip_s2rgb_embed.23} parent=27 // pred_check
          %p206 = pneg %p111
        $region30: #{siglip_s2rgb_embed.23} parent=27 // pred_check_branch
          %208 = sbr.rel (%p206) target = $region32
        $region31: #{siglip_s2rgb_embed.23} parent=27 // pred_region
          %s209 = sand.u32 %s101, 1
          %s210 = sand.u32 %s101, 1
          %s211 = smul.addr %s210, 256
          %s212 = scalar_lea.vmem [#allocation3], %s211
          %s213 = smul.u32 2, %s19
          %s214 = smul.addr %s213, 4
          %s215 = scalar_lea.vmem %s3, %s214
          // Predicated region
          $region33: #{siglip_s2rgb_embed.23} parent=31 // pred_check
            _
          $region34: #{siglip_s2rgb_embed.23} parent=31 // pred_check_branch
            %217 = sbr.rel (0) target = $region36
          $region35: #{siglip_s2rgb_embed.23} parent=31 // pred_region
            // Predicated region
            $region37: #{siglip_s2rgb_embed.23} parent=35 // pred_check
              _
            $region38: #{siglip_s2rgb_embed.23} parent=35 // pred_check_branch
              %219 = sbr.rel (0) target = $region40
            $region39: #{siglip_s2rgb_embed.23} parent=35 // pred_region
              // Predicated region
              $region52: #{siglip_s2rgb_embed.23} parent=39 // pred_check
                _
              $region53: #{siglip_s2rgb_embed.23} parent=39 // pred_check_branch
                %297 = sbr.rel (0) target = $region55
              $region54: #{siglip_s2rgb_embed.23} parent=39 // pred_region
                loop: start=0, step=1, limit=1
                $region56: #{siglip_s2rgb_embed.23} parent=54 // loop_pre_header
                  _
                $region57: #{siglip_s2rgb_embed.23} parent=54 // loop_header
                  %s299 = sphi 0, %s303
                  %p300 = scmp.ge.s32.totalorder %s299, 1
                  %s304 = sphi %s215, %s215
                  %s305 = sphi %s212, %s212
                $region58: #{siglip_s2rgb_embed.23} parent=54 // loop_header_branch
                  %302 = sbr.rel (%p300) target = $region62
                $region59: #{siglip_s2rgb_embed.23} parent=54 // loop_body
                  %v306 = vld [vmem:[%s304] sm:$0xff]
                  %307 = vst [vmem:[%s305] sm:$0xff] %v306
                  %v308 = vld [vmem:[%s304 + $0x10] sm:$0xff]
                  %309 = vst [vmem:[%s305 + $0x8] sm:$0xff] %v308
                  %v310 = vld [vmem:[%s304 + $0x20] sm:$0xff]
                  %311 = vst [vmem:[%s305 + $0x10] sm:$0xff] %v310
                  %v312 = vld [vmem:[%s304 + $0x30] sm:$0xff]
                  %313 = vst [vmem:[%s305 + $0x18] sm:$0xff] %v312
                  %v314 = vld [vmem:[%s304 + $0x40] sm:$0xff]
                  %315 = vst [vmem:[%s305 + $0x20] sm:$0xff] %v314
                  %v316 = vld [vmem:[%s304 + $0x50] sm:$0xff]
                  %317 = vst [vmem:[%s305 + $0x28] sm:$0xff] %v316
                  %v318 = vld [vmem:[%s304 + $0x60] sm:$0xff]
                  %319 = vst [vmem:[%s305 + $0x30] sm:$0xff] %v318
                  %v320 = vld [vmem:[%s304 + $0x70] sm:$0xff]
                  %321 = vst [vmem:[%s305 + $0x38] sm:$0xff] %v320
                  %v322 = vld [vmem:[%s304 + $0x80] sm:$0xff]
                  %323 = vst [vmem:[%s305 + $0x40] sm:$0xff] %v322
                  %v324 = vld [vmem:[%s304 + $0x90] sm:$0xff]
                  %325 = vst [vmem:[%s305 + $0x48] sm:$0xff] %v324
                  %v326 = vld [vmem:[%s304 + $0xa0] sm:$0xff]
                  %327 = vst [vmem:[%s305 + $0x50] sm:$0xff] %v326
                  %v328 = vld [vmem:[%s304 + $0xb0] sm:$0xff]
                  %329 = vst [vmem:[%s305 + $0x58] sm:$0xff] %v328
                  %v330 = vld [vmem:[%s304 + $0xc0] sm:$0xff]
                  %331 = vst [vmem:[%s305 + $0x60] sm:$0xff] %v330
                  %v332 = vld [vmem:[%s304 + $0xd0] sm:$0xff]
                  %333 = vst [vmem:[%s305 + $0x68] sm:$0xff] %v332
                  %v334 = vld [vmem:[%s304 + $0xe0] sm:$0xff]
                  %335 = vst [vmem:[%s305 + $0x70] sm:$0xff] %v334
                  %v336 = vld [vmem:[%s304 + $0xf0] sm:$0xff]
                  %337 = vst [vmem:[%s305 + $0x78] sm:$0xff] %v336
                  %v338 = vld [vmem:[%s304 + $0x100] sm:$0xff]
                  %339 = vst [vmem:[%s305 + $0x80] sm:$0xff] %v338
                  %v340 = vld [vmem:[%s304 + $0x110] sm:$0xff]
                  %341 = vst [vmem:[%s305 + $0x88] sm:$0xff] %v340
                  %v342 = vld [vmem:[%s304 + $0x120] sm:$0xff]
                  %343 = vst [vmem:[%s305 + $0x90] sm:$0xff] %v342
                  %v344 = vld [vmem:[%s304 + $0x130] sm:$0xff]
                  %345 = vst [vmem:[%s305 + $0x98] sm:$0xff] %v344
                  %v346 = vld [vmem:[%s304 + $0x140] sm:$0xff]
                  %347 = vst [vmem:[%s305 + $0xa0] sm:$0xff] %v346
                  %v348 = vld [vmem:[%s304 + $0x150] sm:$0xff]
                  %349 = vst [vmem:[%s305 + $0xa8] sm:$0xff] %v348
                  %v350 = vld [vmem:[%s304 + $0x160] sm:$0xff]
                  %351 = vst [vmem:[%s305 + $0xb0] sm:$0xff] %v350
                  %v352 = vld [vmem:[%s304 + $0x170] sm:$0xff]
                  %353 = vst [vmem:[%s305 + $0xb8] sm:$0xff] %v352
                  %v354 = vld [vmem:[%s304 + $0x180] sm:$0xff]
                  %355 = vst [vmem:[%s305 + $0xc0] sm:$0xff] %v354
                  %v356 = vld [vmem:[%s304 + $0x190] sm:$0xff]
                  %357 = vst [vmem:[%s305 + $0xc8] sm:$0xff] %v356
                  %v358 = vld [vmem:[%s304 + $0x1a0] sm:$0xff]
                  %359 = vst [vmem:[%s305 + $0xd0] sm:$0xff] %v358
                  %v360 = vld [vmem:[%s304 + $0x1b0] sm:$0xff]
                  %361 = vst [vmem:[%s305 + $0xd8] sm:$0xff] %v360
                  %v362 = vld [vmem:[%s304 + $0x1c0] sm:$0xff]
                  %363 = vst [vmem:[%s305 + $0xe0] sm:$0xff] %v362
                  %v364 = vld [vmem:[%s304 + $0x1d0] sm:$0xff]
                  %365 = vst [vmem:[%s305 + $0xe8] sm:$0xff] %v364
                  %v366 = vld [vmem:[%s304 + $0x1e0] sm:$0xff]
                  %367 = vst [vmem:[%s305 + $0xf0] sm:$0xff] %v366
                  %v368 = vld [vmem:[%s304 + $0x1f0] sm:$0xff]
                  %369 = vst [vmem:[%s305 + $0xf8] sm:$0xff] %v368
                $region60: #{siglip_s2rgb_embed.23} parent=54 // loop_footer
                  %s303 = sadd.s32 1, %s299
                $region61: #{siglip_s2rgb_embed.23} parent=54 // loop_footer_branch
                  %298 = sbr.rel target = $region57
                $region62: #{siglip_s2rgb_embed.23} parent=54 // loop_exit
                  _
              $region55: #{siglip_s2rgb_embed.23} parent=39 // pred_fallthru
                _
              // Predicated region
              $region63: #{siglip_s2rgb_embed.23} parent=39 // pred_check
                _
              $region64: #{siglip_s2rgb_embed.23} parent=39 // pred_check_branch
                %371 = sbr.rel target = $region66
              $region65: #{siglip_s2rgb_embed.23} parent=39 // pred_region
                _
              $region66: #{siglip_s2rgb_embed.23} parent=39 // pred_fallthru
                _
            $region40: #{siglip_s2rgb_embed.23} parent=35 // pred_fallthru
              _
            // Predicated region
            $region41: #{siglip_s2rgb_embed.23} parent=35 // pred_check
              _
            $region42: #{siglip_s2rgb_embed.23} parent=35 // pred_check_branch
              %221 = sbr.rel target = $region44
            $region43: #{siglip_s2rgb_embed.23} parent=35 // pred_region
              %s223 = ssub.s32 256, 1
              loop: start=0, step=1, limit=1
              $region45: #{siglip_s2rgb_embed.23} parent=43 // loop_pre_header
                _
              $region46: #{siglip_s2rgb_embed.23} parent=43 // loop_header
                %s225 = sphi 0, %s229
                %p226 = scmp.ge.s32.totalorder %s225, 1
                %s230 = sphi %s215, %s215
                %s231 = sphi %s212, %s212
              $region47: #{siglip_s2rgb_embed.23} parent=43 // loop_header_branch
                %228 = sbr.rel (%p226) target = $region51
              $region48: #{siglip_s2rgb_embed.23} parent=43 // loop_body
                %v232 = vld [vmem:[%s230] sm:%s223]
                %233 = vst [vmem:[%s231] sm:%s223] %v232
                %v234 = vld [vmem:[%s230 + $0x10] sm:%s223]
                %235 = vst [vmem:[%s231 + $0x8] sm:%s223] %v234
                %v236 = vld [vmem:[%s230 + $0x20] sm:%s223]
                %237 = vst [vmem:[%s231 + $0x10] sm:%s223] %v236
                %v238 = vld [vmem:[%s230 + $0x30] sm:%s223]
                %239 = vst [vmem:[%s231 + $0x18] sm:%s223] %v238
                %v240 = vld [vmem:[%s230 + $0x40] sm:%s223]
                %241 = vst [vmem:[%s231 + $0x20] sm:%s223] %v240
                %v242 = vld [vmem:[%s230 + $0x50] sm:%s223]
                %243 = vst [vmem:[%s231 + $0x28] sm:%s223] %v242
                %v244 = vld [vmem:[%s230 + $0x60] sm:%s223]
                %245 = vst [vmem:[%s231 + $0x30] sm:%s223] %v244
                %v246 = vld [vmem:[%s230 + $0x70] sm:%s223]
                %247 = vst [vmem:[%s231 + $0x38] sm:%s223] %v246
                %v248 = vld [vmem:[%s230 + $0x80] sm:%s223]
                %249 = vst [vmem:[%s231 + $0x40] sm:%s223] %v248
                %v250 = vld [vmem:[%s230 + $0x90] sm:%s223]
                %251 = vst [vmem:[%s231 + $0x48] sm:%s223] %v250
                %v252 = vld [vmem:[%s230 + $0xa0] sm:%s223]
                %253 = vst [vmem:[%s231 + $0x50] sm:%s223] %v252
                %v254 = vld [vmem:[%s230 + $0xb0] sm:%s223]
                %255 = vst [vmem:[%s231 + $0x58] sm:%s223] %v254
                %v256 = vld [vmem:[%s230 + $0xc0] sm:%s223]
                %257 = vst [vmem:[%s231 + $0x60] sm:%s223] %v256
                %v258 = vld [vmem:[%s230 + $0xd0] sm:%s223]
                %259 = vst [vmem:[%s231 + $0x68] sm:%s223] %v258
                %v260 = vld [vmem:[%s230 + $0xe0] sm:%s223]
                %261 = vst [vmem:[%s231 + $0x70] sm:%s223] %v260
                %v262 = vld [vmem:[%s230 + $0xf0] sm:%s223]
                %263 = vst [vmem:[%s231 + $0x78] sm:%s223] %v262
                %v264 = vld [vmem:[%s230 + $0x100] sm:%s223]
                %265 = vst [vmem:[%s231 + $0x80] sm:%s223] %v264
                %v266 = vld [vmem:[%s230 + $0x110] sm:%s223]
                %267 = vst [vmem:[%s231 + $0x88] sm:%s223] %v266
                %v268 = vld [vmem:[%s230 + $0x120] sm:%s223]
                %269 = vst [vmem:[%s231 + $0x90] sm:%s223] %v268
                %v270 = vld [vmem:[%s230 + $0x130] sm:%s223]
                %271 = vst [vmem:[%s231 + $0x98] sm:%s223] %v270
                %v272 = vld [vmem:[%s230 + $0x140] sm:%s223]
                %273 = vst [vmem:[%s231 + $0xa0] sm:%s223] %v272
                %v274 = vld [vmem:[%s230 + $0x150] sm:%s223]
                %275 = vst [vmem:[%s231 + $0xa8] sm:%s223] %v274
                %v276 = vld [vmem:[%s230 + $0x160] sm:%s223]
                %277 = vst [vmem:[%s231 + $0xb0] sm:%s223] %v276
                %v278 = vld [vmem:[%s230 + $0x170] sm:%s223]
                %279 = vst [vmem:[%s231 + $0xb8] sm:%s223] %v278
                %v280 = vld [vmem:[%s230 + $0x180] sm:%s223]
                %281 = vst [vmem:[%s231 + $0xc0] sm:%s223] %v280
                %v282 = vld [vmem:[%s230 + $0x190] sm:%s223]
                %283 = vst [vmem:[%s231 + $0xc8] sm:%s223] %v282
                %v284 = vld [vmem:[%s230 + $0x1a0] sm:%s223]
                %285 = vst [vmem:[%s231 + $0xd0] sm:%s223] %v284
                %v286 = vld [vmem:[%s230 + $0x1b0] sm:%s223]
                %287 = vst [vmem:[%s231 + $0xd8] sm:%s223] %v286
                %v288 = vld [vmem:[%s230 + $0x1c0] sm:%s223]
                %289 = vst [vmem:[%s231 + $0xe0] sm:%s223] %v288
                %v290 = vld [vmem:[%s230 + $0x1d0] sm:%s223]
                %291 = vst [vmem:[%s231 + $0xe8] sm:%s223] %v290
                %v292 = vld [vmem:[%s230 + $0x1e0] sm:%s223]
                %293 = vst [vmem:[%s231 + $0xf0] sm:%s223] %v292
                %v294 = vld [vmem:[%s230 + $0x1f0] sm:%s223]
                %295 = vst [vmem:[%s231 + $0xf8] sm:%s223] %v294
              $region49: #{siglip_s2rgb_embed.23} parent=43 // loop_footer
                %s229 = sadd.s32 1, %s225
              $region50: #{siglip_s2rgb_embed.23} parent=43 // loop_footer_branch
                %224 = sbr.rel target = $region46
              $region51: #{siglip_s2rgb_embed.23} parent=43 // loop_exit
                _
            $region44: #{siglip_s2rgb_embed.23} parent=35 // pred_fallthru
              _
          $region36: #{siglip_s2rgb_embed.23} parent=31 // pred_fallthru
            _
          %372 = vnop
        $region32: #{siglip_s2rgb_embed.23} parent=27 // pred_fallthru
          _
        // Predicated region
        $region67: #{siglip_s2rgb_embed.23} parent=27 // pred_check
          %p373 = pneg %p137
        $region68: #{siglip_s2rgb_embed.23} parent=27 // pred_check_branch
          %375 = sbr.rel (%p373) target = $region70
        $region69: #{siglip_s2rgb_embed.23} parent=27 // pred_region
          %s376 = smul.u32 2, %s19
          %p377 = scmp.lt.s32.totalorder %s376, 3
          %s378 = scalar_select %p377, %s376, 3
          %s379 = scalar_lea.vmem %s4, %s378
          %s380 = smul.u32 2, %s19
        $region70: #{siglip_s2rgb_embed.23} parent=27 // pred_fallthru
          _
      $region28: #{siglip_s2rgb_embed.23} parent=5 // pred_fallthru
        _
      %p381 = scmp.le.s32.totalorder 1, %s11
      %p382 = scmp.lt.s32.totalorder %s11, 3
      %p383 = pnand %p381, %p382
      %p384 = pneg %p383
      // Predicated region
      $region71: #{siglip_s2rgb_embed.23} parent=5 // pred_check
        _
      $region72: #{siglip_s2rgb_embed.23} parent=5 // pred_check_branch
        %386 = sbr.rel (%p383) target = $region74
      $region73: #{siglip_s2rgb_embed.23} parent=5 // pred_region
        %s387 = ssub.s32 %s11, 1
        %s388 = sand.u32 %s104, 1
        %s389 = sand.u32 %s104, 1
        %s390 = smul.addr %s389, 256
        %s391 = scalar_lea.vmem [#allocation3], %s390
        // Predicated region
        $region75: #{siglip_s2rgb_embed.23} parent=73 // pred_check
          %p392 = pneg %p117
        $region76: #{siglip_s2rgb_embed.23} parent=73 // pred_check_branch
          %394 = sbr.rel (%p392) target = $region78
        $region77: #{siglip_s2rgb_embed.23} parent=73 // pred_region
          _
        $region78: #{siglip_s2rgb_embed.23} parent=73 // pred_fallthru
          _
        %s395 = smul.u32 4, %s20
        %p396 = scmp.lt.s32.totalorder %s395, 3
        %s397 = scalar_select %p396, %s395, 3
        %s398 = smul.addr %s397, 2
        %s399 = smul.addr %s398, 4
        %s400 = scalar_lea.vmem %s0, %s399
        %p401 = pneg %p49
        %p402 = pneg %p46
        %p403 = pneg %p70
        %p404 = pneg %p67
        %p405 = pneg %p91
        %p406 = pneg %p88
        %s407 = sand.u32 %s104, 1
        %s408 = sand.u32 %s104, 1
        %s409 = smul.addr %s408, 256
        %s410 = scalar_lea.vmem [#allocation3], %s409
        %p411 = pneg %p117
        %p412 = pneg %p114
        %s413 = smul.u32 2, %s21
        %p414 = scmp.lt.s32.totalorder %s413, 3
        %s415 = scalar_select %p414, %s413, 3
        %s416 = scalar_lea.vmem %s4, %s415
        %p417 = pneg %p143
        %p418 = pneg %p140
        %p419 = pneg %p171
        %p420 = pneg %p168
        %s421 = sand.u32 %s158, 1
        %s422 = sand.u32 %s158, 1
        %s423 = smul.addr %s422, 32
        %s424 = scalar_lea.vmem [#allocation4], %s423
        %s425 = smul.u32 4, %s20
        %p426 = scmp.lt.s32.totalorder %s425, 3
        %s427 = scalar_select %p426, %s425, 3
        %s428 = smul.addr %s427, 2
        %s429 = smul.addr %s428, 4
        %s430 = scalar_lea.vmem %s0, %s429
        %s431 = smul.u32 4, %s20
        %s432 = smul.u32 2, %s21
        %s433 = smul.u32 2, %s21
        %p434 = scmp.lt.s32.totalorder %s433, 3
        %s435 = scalar_select %p434, %s433, 3
        %s436 = scalar_lea.vmem %s4, %s435
        %s437 = smul.u32 2, %s21
        %s438 = smul.u32 4, %s20
        %s439 = smul.u32 2, %s21
        %p440 = scmp.eq.s32.totalorder %s21, 0
        // Predicated region
        $region79: #{siglip_s2rgb_embed.23} parent=73 // pred_check
          %p441 = pneg %p440
        $region80: #{siglip_s2rgb_embed.23} parent=73 // pred_check_branch
          %443 = sbr.rel (%p441) target = $region82
        $region81: #{siglip_s2rgb_embed.23} parent=73 // pred_region
          %v444 = vld [vmem:[%s430] sm:$0xff]
          %v445 = vld [vmem:[%s430 + $0x8] sm:$0xff]
          %v446 = vld [vmem:[%s430 + $0x10] sm:$0xff]
          %v447 = vld [vmem:[%s430 + $0x18] sm:$0xff]
          %v448 = vunpack.c.l.bf16 %v444
          %v449 = vunpack.c.h.bf16 %v444
          %v450 = vunpack.c.l.bf16 %v445
          %v451 = vunpack.c.h.bf16 %v445
          %v452 = vunpack.c.l.bf16 %v446
          %v453 = vunpack.c.h.bf16 %v446
          %v454 = vunpack.c.l.bf16 %v447
          %v455 = vunpack.c.h.bf16 %v447
          %v456 = vadd.f32 %v448, %v449
          %457 = vadd.xlane.f32.xlu0 %v456
          %v458 = vpop.xlane.xlu0 %457
          %v459 = vadd.f32 %v450, %v451
          %460 = vadd.xlane.f32.xlu0 %v459
          %v461 = vpop.xlane.xlu0 %460
          %v462 = vadd.f32 %v452, %v453
          %463 = vadd.xlane.f32.xlu0 %v462
          %v464 = vpop.xlane.xlu0 %463
          %v465 = vadd.f32 %v454, %v455
          %466 = vadd.xlane.f32.xlu0 %v465
          %v467 = vpop.xlane.xlu0 %466
          %v468 = vrcp.pop 256.0
          %v469 = vmul.f32 256.0, %v468
          %v470 = vsub.f32 1.0, %v469
          %v471 = vmul.f32 %v468, %v470
          %v472 = vadd.f32 %v468, %v471
          %vm473 = vweird.f32 %v468
          %v474 = vsel %vm473, %v468, %v472
          %v475 = vmul.f32 %v458, %v474
          %v476 = vmul.f32 %v461, %v474
          %v477 = vmul.f32 %v464, %v474
          %v478 = vmul.f32 %v467, %v474
          %v479 = vsub.f32 %v448, %v475
          %v480 = vsub.f32 %v449, %v475
          %v481 = vsub.f32 %v450, %v476
          %v482 = vsub.f32 %v451, %v476
          %v483 = vsub.f32 %v452, %v477
          %v484 = vsub.f32 %v453, %v477
          %v485 = vsub.f32 %v454, %v478
          %v486 = vsub.f32 %v455, %v478
          %v487 = vmul.f32 %v479, %v479
          %v488 = vmul.f32 %v480, %v480
          %v489 = vmul.f32 %v481, %v481
          %v490 = vmul.f32 %v482, %v482
          %v491 = vmul.f32 %v483, %v483
          %v492 = vmul.f32 %v484, %v484
          %v493 = vmul.f32 %v485, %v485
          %v494 = vmul.f32 %v486, %v486
          %v495 = vadd.f32 %v487, %v488
          %496 = vadd.xlane.f32.xlu0 %v495
          %v497 = vpop.xlane.xlu0 %496
          %v498 = vadd.f32 %v489, %v490
          %499 = vadd.xlane.f32.xlu0 %v498
          %v500 = vpop.xlane.xlu0 %499
          %v501 = vadd.f32 %v491, %v492
          %502 = vadd.xlane.f32.xlu0 %v501
          %v503 = vpop.xlane.xlu0 %502
          %v504 = vadd.f32 %v493, %v494
          %505 = vadd.xlane.f32.xlu0 %v504
          %v506 = vpop.xlane.xlu0 %505
          %v507 = vmul.f32 %v497, %v474
          %v508 = vmul.f32 %v500, %v474
          %v509 = vmul.f32 %v503, %v474
          %v510 = vmul.f32 %v506, %v474
          %v511 = vadd.f32 %v507, 1e-06
          %v512 = vadd.f32 %v508, 1e-06
          %v513 = vadd.f32 %v509, 1e-06
          %v514 = vadd.f32 %v510, 1e-06
          %v515 = vrsqrt.pop %v511
          %v516 = vmul.f32 %v515, %v511
          %v517 = vmul.f32 %v516, %v515
          %v518 = vmul.f32 0.5, %v517
          %v519 = vsub.f32 1.5, %v518
          %v520 = vmul.f32 %v515, %v519
          %vm521 = vweird.f32 %v511
          %vm522 = vweird.f32 %v515
          %vm523 = vmor %vm521, %vm522
          %v524 = vsel %vm523, %v515, %v520
          %v525 = vrsqrt.pop %v512
          %v526 = vmul.f32 %v525, %v512
          %v527 = vmul.f32 %v526, %v525
          %v528 = vmul.f32 0.5, %v527
          %v529 = vsub.f32 1.5, %v528
          %v530 = vmul.f32 %v525, %v529
          %vm531 = vweird.f32 %v512
          %vm532 = vweird.f32 %v525
          %vm533 = vmor %vm531, %vm532
          %v534 = vsel %vm533, %v525, %v530
          %v535 = vrsqrt.pop %v513
          %v536 = vmul.f32 %v535, %v513
          %v537 = vmul.f32 %v536, %v535
          %v538 = vmul.f32 0.5, %v537
          %v539 = vsub.f32 1.5, %v538
          %v540 = vmul.f32 %v535, %v539
          %vm541 = vweird.f32 %v513
          %vm542 = vweird.f32 %v535
          %vm543 = vmor %vm541, %vm542
          %v544 = vsel %vm543, %v535, %v540
          %v545 = vrsqrt.pop %v514
          %v546 = vmul.f32 %v545, %v514
          %v547 = vmul.f32 %v546, %v545
          %v548 = vmul.f32 0.5, %v547
          %v549 = vsub.f32 1.5, %v548
          %v550 = vmul.f32 %v545, %v549
          %vm551 = vweird.f32 %v514
          %vm552 = vweird.f32 %v545
          %vm553 = vmor %vm551, %vm552
          %v554 = vsel %vm553, %v545, %v550
          %v555 = vmul.f32 %v479, %v524
          %v556 = vmul.f32 %v480, %v524
          %v557 = vmul.f32 %v481, %v534
          %v558 = vmul.f32 %v482, %v534
          %v559 = vmul.f32 %v483, %v544
          %v560 = vmul.f32 %v484, %v544
          %v561 = vmul.f32 %v485, %v554
          %v562 = vmul.f32 %v486, %v554
          %v563 = vld [vmem:[%s1] sm:$0x3]
          %v565 = vperm.slane %v563, 0
          %v566 = vperm.slane %v563, 1
          %v569 = vmul.f32 %v555, %v565
          %v570 = vmul.f32 %v556, %v566
          %v571 = vmul.f32 %v557, %v565
          %v572 = vmul.f32 %v558, %v566
          %v573 = vmul.f32 %v559, %v565
          %v574 = vmul.f32 %v560, %v566
          %v575 = vmul.f32 %v561, %v565
          %v576 = vmul.f32 %v562, %v566
          %v577 = vld [vmem:[%s2] sm:$0x3]
          %v579 = vperm.slane %v577, 0
          %v580 = vperm.slane %v577, 1
          %v583 = vadd.f32 %v569, %v579
          %v584 = vadd.f32 %v570, %v580
          %v585 = vadd.f32 %v571, %v579
          %v586 = vadd.f32 %v572, %v580
          %v587 = vadd.f32 %v573, %v579
          %v588 = vadd.f32 %v574, %v580
          %v589 = vadd.f32 %v575, %v579
          %v590 = vadd.f32 %v576, %v580
          %v591 = vpack.c.bf16 %v584, %v583
          %v592 = vpack.c.bf16 %v586, %v585
          %v593 = vpack.c.bf16 %v588, %v587
          %v594 = vpack.c.bf16 %v590, %v589
          %595 = vst [vmem:[#allocation2] sm:$0xff] %v591
          %596 = vst [vmem:[#allocation2 + $0x8] sm:$0xff] %v592
          %597 = vst [vmem:[#allocation2 + $0x10] sm:$0xff] %v593
          %598 = vst [vmem:[#allocation2 + $0x18] sm:$0xff] %v594
        $region82: #{siglip_s2rgb_embed.23} parent=73 // pred_fallthru
          _
        %v599 = vld [vmem:[#allocation2] sm:$0xff]
        %v600 = vld [vmem:[#allocation2 + $0x8] sm:$0xff]
        %v601 = vld [vmem:[#allocation2 + $0x10] sm:$0xff]
        %v602 = vld [vmem:[#allocation2 + $0x18] sm:$0xff]
        %v603 = vld [vmem:[%s391] sm:$0xff]
        %v604 = vld [vmem:[%s391 + $0x8] sm:$0xff]
        %v605 = vld [vmem:[%s391 + $0x10] sm:$0xff]
        %v606 = vld [vmem:[%s391 + $0x18] sm:$0xff]
        %v607 = vld [vmem:[%s391 + $0x20] sm:$0xff]
        %v608 = vld [vmem:[%s391 + $0x28] sm:$0xff]
        %v609 = vld [vmem:[%s391 + $0x30] sm:$0xff]
        %v610 = vld [vmem:[%s391 + $0x38] sm:$0xff]
        %v611 = vld [vmem:[%s391 + $0x40] sm:$0xff]
        %v612 = vld [vmem:[%s391 + $0x48] sm:$0xff]
        %v613 = vld [vmem:[%s391 + $0x50] sm:$0xff]
        %v614 = vld [vmem:[%s391 + $0x58] sm:$0xff]
        %v615 = vld [vmem:[%s391 + $0x60] sm:$0xff]
        %v616 = vld [vmem:[%s391 + $0x68] sm:$0xff]
        %v617 = vld [vmem:[%s391 + $0x70] sm:$0xff]
        %v618 = vld [vmem:[%s391 + $0x78] sm:$0xff]
        %v619 = vld [vmem:[%s391 + $0x80] sm:$0xff]
        %v620 = vld [vmem:[%s391 + $0x88] sm:$0xff]
        %v621 = vld [vmem:[%s391 + $0x90] sm:$0xff]
        %v622 = vld [vmem:[%s391 + $0x98] sm:$0xff]
        %v623 = vld [vmem:[%s391 + $0xa0] sm:$0xff]
        %v624 = vld [vmem:[%s391 + $0xa8] sm:$0xff]
        %v625 = vld [vmem:[%s391 + $0xb0] sm:$0xff]
        %v626 = vld [vmem:[%s391 + $0xb8] sm:$0xff]
        %v627 = vld [vmem:[%s391 + $0xc0] sm:$0xff]
        %v628 = vld [vmem:[%s391 + $0xc8] sm:$0xff]
        %v629 = vld [vmem:[%s391 + $0xd0] sm:$0xff]
        %v630 = vld [vmem:[%s391 + $0xd8] sm:$0xff]
        %v631 = vld [vmem:[%s391 + $0xe0] sm:$0xff]
        %v632 = vld [vmem:[%s391 + $0xe8] sm:$0xff]
        %v633 = vld [vmem:[%s391 + $0xf0] sm:$0xff]
        %v634 = vld [vmem:[%s391 + $0xf8] sm:$0xff]
        %v635 = vld [vmem:[%s436] sm:$0x3]
        %v637 = vperm.slane %v635, 0
        %v638 = vperm.slane %v635, 1
        %v645 = vunpack.c.l.b16 %v599
        %v646 = vunpack.c.h.b16 %v599
        %v647 = vunpack.c.l.b16 %v600
        %v648 = vunpack.c.h.b16 %v600
        %v649 = vunpack.c.l.b16 %v601
        %v650 = vunpack.c.h.b16 %v601
        %v651 = vunpack.c.l.b16 %v602
        %v652 = vunpack.c.h.b16 %v602
        %v653 = vpack.c.b16 %v647, %v645
        %v654 = vpack.c.b16 %v648, %v646
        %v655 = vpack.c.b16 %v651, %v649
        %v656 = vpack.c.b16 %v652, %v650
        %v693 = vunpack.c.l.b16 %v603
        %v694 = vunpack.c.h.b16 %v603
        %v695 = vunpack.c.l.b16 %v604
        %v696 = vunpack.c.h.b16 %v604
        %v697 = vunpack.c.l.b16 %v605
        %v698 = vunpack.c.h.b16 %v605
        %v699 = vunpack.c.l.b16 %v606
        %v700 = vunpack.c.h.b16 %v606
        %v701 = vunpack.c.l.b16 %v607
        %v702 = vunpack.c.h.b16 %v607
        %v703 = vunpack.c.l.b16 %v608
        %v704 = vunpack.c.h.b16 %v608
        %v705 = vunpack.c.l.b16 %v609
        %v706 = vunpack.c.h.b16 %v609
        %v707 = vunpack.c.l.b16 %v610
        %v708 = vunpack.c.h.b16 %v610
        %v709 = vunpack.c.l.b16 %v611
        %v710 = vunpack.c.h.b16 %v611
        %v711 = vunpack.c.l.b16 %v612
        %v712 = vunpack.c.h.b16 %v612
        %v713 = vunpack.c.l.b16 %v613
        %v714 = vunpack.c.h.b16 %v613
        %v715 = vunpack.c.l.b16 %v614
        %v716 = vunpack.c.h.b16 %v614
        %v717 = vunpack.c.l.b16 %v615
        %v718 = vunpack.c.h.b16 %v615
        %v719 = vunpack.c.l.b16 %v616
        %v720 = vunpack.c.h.b16 %v616
        %v721 = vunpack.c.l.b16 %v617
        %v722 = vunpack.c.h.b16 %v617
        %v723 = vunpack.c.l.b16 %v618
        %v724 = vunpack.c.h.b16 %v618
        %v725 = vunpack.c.l.b16 %v619
        %v726 = vunpack.c.h.b16 %v619
        %v727 = vunpack.c.l.b16 %v620
        %v728 = vunpack.c.h.b16 %v620
        %v729 = vunpack.c.l.b16 %v621
        %v730 = vunpack.c.h.b16 %v621
        %v731 = vunpack.c.l.b16 %v622
        %v732 = vunpack.c.h.b16 %v622
        %v733 = vunpack.c.l.b16 %v623
        %v734 = vunpack.c.h.b16 %v623
        %v735 = vunpack.c.l.b16 %v624
        %v736 = vunpack.c.h.b16 %v624
        %v737 = vunpack.c.l.b16 %v625
        %v738 = vunpack.c.h.b16 %v625
        %v739 = vunpack.c.l.b16 %v626
        %v740 = vunpack.c.h.b16 %v626
        %v741 = vunpack.c.l.b16 %v627
        %v742 = vunpack.c.h.b16 %v627
        %v743 = vunpack.c.l.b16 %v628
        %v744 = vunpack.c.h.b16 %v628
        %v745 = vunpack.c.l.b16 %v629
        %v746 = vunpack.c.h.b16 %v629
        %v747 = vunpack.c.l.b16 %v630
        %v748 = vunpack.c.h.b16 %v630
        %v749 = vunpack.c.l.b16 %v631
        %v750 = vunpack.c.h.b16 %v631
        %v751 = vunpack.c.l.b16 %v632
        %v752 = vunpack.c.h.b16 %v632
        %v753 = vunpack.c.l.b16 %v633
        %v754 = vunpack.c.h.b16 %v633
        %v755 = vunpack.c.l.b16 %v634
        %v756 = vunpack.c.h.b16 %v634
        %v757 = vpack.c.b16 %v695, %v693
        %v758 = vpack.c.b16 %v696, %v694
        %v759 = vpack.c.b16 %v699, %v697
        %v760 = vpack.c.b16 %v700, %v698
        %v761 = vpack.c.b16 %v703, %v701
        %v762 = vpack.c.b16 %v704, %v702
        %v763 = vpack.c.b16 %v707, %v705
        %v764 = vpack.c.b16 %v708, %v706
        %v765 = vpack.c.b16 %v711, %v709
        %v766 = vpack.c.b16 %v712, %v710
        %v767 = vpack.c.b16 %v715, %v713
        %v768 = vpack.c.b16 %v716, %v714
        %v769 = vpack.c.b16 %v719, %v717
        %v770 = vpack.c.b16 %v720, %v718
        %v771 = vpack.c.b16 %v723, %v721
        %v772 = vpack.c.b16 %v724, %v722
        %v773 = vpack.c.b16 %v727, %v725
        %v774 = vpack.c.b16 %v728, %v726
        %v775 = vpack.c.b16 %v731, %v729
        %v776 = vpack.c.b16 %v732, %v730
        %v777 = vpack.c.b16 %v735, %v733
        %v778 = vpack.c.b16 %v736, %v734
        %v779 = vpack.c.b16 %v739, %v737
        %v780 = vpack.c.b16 %v740, %v738
        %v781 = vpack.c.b16 %v743, %v741
        %v782 = vpack.c.b16 %v744, %v742
        %v783 = vpack.c.b16 %v747, %v745
        %v784 = vpack.c.b16 %v748, %v746
        %v785 = vpack.c.b16 %v751, %v749
        %v786 = vpack.c.b16 %v752, %v750
        %v787 = vpack.c.b16 %v755, %v753
        %v788 = vpack.c.b16 %v756, %v754
        %821 = vmatpush.bf16.msra.mxu0 %v771
        %822 = vmatpush.bf16.msra.mxu0 %v769
        %823 = vmatpush.bf16.msra.mxu0 %v767
        %824 = vmatpush.bf16.msra.mxu0 %v765
        %825 = vmatpush.bf16.msra.mxu0 %v763
        %826 = vmatpush.bf16.msra.mxu0 %v761
        %827 = vmatpush.bf16.msra.mxu0 %v759
        %828 = vmatpush.bf16.msra.mxu0 %v757
        %829 = vmatmul.bf16.gmra.mxu0 %v653
        %v830 = vpop.f32.mrf.mxu0
        %v831 = vadd.f32 %v637, %v830
        %v832 = vpop.f32.mrf.mxu0
        %v833 = vadd.f32 %v637, %v832
        %834 = vmatmul.bf16.gmra.mxu0 %v655
        %v835 = vpop.f32.mrf.mxu0
        %v836 = vadd.f32 %v637, %v835
        %v837 = vpop.f32.mrf.mxu0
        %v838 = vadd.f32 %v637, %v837
        %839 = vdwg.mxu0
        %840 = vmatpush.bf16.msra.mxu0 %v787
        %841 = vmatpush.bf16.msra.mxu0 %v785
        %842 = vmatpush.bf16.msra.mxu0 %v783
        %843 = vmatpush.bf16.msra.mxu0 %v781
        %844 = vmatpush.bf16.msra.mxu0 %v779
        %845 = vmatpush.bf16.msra.mxu0 %v777
        %846 = vmatpush.bf16.msra.mxu0 %v775
        %847 = vmatpush.bf16.msra.mxu0 %v773
        %848 = vmatmul.bf16.gmra.mxu0 %v654
        %v849 = vpop.f32.mrf.mxu0
        %v850 = vadd.f32 %v831, %v849
        %v851 = vpop.f32.mrf.mxu0
        %v852 = vadd.f32 %v833, %v851
        %853 = vmatmul.bf16.gmra.mxu0 %v656
        %v854 = vpop.f32.mrf.mxu0
        %v855 = vadd.f32 %v836, %v854
        %v856 = vpop.f32.mrf.mxu0
        %v857 = vadd.f32 %v838, %v856
        %858 = vdwg.mxu0
        %859 = vmatpush.bf16.msra.mxu0 %v772
        %860 = vmatpush.bf16.msra.mxu0 %v770
        %861 = vmatpush.bf16.msra.mxu0 %v768
        %862 = vmatpush.bf16.msra.mxu0 %v766
        %863 = vmatpush.bf16.msra.mxu0 %v764
        %864 = vmatpush.bf16.msra.mxu0 %v762
        %865 = vmatpush.bf16.msra.mxu0 %v760
        %866 = vmatpush.bf16.msra.mxu0 %v758
        %867 = vmatmul.bf16.gmra.mxu0 %v653
        %v868 = vpop.f32.mrf.mxu0
        %v869 = vadd.f32 %v638, %v868
        %v870 = vpop.f32.mrf.mxu0
        %v871 = vadd.f32 %v638, %v870
        %872 = vmatmul.bf16.gmra.mxu0 %v655
        %v873 = vpop.f32.mrf.mxu0
        %v874 = vadd.f32 %v638, %v873
        %v875 = vpop.f32.mrf.mxu0
        %v876 = vadd.f32 %v638, %v875
        %877 = vdwg.mxu0
        %878 = vmatpush.bf16.msra.mxu0 %v788
        %879 = vmatpush.bf16.msra.mxu0 %v786
        %880 = vmatpush.bf16.msra.mxu0 %v784
        %881 = vmatpush.bf16.msra.mxu0 %v782
        %882 = vmatpush.bf16.msra.mxu0 %v780
        %883 = vmatpush.bf16.msra.mxu0 %v778
        %884 = vmatpush.bf16.msra.mxu0 %v776
        %885 = vmatpush.bf16.msra.mxu0 %v774
        %886 = vmatmul.bf16.gmra.mxu0 %v654
        %v887 = vpop.f32.mrf.mxu0
        %v888 = vadd.f32 %v869, %v887
        %v889 = vpop.f32.mrf.mxu0
        %v890 = vadd.f32 %v871, %v889
        %891 = vmatmul.bf16.gmra.mxu0 %v656
        %v892 = vpop.f32.mrf.mxu0
        %v893 = vadd.f32 %v874, %v892
        %v894 = vpop.f32.mrf.mxu0
        %v895 = vadd.f32 %v876, %v894
        %896 = vdwg.mxu0
        %v897 = vpack.c.bf16 %v888, %v850
        %v898 = vpack.c.bf16 %v890, %v852
        %v899 = vpack.c.bf16 %v893, %v855
        %v900 = vpack.c.bf16 %v895, %v857
        %901 = vst [vmem:[%s424] sm:$0xff] %v897
        %902 = vst [vmem:[%s424 + $0x8] sm:$0xff] %v898
        %903 = vst [vmem:[%s424 + $0x10] sm:$0xff] %v899
        %904 = vst [vmem:[%s424 + $0x18] sm:$0xff] %v900
        %s905 = sand.u32 %s158, 1
        %s906 = sand.u32 %s158, 1
        %s907 = smul.addr %s906, 32
        %s908 = scalar_lea.vmem [#allocation4], %s907
        // Predicated region
        $region83: #{siglip_s2rgb_embed.23} parent=73 // pred_check
          %p909 = pneg %p168
        $region84: #{siglip_s2rgb_embed.23} parent=73 // pred_check_branch
          %911 = sbr.rel (%p909) target = $region86
        $region85: #{siglip_s2rgb_embed.23} parent=73 // pred_region
          %s912 = smul.u32 4, %s20
          %s913 = smul.u32 2, %s21
          %s914 = smul.addr %s912, 4
          %s915 = sadd.s32 %s913, %s914
          %s916 = smul.addr %s915, 4
          %s917 = scalar_lea.vmem %s5, %s916
          // Predicated region
          $region87: #{siglip_s2rgb_embed.23} parent=85 // pred_check
            _
          $region88: #{siglip_s2rgb_embed.23} parent=85 // pred_check_branch
            %919 = sbr.rel (0) target = $region90
          $region89: #{siglip_s2rgb_embed.23} parent=85 // pred_region
            // Predicated region
            $region91: #{siglip_s2rgb_embed.23} parent=89 // pred_check
              _
            $region92: #{siglip_s2rgb_embed.23} parent=89 // pred_check_branch
              %921 = sbr.rel (0) target = $region94
            $region93: #{siglip_s2rgb_embed.23} parent=89 // pred_region
              // Predicated region
              $region106: #{siglip_s2rgb_embed.23} parent=93 // pred_check
                _
              $region107: #{siglip_s2rgb_embed.23} parent=93 // pred_check_branch
                %943 = sbr.rel (0) target = $region109
              $region108: #{siglip_s2rgb_embed.23} parent=93 // pred_region
                loop: start=0, step=1, limit=1
                $region110: #{siglip_s2rgb_embed.23} parent=108 // loop_pre_header
                  _
                $region111: #{siglip_s2rgb_embed.23} parent=108 // loop_header
                  %s945 = sphi 0, %s949
                  %p946 = scmp.ge.s32.totalorder %s945, 1
                  %s950 = sphi %s908, %s908
                  %s951 = sphi %s917, %s917
                $region112: #{siglip_s2rgb_embed.23} parent=108 // loop_header_branch
                  %948 = sbr.rel (%p946) target = $region116
                $region113: #{siglip_s2rgb_embed.23} parent=108 // loop_body
                  %v952 = vld [vmem:[%s950] sm:$0xff]
                  %953 = vst [vmem:[%s951] sm:$0xff] %v952
                  %v954 = vld [vmem:[%s950 + $0x8] sm:$0xff]
                  %955 = vst [vmem:[%s951 + $0x10] sm:$0xff] %v954
                  %v956 = vld [vmem:[%s950 + $0x10] sm:$0xff]
                  %957 = vst [vmem:[%s951 + $0x20] sm:$0xff] %v956
                  %v958 = vld [vmem:[%s950 + $0x18] sm:$0xff]
                  %959 = vst [vmem:[%s951 + $0x30] sm:$0xff] %v958
                $region114: #{siglip_s2rgb_embed.23} parent=108 // loop_footer
                  %s949 = sadd.s32 1, %s945
                $region115: #{siglip_s2rgb_embed.23} parent=108 // loop_footer_branch
                  %944 = sbr.rel target = $region111
                $region116: #{siglip_s2rgb_embed.23} parent=108 // loop_exit
                  _
              $region109: #{siglip_s2rgb_embed.23} parent=93 // pred_fallthru
                _
              // Predicated region
              $region117: #{siglip_s2rgb_embed.23} parent=93 // pred_check
                _
              $region118: #{siglip_s2rgb_embed.23} parent=93 // pred_check_branch
                %961 = sbr.rel target = $region120
              $region119: #{siglip_s2rgb_embed.23} parent=93 // pred_region
                _
              $region120: #{siglip_s2rgb_embed.23} parent=93 // pred_fallthru
                _
            $region94: #{siglip_s2rgb_embed.23} parent=89 // pred_fallthru
              _
            // Predicated region
            $region95: #{siglip_s2rgb_embed.23} parent=89 // pred_check
              _
            $region96: #{siglip_s2rgb_embed.23} parent=89 // pred_check_branch
              %923 = sbr.rel target = $region98
            $region97: #{siglip_s2rgb_embed.23} parent=89 // pred_region
              %s925 = ssub.s32 256, 1
              loop: start=0, step=1, limit=1
              $region99: #{siglip_s2rgb_embed.23} parent=97 // loop_pre_header
                _
              $region100: #{siglip_s2rgb_embed.23} parent=97 // loop_header
                %s927 = sphi 0, %s931
                %p928 = scmp.ge.s32.totalorder %s927, 1
                %s932 = sphi %s908, %s908
                %s933 = sphi %s917, %s917
              $region101: #{siglip_s2rgb_embed.23} parent=97 // loop_header_branch
                %930 = sbr.rel (%p928) target = $region105
              $region102: #{siglip_s2rgb_embed.23} parent=97 // loop_body
                %v934 = vld [vmem:[%s932] sm:%s925]
                %935 = vst [vmem:[%s933] sm:%s925] %v934
                %v936 = vld [vmem:[%s932 + $0x8] sm:%s925]
                %937 = vst [vmem:[%s933 + $0x10] sm:%s925] %v936
                %v938 = vld [vmem:[%s932 + $0x10] sm:%s925]
                %939 = vst [vmem:[%s933 + $0x20] sm:%s925] %v938
                %v940 = vld [vmem:[%s932 + $0x18] sm:%s925]
                %941 = vst [vmem:[%s933 + $0x30] sm:%s925] %v940
              $region103: #{siglip_s2rgb_embed.23} parent=97 // loop_footer
                %s931 = sadd.s32 1, %s927
              $region104: #{siglip_s2rgb_embed.23} parent=97 // loop_footer_branch
                %926 = sbr.rel target = $region100
              $region105: #{siglip_s2rgb_embed.23} parent=97 // loop_exit
                _
            $region98: #{siglip_s2rgb_embed.23} parent=89 // pred_fallthru
              _
          $region90: #{siglip_s2rgb_embed.23} parent=85 // pred_fallthru
            _
          %962 = vnop
        $region86: #{siglip_s2rgb_embed.23} parent=73 // pred_fallthru
          _
      $region74: #{siglip_s2rgb_embed.23} parent=5 // pred_fallthru
        _
      %p963 = scmp.le.s32.totalorder 2, %s11
      // Predicated region
      $region121: #{siglip_s2rgb_embed.23} parent=5 // pred_check
        %p964 = pneg %p963
      $region122: #{siglip_s2rgb_embed.23} parent=5 // pred_check_branch
        %966 = sbr.rel (%p964) target = $region124
      $region123: #{siglip_s2rgb_embed.23} parent=5 // pred_region
        %s967 = ssub.s32 %s11, 2
        // Predicated region
        $region125: #{siglip_s2rgb_embed.23} parent=123 // pred_check
          %p968 = pneg %p174
        $region126: #{siglip_s2rgb_embed.23} parent=123 // pred_check_branch
          %970 = sbr.rel (%p968) target = $region128
        $region127: #{siglip_s2rgb_embed.23} parent=123 // pred_region
          %s971 = sand.u32 %s159, 1
          %s972 = sand.u32 %s159, 1
          %s973 = smul.addr %s972, 32
          %s974 = scalar_lea.vmem [#allocation4], %s973
        $region128: #{siglip_s2rgb_embed.23} parent=123 // pred_fallthru
          _
      $region124: #{siglip_s2rgb_embed.23} parent=5 // pred_fallthru
        _
    $region6: #{siglip_s2rgb_embed.23} parent=1 // loop_footer
      %s15 = sadd.s32 1, %s11
    $region7: #{siglip_s2rgb_embed.23} parent=1 // loop_footer_branch
      %10 = sbr.rel target = $region3
    $region8: #{siglip_s2rgb_embed.23} parent=1 // loop_exit
      _

// kernel: siglip_s2rgb_embed.21
$region0: #{siglip_s2rgb_embed.21}
  #allocation0 [shape = 'u32[]', space=smem, size = 0x4, offset = 0x4, fixed_abs, tag = 'smem constant byte address 0x4 - core index']
  #allocation1 [shape = 'u32[72,128]{1,0:T(1,128)}', space=vmem, size = 0x9000, scoped, tag = 'internal scratch']
  #allocation2 [shape = 'bf16[32,256]{1,0:T(8,128)(2,1)}', space=vmem, size = 0x4000, scoped, tag = 'scratch operand']
  %s0 = inlined_call_operand.vmem [shape: bf16[32,256], index: 0, kind: input, shape index: {}]
  %s1 = inlined_call_operand.vmem [shape: f32[1,256], index: 1, kind: input, shape index: {}]
  %s2 = inlined_call_operand.vmem [shape: f32[1,256], index: 2, kind: input, shape index: {}]
  %s3 = inlined_call_operand.hbm [shape: bf16[256,1024], index: 3, kind: input, shape index: {}]
  %s4 = inlined_call_operand.vmem [shape: f32[1,1024], index: 4, kind: input, shape index: {}]
  %s5 = inlined_call_operand.vmem [shape: bf16[32,1024], index: 5, kind: output, shape index: {}]
  %s6 = sld [smem:[#allocation0]]
  $region95: #{siglip_s2rgb_embed.21} parent=0
    _
  %s8 = ssub.s32 1, %s6
  %s9 = scalar_select 0, %s8, %s6
  $region1: #{siglip_s2rgb_embed.21} parent=0
    #allocation3 [shape = 'u8[262144]{0}', space=vmem, size = 0x40000, scoped, tag = 'input window, operand 3']
    #allocation4 [shape = 's32[2]{0}', space=sflag, size = 0x8, scoped, tag = 'scoped memory for siglip_s2rgb_embed.21']
    #allocation5 [shape = 'u8[32768]{0}', space=vmem, size = 0x8000, scoped, tag = 'output window, operand 0']
    %10 = vsyncpa [#allocation4], 0
    %s11 = scalar_lea.sflag [#allocation4], 1
    %12 = vsyncpa %s11, 0
    loop: start=0, step=1, limit=6
    $region2: #{siglip_s2rgb_embed.21} parent=1 // loop_pre_header
      _
    $region3: #{siglip_s2rgb_embed.21} parent=1 // loop_header
      %s14 = sphi 0, %s18
      %p15 = scmp.ge.s32.totalorder %s14, 6
      %s21 = sphi 0, %s33
      %s22 = sphi 0, %s29
      %s23 = sphi 0, %s21
      %s24 = sphi 0, %s22
      %s25 = sphi 0, %s23
      %s26 = sphi 0, %s24
      %s36 = sphi 0, %s38
      %s39 = sphi 0, %s36
      %s40 = sphi 0, %s39
      %s56 = sphi 0, %s40
      %s60 = sphi 0, %s60
      %s62 = sphi 0, %s60
      %s63 = sphi 0, %s62
      %s77 = sphi 0, %s63
      %s81 = sphi 0, %s81
      %s83 = sphi 0, %s81
      %s84 = sphi 0, %s83
      %s98 = sphi 0, %s84
      %s104 = sphi 0, %s106
      %s107 = sphi 0, %s104
      %s108 = sphi 0, %s107
      %s124 = sphi 0, %s108
      %s130 = sphi 0, %s132
      %s133 = sphi 0, %s130
      %s134 = sphi 0, %s133
      %s150 = sphi 0, %s134
      %s158 = sphi 0, %s160
      %s161 = sphi 0, %s158
      %s162 = sphi 0, %s161
      %s178 = sphi 0, %s162
    $region4: #{siglip_s2rgb_embed.21} parent=1 // loop_header_branch
      %17 = sbr.rel (%p15) target = $region8
    $region5: #{siglip_s2rgb_embed.21} parent=1 // loop_body
      %s19 = ssub.s32 %s14, 1
      %s20 = ssub.s32 %s14, 2
      %s27 = sadd.s32 1, %s22
      %p28 = scmp.ge.s32.totalorder %s27, 4
      %s29 = scalar_select %p28, 0, %s27
      %s30 = sadd.s32 1, %s21
      %s31 = scalar_select %p28, %s30, %s21
      %p32 = scmp.ge.s32.totalorder %s31, 1
      %s33 = scalar_select %p32, 0, %s31
      %s34 = ssub.s32 %s21, %s33
      %p35 = scmp.eq.s32.totalorder %s34, 0
      %s37 = sadd.s32 %s36, 1
      %s38 = scalar_select %p35, %s36, %s37
      %p41 = pneg %p35
      %p42 = scmp.eq.s32.totalorder %s14, 3
      %p43 = por %p41, %p42
      %p44 = scmp.ne.s32.totalorder %s36, %s39
      %p45 = scmp.eq.s32.totalorder %s14, 0
      %p46 = por %p44, %p45
      %p47 = scmp.ne.s32.totalorder %s36, %s39
      %p48 = scmp.eq.s32.totalorder %s19, 3
      %p49 = por %p47, %p48
      %p50 = scmp.ne.s32.totalorder %s39, %s40
      %p51 = scmp.eq.s32.totalorder %s19, 0
      %p52 = por %p50, %p51
      %p53 = scmp.ne.s32.totalorder %s39, %s40
      %p54 = scmp.eq.s32.totalorder %s20, 3
      %p55 = por %p53, %p54
      %p57 = scmp.ne.s32.totalorder %s40, %s56
      %p58 = scmp.eq.s32.totalorder %s20, 0
      %p59 = por %p57, %p58
      %s61 = sadd.s32 %s60, 1
      %p64 = scmp.eq.s32.totalorder %s14, 3
      %p65 = scmp.ne.s32.totalorder %s60, %s62
      %p66 = scmp.eq.s32.totalorder %s14, 0
      %p67 = por %p65, %p66
      %p68 = scmp.ne.s32.totalorder %s60, %s62
      %p69 = scmp.eq.s32.totalorder %s19, 3
      %p70 = por %p68, %p69
      %p71 = scmp.ne.s32.totalorder %s62, %s63
      %p72 = scmp.eq.s32.totalorder %s19, 0
      %p73 = por %p71, %p72
      %p74 = scmp.ne.s32.totalorder %s62, %s63
      %p75 = scmp.eq.s32.totalorder %s20, 3
      %p76 = por %p74, %p75
      %p78 = scmp.ne.s32.totalorder %s63, %s77
      %p79 = scmp.eq.s32.totalorder %s20, 0
      %p80 = por %p78, %p79
      %s82 = sadd.s32 %s81, 1
      %p85 = scmp.eq.s32.totalorder %s14, 3
      %p86 = scmp.ne.s32.totalorder %s81, %s83
      %p87 = scmp.eq.s32.totalorder %s14, 0
      %p88 = por %p86, %p87
      %p89 = scmp.ne.s32.totalorder %s81, %s83
      %p90 = scmp.eq.s32.totalorder %s19, 3
      %p91 = por %p89, %p90
      %p92 = scmp.ne.s32.totalorder %s83, %s84
      %p93 = scmp.eq.s32.totalorder %s19, 0
      %p94 = por %p92, %p93
      %p95 = scmp.ne.s32.totalorder %s83, %s84
      %p96 = scmp.eq.s32.totalorder %s20, 3
      %p97 = por %p95, %p96
      %p99 = scmp.ne.s32.totalorder %s84, %s98
      %p100 = scmp.eq.s32.totalorder %s20, 0
      %p101 = por %p99, %p100
      %s102 = ssub.s32 %s22, %s29
      %p103 = scmp.eq.s32.totalorder %s102, 0
      %s105 = sadd.s32 %s104, 1
      %s106 = scalar_select %p103, %s104, %s105
      %p109 = pneg %p103
      %p110 = scmp.eq.s32.totalorder %s14, 3
      %p111 = por %p109, %p110
      %p112 = scmp.ne.s32.totalorder %s104, %s107
      %p113 = scmp.eq.s32.totalorder %s14, 0
      %p114 = por %p112, %p113
      %p115 = scmp.ne.s32.totalorder %s104, %s107
      %p116 = scmp.eq.s32.totalorder %s19, 3
      %p117 = por %p115, %p116
      %p118 = scmp.ne.s32.totalorder %s107, %s108
      %p119 = scmp.eq.s32.totalorder %s19, 0
      %p120 = por %p118, %p119
      %p121 = scmp.ne.s32.totalorder %s107, %s108
      %p122 = scmp.eq.s32.totalorder %s20, 3
      %p123 = por %p121, %p122
      %p125 = scmp.ne.s32.totalorder %s108, %s124
      %p126 = scmp.eq.s32.totalorder %s20, 0
      %p127 = por %p125, %p126
      %s128 = ssub.s32 %s22, %s29
      %p129 = scmp.eq.s32.totalorder %s128, 0
      %s131 = sadd.s32 %s130, 1
      %s132 = scalar_select %p129, %s130, %s131
      %p135 = pneg %p129
      %p136 = scmp.eq.s32.totalorder %s14, 3
      %p137 = por %p135, %p136
      %p138 = scmp.ne.s32.totalorder %s130, %s133
      %p139 = scmp.eq.s32.totalorder %s14, 0
      %p140 = por %p138, %p139
      %p141 = scmp.ne.s32.totalorder %s130, %s133
      %p142 = scmp.eq.s32.totalorder %s19, 3
      %p143 = por %p141, %p142
      %p144 = scmp.ne.s32.totalorder %s133, %s134
      %p145 = scmp.eq.s32.totalorder %s19, 0
      %p146 = por %p144, %p145
      %p147 = scmp.ne.s32.totalorder %s133, %s134
      %p148 = scmp.eq.s32.totalorder %s20, 3
      %p149 = por %p147, %p148
      %p151 = scmp.ne.s32.totalorder %s134, %s150
      %p152 = scmp.eq.s32.totalorder %s20, 0
      %p153 = por %p151, %p152
      %s154 = ssub.s32 %s21, %s33
      %s155 = ssub.s32 %s22, %s29
      %s156 = sor.u32 %s154, %s155
      %p157 = scmp.eq.s32.totalorder %s156, 0
      %s159 = sadd.s32 %s158, 1
      %s160 = scalar_select %p157, %s158, %s159
      %p163 = pneg %p157
      %p164 = scmp.eq.s32.totalorder %s14, 3
      %p165 = por %p163, %p164
      %p166 = scmp.ne.s32.totalorder %s158, %s161
      %p167 = scmp.eq.s32.totalorder %s14, 0
      %p168 = por %p166, %p167
      %p169 = scmp.ne.s32.totalorder %s158, %s161
      %p170 = scmp.eq.s32.totalorder %s19, 3
      %p171 = por %p169, %p170
      %p172 = scmp.ne.s32.totalorder %s161, %s162
      %p173 = scmp.eq.s32.totalorder %s19, 0
      %p174 = por %p172, %p173
      %p175 = scmp.ne.s32.totalorder %s161, %s162
      %p176 = scmp.eq.s32.totalorder %s20, 3
      %p177 = por %p175, %p176
      %p179 = scmp.ne.s32.totalorder %s162, %s178
      %p180 = scmp.eq.s32.totalorder %s20, 0
      %p181 = por %p179, %p180
      %p182 = scmp.le.s32.totalorder 1, %s14
      %p183 = scmp.lt.s32.totalorder %s14, 5
      %p184 = pnand %p182, %p183
      %p185 = pneg %p184
      // Predicated region
      $region9: #{siglip_s2rgb_embed.21} parent=5 // pred_check
        _
      $region10: #{siglip_s2rgb_embed.21} parent=5 // pred_check_branch
        %187 = sbr.rel (%p184) target = $region12
      $region11: #{siglip_s2rgb_embed.21} parent=5 // pred_region
        %s188 = ssub.s32 %s14, 1
        // Predicated region
        $region13: #{siglip_s2rgb_embed.21} parent=11 // pred_check
          %p189 = pneg %p52
        $region14: #{siglip_s2rgb_embed.21} parent=11 // pred_check_branch
          %191 = sbr.rel (%p189) target = $region16
        $region15: #{siglip_s2rgb_embed.21} parent=11 // pred_region
          %s192 = smul.u32 4, %s23
          %p193 = scmp.lt.s32.totalorder %s192, 3
          %s194 = scalar_select %p193, %s192, 3
          %s195 = smul.addr %s194, 2
          %s196 = smul.addr %s195, 4
          %s197 = scalar_lea.vmem %s0, %s196
          %s198 = smul.u32 4, %s23
        $region16: #{siglip_s2rgb_embed.21} parent=11 // pred_fallthru
          _
        // Predicated region
        $region17: #{siglip_s2rgb_embed.21} parent=11 // pred_check
          %p199 = pneg %p73
        $region18: #{siglip_s2rgb_embed.21} parent=11 // pred_check_branch
          %201 = sbr.rel (%p199) target = $region20
        $region19: #{siglip_s2rgb_embed.21} parent=11 // pred_region
          _
        $region20: #{siglip_s2rgb_embed.21} parent=11 // pred_fallthru
          _
        // Predicated region
        $region21: #{siglip_s2rgb_embed.21} parent=11 // pred_check
          %p202 = pneg %p94
        $region22: #{siglip_s2rgb_embed.21} parent=11 // pred_check_branch
          %204 = sbr.rel (%p202) target = $region24
        $region23: #{siglip_s2rgb_embed.21} parent=11 // pred_region
          _
        $region24: #{siglip_s2rgb_embed.21} parent=11 // pred_fallthru
          _
      $region12: #{siglip_s2rgb_embed.21} parent=5 // pred_fallthru
        _
      %p205 = scmp.lt.s32.totalorder %s14, 4
      // Predicated region
      $region25: #{siglip_s2rgb_embed.21} parent=5 // pred_check
        %p206 = pneg %p205
      $region26: #{siglip_s2rgb_embed.21} parent=5 // pred_check_branch
        %208 = sbr.rel (%p206) target = $region28
      $region27: #{siglip_s2rgb_embed.21} parent=5 // pred_region
        // Predicated region
        $region29: #{siglip_s2rgb_embed.21} parent=27 // pred_check
          %p209 = pneg %p114
        $region30: #{siglip_s2rgb_embed.21} parent=27 // pred_check_branch
          %211 = sbr.rel (%p209) target = $region32
        $region31: #{siglip_s2rgb_embed.21} parent=27 // pred_region
          %s212 = sand.u32 %s104, 1
          %s213 = scalar_lea.sflag [#allocation4], %s212
          %s214 = sand.u32 %s104, 1
          %s215 = smul.addr %s214, 256
          %s216 = scalar_lea.vmem [#allocation3], %s215
          %s217 = smul.u32 2, %s22
          %219 = vsyncadd %s213, 0
          %s220 = smul.addr %s217, 4
          %s221 = scalar_lea.hbm %s3, %s220
          %s222 = sshll.u32 %s221, 4
          %s223 = int_to_ptr.hbm [resolvable:$true] %s222
          %s224 = sshll.u32 %s216, 4
          %s225 = int_to_ptr.vmem [resolvable:$true] %s224
          %230 = dma.hbm_to_vmem [thread:$0]  %s223, 4096, %s225, %s213, 512, 128, 8
        $region32: #{siglip_s2rgb_embed.21} parent=27 // pred_fallthru
          _
        // Predicated region
        $region33: #{siglip_s2rgb_embed.21} parent=27 // pred_check
          %p231 = pneg %p140
        $region34: #{siglip_s2rgb_embed.21} parent=27 // pred_check_branch
          %233 = sbr.rel (%p231) target = $region36
        $region35: #{siglip_s2rgb_embed.21} parent=27 // pred_region
          %s234 = smul.u32 2, %s22
          %p235 = scmp.lt.s32.totalorder %s234, 7
          %s236 = scalar_select %p235, %s234, 7
          %s237 = scalar_lea.vmem %s4, %s236
          %s238 = smul.u32 2, %s22
        $region36: #{siglip_s2rgb_embed.21} parent=27 // pred_fallthru
          _
      $region28: #{siglip_s2rgb_embed.21} parent=5 // pred_fallthru
        _
      %p239 = scmp.le.s32.totalorder 1, %s14
      %p240 = scmp.lt.s32.totalorder %s14, 5
      %p241 = pnand %p239, %p240
      %p242 = pneg %p241
      // Predicated region
      $region37: #{siglip_s2rgb_embed.21} parent=5 // pred_check
        _
      $region38: #{siglip_s2rgb_embed.21} parent=5 // pred_check_branch
        %244 = sbr.rel (%p241) target = $region40
      $region39: #{siglip_s2rgb_embed.21} parent=5 // pred_region
        %s245 = ssub.s32 %s14, 1
        %s246 = sand.u32 %s107, 1
        %s247 = scalar_lea.sflag [#allocation4], %s246
        %s248 = sand.u32 %s107, 1
        %s249 = smul.addr %s248, 256
        %s250 = scalar_lea.vmem [#allocation3], %s249
        // Predicated region
        $region41: #{siglip_s2rgb_embed.21} parent=39 // pred_check
          %p251 = pneg %p120
        $region42: #{siglip_s2rgb_embed.21} parent=39 // pred_check_branch
          %253 = sbr.rel (%p251) target = $region44
        $region43: #{siglip_s2rgb_embed.21} parent=39 // pred_region
          %255 = dma.done %s247, 4096
        $region44: #{siglip_s2rgb_embed.21} parent=39 // pred_fallthru
          _
        %s256 = smul.u32 4, %s23
        %p257 = scmp.lt.s32.totalorder %s256, 3
        %s258 = scalar_select %p257, %s256, 3
        %s259 = smul.addr %s258, 2
        %s260 = smul.addr %s259, 4
        %s261 = scalar_lea.vmem %s0, %s260
        %p262 = pneg %p52
        %p263 = pneg %p49
        %p264 = pneg %p73
        %p265 = pneg %p70
        %p266 = pneg %p94
        %p267 = pneg %p91
        %s268 = sand.u32 %s107, 1
        %s269 = scalar_lea.sflag [#allocation4], %s268
        %s270 = sand.u32 %s107, 1
        %s271 = smul.addr %s270, 256
        %s272 = scalar_lea.vmem [#allocation3], %s271
        %p273 = pneg %p120
        %p274 = pneg %p117
        %s275 = smul.u32 2, %s24
        %p276 = scmp.lt.s32.totalorder %s275, 7
        %s277 = scalar_select %p276, %s275, 7
        %s278 = scalar_lea.vmem %s4, %s277
        %p279 = pneg %p146
        %p280 = pneg %p143
        %p281 = pneg %p174
        %p282 = pneg %p171
        %s283 = sand.u32 %s161, 1
        %s284 = sand.u32 %s161, 1
        %s285 = smul.addr %s284, 32
        %s286 = scalar_lea.vmem [#allocation5], %s285
        %s287 = smul.u32 4, %s23
        %p288 = scmp.lt.s32.totalorder %s287, 3
        %s289 = scalar_select %p288, %s287, 3
        %s290 = smul.addr %s289, 2
        %s291 = smul.addr %s290, 4
        %s292 = scalar_lea.vmem %s0, %s291
        %s293 = smul.u32 4, %s23
        %s294 = smul.u32 2, %s24
        %s295 = smul.u32 2, %s24
        %p296 = scmp.lt.s32.totalorder %s295, 7
        %s297 = scalar_select %p296, %s295, 7
        %s298 = scalar_lea.vmem %s4, %s297
        %s299 = smul.u32 2, %s24
        %s300 = smul.u32 4, %s23
        %s301 = smul.u32 2, %s24
        %p302 = scmp.eq.s32.totalorder %s24, 0
        // Predicated region
        $region45: #{siglip_s2rgb_embed.21} parent=39 // pred_check
          %p303 = pneg %p302
        $region46: #{siglip_s2rgb_embed.21} parent=39 // pred_check_branch
          %305 = sbr.rel (%p303) target = $region48
        $region47: #{siglip_s2rgb_embed.21} parent=39 // pred_region
          %v306 = vld [vmem:[%s292] sm:$0xff]
          %v307 = vld [vmem:[%s292 + $0x8] sm:$0xff]
          %v308 = vld [vmem:[%s292 + $0x10] sm:$0xff]
          %v309 = vld [vmem:[%s292 + $0x18] sm:$0xff]
          %v310 = vunpack.c.l.bf16 %v306
          %v311 = vunpack.c.h.bf16 %v306
          %v312 = vunpack.c.l.bf16 %v307
          %v313 = vunpack.c.h.bf16 %v307
          %v314 = vunpack.c.l.bf16 %v308
          %v315 = vunpack.c.h.bf16 %v308
          %v316 = vunpack.c.l.bf16 %v309
          %v317 = vunpack.c.h.bf16 %v309
          %v318 = vadd.f32 %v310, %v311
          %319 = vadd.xlane.f32.xlu0 %v318
          %v320 = vpop.xlane.xlu0 %319
          %v321 = vadd.f32 %v312, %v313
          %322 = vadd.xlane.f32.xlu0 %v321
          %v323 = vpop.xlane.xlu0 %322
          %v324 = vadd.f32 %v314, %v315
          %325 = vadd.xlane.f32.xlu0 %v324
          %v326 = vpop.xlane.xlu0 %325
          %v327 = vadd.f32 %v316, %v317
          %328 = vadd.xlane.f32.xlu0 %v327
          %v329 = vpop.xlane.xlu0 %328
          %v330 = vrcp.pop 256.0
          %v331 = vmul.f32 256.0, %v330
          %v332 = vsub.f32 1.0, %v331
          %v333 = vmul.f32 %v330, %v332
          %v334 = vadd.f32 %v330, %v333
          %vm335 = vweird.f32 %v330
          %v336 = vsel %vm335, %v330, %v334
          %v337 = vmul.f32 %v320, %v336
          %v338 = vmul.f32 %v323, %v336
          %v339 = vmul.f32 %v326, %v336
          %v340 = vmul.f32 %v329, %v336
          %v341 = vsub.f32 %v310, %v337
          %v342 = vsub.f32 %v311, %v337
          %v343 = vsub.f32 %v312, %v338
          %v344 = vsub.f32 %v313, %v338
          %v345 = vsub.f32 %v314, %v339
          %v346 = vsub.f32 %v315, %v339
          %v347 = vsub.f32 %v316, %v340
          %v348 = vsub.f32 %v317, %v340
          %v349 = vmul.f32 %v341, %v341
          %v350 = vmul.f32 %v342, %v342
          %v351 = vmul.f32 %v343, %v343
          %v352 = vmul.f32 %v344, %v344
          %v353 = vmul.f32 %v345, %v345
          %v354 = vmul.f32 %v346, %v346
          %v355 = vmul.f32 %v347, %v347
          %v356 = vmul.f32 %v348, %v348
          %v357 = vadd.f32 %v349, %v350
          %358 = vadd.xlane.f32.xlu0 %v357
          %v359 = vpop.xlane.xlu0 %358
          %v360 = vadd.f32 %v351, %v352
          %361 = vadd.xlane.f32.xlu0 %v360
          %v362 = vpop.xlane.xlu0 %361
          %v363 = vadd.f32 %v353, %v354
          %364 = vadd.xlane.f32.xlu0 %v363
          %v365 = vpop.xlane.xlu0 %364
          %v366 = vadd.f32 %v355, %v356
          %367 = vadd.xlane.f32.xlu0 %v366
          %v368 = vpop.xlane.xlu0 %367
          %v369 = vmul.f32 %v359, %v336
          %v370 = vmul.f32 %v362, %v336
          %v371 = vmul.f32 %v365, %v336
          %v372 = vmul.f32 %v368, %v336
          %v373 = vadd.f32 %v369, 1e-06
          %v374 = vadd.f32 %v370, 1e-06
          %v375 = vadd.f32 %v371, 1e-06
          %v376 = vadd.f32 %v372, 1e-06
          %v377 = vrsqrt.pop %v373
          %v378 = vmul.f32 %v377, %v373
          %v379 = vmul.f32 %v378, %v377
          %v380 = vmul.f32 0.5, %v379
          %v381 = vsub.f32 1.5, %v380
          %v382 = vmul.f32 %v377, %v381
          %vm383 = vweird.f32 %v373
          %vm384 = vweird.f32 %v377
          %vm385 = vmor %vm383, %vm384
          %v386 = vsel %vm385, %v377, %v382
          %v387 = vrsqrt.pop %v374
          %v388 = vmul.f32 %v387, %v374
          %v389 = vmul.f32 %v388, %v387
          %v390 = vmul.f32 0.5, %v389
          %v391 = vsub.f32 1.5, %v390
          %v392 = vmul.f32 %v387, %v391
          %vm393 = vweird.f32 %v374
          %vm394 = vweird.f32 %v387
          %vm395 = vmor %vm393, %vm394
          %v396 = vsel %vm395, %v387, %v392
          %v397 = vrsqrt.pop %v375
          %v398 = vmul.f32 %v397, %v375
          %v399 = vmul.f32 %v398, %v397
          %v400 = vmul.f32 0.5, %v399
          %v401 = vsub.f32 1.5, %v400
          %v402 = vmul.f32 %v397, %v401
          %vm403 = vweird.f32 %v375
          %vm404 = vweird.f32 %v397
          %vm405 = vmor %vm403, %vm404
          %v406 = vsel %vm405, %v397, %v402
          %v407 = vrsqrt.pop %v376
          %v408 = vmul.f32 %v407, %v376
          %v409 = vmul.f32 %v408, %v407
          %v410 = vmul.f32 0.5, %v409
          %v411 = vsub.f32 1.5, %v410
          %v412 = vmul.f32 %v407, %v411
          %vm413 = vweird.f32 %v376
          %vm414 = vweird.f32 %v407
          %vm415 = vmor %vm413, %vm414
          %v416 = vsel %vm415, %v407, %v412
          %v417 = vmul.f32 %v341, %v386
          %v418 = vmul.f32 %v342, %v386
          %v419 = vmul.f32 %v343, %v396
          %v420 = vmul.f32 %v344, %v396
          %v421 = vmul.f32 %v345, %v406
          %v422 = vmul.f32 %v346, %v406
          %v423 = vmul.f32 %v347, %v416
          %v424 = vmul.f32 %v348, %v416
          %v425 = vld [vmem:[%s1] sm:$0x3]
          %v427 = vperm.slane %v425, 0
          %v428 = vperm.slane %v425, 1
          %v431 = vmul.f32 %v417, %v427
          %v432 = vmul.f32 %v418, %v428
          %v433 = vmul.f32 %v419, %v427
          %v434 = vmul.f32 %v420, %v428
          %v435 = vmul.f32 %v421, %v427
          %v436 = vmul.f32 %v422, %v428
          %v437 = vmul.f32 %v423, %v427
          %v438 = vmul.f32 %v424, %v428
          %v439 = vld [vmem:[%s2] sm:$0x3]
          %v441 = vperm.slane %v439, 0
          %v442 = vperm.slane %v439, 1
          %v445 = vadd.f32 %v431, %v441
          %v446 = vadd.f32 %v432, %v442
          %v447 = vadd.f32 %v433, %v441
          %v448 = vadd.f32 %v434, %v442
          %v449 = vadd.f32 %v435, %v441
          %v450 = vadd.f32 %v436, %v442
          %v451 = vadd.f32 %v437, %v441
          %v452 = vadd.f32 %v438, %v442
          %v453 = vpack.c.bf16 %v446, %v445
          %v454 = vpack.c.bf16 %v448, %v447
          %v455 = vpack.c.bf16 %v450, %v449
          %v456 = vpack.c.bf16 %v452, %v451
          %457 = vst [vmem:[#allocation2] sm:$0xff] %v453
          %458 = vst [vmem:[#allocation2 + $0x8] sm:$0xff] %v454
          %459 = vst [vmem:[#allocation2 + $0x10] sm:$0xff] %v455
          %460 = vst [vmem:[#allocation2 + $0x18] sm:$0xff] %v456
        $region48: #{siglip_s2rgb_embed.21} parent=39 // pred_fallthru
          _
        %v461 = vld [vmem:[#allocation2] sm:$0xff]
        %v462 = vld [vmem:[#allocation2 + $0x8] sm:$0xff]
        %v463 = vld [vmem:[#allocation2 + $0x10] sm:$0xff]
        %v464 = vld [vmem:[#allocation2 + $0x18] sm:$0xff]
        %v465 = vld [vmem:[%s250] sm:$0xff]
        %v466 = vld [vmem:[%s250 + $0x8] sm:$0xff]
        %v467 = vld [vmem:[%s250 + $0x10] sm:$0xff]
        %v468 = vld [vmem:[%s250 + $0x18] sm:$0xff]
        %v469 = vld [vmem:[%s250 + $0x20] sm:$0xff]
        %v470 = vld [vmem:[%s250 + $0x28] sm:$0xff]
        %v471 = vld [vmem:[%s250 + $0x30] sm:$0xff]
        %v472 = vld [vmem:[%s250 + $0x38] sm:$0xff]
        %v473 = vld [vmem:[%s250 + $0x40] sm:$0xff]
        %v474 = vld [vmem:[%s250 + $0x48] sm:$0xff]
        %v475 = vld [vmem:[%s250 + $0x50] sm:$0xff]
        %v476 = vld [vmem:[%s250 + $0x58] sm:$0xff]
        %v477 = vld [vmem:[%s250 + $0x60] sm:$0xff]
        %v478 = vld [vmem:[%s250 + $0x68] sm:$0xff]
        %v479 = vld [vmem:[%s250 + $0x70] sm:$0xff]
        %v480 = vld [vmem:[%s250 + $0x78] sm:$0xff]
        %v481 = vld [vmem:[%s250 + $0x80] sm:$0xff]
        %v482 = vld [vmem:[%s250 + $0x88] sm:$0xff]
        %v483 = vld [vmem:[%s250 + $0x90] sm:$0xff]
        %v484 = vld [vmem:[%s250 + $0x98] sm:$0xff]
        %v485 = vld [vmem:[%s250 + $0xa0] sm:$0xff]
        %v486 = vld [vmem:[%s250 + $0xa8] sm:$0xff]
        %v487 = vld [vmem:[%s250 + $0xb0] sm:$0xff]
        %v488 = vld [vmem:[%s250 + $0xb8] sm:$0xff]
        %v489 = vld [vmem:[%s250 + $0xc0] sm:$0xff]
        %v490 = vld [vmem:[%s250 + $0xc8] sm:$0xff]
        %v491 = vld [vmem:[%s250 + $0xd0] sm:$0xff]
        %v492 = vld [vmem:[%s250 + $0xd8] sm:$0xff]
        %v493 = vld [vmem:[%s250 + $0xe0] sm:$0xff]
        %v494 = vld [vmem:[%s250 + $0xe8] sm:$0xff]
        %v495 = vld [vmem:[%s250 + $0xf0] sm:$0xff]
        %v496 = vld [vmem:[%s250 + $0xf8] sm:$0xff]
        %v497 = vld [vmem:[%s298] sm:$0x3]
        %v499 = vperm.slane %v497, 0
        %v500 = vperm.slane %v497, 1
        %v507 = vunpack.c.l.b16 %v461
        %v508 = vunpack.c.h.b16 %v461
        %v509 = vunpack.c.l.b16 %v462
        %v510 = vunpack.c.h.b16 %v462
        %v511 = vunpack.c.l.b16 %v463
        %v512 = vunpack.c.h.b16 %v463
        %v513 = vunpack.c.l.b16 %v464
        %v514 = vunpack.c.h.b16 %v464
        %v515 = vpack.c.b16 %v509, %v507
        %v516 = vpack.c.b16 %v510, %v508
        %v517 = vpack.c.b16 %v513, %v511
        %v518 = vpack.c.b16 %v514, %v512
        %v555 = vunpack.c.l.b16 %v465
        %v556 = vunpack.c.h.b16 %v465
        %v557 = vunpack.c.l.b16 %v466
        %v558 = vunpack.c.h.b16 %v466
        %v559 = vunpack.c.l.b16 %v467
        %v560 = vunpack.c.h.b16 %v467
        %v561 = vunpack.c.l.b16 %v468
        %v562 = vunpack.c.h.b16 %v468
        %v563 = vunpack.c.l.b16 %v469
        %v564 = vunpack.c.h.b16 %v469
        %v565 = vunpack.c.l.b16 %v470
        %v566 = vunpack.c.h.b16 %v470
        %v567 = vunpack.c.l.b16 %v471
        %v568 = vunpack.c.h.b16 %v471
        %v569 = vunpack.c.l.b16 %v472
        %v570 = vunpack.c.h.b16 %v472
        %v571 = vunpack.c.l.b16 %v473
        %v572 = vunpack.c.h.b16 %v473
        %v573 = vunpack.c.l.b16 %v474
        %v574 = vunpack.c.h.b16 %v474
        %v575 = vunpack.c.l.b16 %v475
        %v576 = vunpack.c.h.b16 %v475
        %v577 = vunpack.c.l.b16 %v476
        %v578 = vunpack.c.h.b16 %v476
        %v579 = vunpack.c.l.b16 %v477
        %v580 = vunpack.c.h.b16 %v477
        %v581 = vunpack.c.l.b16 %v478
        %v582 = vunpack.c.h.b16 %v478
        %v583 = vunpack.c.l.b16 %v479
        %v584 = vunpack.c.h.b16 %v479
        %v585 = vunpack.c.l.b16 %v480
        %v586 = vunpack.c.h.b16 %v480
        %v587 = vunpack.c.l.b16 %v481
        %v588 = vunpack.c.h.b16 %v481
        %v589 = vunpack.c.l.b16 %v482
        %v590 = vunpack.c.h.b16 %v482
        %v591 = vunpack.c.l.b16 %v483
        %v592 = vunpack.c.h.b16 %v483
        %v593 = vunpack.c.l.b16 %v484
        %v594 = vunpack.c.h.b16 %v484
        %v595 = vunpack.c.l.b16 %v485
        %v596 = vunpack.c.h.b16 %v485
        %v597 = vunpack.c.l.b16 %v486
        %v598 = vunpack.c.h.b16 %v486
        %v599 = vunpack.c.l.b16 %v487
        %v600 = vunpack.c.h.b16 %v487
        %v601 = vunpack.c.l.b16 %v488
        %v602 = vunpack.c.h.b16 %v488
        %v603 = vunpack.c.l.b16 %v489
        %v604 = vunpack.c.h.b16 %v489
        %v605 = vunpack.c.l.b16 %v490
        %v606 = vunpack.c.h.b16 %v490
        %v607 = vunpack.c.l.b16 %v491
        %v608 = vunpack.c.h.b16 %v491
        %v609 = vunpack.c.l.b16 %v492
        %v610 = vunpack.c.h.b16 %v492
        %v611 = vunpack.c.l.b16 %v493
        %v612 = vunpack.c.h.b16 %v493
        %v613 = vunpack.c.l.b16 %v494
        %v614 = vunpack.c.h.b16 %v494
        %v615 = vunpack.c.l.b16 %v495
        %v616 = vunpack.c.h.b16 %v495
        %v617 = vunpack.c.l.b16 %v496
        %v618 = vunpack.c.h.b16 %v496
        %v619 = vpack.c.b16 %v557, %v555
        %v620 = vpack.c.b16 %v558, %v556
        %v621 = vpack.c.b16 %v561, %v559
        %v622 = vpack.c.b16 %v562, %v560
        %v623 = vpack.c.b16 %v565, %v563
        %v624 = vpack.c.b16 %v566, %v564
        %v625 = vpack.c.b16 %v569, %v567
        %v626 = vpack.c.b16 %v570, %v568
        %v627 = vpack.c.b16 %v573, %v571
        %v628 = vpack.c.b16 %v574, %v572
        %v629 = vpack.c.b16 %v577, %v575
        %v630 = vpack.c.b16 %v578, %v576
        %v631 = vpack.c.b16 %v581, %v579
        %v632 = vpack.c.b16 %v582, %v580
        %v633 = vpack.c.b16 %v585, %v583
        %v634 = vpack.c.b16 %v586, %v584
        %v635 = vpack.c.b16 %v589, %v587
        %v636 = vpack.c.b16 %v590, %v588
        %v637 = vpack.c.b16 %v593, %v591
        %v638 = vpack.c.b16 %v594, %v592
        %v639 = vpack.c.b16 %v597, %v595
        %v640 = vpack.c.b16 %v598, %v596
        %v641 = vpack.c.b16 %v601, %v599
        %v642 = vpack.c.b16 %v602, %v600
        %v643 = vpack.c.b16 %v605, %v603
        %v644 = vpack.c.b16 %v606, %v604
        %v645 = vpack.c.b16 %v609, %v607
        %v646 = vpack.c.b16 %v610, %v608
        %v647 = vpack.c.b16 %v613, %v611
        %v648 = vpack.c.b16 %v614, %v612
        %v649 = vpack.c.b16 %v617, %v615
        %v650 = vpack.c.b16 %v618, %v616
        %683 = vmatpush.bf16.msra.mxu0 %v633
        %684 = vmatpush.bf16.msra.mxu0 %v631
        %685 = vmatpush.bf16.msra.mxu0 %v629
        %686 = vmatpush.bf16.msra.mxu0 %v627
        %687 = vmatpush.bf16.msra.mxu0 %v625
        %688 = vmatpush.bf16.msra.mxu0 %v623
        %689 = vmatpush.bf16.msra.mxu0 %v621
        %690 = vmatpush.bf16.msra.mxu0 %v619
        %691 = vmatmul.bf16.gmra.mxu0 %v515
        %v692 = vpop.f32.mrf.mxu0
        %v693 = vadd.f32 %v499, %v692
        %v694 = vpop.f32.mrf.mxu0
        %v695 = vadd.f32 %v499, %v694
        %696 = vmatmul.bf16.gmra.mxu0 %v517
        %v697 = vpop.f32.mrf.mxu0
        %v698 = vadd.f32 %v499, %v697
        %v699 = vpop.f32.mrf.mxu0
        %v700 = vadd.f32 %v499, %v699
        %701 = vdwg.mxu0
        %702 = vmatpush.bf16.msra.mxu0 %v649
        %703 = vmatpush.bf16.msra.mxu0 %v647
        %704 = vmatpush.bf16.msra.mxu0 %v645
        %705 = vmatpush.bf16.msra.mxu0 %v643
        %706 = vmatpush.bf16.msra.mxu0 %v641
        %707 = vmatpush.bf16.msra.mxu0 %v639
        %708 = vmatpush.bf16.msra.mxu0 %v637
        %709 = vmatpush.bf16.msra.mxu0 %v635
        %710 = vmatmul.bf16.gmra.mxu0 %v516
        %v711 = vpop.f32.mrf.mxu0
        %v712 = vadd.f32 %v693, %v711
        %v713 = vpop.f32.mrf.mxu0
        %v714 = vadd.f32 %v695, %v713
        %715 = vmatmul.bf16.gmra.mxu0 %v518
        %v716 = vpop.f32.mrf.mxu0
        %v717 = vadd.f32 %v698, %v716
        %v718 = vpop.f32.mrf.mxu0
        %v719 = vadd.f32 %v700, %v718
        %720 = vdwg.mxu0
        %721 = vmatpush.bf16.msra.mxu0 %v634
        %722 = vmatpush.bf16.msra.mxu0 %v632
        %723 = vmatpush.bf16.msra.mxu0 %v630
        %724 = vmatpush.bf16.msra.mxu0 %v628
        %725 = vmatpush.bf16.msra.mxu0 %v626
        %726 = vmatpush.bf16.msra.mxu0 %v624
        %727 = vmatpush.bf16.msra.mxu0 %v622
        %728 = vmatpush.bf16.msra.mxu0 %v620
        %729 = vmatmul.bf16.gmra.mxu0 %v515
        %v730 = vpop.f32.mrf.mxu0
        %v731 = vadd.f32 %v500, %v730
        %v732 = vpop.f32.mrf.mxu0
        %v733 = vadd.f32 %v500, %v732
        %734 = vmatmul.bf16.gmra.mxu0 %v517
        %v735 = vpop.f32.mrf.mxu0
        %v736 = vadd.f32 %v500, %v735
        %v737 = vpop.f32.mrf.mxu0
        %v738 = vadd.f32 %v500, %v737
        %739 = vdwg.mxu0
        %740 = vmatpush.bf16.msra.mxu0 %v650
        %741 = vmatpush.bf16.msra.mxu0 %v648
        %742 = vmatpush.bf16.msra.mxu0 %v646
        %743 = vmatpush.bf16.msra.mxu0 %v644
        %744 = vmatpush.bf16.msra.mxu0 %v642
        %745 = vmatpush.bf16.msra.mxu0 %v640
        %746 = vmatpush.bf16.msra.mxu0 %v638
        %747 = vmatpush.bf16.msra.mxu0 %v636
        %748 = vmatmul.bf16.gmra.mxu0 %v516
        %v749 = vpop.f32.mrf.mxu0
        %v750 = vadd.f32 %v731, %v749
        %v751 = vpop.f32.mrf.mxu0
        %v752 = vadd.f32 %v733, %v751
        %753 = vmatmul.bf16.gmra.mxu0 %v518
        %v754 = vpop.f32.mrf.mxu0
        %v755 = vadd.f32 %v736, %v754
        %v756 = vpop.f32.mrf.mxu0
        %v757 = vadd.f32 %v738, %v756
        %758 = vdwg.mxu0
        %v759 = vmul.f32 %v712, %v712
        %v760 = vmul.f32 %v750, %v750
        %v761 = vmul.f32 %v714, %v714
        %v762 = vmul.f32 %v752, %v752
        %v763 = vmul.f32 %v717, %v717
        %v764 = vmul.f32 %v755, %v755
        %v765 = vmul.f32 %v719, %v719
        %v766 = vmul.f32 %v757, %v757
        %v767 = vmul.f32 %v712, %v759
        %v768 = vmul.f32 %v750, %v760
        %v769 = vmul.f32 %v714, %v761
        %v770 = vmul.f32 %v752, %v762
        %v771 = vmul.f32 %v717, %v763
        %v772 = vmul.f32 %v755, %v764
        %v773 = vmul.f32 %v719, %v765
        %v774 = vmul.f32 %v757, %v766
        %v775 = vmul.f32 %v767, 0.044715
        %v776 = vmul.f32 %v768, 0.044715
        %v777 = vmul.f32 %v769, 0.044715
        %v778 = vmul.f32 %v770, 0.044715
        %v779 = vmul.f32 %v771, 0.044715
        %v780 = vmul.f32 %v772, 0.044715
        %v781 = vmul.f32 %v773, 0.044715
        %v782 = vmul.f32 %v774, 0.044715
        %v783 = vadd.f32 %v712, %v775
        %v784 = vadd.f32 %v750, %v776
        %v785 = vadd.f32 %v714, %v777
        %v786 = vadd.f32 %v752, %v778
        %v787 = vadd.f32 %v717, %v779
        %v788 = vadd.f32 %v755, %v780
        %v789 = vadd.f32 %v719, %v781
        %v790 = vadd.f32 %v757, %v782
        %v791 = vmul.f32 %v783, 0.7978846
        %v792 = vmul.f32 %v784, 0.7978846
        %v793 = vmul.f32 %v785, 0.7978846
        %v794 = vmul.f32 %v786, 0.7978846
        %v795 = vmul.f32 %v787, 0.7978846
        %v796 = vmul.f32 %v788, 0.7978846
        %v797 = vmul.f32 %v789, 0.7978846
        %v798 = vmul.f32 %v790, 0.7978846
        %v799 = vtanh.pop %v791
        %v800 = vtanh.pop %v792
        %v801 = vtanh.pop %v793
        %v802 = vtanh.pop %v794
        %v803 = vtanh.pop %v795
        %v804 = vtanh.pop %v796
        %v805 = vtanh.pop %v797
        %v806 = vtanh.pop %v798
        %v807 = vadd.f32 %v799, 1.0
        %v808 = vadd.f32 %v800, 1.0
        %v809 = vadd.f32 %v801, 1.0
        %v810 = vadd.f32 %v802, 1.0
        %v811 = vadd.f32 %v803, 1.0
        %v812 = vadd.f32 %v804, 1.0
        %v813 = vadd.f32 %v805, 1.0
        %v814 = vadd.f32 %v806, 1.0
        %v815 = vmul.f32 %v807, 0.5
        %v816 = vmul.f32 %v808, 0.5
        %v817 = vmul.f32 %v809, 0.5
        %v818 = vmul.f32 %v810, 0.5
        %v819 = vmul.f32 %v811, 0.5
        %v820 = vmul.f32 %v812, 0.5
        %v821 = vmul.f32 %v813, 0.5
        %v822 = vmul.f32 %v814, 0.5
        %v823 = vmul.f32 %v712, %v815
        %v824 = vmul.f32 %v750, %v816
        %v825 = vmul.f32 %v714, %v817
        %v826 = vmul.f32 %v752, %v818
        %v827 = vmul.f32 %v717, %v819
        %v828 = vmul.f32 %v755, %v820
        %v829 = vmul.f32 %v719, %v821
        %v830 = vmul.f32 %v757, %v822
        %v831 = vpack.c.bf16 %v824, %v823
        %v832 = vpack.c.bf16 %v826, %v825
        %v833 = vpack.c.bf16 %v828, %v827
        %v834 = vpack.c.bf16 %v830, %v829
        %835 = vst [vmem:[%s286] sm:$0xff] %v831
        %836 = vst [vmem:[%s286 + $0x8] sm:$0xff] %v832
        %837 = vst [vmem:[%s286 + $0x10] sm:$0xff] %v833
        %838 = vst [vmem:[%s286 + $0x18] sm:$0xff] %v834
        %s839 = sand.u32 %s161, 1
        %s840 = sand.u32 %s161, 1
        %s841 = smul.addr %s840, 32
        %s842 = scalar_lea.vmem [#allocation5], %s841
        // Predicated region
        $region49: #{siglip_s2rgb_embed.21} parent=39 // pred_check
          %p843 = pneg %p171
        $region50: #{siglip_s2rgb_embed.21} parent=39 // pred_check_branch
          %845 = sbr.rel (%p843) target = $region52
        $region51: #{siglip_s2rgb_embed.21} parent=39 // pred_region
          %s846 = smul.u32 4, %s23
          %s847 = smul.u32 2, %s24
          %s848 = smul.addr %s846, 8
          %s849 = sadd.s32 %s847, %s848
          %s850 = smul.addr %s849, 4
          %s851 = scalar_lea.vmem %s5, %s850
          // Predicated region
          $region53: #{siglip_s2rgb_embed.21} parent=51 // pred_check
            _
          $region54: #{siglip_s2rgb_embed.21} parent=51 // pred_check_branch
            %853 = sbr.rel (0) target = $region56
          $region55: #{siglip_s2rgb_embed.21} parent=51 // pred_region
            // Predicated region
            $region57: #{siglip_s2rgb_embed.21} parent=55 // pred_check
              _
            $region58: #{siglip_s2rgb_embed.21} parent=55 // pred_check_branch
              %855 = sbr.rel (0) target = $region60
            $region59: #{siglip_s2rgb_embed.21} parent=55 // pred_region
              // Predicated region
              $region72: #{siglip_s2rgb_embed.21} parent=59 // pred_check
                _
              $region73: #{siglip_s2rgb_embed.21} parent=59 // pred_check_branch
                %877 = sbr.rel (0) target = $region75
              $region74: #{siglip_s2rgb_embed.21} parent=59 // pred_region
                loop: start=0, step=1, limit=1
                $region76: #{siglip_s2rgb_embed.21} parent=74 // loop_pre_header
                  _
                $region77: #{siglip_s2rgb_embed.21} parent=74 // loop_header
                  %s879 = sphi 0, %s883
                  %p880 = scmp.ge.s32.totalorder %s879, 1
                  %s884 = sphi %s842, %s842
                  %s885 = sphi %s851, %s851
                $region78: #{siglip_s2rgb_embed.21} parent=74 // loop_header_branch
                  %882 = sbr.rel (%p880) target = $region82
                $region79: #{siglip_s2rgb_embed.21} parent=74 // loop_body
                  %v886 = vld [vmem:[%s884] sm:$0xff]
                  %887 = vst [vmem:[%s885] sm:$0xff] %v886
                  %v888 = vld [vmem:[%s884 + $0x8] sm:$0xff]
                  %889 = vst [vmem:[%s885 + $0x20] sm:$0xff] %v888
                  %v890 = vld [vmem:[%s884 + $0x10] sm:$0xff]
                  %891 = vst [vmem:[%s885 + $0x40] sm:$0xff] %v890
                  %v892 = vld [vmem:[%s884 + $0x18] sm:$0xff]
                  %893 = vst [vmem:[%s885 + $0x60] sm:$0xff] %v892
                $region80: #{siglip_s2rgb_embed.21} parent=74 // loop_footer
                  %s883 = sadd.s32 1, %s879
                $region81: #{siglip_s2rgb_embed.21} parent=74 // loop_footer_branch
                  %878 = sbr.rel target = $region77
                $region82: #{siglip_s2rgb_embed.21} parent=74 // loop_exit
                  _
              $region75: #{siglip_s2rgb_embed.21} parent=59 // pred_fallthru
                _
              // Predicated region
              $region83: #{siglip_s2rgb_embed.21} parent=59 // pred_check
                _
              $region84: #{siglip_s2rgb_embed.21} parent=59 // pred_check_branch
                %895 = sbr.rel target = $region86
              $region85: #{siglip_s2rgb_embed.21} parent=59 // pred_region
                _
              $region86: #{siglip_s2rgb_embed.21} parent=59 // pred_fallthru
                _
            $region60: #{siglip_s2rgb_embed.21} parent=55 // pred_fallthru
              _
            // Predicated region
            $region61: #{siglip_s2rgb_embed.21} parent=55 // pred_check
              _
            $region62: #{siglip_s2rgb_embed.21} parent=55 // pred_check_branch
              %857 = sbr.rel target = $region64
            $region63: #{siglip_s2rgb_embed.21} parent=55 // pred_region
              %s859 = ssub.s32 256, 1
              loop: start=0, step=1, limit=1
              $region65: #{siglip_s2rgb_embed.21} parent=63 // loop_pre_header
                _
              $region66: #{siglip_s2rgb_embed.21} parent=63 // loop_header
                %s861 = sphi 0, %s865
                %p862 = scmp.ge.s32.totalorder %s861, 1
                %s866 = sphi %s842, %s842
                %s867 = sphi %s851, %s851
              $region67: #{siglip_s2rgb_embed.21} parent=63 // loop_header_branch
                %864 = sbr.rel (%p862) target = $region71
              $region68: #{siglip_s2rgb_embed.21} parent=63 // loop_body
                %v868 = vld [vmem:[%s866] sm:%s859]
                %869 = vst [vmem:[%s867] sm:%s859] %v868
                %v870 = vld [vmem:[%s866 + $0x8] sm:%s859]
                %871 = vst [vmem:[%s867 + $0x20] sm:%s859] %v870
                %v872 = vld [vmem:[%s866 + $0x10] sm:%s859]
                %873 = vst [vmem:[%s867 + $0x40] sm:%s859] %v872
                %v874 = vld [vmem:[%s866 + $0x18] sm:%s859]
                %875 = vst [vmem:[%s867 + $0x60] sm:%s859] %v874
              $region69: #{siglip_s2rgb_embed.21} parent=63 // loop_footer
                %s865 = sadd.s32 1, %s861
              $region70: #{siglip_s2rgb_embed.21} parent=63 // loop_footer_branch
                %860 = sbr.rel target = $region66
              $region71: #{siglip_s2rgb_embed.21} parent=63 // loop_exit
                _
            $region64: #{siglip_s2rgb_embed.21} parent=55 // pred_fallthru
              _
          $region56: #{siglip_s2rgb_embed.21} parent=51 // pred_fallthru
            _
          %896 = vnop
        $region52: #{siglip_s2rgb_embed.21} parent=39 // pred_fallthru
          _
      $region40: #{siglip_s2rgb_embed.21} parent=5 // pred_fallthru
        _
      %p897 = scmp.le.s32.totalorder 2, %s14
      // Predicated region
      $region87: #{siglip_s2rgb_embed.21} parent=5 // pred_check
        %p898 = pneg %p897
      $region88: #{siglip_s2rgb_embed.21} parent=5 // pred_check_branch
        %900 = sbr.rel (%p898) target = $region90
      $region89: #{siglip_s2rgb_embed.21} parent=5 // pred_region
        %s901 = ssub.s32 %s14, 2
        // Predicated region
        $region91: #{siglip_s2rgb_embed.21} parent=89 // pred_check
          %p902 = pneg %p177
        $region92: #{siglip_s2rgb_embed.21} parent=89 // pred_check_branch
          %904 = sbr.rel (%p902) target = $region94
        $region93: #{siglip_s2rgb_embed.21} parent=89 // pred_region
          %s905 = sand.u32 %s162, 1
          %s906 = sand.u32 %s162, 1
          %s907 = smul.addr %s906, 32
          %s908 = scalar_lea.vmem [#allocation5], %s907
        $region94: #{siglip_s2rgb_embed.21} parent=89 // pred_fallthru
          _
      $region90: #{siglip_s2rgb_embed.21} parent=5 // pred_fallthru
        _
    $region6: #{siglip_s2rgb_embed.21} parent=1 // loop_footer
      %s18 = sadd.s32 1, %s14
    $region7: #{siglip_s2rgb_embed.21} parent=1 // loop_footer_branch
      %13 = sbr.rel target = $region3
    $region8: #{siglip_s2rgb_embed.21} parent=1 // loop_exit
      _
    %909 = vsyncpa [#allocation4], 1
    %s910 = scalar_lea.sflag [#allocation4], 1
    %911 = vsyncpa %s910, 1

// kernel: siglip_s2rgb_embed.18
$region0: #{siglip_s2rgb_embed.18}
  #allocation0 [shape = 'u32[]', space=smem, size = 0x4, offset = 0x4, fixed_abs, tag = 'smem constant byte address 0x4 - core index']
  #allocation1 [shape = 'u32[72,128]{1,0:T(1,128)}', space=vmem, size = 0x9000, scoped, tag = 'internal scratch']
  #allocation2 [shape = 'f32[32,256]{1,0:T(8,128)}', space=vmem, size = 0x8000, scoped, tag = 'scratch operand']
  %s0 = inlined_call_operand.vmem [shape: bf16[32,1024], index: 0, kind: input, shape index: {}]
  %s1 = inlined_call_operand.hbm [shape: bf16[1024,256], index: 1, kind: input, shape index: {}]
  %s2 = inlined_call_operand.vmem [shape: f32[1,256], index: 2, kind: input, shape index: {}]
  %s3 = inlined_call_operand.vmem [shape: bf16[32,256], index: 3, kind: input, shape index: {}]
  %s4 = inlined_call_operand.vmem [shape: bf16[32,256], index: 4, kind: output, shape index: {}]
  %s5 = sld [smem:[#allocation0]]
  $region84: #{siglip_s2rgb_embed.18} parent=0
    _
  %s7 = ssub.s32 1, %s5
  %s8 = scalar_select 0, %s7, %s5
  $region1: #{siglip_s2rgb_embed.18} parent=0
    #allocation3 [shape = 'u8[65536]{0}', space=vmem, size = 0x10000, scoped, tag = 'input window, operand 0']
    #allocation4 [shape = 'u8[524288]{0}', space=vmem, size = 0x80000, scoped, tag = 'input window, operand 1']
    #allocation5 [shape = 's32[2]{0}', space=sflag, size = 0x8, scoped, tag = 'scoped memory for siglip_s2rgb_embed.18']
    %9 = vsyncpa [#allocation5], 0
    %s10 = scalar_lea.sflag [#allocation5], 1
    %11 = vsyncpa %s10, 0
    loop: start=0, step=1, limit=4
    $region2: #{siglip_s2rgb_embed.18} parent=1 // loop_pre_header
      _
    $region3: #{siglip_s2rgb_embed.18} parent=1 // loop_header
      %s13 = sphi 0, %s17
      %p14 = scmp.ge.s32.totalorder %s13, 4
      %s20 = sphi 0, %s39
      %s21 = sphi 0, %s35
      %s22 = sphi 0, %s31
      %s23 = sphi 0, %s20
      %s24 = sphi 0, %s21
      %s25 = sphi 0, %s22
      %s26 = sphi 0, %s23
      %s27 = sphi 0, %s24
      %s28 = sphi 0, %s25
      %s44 = sphi 0, %s46
      %s47 = sphi 0, %s44
      %s48 = sphi 0, %s47
      %s64 = sphi 0, %s48
      %s72 = sphi 0, %s74
      %s75 = sphi 0, %s72
      %s76 = sphi 0, %s75
      %s92 = sphi 0, %s76
      %s98 = sphi 0, %s100
      %s101 = sphi 0, %s98
      %s102 = sphi 0, %s101
      %s118 = sphi 0, %s102
      %s126 = sphi 0, %s128
      %s129 = sphi 0, %s126
      %s130 = sphi 0, %s129
      %s146 = sphi 0, %s130
      %s154 = sphi 0, %s156
      %s157 = sphi 0, %s154
      %s158 = sphi 0, %s157
      %s174 = sphi 0, %s158
    $region4: #{siglip_s2rgb_embed.18} parent=1 // loop_header_branch
      %16 = sbr.rel (%p14) target = $region8
    $region5: #{siglip_s2rgb_embed.18} parent=1 // loop_body
      %s18 = ssub.s32 %s13, 1
      %s19 = ssub.s32 %s13, 2
      %s29 = sadd.s32 1, %s22
      %p30 = scmp.ge.s32.totalorder %s29, 2
      %s31 = scalar_select %p30, 0, %s29
      %s32 = sadd.s32 1, %s21
      %s33 = scalar_select %p30, %s32, %s21
      %p34 = scmp.ge.s32.totalorder %s33, 1
      %s35 = scalar_select %p34, 0, %s33
      %s36 = sadd.s32 1, %s20
      %s37 = scalar_select %p34, %s36, %s20
      %p38 = scmp.ge.s32.totalorder %s37, 1
      %s39 = scalar_select %p38, 0, %s37
      %s40 = ssub.s32 %s20, %s39
      %s41 = ssub.s32 %s22, %s31
      %s42 = sor.u32 %s40, %s41
      %p43 = scmp.eq.s32.totalorder %s42, 0
      %s45 = sadd.s32 %s44, 1
      %s46 = scalar_select %p43, %s44, %s45
      %p49 = pneg %p43
      %p50 = scmp.eq.s32.totalorder %s13, 1
      %p51 = por %p49, %p50
      %p52 = scmp.ne.s32.totalorder %s44, %s47
      %p53 = scmp.eq.s32.totalorder %s13, 0
      %p54 = por %p52, %p53
      %p55 = scmp.ne.s32.totalorder %s44, %s47
      %p56 = scmp.eq.s32.totalorder %s18, 1
      %p57 = por %p55, %p56
      %p58 = scmp.ne.s32.totalorder %s47, %s48
      %p59 = scmp.eq.s32.totalorder %s18, 0
      %p60 = por %p58, %p59
      %p61 = scmp.ne.s32.totalorder %s47, %s48
      %p62 = scmp.eq.s32.totalorder %s19, 1
      %p63 = por %p61, %p62
      %p65 = scmp.ne.s32.totalorder %s48, %s64
      %p66 = scmp.eq.s32.totalorder %s19, 0
      %p67 = por %p65, %p66
      %s68 = ssub.s32 %s22, %s31
      %s69 = ssub.s32 %s21, %s35
      %s70 = sor.u32 %s68, %s69
      %p71 = scmp.eq.s32.totalorder %s70, 0
      %s73 = sadd.s32 %s72, 1
      %s74 = scalar_select %p71, %s72, %s73
      %p77 = pneg %p71
      %p78 = scmp.eq.s32.totalorder %s13, 1
      %p79 = por %p77, %p78
      %p80 = scmp.ne.s32.totalorder %s72, %s75
      %p81 = scmp.eq.s32.totalorder %s13, 0
      %p82 = por %p80, %p81
      %p83 = scmp.ne.s32.totalorder %s72, %s75
      %p84 = scmp.eq.s32.totalorder %s18, 1
      %p85 = por %p83, %p84
      %p86 = scmp.ne.s32.totalorder %s75, %s76
      %p87 = scmp.eq.s32.totalorder %s18, 0
      %p88 = por %p86, %p87
      %p89 = scmp.ne.s32.totalorder %s75, %s76
      %p90 = scmp.eq.s32.totalorder %s19, 1
      %p91 = por %p89, %p90
      %p93 = scmp.ne.s32.totalorder %s76, %s92
      %p94 = scmp.eq.s32.totalorder %s19, 0
      %p95 = por %p93, %p94
      %s96 = ssub.s32 %s21, %s35
      %p97 = scmp.eq.s32.totalorder %s96, 0
      %s99 = sadd.s32 %s98, 1
      %s100 = scalar_select %p97, %s98, %s99
      %p103 = pneg %p97
      %p104 = scmp.eq.s32.totalorder %s13, 1
      %p105 = por %p103, %p104
      %p106 = scmp.ne.s32.totalorder %s98, %s101
      %p107 = scmp.eq.s32.totalorder %s13, 0
      %p108 = por %p106, %p107
      %p109 = scmp.ne.s32.totalorder %s98, %s101
      %p110 = scmp.eq.s32.totalorder %s18, 1
      %p111 = por %p109, %p110
      %p112 = scmp.ne.s32.totalorder %s101, %s102
      %p113 = scmp.eq.s32.totalorder %s18, 0
      %p114 = por %p112, %p113
      %p115 = scmp.ne.s32.totalorder %s101, %s102
      %p116 = scmp.eq.s32.totalorder %s19, 1
      %p117 = por %p115, %p116
      %p119 = scmp.ne.s32.totalorder %s102, %s118
      %p120 = scmp.eq.s32.totalorder %s19, 0
      %p121 = por %p119, %p120
      %s122 = ssub.s32 %s20, %s39
      %s123 = ssub.s32 %s21, %s35
      %s124 = sor.u32 %s122, %s123
      %p125 = scmp.eq.s32.totalorder %s124, 0
      %s127 = sadd.s32 %s126, 1
      %s128 = scalar_select %p125, %s126, %s127
      %p131 = pneg %p125
      %p132 = scmp.eq.s32.totalorder %s13, 1
      %p133 = por %p131, %p132
      %p134 = scmp.ne.s32.totalorder %s126, %s129
      %p135 = scmp.eq.s32.totalorder %s13, 0
      %p136 = por %p134, %p135
      %p137 = scmp.ne.s32.totalorder %s126, %s129
      %p138 = scmp.eq.s32.totalorder %s18, 1
      %p139 = por %p137, %p138
      %p140 = scmp.ne.s32.totalorder %s129, %s130
      %p141 = scmp.eq.s32.totalorder %s18, 0
      %p142 = por %p140, %p141
      %p143 = scmp.ne.s32.totalorder %s129, %s130
      %p144 = scmp.eq.s32.totalorder %s19, 1
      %p145 = por %p143, %p144
      %p147 = scmp.ne.s32.totalorder %s130, %s146
      %p148 = scmp.eq.s32.totalorder %s19, 0
      %p149 = por %p147, %p148
      %s150 = ssub.s32 %s20, %s39
      %s151 = ssub.s32 %s21, %s35
      %s152 = sor.u32 %s150, %s151
      %p153 = scmp.eq.s32.totalorder %s152, 0
      %s155 = sadd.s32 %s154, 1
      %s156 = scalar_select %p153, %s154, %s155
      %p159 = pneg %p153
      %p160 = scmp.eq.s32.totalorder %s13, 1
      %p161 = por %p159, %p160
      %p162 = scmp.ne.s32.totalorder %s154, %s157
      %p163 = scmp.eq.s32.totalorder %s13, 0
      %p164 = por %p162, %p163
      %p165 = scmp.ne.s32.totalorder %s154, %s157
      %p166 = scmp.eq.s32.totalorder %s18, 1
      %p167 = por %p165, %p166
      %p168 = scmp.ne.s32.totalorder %s157, %s158
      %p169 = scmp.eq.s32.totalorder %s18, 0
      %p170 = por %p168, %p169
      %p171 = scmp.ne.s32.totalorder %s157, %s158
      %p172 = scmp.eq.s32.totalorder %s19, 1
      %p173 = por %p171, %p172
      %p175 = scmp.ne.s32.totalorder %s158, %s174
      %p176 = scmp.eq.s32.totalorder %s19, 0
      %p177 = por %p175, %p176
      %p178 = scmp.le.s32.totalorder 1, %s13
      %p179 = scmp.lt.s32.totalorder %s13, 3
      %p180 = pnand %p178, %p179
      %p181 = pneg %p180
      // Predicated region
      $region9: #{siglip_s2rgb_embed.18} parent=5 // pred_check
        _
      $region10: #{siglip_s2rgb_embed.18} parent=5 // pred_check_branch
        %183 = sbr.rel (%p180) target = $region12
      $region11: #{siglip_s2rgb_embed.18} parent=5 // pred_region
        %s184 = ssub.s32 %s13, 1
        // Predicated region
        $region13: #{siglip_s2rgb_embed.18} parent=11 // pred_check
          %p185 = pneg %p114
        $region14: #{siglip_s2rgb_embed.18} parent=11 // pred_check_branch
          %187 = sbr.rel (%p185) target = $region16
        $region15: #{siglip_s2rgb_embed.18} parent=11 // pred_region
          %s188 = smul.u32 2, %s24
          %p189 = scmp.lt.s32.totalorder %s188, 1
          %s190 = scalar_select %p189, %s188, 1
          %s191 = scalar_lea.vmem %s2, %s190
          %s192 = smul.u32 2, %s24
        $region16: #{siglip_s2rgb_embed.18} parent=11 // pred_fallthru
          _
        // Predicated region
        $region17: #{siglip_s2rgb_embed.18} parent=11 // pred_check
          %p193 = pneg %p142
        $region18: #{siglip_s2rgb_embed.18} parent=11 // pred_check_branch
          %195 = sbr.rel (%p193) target = $region20
        $region19: #{siglip_s2rgb_embed.18} parent=11 // pred_region
          %s196 = smul.u32 4, %s23
          %s197 = smul.u32 2, %s24
          %p198 = scmp.lt.s32.totalorder %s196, 3
          %s199 = scalar_select %p198, %s196, 3
          %p200 = scmp.lt.s32.totalorder %s197, 1
          %s201 = scalar_select %p200, %s197, 1
          %s202 = smul.addr %s199, 2
          %s203 = sadd.s32 %s201, %s202
          %s204 = smul.addr %s203, 4
          %s205 = scalar_lea.vmem %s3, %s204
          %s206 = smul.u32 4, %s23
          %s207 = smul.u32 2, %s24
        $region20: #{siglip_s2rgb_embed.18} parent=11 // pred_fallthru
          _
      $region12: #{siglip_s2rgb_embed.18} parent=5 // pred_fallthru
        _
      %p208 = scmp.lt.s32.totalorder %s13, 2
      // Predicated region
      $region21: #{siglip_s2rgb_embed.18} parent=5 // pred_check
        %p209 = pneg %p208
      $region22: #{siglip_s2rgb_embed.18} parent=5 // pred_check_branch
        %211 = sbr.rel (%p209) target = $region24
      $region23: #{siglip_s2rgb_embed.18} parent=5 // pred_region
        // Predicated region
        $region25: #{siglip_s2rgb_embed.18} parent=23 // pred_check
          %p212 = pneg %p54
        $region26: #{siglip_s2rgb_embed.18} parent=23 // pred_check_branch
          %214 = sbr.rel (%p212) target = $region28
        $region27: #{siglip_s2rgb_embed.18} parent=23 // pred_region
          %s215 = sand.u32 %s44, 1
          %s216 = sand.u32 %s44, 1
          %s217 = smul.addr %s216, 64
          %s218 = scalar_lea.vmem [#allocation3], %s217
          %s219 = smul.u32 4, %s20
          %s220 = smul.u32 4, %s22
          %s221 = smul.addr %s219, 8
          %s222 = sadd.s32 %s220, %s221
          %s223 = smul.addr %s222, 4
          %s224 = scalar_lea.vmem %s0, %s223
          // Predicated region
          $region29: #{siglip_s2rgb_embed.18} parent=27 // pred_check
            _
          $region30: #{siglip_s2rgb_embed.18} parent=27 // pred_check_branch
            %226 = sbr.rel (0) target = $region32
          $region31: #{siglip_s2rgb_embed.18} parent=27 // pred_region
            // Predicated region
            $region33: #{siglip_s2rgb_embed.18} parent=31 // pred_check
              _
            $region34: #{siglip_s2rgb_embed.18} parent=31 // pred_check_branch
              %228 = sbr.rel (0) target = $region36
            $region35: #{siglip_s2rgb_embed.18} parent=31 // pred_region
              loop: start=0, step=1, limit=1
              $region37: #{siglip_s2rgb_embed.18} parent=35 // loop_pre_header
                _
              $region38: #{siglip_s2rgb_embed.18} parent=35 // loop_header
                %s230 = sphi 0, %s234
                %p231 = scmp.ge.s32.totalorder %s230, 1
                %s235 = sphi %s224, %s224
                %s236 = sphi %s218, %s218
              $region39: #{siglip_s2rgb_embed.18} parent=35 // loop_header_branch
                %233 = sbr.rel (%p231) target = $region43
              $region40: #{siglip_s2rgb_embed.18} parent=35 // loop_body
                %v237 = vld [vmem:[%s235] sm:$0xff]
                %238 = vst [vmem:[%s236] sm:$0xff] %v237
                %v239 = vld [vmem:[%s235 + $0x8] sm:$0xff]
                %240 = vst [vmem:[%s236 + $0x8] sm:$0xff] %v239
                %v241 = vld [vmem:[%s235 + $0x20] sm:$0xff]
                %242 = vst [vmem:[%s236 + $0x10] sm:$0xff] %v241
                %v243 = vld [vmem:[%s235 + $0x28] sm:$0xff]
                %244 = vst [vmem:[%s236 + $0x18] sm:$0xff] %v243
                %v245 = vld [vmem:[%s235 + $0x40] sm:$0xff]
                %246 = vst [vmem:[%s236 + $0x20] sm:$0xff] %v245
                %v247 = vld [vmem:[%s235 + $0x48] sm:$0xff]
                %248 = vst [vmem:[%s236 + $0x28] sm:$0xff] %v247
                %v249 = vld [vmem:[%s235 + $0x60] sm:$0xff]
                %250 = vst [vmem:[%s236 + $0x30] sm:$0xff] %v249
                %v251 = vld [vmem:[%s235 + $0x68] sm:$0xff]
                %252 = vst [vmem:[%s236 + $0x38] sm:$0xff] %v251
              $region41: #{siglip_s2rgb_embed.18} parent=35 // loop_footer
                %s234 = sadd.s32 1, %s230
              $region42: #{siglip_s2rgb_embed.18} parent=35 // loop_footer_branch
                %229 = sbr.rel target = $region38
              $region43: #{siglip_s2rgb_embed.18} parent=35 // loop_exit
                _
            $region36: #{siglip_s2rgb_embed.18} parent=31 // pred_fallthru
              _
            // Predicated region
            $region44: #{siglip_s2rgb_embed.18} parent=31 // pred_check
              _
            $region45: #{siglip_s2rgb_embed.18} parent=31 // pred_check_branch
              %254 = sbr.rel target = $region47
            $region46: #{siglip_s2rgb_embed.18} parent=31 // pred_region
              _
            $region47: #{siglip_s2rgb_embed.18} parent=31 // pred_fallthru
              _
          $region32: #{siglip_s2rgb_embed.18} parent=27 // pred_fallthru
            _
          %255 = vnop
        $region28: #{siglip_s2rgb_embed.18} parent=23 // pred_fallthru
          _
        // Predicated region
        $region48: #{siglip_s2rgb_embed.18} parent=23 // pred_check
          %p256 = pneg %p82
        $region49: #{siglip_s2rgb_embed.18} parent=23 // pred_check_branch
          %258 = sbr.rel (%p256) target = $region51
        $region50: #{siglip_s2rgb_embed.18} parent=23 // pred_region
          %s259 = sand.u32 %s72, 1
          %s260 = scalar_lea.sflag [#allocation5], %s259
          %s261 = sand.u32 %s72, 1
          %s262 = smul.addr %s261, 512
          %s263 = scalar_lea.vmem [#allocation4], %s262
          %s264 = smul.u32 64, %s22
          %s265 = smul.u32 2, %s21
          %267 = vsyncadd %s260, 0
          %s268 = smul.addr %s264, 2
          %s269 = sadd.s32 %s265, %s268
          %s270 = smul.addr %s269, 4
          %s271 = scalar_lea.hbm %s1, %s270
          %s272 = sshll.u32 %s271, 4
          %s273 = int_to_ptr.hbm [resolvable:$true] %s272
          %s274 = sshll.u32 %s263, 4
          %s275 = int_to_ptr.vmem [resolvable:$true] %s274
          %280 = dma.hbm_to_vmem [thread:$0]  %s273, 8192, %s275, %s260, 128, 128, 8
        $region51: #{siglip_s2rgb_embed.18} parent=23 // pred_fallthru
          _
      $region24: #{siglip_s2rgb_embed.18} parent=5 // pred_fallthru
        _
      %p281 = scmp.le.s32.totalorder 1, %s13
      %p282 = scmp.lt.s32.totalorder %s13, 3
      %p283 = pnand %p281, %p282
      %p284 = pneg %p283
      // Predicated region
      $region52: #{siglip_s2rgb_embed.18} parent=5 // pred_check
        _
      $region53: #{siglip_s2rgb_embed.18} parent=5 // pred_check_branch
        %286 = sbr.rel (%p283) target = $region55
      $region54: #{siglip_s2rgb_embed.18} parent=5 // pred_region
        %s287 = ssub.s32 %s13, 1
        %s288 = sand.u32 %s47, 1
        %s289 = sand.u32 %s47, 1
        %s290 = smul.addr %s289, 64
        %s291 = scalar_lea.vmem [#allocation3], %s290
        // Predicated region
        $region56: #{siglip_s2rgb_embed.18} parent=54 // pred_check
          %p292 = pneg %p60
        $region57: #{siglip_s2rgb_embed.18} parent=54 // pred_check_branch
          %294 = sbr.rel (%p292) target = $region59
        $region58: #{siglip_s2rgb_embed.18} parent=54 // pred_region
          _
        $region59: #{siglip_s2rgb_embed.18} parent=54 // pred_fallthru
          _
        %s295 = sand.u32 %s75, 1
        %s296 = scalar_lea.sflag [#allocation5], %s295
        %s297 = sand.u32 %s75, 1
        %s298 = smul.addr %s297, 512
        %s299 = scalar_lea.vmem [#allocation4], %s298
        // Predicated region
        $region60: #{siglip_s2rgb_embed.18} parent=54 // pred_check
          %p300 = pneg %p88
        $region61: #{siglip_s2rgb_embed.18} parent=54 // pred_check_branch
          %302 = sbr.rel (%p300) target = $region63
        $region62: #{siglip_s2rgb_embed.18} parent=54 // pred_region
          %304 = dma.done %s296, 8192
        $region63: #{siglip_s2rgb_embed.18} parent=54 // pred_fallthru
          _
        %s305 = sand.u32 %s47, 1
        %s306 = sand.u32 %s47, 1
        %s307 = smul.addr %s306, 64
        %s308 = scalar_lea.vmem [#allocation3], %s307
        %p309 = pneg %p60
        %p310 = pneg %p57
        %s311 = sand.u32 %s75, 1
        %s312 = scalar_lea.sflag [#allocation5], %s311
        %s313 = sand.u32 %s75, 1
        %s314 = smul.addr %s313, 512
        %s315 = scalar_lea.vmem [#allocation4], %s314
        %p316 = pneg %p88
        %p317 = pneg %p85
        %s318 = smul.u32 2, %s24
        %p319 = scmp.lt.s32.totalorder %s318, 1
        %s320 = scalar_select %p319, %s318, 1
        %s321 = scalar_lea.vmem %s2, %s320
        %p322 = pneg %p114
        %p323 = pneg %p111
        %s324 = smul.u32 4, %s23
        %s325 = smul.u32 2, %s24
        %p326 = scmp.lt.s32.totalorder %s324, 3
        %s327 = scalar_select %p326, %s324, 3
        %p328 = scmp.lt.s32.totalorder %s325, 1
        %s329 = scalar_select %p328, %s325, 1
        %s330 = smul.addr %s327, 2
        %s331 = sadd.s32 %s329, %s330
        %s332 = smul.addr %s331, 4
        %s333 = scalar_lea.vmem %s3, %s332
        %p334 = pneg %p142
        %p335 = pneg %p139
        %p336 = pneg %p170
        %p337 = pneg %p167
        %s338 = smul.u32 4, %s23
        %s339 = smul.u32 2, %s24
        %p340 = scmp.lt.s32.totalorder %s338, 3
        %s341 = scalar_select %p340, %s338, 3
        %p342 = scmp.lt.s32.totalorder %s339, 1
        %s343 = scalar_select %p342, %s339, 1
        %s344 = smul.addr %s341, 2
        %s345 = sadd.s32 %s343, %s344
        %s346 = smul.addr %s345, 4
        %s347 = scalar_lea.vmem %s4, %s346
        %s348 = smul.u32 4, %s23
        %s349 = smul.u32 4, %s25
        %s350 = smul.u32 64, %s25
        %s351 = smul.u32 2, %s24
        %s352 = smul.u32 2, %s24
        %p353 = scmp.lt.s32.totalorder %s352, 1
        %s354 = scalar_select %p353, %s352, 1
        %s355 = scalar_lea.vmem %s2, %s354
        %s356 = smul.u32 2, %s24
        %s357 = smul.u32 4, %s23
        %s358 = smul.u32 2, %s24
        %p359 = scmp.lt.s32.totalorder %s357, 3
        %s360 = scalar_select %p359, %s357, 3
        %p361 = scmp.lt.s32.totalorder %s358, 1
        %s362 = scalar_select %p361, %s358, 1
        %s363 = smul.addr %s360, 2
        %s364 = sadd.s32 %s362, %s363
        %s365 = smul.addr %s364, 4
        %s366 = scalar_lea.vmem %s3, %s365
        %s367 = smul.u32 4, %s23
        %s368 = smul.u32 2, %s24
        %s369 = smul.u32 4, %s23
        %s370 = smul.u32 2, %s24
        %p371 = scmp.lt.s32.totalorder %s369, 3
        %s372 = scalar_select %p371, %s369, 3
        %p373 = scmp.lt.s32.totalorder %s370, 1
        %s374 = scalar_select %p373, %s370, 1
        %s375 = smul.addr %s372, 2
        %s376 = sadd.s32 %s374, %s375
        %s377 = smul.addr %s376, 4
        %s378 = scalar_lea.vmem %s4, %s377
        %s379 = smul.u32 4, %s23
        %s380 = smul.u32 2, %s24
        %p381 = scmp.eq.s32.totalorder %s25, 0
        // Predicated region
        $region64: #{siglip_s2rgb_embed.18} parent=54 // pred_check
          %p382 = pneg %p381
        $region65: #{siglip_s2rgb_embed.18} parent=54 // pred_check_branch
          %384 = sbr.rel (%p382) target = $region67
        $region66: #{siglip_s2rgb_embed.18} parent=54 // pred_region
          %385 = vst [vmem:[#allocation2] sm:$0xff] 0.0
          %386 = vst [vmem:[#allocation2 + $0x8] sm:$0xff] 0.0
          %387 = vst [vmem:[#allocation2 + $0x10] sm:$0xff] 0.0
          %388 = vst [vmem:[#allocation2 + $0x18] sm:$0xff] 0.0
          %389 = vst [vmem:[#allocation2 + $0x20] sm:$0xff] 0.0
          %390 = vst [vmem:[#allocation2 + $0x28] sm:$0xff] 0.0
          %391 = vst [vmem:[#allocation2 + $0x30] sm:$0xff] 0.0
          %392 = vst [vmem:[#allocation2 + $0x38] sm:$0xff] 0.0
        $region67: #{siglip_s2rgb_embed.18} parent=54 // pred_fallthru
          _
        %v393 = vld [vmem:[#allocation2] sm:$0xff]
        %v394 = vld [vmem:[#allocation2 + $0x8] sm:$0xff]
        %v395 = vld [vmem:[#allocation2 + $0x10] sm:$0xff]
        %v396 = vld [vmem:[#allocation2 + $0x18] sm:$0xff]
        %v397 = vld [vmem:[#allocation2 + $0x20] sm:$0xff]
        %v398 = vld [vmem:[#allocation2 + $0x28] sm:$0xff]
        %v399 = vld [vmem:[#allocation2 + $0x30] sm:$0xff]
        %v400 = vld [vmem:[#allocation2 + $0x38] sm:$0xff]
        %v401 = vld [vmem:[%s291] sm:$0xff]
        %v402 = vld [vmem:[%s291 + $0x8] sm:$0xff]
        %v403 = vld [vmem:[%s291 + $0x10] sm:$0xff]
        %v404 = vld [vmem:[%s291 + $0x18] sm:$0xff]
        %v405 = vld [vmem:[%s291 + $0x20] sm:$0xff]
        %v406 = vld [vmem:[%s291 + $0x28] sm:$0xff]
        %v407 = vld [vmem:[%s291 + $0x30] sm:$0xff]
        %v408 = vld [vmem:[%s291 + $0x38] sm:$0xff]
        %v409 = vld [vmem:[%s299] sm:$0xff]
        %v410 = vld [vmem:[%s299 + $0x8] sm:$0xff]
        %v411 = vld [vmem:[%s299 + $0x10] sm:$0xff]
        %v412 = vld [vmem:[%s299 + $0x18] sm:$0xff]
        %v413 = vld [vmem:[%s299 + $0x20] sm:$0xff]
        %v414 = vld [vmem:[%s299 + $0x28] sm:$0xff]
        %v415 = vld [vmem:[%s299 + $0x30] sm:$0xff]
        %v416 = vld [vmem:[%s299 + $0x38] sm:$0xff]
        %v417 = vld [vmem:[%s299 + $0x40] sm:$0xff]
        %v418 = vld [vmem:[%s299 + $0x48] sm:$0xff]
        %v419 = vld [vmem:[%s299 + $0x50] sm:$0xff]
        %v420 = vld [vmem:[%s299 + $0x58] sm:$0xff]
        %v421 = vld [vmem:[%s299 + $0x60] sm:$0xff]
        %v422 = vld [vmem:[%s299 + $0x68] sm:$0xff]
        %v423 = vld [vmem:[%s299 + $0x70] sm:$0xff]
        %v424 = vld [vmem:[%s299 + $0x78] sm:$0xff]
        %v425 = vld [vmem:[%s299 + $0x80] sm:$0xff]
        %v426 = vld [vmem:[%s299 + $0x88] sm:$0xff]
        %v427 = vld [vmem:[%s299 + $0x90] sm:$0xff]
        %v428 = vld [vmem:[%s299 + $0x98] sm:$0xff]
        %v429 = vld [vmem:[%s299 + $0xa0] sm:$0xff]
        %v430 = vld [vmem:[%s299 + $0xa8] sm:$0xff]
        %v431 = vld [vmem:[%s299 + $0xb0] sm:$0xff]
        %v432 = vld [vmem:[%s299 + $0xb8] sm:$0xff]
        %v433 = vld [vmem:[%s299 + $0xc0] sm:$0xff]
        %v434 = vld [vmem:[%s299 + $0xc8] sm:$0xff]
        %v435 = vld [vmem:[%s299 + $0xd0] sm:$0xff]
        %v436 = vld [vmem:[%s299 + $0xd8] sm:$0xff]
        %v437 = vld [vmem:[%s299 + $0xe0] sm:$0xff]
        %v438 = vld [vmem:[%s299 + $0xe8] sm:$0xff]
        %v439 = vld [vmem:[%s299 + $0xf0] sm:$0xff]
        %v440 = vld [vmem:[%s299 + $0xf8] sm:$0xff]
        %v441 = vld [vmem:[%s299 + $0x100] sm:$0xff]
        %v442 = vld [vmem:[%s299 + $0x108] sm:$0xff]
        %v443 = vld [vmem:[%s299 + $0x110] sm:$0xff]
        %v444 = vld [vmem:[%s299 + $0x118] sm:$0xff]
        %v445 = vld [vmem:[%s299 + $0x120] sm:$0xff]
        %v446 = vld [vmem:[%s299 + $0x128] sm:$0xff]
        %v447 = vld [vmem:[%s299 + $0x130] sm:$0xff]
        %v448 = vld [vmem:[%s299 + $0x138] sm:$0xff]
        %v449 = vld [vmem:[%s299 + $0x140] sm:$0xff]
        %v450 = vld [vmem:[%s299 + $0x148] sm:$0xff]
        %v451 = vld [vmem:[%s299 + $0x150] sm:$0xff]
        %v452 = vld [vmem:[%s299 + $0x158] sm:$0xff]
        %v453 = vld [vmem:[%s299 + $0x160] sm:$0xff]
        %v454 = vld [vmem:[%s299 + $0x168] sm:$0xff]
        %v455 = vld [vmem:[%s299 + $0x170] sm:$0xff]
        %v456 = vld [vmem:[%s299 + $0x178] sm:$0xff]
        %v457 = vld [vmem:[%s299 + $0x180] sm:$0xff]
        %v458 = vld [vmem:[%s299 + $0x188] sm:$0xff]
        %v459 = vld [vmem:[%s299 + $0x190] sm:$0xff]
        %v460 = vld [vmem:[%s299 + $0x198] sm:$0xff]
        %v461 = vld [vmem:[%s299 + $0x1a0] sm:$0xff]
        %v462 = vld [vmem:[%s299 + $0x1a8] sm:$0xff]
        %v463 = vld [vmem:[%s299 + $0x1b0] sm:$0xff]
        %v464 = vld [vmem:[%s299 + $0x1b8] sm:$0xff]
        %v465 = vld [vmem:[%s299 + $0x1c0] sm:$0xff]
        %v466 = vld [vmem:[%s299 + $0x1c8] sm:$0xff]
        %v467 = vld [vmem:[%s299 + $0x1d0] sm:$0xff]
        %v468 = vld [vmem:[%s299 + $0x1d8] sm:$0xff]
        %v469 = vld [vmem:[%s299 + $0x1e0] sm:$0xff]
        %v470 = vld [vmem:[%s299 + $0x1e8] sm:$0xff]
        %v471 = vld [vmem:[%s299 + $0x1f0] sm:$0xff]
        %v472 = vld [vmem:[%s299 + $0x1f8] sm:$0xff]
        %v481 = vunpack.c.l.b16 %v401
        %v482 = vunpack.c.h.b16 %v401
        %v483 = vunpack.c.l.b16 %v402
        %v484 = vunpack.c.h.b16 %v402
        %v485 = vunpack.c.l.b16 %v403
        %v486 = vunpack.c.h.b16 %v403
        %v487 = vunpack.c.l.b16 %v404
        %v488 = vunpack.c.h.b16 %v404
        %v489 = vunpack.c.l.b16 %v405
        %v490 = vunpack.c.h.b16 %v405
        %v491 = vunpack.c.l.b16 %v406
        %v492 = vunpack.c.h.b16 %v406
        %v493 = vunpack.c.l.b16 %v407
        %v494 = vunpack.c.h.b16 %v407
        %v495 = vunpack.c.l.b16 %v408
        %v496 = vunpack.c.h.b16 %v408
        %v497 = vpack.c.b16 %v485, %v481
        %v498 = vpack.c.b16 %v486, %v482
        %v499 = vpack.c.b16 %v487, %v483
        %v500 = vpack.c.b16 %v488, %v484
        %v501 = vpack.c.b16 %v493, %v489
        %v502 = vpack.c.b16 %v494, %v490
        %v503 = vpack.c.b16 %v495, %v491
        %v504 = vpack.c.b16 %v496, %v492
        %v577 = vunpack.c.l.b16 %v409
        %v578 = vunpack.c.h.b16 %v409
        %v579 = vunpack.c.l.b16 %v410
        %v580 = vunpack.c.h.b16 %v410
        %v581 = vunpack.c.l.b16 %v411
        %v582 = vunpack.c.h.b16 %v411
        %v583 = vunpack.c.l.b16 %v412
        %v584 = vunpack.c.h.b16 %v412
        %v585 = vunpack.c.l.b16 %v413
        %v586 = vunpack.c.h.b16 %v413
        %v587 = vunpack.c.l.b16 %v414
        %v588 = vunpack.c.h.b16 %v414
        %v589 = vunpack.c.l.b16 %v415
        %v590 = vunpack.c.h.b16 %v415
        %v591 = vunpack.c.l.b16 %v416
        %v592 = vunpack.c.h.b16 %v416
        %v593 = vunpack.c.l.b16 %v417
        %v594 = vunpack.c.h.b16 %v417
        %v595 = vunpack.c.l.b16 %v418
        %v596 = vunpack.c.h.b16 %v418
        %v597 = vunpack.c.l.b16 %v419
        %v598 = vunpack.c.h.b16 %v419
        %v599 = vunpack.c.l.b16 %v420
        %v600 = vunpack.c.h.b16 %v420
        %v601 = vunpack.c.l.b16 %v421
        %v602 = vunpack.c.h.b16 %v421
        %v603 = vunpack.c.l.b16 %v422
        %v604 = vunpack.c.h.b16 %v422
        %v605 = vunpack.c.l.b16 %v423
        %v606 = vunpack.c.h.b16 %v423
        %v607 = vunpack.c.l.b16 %v424
        %v608 = vunpack.c.h.b16 %v424
        %v609 = vunpack.c.l.b16 %v425
        %v610 = vunpack.c.h.b16 %v425
        %v611 = vunpack.c.l.b16 %v426
        %v612 = vunpack.c.h.b16 %v426
        %v613 = vunpack.c.l.b16 %v427
        %v614 = vunpack.c.h.b16 %v427
        %v615 = vunpack.c.l.b16 %v428
        %v616 = vunpack.c.h.b16 %v428
        %v617 = vunpack.c.l.b16 %v429
        %v618 = vunpack.c.h.b16 %v429
        %v619 = vunpack.c.l.b16 %v430
        %v620 = vunpack.c.h.b16 %v430
        %v621 = vunpack.c.l.b16 %v431
        %v622 = vunpack.c.h.b16 %v431
        %v623 = vunpack.c.l.b16 %v432
        %v624 = vunpack.c.h.b16 %v432
        %v625 = vunpack.c.l.b16 %v433
        %v626 = vunpack.c.h.b16 %v433
        %v627 = vunpack.c.l.b16 %v434
        %v628 = vunpack.c.h.b16 %v434
        %v629 = vunpack.c.l.b16 %v435
        %v630 = vunpack.c.h.b16 %v435
        %v631 = vunpack.c.l.b16 %v436
        %v632 = vunpack.c.h.b16 %v436
        %v633 = vunpack.c.l.b16 %v437
        %v634 = vunpack.c.h.b16 %v437
        %v635 = vunpack.c.l.b16 %v438
        %v636 = vunpack.c.h.b16 %v438
        %v637 = vunpack.c.l.b16 %v439
        %v638 = vunpack.c.h.b16 %v439
        %v639 = vunpack.c.l.b16 %v440
        %v640 = vunpack.c.h.b16 %v440
        %v641 = vunpack.c.l.b16 %v441
        %v642 = vunpack.c.h.b16 %v441
        %v643 = vunpack.c.l.b16 %v442
        %v644 = vunpack.c.h.b16 %v442
        %v645 = vunpack.c.l.b16 %v443
        %v646 = vunpack.c.h.b16 %v443
        %v647 = vunpack.c.l.b16 %v444
        %v648 = vunpack.c.h.b16 %v444
        %v649 = vunpack.c.l.b16 %v445
        %v650 = vunpack.c.h.b16 %v445
        %v651 = vunpack.c.l.b16 %v446
        %v652 = vunpack.c.h.b16 %v446
        %v653 = vunpack.c.l.b16 %v447
        %v654 = vunpack.c.h.b16 %v447
        %v655 = vunpack.c.l.b16 %v448
        %v656 = vunpack.c.h.b16 %v448
        %v657 = vunpack.c.l.b16 %v449
        %v658 = vunpack.c.h.b16 %v449
        %v659 = vunpack.c.l.b16 %v450
        %v660 = vunpack.c.h.b16 %v450
        %v661 = vunpack.c.l.b16 %v451
        %v662 = vunpack.c.h.b16 %v451
        %v663 = vunpack.c.l.b16 %v452
        %v664 = vunpack.c.h.b16 %v452
        %v665 = vunpack.c.l.b16 %v453
        %v666 = vunpack.c.h.b16 %v453
        %v667 = vunpack.c.l.b16 %v454
        %v668 = vunpack.c.h.b16 %v454
        %v669 = vunpack.c.l.b16 %v455
        %v670 = vunpack.c.h.b16 %v455
        %v671 = vunpack.c.l.b16 %v456
        %v672 = vunpack.c.h.b16 %v456
        %v673 = vunpack.c.l.b16 %v457
        %v674 = vunpack.c.h.b16 %v457
        %v675 = vunpack.c.l.b16 %v458
        %v676 = vunpack.c.h.b16 %v458
        %v677 = vunpack.c.l.b16 %v459
        %v678 = vunpack.c.h.b16 %v459
        %v679 = vunpack.c.l.b16 %v460
        %v680 = vunpack.c.h.b16 %v460
        %v681 = vunpack.c.l.b16 %v461
        %v682 = vunpack.c.h.b16 %v461
        %v683 = vunpack.c.l.b16 %v462
        %v684 = vunpack.c.h.b16 %v462
        %v685 = vunpack.c.l.b16 %v463
        %v686 = vunpack.c.h.b16 %v463
        %v687 = vunpack.c.l.b16 %v464
        %v688 = vunpack.c.h.b16 %v464
        %v689 = vunpack.c.l.b16 %v465
        %v690 = vunpack.c.h.b16 %v465
        %v691 = vunpack.c.l.b16 %v466
        %v692 = vunpack.c.h.b16 %v466
        %v693 = vunpack.c.l.b16 %v467
        %v694 = vunpack.c.h.b16 %v467
        %v695 = vunpack.c.l.b16 %v468
        %v696 = vunpack.c.h.b16 %v468
        %v697 = vunpack.c.l.b16 %v469
        %v698 = vunpack.c.h.b16 %v469
        %v699 = vunpack.c.l.b16 %v470
        %v700 = vunpack.c.h.b16 %v470
        %v701 = vunpack.c.l.b16 %v471
        %v702 = vunpack.c.h.b16 %v471
        %v703 = vunpack.c.l.b16 %v472
        %v704 = vunpack.c.h.b16 %v472
        %v705 = vpack.c.b16 %v579, %v577
        %v706 = vpack.c.b16 %v580, %v578
        %v707 = vpack.c.b16 %v583, %v581
        %v708 = vpack.c.b16 %v584, %v582
        %v709 = vpack.c.b16 %v587, %v585
        %v710 = vpack.c.b16 %v588, %v586
        %v711 = vpack.c.b16 %v591, %v589
        %v712 = vpack.c.b16 %v592, %v590
        %v713 = vpack.c.b16 %v595, %v593
        %v714 = vpack.c.b16 %v596, %v594
        %v715 = vpack.c.b16 %v599, %v597
        %v716 = vpack.c.b16 %v600, %v598
        %v717 = vpack.c.b16 %v603, %v601
        %v718 = vpack.c.b16 %v604, %v602
        %v719 = vpack.c.b16 %v607, %v605
        %v720 = vpack.c.b16 %v608, %v606
        %v721 = vpack.c.b16 %v611, %v609
        %v722 = vpack.c.b16 %v612, %v610
        %v723 = vpack.c.b16 %v615, %v613
        %v724 = vpack.c.b16 %v616, %v614
        %v725 = vpack.c.b16 %v619, %v617
        %v726 = vpack.c.b16 %v620, %v618
        %v727 = vpack.c.b16 %v623, %v621
        %v728 = vpack.c.b16 %v624, %v622
        %v729 = vpack.c.b16 %v627, %v625
        %v730 = vpack.c.b16 %v628, %v626
        %v731 = vpack.c.b16 %v631, %v629
        %v732 = vpack.c.b16 %v632, %v630
        %v733 = vpack.c.b16 %v635, %v633
        %v734 = vpack.c.b16 %v636, %v634
        %v735 = vpack.c.b16 %v639, %v637
        %v736 = vpack.c.b16 %v640, %v638
        %v737 = vpack.c.b16 %v643, %v641
        %v738 = vpack.c.b16 %v644, %v642
        %v739 = vpack.c.b16 %v647, %v645
        %v740 = vpack.c.b16 %v648, %v646
        %v741 = vpack.c.b16 %v651, %v649
        %v742 = vpack.c.b16 %v652, %v650
        %v743 = vpack.c.b16 %v655, %v653
        %v744 = vpack.c.b16 %v656, %v654
        %v745 = vpack.c.b16 %v659, %v657
        %v746 = vpack.c.b16 %v660, %v658
        %v747 = vpack.c.b16 %v663, %v661
        %v748 = vpack.c.b16 %v664, %v662
        %v749 = vpack.c.b16 %v667, %v665
        %v750 = vpack.c.b16 %v668, %v666
        %v751 = vpack.c.b16 %v671, %v669
        %v752 = vpack.c.b16 %v672, %v670
        %v753 = vpack.c.b16 %v675, %v673
        %v754 = vpack.c.b16 %v676, %v674
        %v755 = vpack.c.b16 %v679, %v677
        %v756 = vpack.c.b16 %v680, %v678
        %v757 = vpack.c.b16 %v683, %v681
        %v758 = vpack.c.b16 %v684, %v682
        %v759 = vpack.c.b16 %v687, %v685
        %v760 = vpack.c.b16 %v688, %v686
        %v761 = vpack.c.b16 %v691, %v689
        %v762 = vpack.c.b16 %v692, %v690
        %v763 = vpack.c.b16 %v695, %v693
        %v764 = vpack.c.b16 %v696, %v694
        %v765 = vpack.c.b16 %v699, %v697
        %v766 = vpack.c.b16 %v700, %v698
        %v767 = vpack.c.b16 %v703, %v701
        %v768 = vpack.c.b16 %v704, %v702
        %833 = vmatpush.bf16.msra.mxu0 %v719
        %834 = vmatpush.bf16.msra.mxu0 %v717
        %835 = vmatpush.bf16.msra.mxu0 %v715
        %836 = vmatpush.bf16.msra.mxu0 %v713
        %837 = vmatpush.bf16.msra.mxu0 %v711
        %838 = vmatpush.bf16.msra.mxu0 %v709
        %839 = vmatpush.bf16.msra.mxu0 %v707
        %840 = vmatpush.bf16.msra.mxu0 %v705
        %841 = vmatmul.bf16.gmra.mxu0 %v497
        %v842 = vpop.f32.mrf.mxu0
        %v843 = vadd.f32 0.0, %v842
        %v844 = vpop.f32.mrf.mxu0
        %v845 = vadd.f32 0.0, %v844
        %846 = vmatmul.bf16.gmra.mxu0 %v501
        %v847 = vpop.f32.mrf.mxu0
        %v848 = vadd.f32 0.0, %v847
        %v849 = vpop.f32.mrf.mxu0
        %v850 = vadd.f32 0.0, %v849
        %851 = vdwg.mxu0
        %852 = vmatpush.bf16.msra.mxu0 %v735
        %853 = vmatpush.bf16.msra.mxu0 %v733
        %854 = vmatpush.bf16.msra.mxu0 %v731
        %855 = vmatpush.bf16.msra.mxu0 %v729
        %856 = vmatpush.bf16.msra.mxu0 %v727
        %857 = vmatpush.bf16.msra.mxu0 %v725
        %858 = vmatpush.bf16.msra.mxu0 %v723
        %859 = vmatpush.bf16.msra.mxu0 %v721
        %860 = vmatmul.bf16.gmra.mxu0 %v498
        %v861 = vpop.f32.mrf.mxu0
        %v862 = vadd.f32 %v843, %v861
        %v863 = vpop.f32.mrf.mxu0
        %v864 = vadd.f32 %v845, %v863
        %865 = vmatmul.bf16.gmra.mxu0 %v502
        %v866 = vpop.f32.mrf.mxu0
        %v867 = vadd.f32 %v848, %v866
        %v868 = vpop.f32.mrf.mxu0
        %v869 = vadd.f32 %v850, %v868
        %870 = vdwg.mxu0
        %871 = vmatpush.bf16.msra.mxu0 %v751
        %872 = vmatpush.bf16.msra.mxu0 %v749
        %873 = vmatpush.bf16.msra.mxu0 %v747
        %874 = vmatpush.bf16.msra.mxu0 %v745
        %875 = vmatpush.bf16.msra.mxu0 %v743
        %876 = vmatpush.bf16.msra.mxu0 %v741
        %877 = vmatpush.bf16.msra.mxu0 %v739
        %878 = vmatpush.bf16.msra.mxu0 %v737
        %879 = vmatmul.bf16.gmra.mxu0 %v499
        %v880 = vpop.f32.mrf.mxu0
        %v881 = vadd.f32 %v862, %v880
        %v882 = vpop.f32.mrf.mxu0
        %v883 = vadd.f32 %v864, %v882
        %884 = vmatmul.bf16.gmra.mxu0 %v503
        %v885 = vpop.f32.mrf.mxu0
        %v886 = vadd.f32 %v867, %v885
        %v887 = vpop.f32.mrf.mxu0
        %v888 = vadd.f32 %v869, %v887
        %889 = vdwg.mxu0
        %890 = vmatpush.bf16.msra.mxu0 %v767
        %891 = vmatpush.bf16.msra.mxu0 %v765
        %892 = vmatpush.bf16.msra.mxu0 %v763
        %893 = vmatpush.bf16.msra.mxu0 %v761
        %894 = vmatpush.bf16.msra.mxu0 %v759
        %895 = vmatpush.bf16.msra.mxu0 %v757
        %896 = vmatpush.bf16.msra.mxu0 %v755
        %897 = vmatpush.bf16.msra.mxu0 %v753
        %898 = vmatmul.bf16.gmra.mxu0 %v500
        %v899 = vpop.f32.mrf.mxu0
        %v900 = vadd.f32 %v881, %v899
        %v901 = vpop.f32.mrf.mxu0
        %v902 = vadd.f32 %v883, %v901
        %903 = vmatmul.bf16.gmra.mxu0 %v504
        %v904 = vpop.f32.mrf.mxu0
        %v905 = vadd.f32 %v886, %v904
        %v906 = vpop.f32.mrf.mxu0
        %v907 = vadd.f32 %v888, %v906
        %908 = vdwg.mxu0
        %909 = vmatpush.bf16.msra.mxu0 %v720
        %910 = vmatpush.bf16.msra.mxu0 %v718
        %911 = vmatpush.bf16.msra.mxu0 %v716
        %912 = vmatpush.bf16.msra.mxu0 %v714
        %913 = vmatpush.bf16.msra.mxu0 %v712
        %914 = vmatpush.bf16.msra.mxu0 %v710
        %915 = vmatpush.bf16.msra.mxu0 %v708
        %916 = vmatpush.bf16.msra.mxu0 %v706
        %917 = vmatmul.bf16.gmra.mxu0 %v497
        %v918 = vpop.f32.mrf.mxu0
        %v919 = vadd.f32 0.0, %v918
        %v920 = vpop.f32.mrf.mxu0
        %v921 = vadd.f32 0.0, %v920
        %922 = vmatmul.bf16.gmra.mxu0 %v501
        %v923 = vpop.f32.mrf.mxu0
        %v924 = vadd.f32 0.0, %v923
        %v925 = vpop.f32.mrf.mxu0
        %v926 = vadd.f32 0.0, %v925
        %927 = vdwg.mxu0
        %928 = vmatpush.bf16.msra.mxu0 %v736
        %929 = vmatpush.bf16.msra.mxu0 %v734
        %930 = vmatpush.bf16.msra.mxu0 %v732
        %931 = vmatpush.bf16.msra.mxu0 %v730
        %932 = vmatpush.bf16.msra.mxu0 %v728
        %933 = vmatpush.bf16.msra.mxu0 %v726
        %934 = vmatpush.bf16.msra.mxu0 %v724
        %935 = vmatpush.bf16.msra.mxu0 %v722
        %936 = vmatmul.bf16.gmra.mxu0 %v498
        %v937 = vpop.f32.mrf.mxu0
        %v938 = vadd.f32 %v919, %v937
        %v939 = vpop.f32.mrf.mxu0
        %v940 = vadd.f32 %v921, %v939
        %941 = vmatmul.bf16.gmra.mxu0 %v502
        %v942 = vpop.f32.mrf.mxu0
        %v943 = vadd.f32 %v924, %v942
        %v944 = vpop.f32.mrf.mxu0
        %v945 = vadd.f32 %v926, %v944
        %946 = vdwg.mxu0
        %947 = vmatpush.bf16.msra.mxu0 %v752
        %948 = vmatpush.bf16.msra.mxu0 %v750
        %949 = vmatpush.bf16.msra.mxu0 %v748
        %950 = vmatpush.bf16.msra.mxu0 %v746
        %951 = vmatpush.bf16.msra.mxu0 %v744
        %952 = vmatpush.bf16.msra.mxu0 %v742
        %953 = vmatpush.bf16.msra.mxu0 %v740
        %954 = vmatpush.bf16.msra.mxu0 %v738
        %955 = vmatmul.bf16.gmra.mxu0 %v499
        %v956 = vpop.f32.mrf.mxu0
        %v957 = vadd.f32 %v938, %v956
        %v958 = vpop.f32.mrf.mxu0
        %v959 = vadd.f32 %v940, %v958
        %960 = vmatmul.bf16.gmra.mxu0 %v503
        %v961 = vpop.f32.mrf.mxu0
        %v962 = vadd.f32 %v943, %v961
        %v963 = vpop.f32.mrf.mxu0
        %v964 = vadd.f32 %v945, %v963
        %965 = vdwg.mxu0
        %966 = vmatpush.bf16.msra.mxu0 %v768
        %967 = vmatpush.bf16.msra.mxu0 %v766
        %968 = vmatpush.bf16.msra.mxu0 %v764
        %969 = vmatpush.bf16.msra.mxu0 %v762
        %970 = vmatpush.bf16.msra.mxu0 %v760
        %971 = vmatpush.bf16.msra.mxu0 %v758
        %972 = vmatpush.bf16.msra.mxu0 %v756
        %973 = vmatpush.bf16.msra.mxu0 %v754
        %974 = vmatmul.bf16.gmra.mxu0 %v500
        %v975 = vpop.f32.mrf.mxu0
        %v976 = vadd.f32 %v957, %v975
        %v977 = vpop.f32.mrf.mxu0
        %v978 = vadd.f32 %v959, %v977
        %979 = vmatmul.bf16.gmra.mxu0 %v504
        %v980 = vpop.f32.mrf.mxu0
        %v981 = vadd.f32 %v962, %v980
        %v982 = vpop.f32.mrf.mxu0
        %v983 = vadd.f32 %v964, %v982
        %984 = vdwg.mxu0
        %v985 = vadd.f32 %v393, %v900
        %v986 = vadd.f32 %v394, %v976
        %v987 = vadd.f32 %v395, %v902
        %v988 = vadd.f32 %v396, %v978
        %v989 = vadd.f32 %v397, %v905
        %v990 = vadd.f32 %v398, %v981
        %v991 = vadd.f32 %v399, %v907
        %v992 = vadd.f32 %v400, %v983
        %993 = vst [vmem:[#allocation2] sm:$0xff] %v985
        %994 = vst [vmem:[#allocation2 + $0x8] sm:$0xff] %v986
        %995 = vst [vmem:[#allocation2 + $0x10] sm:$0xff] %v987
        %996 = vst [vmem:[#allocation2 + $0x18] sm:$0xff] %v988
        %997 = vst [vmem:[#allocation2 + $0x20] sm:$0xff] %v989
        %998 = vst [vmem:[#allocation2 + $0x28] sm:$0xff] %v990
        %999 = vst [vmem:[#allocation2 + $0x30] sm:$0xff] %v991
        %1000 = vst [vmem:[#allocation2 + $0x38] sm:$0xff] %v992
        %p1001 = scmp.eq.s32.totalorder %s25, 1
        // Predicated region
        $region68: #{siglip_s2rgb_embed.18} parent=54 // pred_check
          %p1002 = pneg %p1001
        $region69: #{siglip_s2rgb_embed.18} parent=54 // pred_check_branch
          %1004 = sbr.rel (%p1002) target = $region71
        $region70: #{siglip_s2rgb_embed.18} parent=54 // pred_region
          %v1005 = vld [vmem:[#allocation2] sm:$0xff]
          %v1006 = vld [vmem:[#allocation2 + $0x8] sm:$0xff]
          %v1007 = vld [vmem:[#allocation2 + $0x10] sm:$0xff]
          %v1008 = vld [vmem:[#allocation2 + $0x18] sm:$0xff]
          %v1009 = vld [vmem:[#allocation2 + $0x20] sm:$0xff]
          %v1010 = vld [vmem:[#allocation2 + $0x28] sm:$0xff]
          %v1011 = vld [vmem:[#allocation2 + $0x30] sm:$0xff]
          %v1012 = vld [vmem:[#allocation2 + $0x38] sm:$0xff]
          %v1013 = vld [vmem:[%s355] sm:$0x3]
          %v1015 = vperm.slane %v1013, 0
          %v1016 = vperm.slane %v1013, 1
          %v1019 = vadd.f32 %v1005, %v1015
          %v1020 = vadd.f32 %v1006, %v1016
          %v1021 = vadd.f32 %v1007, %v1015
          %v1022 = vadd.f32 %v1008, %v1016
          %v1023 = vadd.f32 %v1009, %v1015
          %v1024 = vadd.f32 %v1010, %v1016
          %v1025 = vadd.f32 %v1011, %v1015
          %v1026 = vadd.f32 %v1012, %v1016
          %v1027 = vld [vmem:[%s366] sm:$0xff]
          %v1028 = vld [vmem:[%s366 + $0x8] sm:$0xff]
          %v1029 = vld [vmem:[%s366 + $0x10] sm:$0xff]
          %v1030 = vld [vmem:[%s366 + $0x18] sm:$0xff]
          %v1031 = vunpack.c.l.bf16 %v1027
          %v1032 = vunpack.c.h.bf16 %v1027
          %v1033 = vunpack.c.l.bf16 %v1028
          %v1034 = vunpack.c.h.bf16 %v1028
          %v1035 = vunpack.c.l.bf16 %v1029
          %v1036 = vunpack.c.h.bf16 %v1029
          %v1037 = vunpack.c.l.bf16 %v1030
          %v1038 = vunpack.c.h.bf16 %v1030
          %v1039 = vadd.f32 %v1019, %v1031
          %v1040 = vadd.f32 %v1020, %v1032
          %v1041 = vadd.f32 %v1021, %v1033
          %v1042 = vadd.f32 %v1022, %v1034
          %v1043 = vadd.f32 %v1023, %v1035
          %v1044 = vadd.f32 %v1024, %v1036
          %v1045 = vadd.f32 %v1025, %v1037
          %v1046 = vadd.f32 %v1026, %v1038
          %v1047 = vpack.c.bf16 %v1040, %v1039
          %v1048 = vpack.c.bf16 %v1042, %v1041
          %v1049 = vpack.c.bf16 %v1044, %v1043
          %v1050 = vpack.c.bf16 %v1046, %v1045
          %1051 = vst [vmem:[%s378] sm:$0xff] %v1047
          %1052 = vst [vmem:[%s378 + $0x8] sm:$0xff] %v1048
          %1053 = vst [vmem:[%s378 + $0x10] sm:$0xff] %v1049
          %1054 = vst [vmem:[%s378 + $0x18] sm:$0xff] %v1050
        $region71: #{siglip_s2rgb_embed.18} parent=54 // pred_fallthru
          _
        %s1055 = smul.u32 4, %s23
        %s1056 = smul.u32 2, %s24
        %p1057 = scmp.lt.s32.totalorder %s1055, 3
        %s1058 = scalar_select %p1057, %s1055, 3
        %p1059 = scmp.lt.s32.totalorder %s1056, 1
        %s1060 = scalar_select %p1059, %s1056, 1
        %s1061 = smul.addr %s1058, 2
        %s1062 = sadd.s32 %s1060, %s1061
        %s1063 = smul.addr %s1062, 4
        %s1064 = scalar_lea.vmem %s4, %s1063
        // Predicated region
        $region72: #{siglip_s2rgb_embed.18} parent=54 // pred_check
          %p1065 = pneg %p167
        $region73: #{siglip_s2rgb_embed.18} parent=54 // pred_check_branch
          %1067 = sbr.rel (%p1065) target = $region75
        $region74: #{siglip_s2rgb_embed.18} parent=54 // pred_region
          %s1068 = smul.u32 4, %s23
          %s1069 = smul.u32 2, %s24
        $region75: #{siglip_s2rgb_embed.18} parent=54 // pred_fallthru
          _
        // Predicated region
        $region76: #{siglip_s2rgb_embed.18} parent=54 // pred_check
          %p1070 = pneg %p167
        $region77: #{siglip_s2rgb_embed.18} parent=54 // pred_check_branch
          %1072 = sbr.rel (%p1070) target = $region79
        $region78: #{siglip_s2rgb_embed.18} parent=54 // pred_region
          %s1073 = smul.u32 4, %s23
          %s1074 = smul.u32 2, %s24
          %p1075 = scmp.lt.s32.totalorder %s1073, 3
          %s1076 = scalar_select %p1075, %s1073, 3
          %p1077 = scmp.lt.s32.totalorder %s1074, 1
          %s1078 = scalar_select %p1077, %s1074, 1
          %s1079 = smul.addr %s1076, 2
          %s1080 = sadd.s32 %s1078, %s1079
          %s1081 = smul.addr %s1080, 4
          %s1082 = scalar_lea.vmem %s4, %s1081
        $region79: #{siglip_s2rgb_embed.18} parent=54 // pred_fallthru
          _
      $region55: #{siglip_s2rgb_embed.18} parent=5 // pred_fallthru
        _
      %p1083 = scmp.le.s32.totalorder 2, %s13
      // Predicated region
      $region80: #{siglip_s2rgb_embed.18} parent=5 // pred_check
        %p1084 = pneg %p1083
      $region81: #{siglip_s2rgb_embed.18} parent=5 // pred_check_branch
        %1086 = sbr.rel (%p1084) target = $region83
      $region82: #{siglip_s2rgb_embed.18} parent=5 // pred_region
        %s1087 = ssub.s32 %s13, 2
      $region83: #{siglip_s2rgb_embed.18} parent=5 // pred_fallthru
        _
    $region6: #{siglip_s2rgb_embed.18} parent=1 // loop_footer
      %s17 = sadd.s32 1, %s13
    $region7: #{siglip_s2rgb_embed.18} parent=1 // loop_footer_branch
      %12 = sbr.rel target = $region3
    $region8: #{siglip_s2rgb_embed.18} parent=1 // loop_exit
      _
    %1088 = vsyncpa [#allocation5], 1
    %s1089 = scalar_lea.sflag [#allocation5], 1
    %1090 = vsyncpa %s1089, 1

// kernel: siglip_s2rgb_embed.24
$region0: #{siglip_s2rgb_embed.24}
  #allocation0 [shape = 'u32[]', space=smem, size = 0x4, offset = 0x4, fixed_abs, tag = 'smem constant byte address 0x4 - core index']
  #allocation1 [shape = 'u32[72,128]{1,0:T(1,128)}', space=vmem, size = 0x9000, scoped, tag = 'internal scratch']
  #allocation2 [shape = 'f32[2,256]{1,0:T(2,128)}', space=vmem, size = 0x800, scoped, tag = 'scratch operand']
  %s0 = inlined_call_operand.vmem [shape: bf16[2,256], index: 0, kind: input, shape index: {}]
  %s1 = inlined_call_operand.hbm [shape: bf16[256,256], index: 1, kind: input, shape index: {}]
  %s2 = inlined_call_operand.vmem [shape: f32[1,256], index: 2, kind: input, shape index: {}]
  %s3 = inlined_call_operand.vmem [shape: bf16[2,256], index: 3, kind: output, shape index: {}]
  %s4 = sld [smem:[#allocation0]]
  $region34: #{siglip_s2rgb_embed.24} parent=0
    _
  %s6 = ssub.s32 1, %s4
  %s7 = scalar_select 0, %s6, %s4
  $region1: #{siglip_s2rgb_embed.24} parent=0
    #allocation3 [shape = 'u8[131072]{0}', space=vmem, size = 0x20000, scoped, tag = 'input window, operand 1, single buffered']
    #allocation4 [shape = 's32[1]{0}', space=sflag, size = 0x4, scoped, tag = 'scoped memory for siglip_s2rgb_embed.24']
    %8 = vsyncpa [#allocation4], 0
    // Predicated region
    $region2: #{siglip_s2rgb_embed.24} parent=1 // pred_check
      _
    $region3: #{siglip_s2rgb_embed.24} parent=1 // pred_check_branch
      %10 = sbr.rel (0) target = $region5
    $region4: #{siglip_s2rgb_embed.24} parent=1 // pred_region
      _
    $region5: #{siglip_s2rgb_embed.24} parent=1 // pred_fallthru
      _
    // Predicated region
    $region6: #{siglip_s2rgb_embed.24} parent=1 // pred_check
      _
    $region7: #{siglip_s2rgb_embed.24} parent=1 // pred_check_branch
      %12 = sbr.rel (0) target = $region9
    $region8: #{siglip_s2rgb_embed.24} parent=1 // pred_region
      %14 = vsyncadd [#allocation4], 0
      %s15 = sshll.u32 %s1, 4
      %s16 = int_to_ptr.hbm [resolvable:$true] %s15
      %s17 = sshll.u32 [#allocation3], 4
      %s18 = int_to_ptr.vmem [resolvable:$true] %s17
      %23 = dma.hbm_to_vmem [thread:$0]  %s16, 4096, %s18, [#allocation4], 128, 128, 8
    $region9: #{siglip_s2rgb_embed.24} parent=1 // pred_fallthru
      _
    // Predicated region
    $region10: #{siglip_s2rgb_embed.24} parent=1 // pred_check
      _
    $region11: #{siglip_s2rgb_embed.24} parent=1 // pred_check_branch
      %25 = sbr.rel (0) target = $region13
    $region12: #{siglip_s2rgb_embed.24} parent=1 // pred_region
      _
    $region13: #{siglip_s2rgb_embed.24} parent=1 // pred_fallthru
      _
    // Predicated region
    $region14: #{siglip_s2rgb_embed.24} parent=1 // pred_check
      _
    $region15: #{siglip_s2rgb_embed.24} parent=1 // pred_check_branch
      %27 = sbr.rel (0) target = $region17
    $region16: #{siglip_s2rgb_embed.24} parent=1 // pred_region
      %29 = dma.done [#allocation4], 4096
    $region17: #{siglip_s2rgb_embed.24} parent=1 // pred_fallthru
      _
    %p30 = scmp.eq.s32.totalorder 0, 0
    // Predicated region
    $region18: #{siglip_s2rgb_embed.24} parent=1 // pred_check
      %p31 = pneg %p30
    $region19: #{siglip_s2rgb_embed.24} parent=1 // pred_check_branch
      %33 = sbr.rel (%p31) target = $region21
    $region20: #{siglip_s2rgb_embed.24} parent=1 // pred_region
      %34 = vst [vmem:[#allocation2] sm:$0xf] 0.0
    $region21: #{siglip_s2rgb_embed.24} parent=1 // pred_fallthru
      _
    %v35 = vld [vmem:[#allocation2] sm:$0xf]
    %v36 = vld [vmem:[%s0] sm:$0x3]
    %v37 = vld [vmem:[#allocation3] sm:$0xff]
    %v38 = vld [vmem:[#allocation3 + $0x8] sm:$0xff]
    %v39 = vld [vmem:[#allocation3 + $0x10] sm:$0xff]
    %v40 = vld [vmem:[#allocation3 + $0x18] sm:$0xff]
    %v41 = vld [vmem:[#allocation3 + $0x20] sm:$0xff]
    %v42 = vld [vmem:[#allocation3 + $0x28] sm:$0xff]
    %v43 = vld [vmem:[#allocation3 + $0x30] sm:$0xff]
    %v44 = vld [vmem:[#allocation3 + $0x38] sm:$0xff]
    %v45 = vld [vmem:[#allocation3 + $0x40] sm:$0xff]
    %v46 = vld [vmem:[#allocation3 + $0x48] sm:$0xff]
    %v47 = vld [vmem:[#allocation3 + $0x50] sm:$0xff]
    %v48 = vld [vmem:[#allocation3 + $0x58] sm:$0xff]
    %v49 = vld [vmem:[#allocation3 + $0x60] sm:$0xff]
    %v50 = vld [vmem:[#allocation3 + $0x68] sm:$0xff]
    %v51 = vld [vmem:[#allocation3 + $0x70] sm:$0xff]
    %v52 = vld [vmem:[#allocation3 + $0x78] sm:$0xff]
    %v53 = vld [vmem:[#allocation3 + $0x80] sm:$0xff]
    %v54 = vld [vmem:[#allocation3 + $0x88] sm:$0xff]
    %v55 = vld [vmem:[#allocation3 + $0x90] sm:$0xff]
    %v56 = vld [vmem:[#allocation3 + $0x98] sm:$0xff]
    %v57 = vld [vmem:[#allocation3 + $0xa0] sm:$0xff]
    %v58 = vld [vmem:[#allocation3 + $0xa8] sm:$0xff]
    %v59 = vld [vmem:[#allocation3 + $0xb0] sm:$0xff]
    %v60 = vld [vmem:[#allocation3 + $0xb8] sm:$0xff]
    %v61 = vld [vmem:[#allocation3 + $0xc0] sm:$0xff]
    %v62 = vld [vmem:[#allocation3 + $0xc8] sm:$0xff]
    %v63 = vld [vmem:[#allocation3 + $0xd0] sm:$0xff]
    %v64 = vld [vmem:[#allocation3 + $0xd8] sm:$0xff]
    %v65 = vld [vmem:[#allocation3 + $0xe0] sm:$0xff]
    %v66 = vld [vmem:[#allocation3 + $0xe8] sm:$0xff]
    %v67 = vld [vmem:[#allocation3 + $0xf0] sm:$0xff]
    %v68 = vld [vmem:[#allocation3 + $0xf8] sm:$0xff]
    %70 = vst [vmem:[#allocation1] ss:$9 sm:$0xff] %v36
    %v71 = vld [vmem:[#allocation1] sm:$0xff]
    %v72 = vld [vmem:[#allocation1 + $0x9] sm:$0xff]
    %v107 = vunpack.c.l.b16 %v37
    %v108 = vunpack.c.h.b16 %v37
    %v109 = vunpack.c.l.b16 %v38
    %v110 = vunpack.c.h.b16 %v38
    %v111 = vunpack.c.l.b16 %v39
    %v112 = vunpack.c.h.b16 %v39
    %v113 = vunpack.c.l.b16 %v40
    %v114 = vunpack.c.h.b16 %v40
    %v115 = vunpack.c.l.b16 %v41
    %v116 = vunpack.c.h.b16 %v41
    %v117 = vunpack.c.l.b16 %v42
    %v118 = vunpack.c.h.b16 %v42
    %v119 = vunpack.c.l.b16 %v43
    %v120 = vunpack.c.h.b16 %v43
    %v121 = vunpack.c.l.b16 %v44
    %v122 = vunpack.c.h.b16 %v44
    %v123 = vunpack.c.l.b16 %v45
    %v124 = vunpack.c.h.b16 %v45
    %v125 = vunpack.c.l.b16 %v46
    %v126 = vunpack.c.h.b16 %v46
    %v127 = vunpack.c.l.b16 %v47
    %v128 = vunpack.c.h.b16 %v47
    %v129 = vunpack.c.l.b16 %v48
    %v130 = vunpack.c.h.b16 %v48
    %v131 = vunpack.c.l.b16 %v49
    %v132 = vunpack.c.h.b16 %v49
    %v133 = vunpack.c.l.b16 %v50
    %v134 = vunpack.c.h.b16 %v50
    %v135 = vunpack.c.l.b16 %v51
    %v136 = vunpack.c.h.b16 %v51
    %v137 = vunpack.c.l.b16 %v52
    %v138 = vunpack.c.h.b16 %v52
    %v139 = vunpack.c.l.b16 %v53
    %v140 = vunpack.c.h.b16 %v53
    %v141 = vunpack.c.l.b16 %v54
    %v142 = vunpack.c.h.b16 %v54
    %v143 = vunpack.c.l.b16 %v55
    %v144 = vunpack.c.h.b16 %v55
    %v145 = vunpack.c.l.b16 %v56
    %v146 = vunpack.c.h.b16 %v56
    %v147 = vunpack.c.l.b16 %v57
    %v148 = vunpack.c.h.b16 %v57
    %v149 = vunpack.c.l.b16 %v58
    %v150 = vunpack.c.h.b16 %v58
    %v151 = vunpack.c.l.b16 %v59
    %v152 = vunpack.c.h.b16 %v59
    %v153 = vunpack.c.l.b16 %v60
    %v154 = vunpack.c.h.b16 %v60
    %v155 = vunpack.c.l.b16 %v61
    %v156 = vunpack.c.h.b16 %v61
    %v157 = vunpack.c.l.b16 %v62
    %v158 = vunpack.c.h.b16 %v62
    %v159 = vunpack.c.l.b16 %v63
    %v160 = vunpack.c.h.b16 %v63
    %v161 = vunpack.c.l.b16 %v64
    %v162 = vunpack.c.h.b16 %v64
    %v163 = vunpack.c.l.b16 %v65
    %v164 = vunpack.c.h.b16 %v65
    %v165 = vunpack.c.l.b16 %v66
    %v166 = vunpack.c.h.b16 %v66
    %v167 = vunpack.c.l.b16 %v67
    %v168 = vunpack.c.h.b16 %v67
    %v169 = vunpack.c.l.b16 %v68
    %v170 = vunpack.c.h.b16 %v68
    %v171 = vpack.c.b16 %v109, %v107
    %v172 = vpack.c.b16 %v110, %v108
    %v173 = vpack.c.b16 %v113, %v111
    %v174 = vpack.c.b16 %v114, %v112
    %v175 = vpack.c.b16 %v117, %v115
    %v176 = vpack.c.b16 %v118, %v116
    %v177 = vpack.c.b16 %v121, %v119
    %v178 = vpack.c.b16 %v122, %v120
    %v179 = vpack.c.b16 %v125, %v123
    %v180 = vpack.c.b16 %v126, %v124
    %v181 = vpack.c.b16 %v129, %v127
    %v182 = vpack.c.b16 %v130, %v128
    %v183 = vpack.c.b16 %v133, %v131
    %v184 = vpack.c.b16 %v134, %v132
    %v185 = vpack.c.b16 %v137, %v135
    %v186 = vpack.c.b16 %v138, %v136
    %v187 = vpack.c.b16 %v141, %v139
    %v188 = vpack.c.b16 %v142, %v140
    %v189 = vpack.c.b16 %v145, %v143
    %v190 = vpack.c.b16 %v146, %v144
    %v191 = vpack.c.b16 %v149, %v147
    %v192 = vpack.c.b16 %v150, %v148
    %v193 = vpack.c.b16 %v153, %v151
    %v194 = vpack.c.b16 %v154, %v152
    %v195 = vpack.c.b16 %v157, %v155
    %v196 = vpack.c.b16 %v158, %v156
    %v197 = vpack.c.b16 %v161, %v159
    %v198 = vpack.c.b16 %v162, %v160
    %v199 = vpack.c.b16 %v165, %v163
    %v200 = vpack.c.b16 %v166, %v164
    %v201 = vpack.c.b16 %v169, %v167
    %v202 = vpack.c.b16 %v170, %v168
    %235 = vmatpush.bf16.msra.mxu0 %v185
    %236 = vmatpush.bf16.msra.mxu0 %v183
    %237 = vmatpush.bf16.msra.mxu0 %v181
    %238 = vmatpush.bf16.msra.mxu0 %v179
    %239 = vmatpush.bf16.msra.mxu0 %v177
    %240 = vmatpush.bf16.msra.mxu0 %v175
    %241 = vmatpush.bf16.msra.mxu0 %v173
    %242 = vmatpush.bf16.msra.mxu0 %v171
    %243 = vmatmul.bf16.gmra.mxu0 %v71
    %v244 = vpop.f32.mrf.mxu0
    %v245 = vadd.f32 0.0, %v244
    %v246 = vpop.f32.mrf.mxu0
    %247 = vdwg.mxu0
    %248 = vmatpush.bf16.msra.mxu0 %v201
    %249 = vmatpush.bf16.msra.mxu0 %v199
    %250 = vmatpush.bf16.msra.mxu0 %v197
    %251 = vmatpush.bf16.msra.mxu0 %v195
    %252 = vmatpush.bf16.msra.mxu0 %v193
    %253 = vmatpush.bf16.msra.mxu0 %v191
    %254 = vmatpush.bf16.msra.mxu0 %v189
    %255 = vmatpush.bf16.msra.mxu0 %v187
    %256 = vmatmul.bf16.gmra.mxu0 %v72
    %v257 = vpop.f32.mrf.mxu0
    %v258 = vadd.f32 %v245, %v257
    %v259 = vpop.f32.mrf.mxu0
    %260 = vdwg.mxu0
    %261 = vmatpush.bf16.msra.mxu0 %v186
    %262 = vmatpush.bf16.msra.mxu0 %v184
    %263 = vmatpush.bf16.msra.mxu0 %v182
    %264 = vmatpush.bf16.msra.mxu0 %v180
    %265 = vmatpush.bf16.msra.mxu0 %v178
    %266 = vmatpush.bf16.msra.mxu0 %v176
    %267 = vmatpush.bf16.msra.mxu0 %v174
    %268 = vmatpush.bf16.msra.mxu0 %v172
    %269 = vmatmul.bf16.gmra.mxu0 %v71
    %v270 = vpop.f32.mrf.mxu0
    %v271 = vadd.f32 0.0, %v270
    %v272 = vpop.f32.mrf.mxu0
    %273 = vdwg.mxu0
    %274 = vmatpush.bf16.msra.mxu0 %v202
    %275 = vmatpush.bf16.msra.mxu0 %v200
    %276 = vmatpush.bf16.msra.mxu0 %v198
    %277 = vmatpush.bf16.msra.mxu0 %v196
    %278 = vmatpush.bf16.msra.mxu0 %v194
    %279 = vmatpush.bf16.msra.mxu0 %v192
    %280 = vmatpush.bf16.msra.mxu0 %v190
    %281 = vmatpush.bf16.msra.mxu0 %v188
    %282 = vmatmul.bf16.gmra.mxu0 %v72
    %v283 = vpop.f32.mrf.mxu0
    %v284 = vadd.f32 %v271, %v283
    %v285 = vpop.f32.mrf.mxu0
    %286 = vdwg.mxu0
    %v289 = vrot.slane %v284, 6
    %vm290 = vcmask 1041408
    %v291 = vsel %vm290, %v258, %v289
    %v293 = vadd.f32 %v35, %v291
    %294 = vst [vmem:[#allocation2] sm:$0xf] %v293
    // Predicated region
    $region22: #{siglip_s2rgb_embed.24} parent=1 // pred_check
      %p295 = pneg %p30
    $region23: #{siglip_s2rgb_embed.24} parent=1 // pred_check_branch
      %297 = sbr.rel (%p295) target = $region25
    $region24: #{siglip_s2rgb_embed.24} parent=1 // pred_region
      %v298 = vld [vmem:[#allocation2] sm:$0xf]
      %v299 = vld [vmem:[%s2] sm:$0x3]
      %v301 = vperm.slane %v299, 0
      %v302 = vperm.slane %v299, 1
      %v303 = vrot.slane %v302, 6
      %v304 = vsel %vm290, %v301, %v303
      %v306 = vadd.f32 %v298, %v304
      %308 = vst [vmem:[#allocation1] ss:$4 sm:$0xff] %v306
      %v309 = vld.sshfl [vmem:[#allocation1] sm:$0xff pattern:$0x73625140]
      %v310 = vld.sshfl [vmem:[#allocation1 + $0x8] sm:$0xff pattern:$0x73625140]
      %v313 = vpack.c.bf16 %v310, %v309
      %v315 = vrot.slane %v313, 3
      %vm316 = vcmask 1040384
      %v319 = vsel %vm316, %v313, %v315
      %321 = vst [vmem:[%s3] sm:$0x3] %v319
    $region25: #{siglip_s2rgb_embed.24} parent=1 // pred_fallthru
      _
    // Predicated region
    $region26: #{siglip_s2rgb_embed.24} parent=1 // pred_check
      _
    $region27: #{siglip_s2rgb_embed.24} parent=1 // pred_check_branch
      %323 = sbr.rel (0) target = $region29
    $region28: #{siglip_s2rgb_embed.24} parent=1 // pred_region
      _
    $region29: #{siglip_s2rgb_embed.24} parent=1 // pred_fallthru
      _
    // Predicated region
    $region30: #{siglip_s2rgb_embed.24} parent=1 // pred_check
      _
    $region31: #{siglip_s2rgb_embed.24} parent=1 // pred_check_branch
      %325 = sbr.rel (0) target = $region33
    $region32: #{siglip_s2rgb_embed.24} parent=1 // pred_region
      _
    $region33: #{siglip_s2rgb_embed.24} parent=1 // pred_fallthru
      _
    %326 = vsyncpa [#allocation4], 1

// kernel: siglip_s2rgb_embed.25
$region0: #{siglip_s2rgb_embed.25}
  #allocation0 [shape = 'u32[]', space=smem, size = 0x4, offset = 0x4, fixed_abs, tag = 'smem constant byte address 0x4 - core index']
  #allocation1 [shape = 'u32[72,128]{1,0:T(1,128)}', space=vmem, size = 0x9000, scoped, tag = 'internal scratch']
  #allocation2 [shape = 'f32[1,256]{1,0:T(1,128)}', space=vmem, size = 0x400, scoped, tag = 'scratch operand']
  %s0 = inlined_call_operand.vmem [shape: bf16[2,1,256], index: 0, kind: input, shape index: {}]
  %s1 = inlined_call_operand.vmem [shape: bf16[2,16,512], index: 1, kind: input, shape index: {}]
  %s2 = inlined_call_operand.hbm [shape: bf16[256,256], index: 2, kind: input, shape index: {}]
  %s3 = inlined_call_operand.vmem [shape: f32[1,256], index: 3, kind: input, shape index: {}]
  %s4 = inlined_call_operand.vmem [shape: bf16[2,1,256], index: 4, kind: output, shape index: {}]
  %s5 = sld [smem:[#allocation0]]
  $region99: #{siglip_s2rgb_embed.25} parent=0
    _
  %s7 = ssub.s32 1, %s5
  %s8 = scalar_select 0, %s7, %s5
  $region1: #{siglip_s2rgb_embed.25} parent=0
    #allocation3 [shape = 'u8[16384]{0}', space=vmem, size = 0x4000, scoped, tag = 'input window, operand 1']
    #allocation4 [shape = 'u8[131072]{0}', space=vmem, size = 0x20000, scoped, tag = 'input window, operand 2']
    #allocation5 [shape = 's32[2]{0}', space=sflag, size = 0x8, scoped, tag = 'scoped memory for siglip_s2rgb_embed.25']
    %9 = vsyncpa [#allocation5], 0
    %s10 = scalar_lea.sflag [#allocation5], 1
    %11 = vsyncpa %s10, 0
    loop: start=0, step=1, limit=6
    $region2: #{siglip_s2rgb_embed.25} parent=1 // loop_pre_header
      _
    $region3: #{siglip_s2rgb_embed.25} parent=1 // loop_header
      %s13 = sphi 0, %s17
      %p14 = scmp.ge.s32.totalorder %s13, 6
      %s20 = sphi 0, %s32
      %s21 = sphi 0, %s28
      %s22 = sphi 0, %s20
      %s23 = sphi 0, %s21
      %s24 = sphi 0, %s22
      %s25 = sphi 0, %s23
      %s37 = sphi 0, %s39
      %s40 = sphi 0, %s37
      %s41 = sphi 0, %s40
      %s57 = sphi 0, %s41
      %s65 = sphi 0, %s67
      %s68 = sphi 0, %s65
      %s69 = sphi 0, %s68
      %s85 = sphi 0, %s69
      %s91 = sphi 0, %s93
      %s94 = sphi 0, %s91
      %s95 = sphi 0, %s94
      %s111 = sphi 0, %s95
      %s115 = sphi 0, %s115
      %s117 = sphi 0, %s115
      %s118 = sphi 0, %s117
      %s132 = sphi 0, %s118
      %s138 = sphi 0, %s140
      %s141 = sphi 0, %s138
      %s142 = sphi 0, %s141
      %s158 = sphi 0, %s142
    $region4: #{siglip_s2rgb_embed.25} parent=1 // loop_header_branch
      %16 = sbr.rel (%p14) target = $region8
    $region5: #{siglip_s2rgb_embed.25} parent=1 // loop_body
      %s18 = ssub.s32 %s13, 1
      %s19 = ssub.s32 %s13, 2
      %s26 = sadd.s32 1, %s21
      %p27 = scmp.ge.s32.totalorder %s26, 2
      %s28 = scalar_select %p27, 0, %s26
      %s29 = sadd.s32 1, %s20
      %s30 = scalar_select %p27, %s29, %s20
      %p31 = scmp.ge.s32.totalorder %s30, 2
      %s32 = scalar_select %p31, 0, %s30
      %s33 = ssub.s32 %s20, %s32
      %s34 = ssub.s32 %s21, %s28
      %s35 = sor.u32 %s33, %s34
      %p36 = scmp.eq.s32.totalorder %s35, 0
      %s38 = sadd.s32 %s37, 1
      %s39 = scalar_select %p36, %s37, %s38
      %p42 = pneg %p36
      %p43 = scmp.eq.s32.totalorder %s13, 3
      %p44 = por %p42, %p43
      %p45 = scmp.ne.s32.totalorder %s37, %s40
      %p46 = scmp.eq.s32.totalorder %s13, 0
      %p47 = por %p45, %p46
      %p48 = scmp.ne.s32.totalorder %s37, %s40
      %p49 = scmp.eq.s32.totalorder %s18, 3
      %p50 = por %p48, %p49
      %p51 = scmp.ne.s32.totalorder %s40, %s41
      %p52 = scmp.eq.s32.totalorder %s18, 0
      %p53 = por %p51, %p52
      %p54 = scmp.ne.s32.totalorder %s40, %s41
      %p55 = scmp.eq.s32.totalorder %s19, 3
      %p56 = por %p54, %p55
      %p58 = scmp.ne.s32.totalorder %s41, %s57
      %p59 = scmp.eq.s32.totalorder %s19, 0
      %p60 = por %p58, %p59
      %s61 = ssub.s32 %s20, %s32
      %s62 = ssub.s32 %s21, %s28
      %s63 = sor.u32 %s61, %s62
      %p64 = scmp.eq.s32.totalorder %s63, 0
      %s66 = sadd.s32 %s65, 1
      %s67 = scalar_select %p64, %s65, %s66
      %p70 = pneg %p64
      %p71 = scmp.eq.s32.totalorder %s13, 3
      %p72 = por %p70, %p71
      %p73 = scmp.ne.s32.totalorder %s65, %s68
      %p74 = scmp.eq.s32.totalorder %s13, 0
      %p75 = por %p73, %p74
      %p76 = scmp.ne.s32.totalorder %s65, %s68
      %p77 = scmp.eq.s32.totalorder %s18, 3
      %p78 = por %p76, %p77
      %p79 = scmp.ne.s32.totalorder %s68, %s69
      %p80 = scmp.eq.s32.totalorder %s18, 0
      %p81 = por %p79, %p80
      %p82 = scmp.ne.s32.totalorder %s68, %s69
      %p83 = scmp.eq.s32.totalorder %s19, 3
      %p84 = por %p82, %p83
      %p86 = scmp.ne.s32.totalorder %s69, %s85
      %p87 = scmp.eq.s32.totalorder %s19, 0
      %p88 = por %p86, %p87
      %s89 = ssub.s32 %s21, %s28
      %p90 = scmp.eq.s32.totalorder %s89, 0
      %s92 = sadd.s32 %s91, 1
      %s93 = scalar_select %p90, %s91, %s92
      %p96 = pneg %p90
      %p97 = scmp.eq.s32.totalorder %s13, 3
      %p98 = por %p96, %p97
      %p99 = scmp.ne.s32.totalorder %s91, %s94
      %p100 = scmp.eq.s32.totalorder %s13, 0
      %p101 = por %p99, %p100
      %p102 = scmp.ne.s32.totalorder %s91, %s94
      %p103 = scmp.eq.s32.totalorder %s18, 3
      %p104 = por %p102, %p103
      %p105 = scmp.ne.s32.totalorder %s94, %s95
      %p106 = scmp.eq.s32.totalorder %s18, 0
      %p107 = por %p105, %p106
      %p108 = scmp.ne.s32.totalorder %s94, %s95
      %p109 = scmp.eq.s32.totalorder %s19, 3
      %p110 = por %p108, %p109
      %p112 = scmp.ne.s32.totalorder %s95, %s111
      %p113 = scmp.eq.s32.totalorder %s19, 0
      %p114 = por %p112, %p113
      %s116 = sadd.s32 %s115, 1
      %p119 = scmp.eq.s32.totalorder %s13, 3
      %p120 = scmp.ne.s32.totalorder %s115, %s117
      %p121 = scmp.eq.s32.totalorder %s13, 0
      %p122 = por %p120, %p121
      %p123 = scmp.ne.s32.totalorder %s115, %s117
      %p124 = scmp.eq.s32.totalorder %s18, 3
      %p125 = por %p123, %p124
      %p126 = scmp.ne.s32.totalorder %s117, %s118
      %p127 = scmp.eq.s32.totalorder %s18, 0
      %p128 = por %p126, %p127
      %p129 = scmp.ne.s32.totalorder %s117, %s118
      %p130 = scmp.eq.s32.totalorder %s19, 3
      %p131 = por %p129, %p130
      %p133 = scmp.ne.s32.totalorder %s118, %s132
      %p134 = scmp.eq.s32.totalorder %s19, 0
      %p135 = por %p133, %p134
      %s136 = ssub.s32 %s20, %s32
      %p137 = scmp.eq.s32.totalorder %s136, 0
      %s139 = sadd.s32 %s138, 1
      %s140 = scalar_select %p137, %s138, %s139
      %p143 = pneg %p137
      %p144 = scmp.eq.s32.totalorder %s13, 3
      %p145 = por %p143, %p144
      %p146 = scmp.ne.s32.totalorder %s138, %s141
      %p147 = scmp.eq.s32.totalorder %s13, 0
      %p148 = por %p146, %p147
      %p149 = scmp.ne.s32.totalorder %s138, %s141
      %p150 = scmp.eq.s32.totalorder %s18, 3
      %p151 = por %p149, %p150
      %p152 = scmp.ne.s32.totalorder %s141, %s142
      %p153 = scmp.eq.s32.totalorder %s18, 0
      %p154 = por %p152, %p153
      %p155 = scmp.ne.s32.totalorder %s141, %s142
      %p156 = scmp.eq.s32.totalorder %s19, 3
      %p157 = por %p155, %p156
      %p159 = scmp.ne.s32.totalorder %s142, %s158
      %p160 = scmp.eq.s32.totalorder %s19, 0
      %p161 = por %p159, %p160
      %p162 = scmp.le.s32.totalorder 1, %s13
      %p163 = scmp.lt.s32.totalorder %s13, 5
      %p164 = pnand %p162, %p163
      %p165 = pneg %p164
      // Predicated region
      $region9: #{siglip_s2rgb_embed.25} parent=5 // pred_check
        _
      $region10: #{siglip_s2rgb_embed.25} parent=5 // pred_check_branch
        %167 = sbr.rel (%p164) target = $region12
      $region11: #{siglip_s2rgb_embed.25} parent=5 // pred_region
        %s168 = ssub.s32 %s13, 1
        // Predicated region
        $region13: #{siglip_s2rgb_embed.25} parent=11 // pred_check
          %p169 = pneg %p128
        $region14: #{siglip_s2rgb_embed.25} parent=11 // pred_check_branch
          %171 = sbr.rel (%p169) target = $region16
        $region15: #{siglip_s2rgb_embed.25} parent=11 // pred_region
          _
        $region16: #{siglip_s2rgb_embed.25} parent=11 // pred_fallthru
          _
      $region12: #{siglip_s2rgb_embed.25} parent=5 // pred_fallthru
        _
      %p172 = scmp.lt.s32.totalorder %s13, 4
      // Predicated region
      $region17: #{siglip_s2rgb_embed.25} parent=5 // pred_check
        %p173 = pneg %p172
      $region18: #{siglip_s2rgb_embed.25} parent=5 // pred_check_branch
        %175 = sbr.rel (%p173) target = $region20
      $region19: #{siglip_s2rgb_embed.25} parent=5 // pred_region
        // Predicated region
        $region21: #{siglip_s2rgb_embed.25} parent=19 // pred_check
          %p176 = pneg %p47
        $region22: #{siglip_s2rgb_embed.25} parent=19 // pred_check_branch
          %178 = sbr.rel (%p176) target = $region24
        $region23: #{siglip_s2rgb_embed.25} parent=19 // pred_region
          %p179 = scmp.lt.s32.totalorder %s20, 1
          %s180 = scalar_select %p179, %s20, 1
          %p181 = scmp.lt.s32.totalorder %s21, 1
          %s182 = scalar_select %p181, %s21, 1
          %s183 = smul.addr %s180, 2
          %s184 = sadd.s32 %s182, %s183
          %s185 = scalar_lea.vmem %s0, %s184
        $region24: #{siglip_s2rgb_embed.25} parent=19 // pred_fallthru
          _
        // Predicated region
        $region25: #{siglip_s2rgb_embed.25} parent=19 // pred_check
          %p186 = pneg %p75
        $region26: #{siglip_s2rgb_embed.25} parent=19 // pred_check_branch
          %188 = sbr.rel (%p186) target = $region28
        $region27: #{siglip_s2rgb_embed.25} parent=19 // pred_region
          %s189 = sand.u32 %s65, 1
          %s190 = sand.u32 %s65, 1
          %s191 = smul.addr %s190, 16
          %s192 = scalar_lea.vmem [#allocation3], %s191
          %s193 = smul.u32 2, %s21
          %s194 = smul.addr %s20, 8
          %s195 = sadd.s32 %s193, %s194
          %s196 = smul.addr %s195, 4
          %s197 = scalar_lea.vmem %s1, %s196
          // Predicated region
          $region29: #{siglip_s2rgb_embed.25} parent=27 // pred_check
            _
          $region30: #{siglip_s2rgb_embed.25} parent=27 // pred_check_branch
            %199 = sbr.rel (0) target = $region32
          $region31: #{siglip_s2rgb_embed.25} parent=27 // pred_region
            // Predicated region
            $region33: #{siglip_s2rgb_embed.25} parent=31 // pred_check
              _
            $region34: #{siglip_s2rgb_embed.25} parent=31 // pred_check_branch
              %201 = sbr.rel (0) target = $region36
            $region35: #{siglip_s2rgb_embed.25} parent=31 // pred_region
              // Predicated region
              $region48: #{siglip_s2rgb_embed.25} parent=35 // pred_check
                _
              $region49: #{siglip_s2rgb_embed.25} parent=35 // pred_check_branch
                %219 = sbr.rel (0) target = $region51
              $region50: #{siglip_s2rgb_embed.25} parent=35 // pred_region
                loop: start=0, step=1, limit=1
                $region52: #{siglip_s2rgb_embed.25} parent=50 // loop_pre_header
                  _
                $region53: #{siglip_s2rgb_embed.25} parent=50 // loop_header
                  %s221 = sphi 0, %s225
                  %p222 = scmp.ge.s32.totalorder %s221, 1
                  %s226 = sphi %s197, %s197
                  %s227 = sphi %s192, %s192
                $region54: #{siglip_s2rgb_embed.25} parent=50 // loop_header_branch
                  %224 = sbr.rel (%p222) target = $region58
                $region55: #{siglip_s2rgb_embed.25} parent=50 // loop_body
                  %v228 = vld [vmem:[%s226] sm:$0xff]
                  %229 = vst [vmem:[%s227] sm:$0xff] %v228
                  %v230 = vld [vmem:[%s226 + $0x10] sm:$0xff]
                  %231 = vst [vmem:[%s227 + $0x8] sm:$0xff] %v230
                $region56: #{siglip_s2rgb_embed.25} parent=50 // loop_footer
                  %s225 = sadd.s32 1, %s221
                $region57: #{siglip_s2rgb_embed.25} parent=50 // loop_footer_branch
                  %220 = sbr.rel target = $region53
                $region58: #{siglip_s2rgb_embed.25} parent=50 // loop_exit
                  _
              $region51: #{siglip_s2rgb_embed.25} parent=35 // pred_fallthru
                _
              // Predicated region
              $region59: #{siglip_s2rgb_embed.25} parent=35 // pred_check
                _
              $region60: #{siglip_s2rgb_embed.25} parent=35 // pred_check_branch
                %233 = sbr.rel target = $region62
              $region61: #{siglip_s2rgb_embed.25} parent=35 // pred_region
                _
              $region62: #{siglip_s2rgb_embed.25} parent=35 // pred_fallthru
                _
            $region36: #{siglip_s2rgb_embed.25} parent=31 // pred_fallthru
              _
            // Predicated region
            $region37: #{siglip_s2rgb_embed.25} parent=31 // pred_check
              _
            $region38: #{siglip_s2rgb_embed.25} parent=31 // pred_check_branch
              %203 = sbr.rel target = $region40
            $region39: #{siglip_s2rgb_embed.25} parent=31 // pred_region
              %s205 = ssub.s32 256, 1
              loop: start=0, step=1, limit=1
              $region41: #{siglip_s2rgb_embed.25} parent=39 // loop_pre_header
                _
              $region42: #{siglip_s2rgb_embed.25} parent=39 // loop_header
                %s207 = sphi 0, %s211
                %p208 = scmp.ge.s32.totalorder %s207, 1
                %s212 = sphi %s197, %s197
                %s213 = sphi %s192, %s192
              $region43: #{siglip_s2rgb_embed.25} parent=39 // loop_header_branch
                %210 = sbr.rel (%p208) target = $region47
              $region44: #{siglip_s2rgb_embed.25} parent=39 // loop_body
                %v214 = vld [vmem:[%s212] sm:%s205]
                %215 = vst [vmem:[%s213] sm:%s205] %v214
                %v216 = vld [vmem:[%s212 + $0x10] sm:%s205]
                %217 = vst [vmem:[%s213 + $0x8] sm:%s205] %v216
              $region45: #{siglip_s2rgb_embed.25} parent=39 // loop_footer
                %s211 = sadd.s32 1, %s207
              $region46: #{siglip_s2rgb_embed.25} parent=39 // loop_footer_branch
                %206 = sbr.rel target = $region42
              $region47: #{siglip_s2rgb_embed.25} parent=39 // loop_exit
                _
            $region40: #{siglip_s2rgb_embed.25} parent=31 // pred_fallthru
              _
          $region32: #{siglip_s2rgb_embed.25} parent=27 // pred_fallthru
            _
          %234 = vnop
        $region28: #{siglip_s2rgb_embed.25} parent=19 // pred_fallthru
          _
        // Predicated region
        $region63: #{siglip_s2rgb_embed.25} parent=19 // pred_check
          %p235 = pneg %p101
        $region64: #{siglip_s2rgb_embed.25} parent=19 // pred_check_branch
          %237 = sbr.rel (%p235) target = $region66
        $region65: #{siglip_s2rgb_embed.25} parent=19 // pred_region
          %s238 = sand.u32 %s91, 1
          %s239 = scalar_lea.sflag [#allocation5], %s238
          %s240 = sand.u32 %s91, 1
          %s241 = smul.addr %s240, 128
          %s242 = scalar_lea.vmem [#allocation4], %s241
          %s243 = smul.u32 16, %s21
          %245 = vsyncadd %s239, 0
          %s246 = smul.addr %s243, 2
          %s247 = smul.addr %s246, 4
          %s248 = scalar_lea.hbm %s2, %s247
          %s249 = sshll.u32 %s248, 4
          %s250 = int_to_ptr.hbm [resolvable:$true] %s249
          %s251 = sshll.u32 %s242, 4
          %s252 = int_to_ptr.vmem [resolvable:$true] %s251
          %257 = dma.hbm_to_vmem [thread:$0]  %s250, 2048, %s252, %s239, 128, 128, 8
        $region66: #{siglip_s2rgb_embed.25} parent=19 // pred_fallthru
          _
      $region20: #{siglip_s2rgb_embed.25} parent=5 // pred_fallthru
        _
      %p258 = scmp.le.s32.totalorder 1, %s13
      %p259 = scmp.lt.s32.totalorder %s13, 5
      %p260 = pnand %p258, %p259
      %p261 = pneg %p260
      // Predicated region
      $region67: #{siglip_s2rgb_embed.25} parent=5 // pred_check
        _
      $region68: #{siglip_s2rgb_embed.25} parent=5 // pred_check_branch
        %263 = sbr.rel (%p260) target = $region70
      $region69: #{siglip_s2rgb_embed.25} parent=5 // pred_region
        %s264 = ssub.s32 %s13, 1
        %s265 = sand.u32 %s68, 1
        %s266 = sand.u32 %s68, 1
        %s267 = smul.addr %s266, 16
        %s268 = scalar_lea.vmem [#allocation3], %s267
        // Predicated region
        $region71: #{siglip_s2rgb_embed.25} parent=69 // pred_check
          %p269 = pneg %p81
        $region72: #{siglip_s2rgb_embed.25} parent=69 // pred_check_branch
          %271 = sbr.rel (%p269) target = $region74
        $region73: #{siglip_s2rgb_embed.25} parent=69 // pred_region
          _
        $region74: #{siglip_s2rgb_embed.25} parent=69 // pred_fallthru
          _
        %s272 = sand.u32 %s94, 1
        %s273 = scalar_lea.sflag [#allocation5], %s272
        %s274 = sand.u32 %s94, 1
        %s275 = smul.addr %s274, 128
        %s276 = scalar_lea.vmem [#allocation4], %s275
        // Predicated region
        $region75: #{siglip_s2rgb_embed.25} parent=69 // pred_check
          %p277 = pneg %p107
        $region76: #{siglip_s2rgb_embed.25} parent=69 // pred_check_branch
          %279 = sbr.rel (%p277) target = $region78
        $region77: #{siglip_s2rgb_embed.25} parent=69 // pred_region
          %281 = dma.done %s273, 2048
        $region78: #{siglip_s2rgb_embed.25} parent=69 // pred_fallthru
          _
        %p282 = scmp.lt.s32.totalorder %s22, 1
        %s283 = scalar_select %p282, %s22, 1
        %p284 = scmp.lt.s32.totalorder %s23, 1
        %s285 = scalar_select %p284, %s23, 1
        %s286 = smul.addr %s283, 2
        %s287 = sadd.s32 %s285, %s286
        %s288 = scalar_lea.vmem %s0, %s287
        %p289 = pneg %p53
        %p290 = pneg %p50
        %s291 = sand.u32 %s68, 1
        %s292 = sand.u32 %s68, 1
        %s293 = smul.addr %s292, 16
        %s294 = scalar_lea.vmem [#allocation3], %s293
        %p295 = pneg %p81
        %p296 = pneg %p78
        %s297 = sand.u32 %s94, 1
        %s298 = scalar_lea.sflag [#allocation5], %s297
        %s299 = sand.u32 %s94, 1
        %s300 = smul.addr %s299, 128
        %s301 = scalar_lea.vmem [#allocation4], %s300
        %p302 = pneg %p107
        %p303 = pneg %p104
        %p304 = pneg %p128
        %p305 = pneg %p125
        %p306 = pneg %p154
        %p307 = pneg %p151
        %p308 = scmp.lt.s32.totalorder %s22, 1
        %s309 = scalar_select %p308, %s22, 1
        %s310 = smul.addr %s309, 2
        %s311 = scalar_lea.vmem %s4, %s310
        %p312 = scmp.lt.s32.totalorder %s22, 1
        %s313 = scalar_select %p312, %s22, 1
        %p314 = scmp.lt.s32.totalorder %s23, 1
        %s315 = scalar_select %p314, %s23, 1
        %s316 = smul.addr %s313, 2
        %s317 = sadd.s32 %s315, %s316
        %s318 = scalar_lea.vmem %s0, %s317
        %s319 = smul.u32 2, %s23
        %s320 = smul.u32 16, %s23
        %p321 = scmp.lt.s32.totalorder %s22, 1
        %s322 = scalar_select %p321, %s22, 1
        %s323 = smul.addr %s322, 2
        %s324 = scalar_lea.vmem %s4, %s323
        %p326 = scmp.eq.s32.totalorder %s23, 0
        // Predicated region
        $region79: #{siglip_s2rgb_embed.25} parent=69 // pred_check
          %p327 = pneg %p326
        $region80: #{siglip_s2rgb_embed.25} parent=69 // pred_check_branch
          %329 = sbr.rel (%p327) target = $region82
        $region81: #{siglip_s2rgb_embed.25} parent=69 // pred_region
          %v330 = vlaneseq
          %vm331 = vcmp.ge.s32.totalorder %v330, 0
          %vm332 = vcmp.lt.s32.totalorder %v330, 256
          %vm333 = vmand %vm331, %vm332
          %334 = vst.msk [vmem:[#allocation2] sm:$0x3] %vm333, 0.0
        $region82: #{siglip_s2rgb_embed.25} parent=69 // pred_fallthru
          _
        %v335 = vld [vmem:[%s318] sm:$0x1]
        %v336 = vld [vmem:[%s268] sm:$0xff]
        %v337 = vld [vmem:[%s268 + $0x8] sm:$0xff]
        %v340 = vunpack.c.l.b16 %v336
        %v341 = vunpack.c.l.b16 %v337
        %v342 = vpack.c.b16 %v341, %v340
        %344 = vmatpush.bf16.xpose.msra.mxu0 0
        %345 = vmatpush.bf16.xpose.msra.mxu0 0
        %346 = vmatpush.bf16.xpose.msra.mxu0 0
        %347 = vmatpush.bf16.xpose.msra.mxu0 0
        %348 = vmatpush.bf16.xpose.msra.mxu0 0
        %349 = vmatpush.bf16.xpose.msra.mxu0 0
        %350 = vmatpush.bf16.xpose.msra.mxu0 0
        %351 = vmatpush.bf16.xpose.msra.mxu0 %v342
        %352 = vmatmul.bf16.gmra.mxu0 %v335
        %v353 = vpop.f32.mrf.mxu0
        %v354 = vadd.f32 0.0, %v353
        %v355 = vpop.f32.mrf.mxu0
        %356 = vdwg.mxu0
        %v357 = vmul.f32 %v354, 0.088388346
        %vm358 = vcmask 122880
        %v359 = vsel %vm358, %v357, -inf
        %360 = vmax.xlane.f32.xlu0 %v359
        %v361 = vpop.xlane.xlu0 %360
        %v362 = vsub.f32 %v357, %v361
        %v363 = vmul.f32 %v362, 1.442695
        %v364 = vpow.pop %v363
        %v365 = vsel %vm358, %v364, 0.0
        %366 = vadd.xlane.f32.xlu0 %v365
        %v367 = vpop.xlane.xlu0 %366
        %v368 = vrcp.pop %v367
        %v369 = vmul.f32 %v367, %v368
        %v370 = vsub.f32 1.0, %v369
        %v371 = vmul.f32 %v368, %v370
        %v372 = vadd.f32 %v368, %v371
        %vm373 = vweird.f32 %v367
        %vm374 = vweird.f32 %v368
        %vm375 = vmor %vm373, %vm374
        %v376 = vsel %vm375, %v368, %v372
        %v377 = vand.u32 2147483647, %v367
        %vm378 = vcmp.eq.f32.partialorder %v377, 8.507059e+37
        %v379 = vand.u32 %v367, 2147483648
        %v380 = vor.u32 1.1754944e-38, %v379
        %v381 = vsel %vm378, %v380, %v376
        %v382 = vmul.f32 %v364, %v381
        %v383 = vpack.c.bf16 %v382, %v382
        %v384 = vunpack.c.h.b16 %v336
        %v385 = vunpack.c.h.b16 %v337
        %v386 = vpack.c.b16 %v385, %v384
        %vm388 = vcmask 130048
        %v390 = vsel %vm388, %v383, 0
        %392 = vmatpush.bf16.msra.mxu0 0
        %393 = vmatpush.bf16.msra.mxu0 0
        %394 = vmatpush.bf16.msra.mxu0 0
        %395 = vmatpush.bf16.msra.mxu0 0
        %396 = vmatpush.bf16.msra.mxu0 0
        %397 = vmatpush.bf16.msra.mxu0 0
        %398 = vmatpush.bf16.msra.mxu0 0
        %399 = vmatpush.bf16.msra.mxu0 %v386
        %400 = vmatmul.bf16.gmra.mxu0 %v390
        %v401 = vpop.f32.mrf.mxu0
        %v402 = vadd.f32 0.0, %v401
        %v403 = vpop.f32.mrf.mxu0
        %404 = vdwg.mxu0
        %v405 = vld [vmem:[#allocation2] sm:$0x3]
        %v406 = vpack.c.bf16 %v402, %v402
        %v407 = vld [vmem:[%s276] sm:$0xff]
        %v408 = vld [vmem:[%s276 + $0x8] sm:$0xff]
        %v409 = vld [vmem:[%s276 + $0x10] sm:$0xff]
        %v410 = vld [vmem:[%s276 + $0x18] sm:$0xff]
        %v411 = vld [vmem:[%s276 + $0x20] sm:$0xff]
        %v412 = vld [vmem:[%s276 + $0x28] sm:$0xff]
        %v413 = vld [vmem:[%s276 + $0x30] sm:$0xff]
        %v414 = vld [vmem:[%s276 + $0x38] sm:$0xff]
        %v415 = vld [vmem:[%s276 + $0x40] sm:$0xff]
        %v416 = vld [vmem:[%s276 + $0x48] sm:$0xff]
        %v417 = vld [vmem:[%s276 + $0x50] sm:$0xff]
        %v418 = vld [vmem:[%s276 + $0x58] sm:$0xff]
        %v419 = vld [vmem:[%s276 + $0x60] sm:$0xff]
        %v420 = vld [vmem:[%s276 + $0x68] sm:$0xff]
        %v421 = vld [vmem:[%s276 + $0x70] sm:$0xff]
        %v422 = vld [vmem:[%s276 + $0x78] sm:$0xff]
        %v439 = vunpack.c.l.b16 %v407
        %v440 = vunpack.c.h.b16 %v407
        %v441 = vunpack.c.l.b16 %v408
        %v442 = vunpack.c.h.b16 %v408
        %v443 = vunpack.c.l.b16 %v409
        %v444 = vunpack.c.h.b16 %v409
        %v445 = vunpack.c.l.b16 %v410
        %v446 = vunpack.c.h.b16 %v410
        %v447 = vunpack.c.l.b16 %v411
        %v448 = vunpack.c.h.b16 %v411
        %v449 = vunpack.c.l.b16 %v412
        %v450 = vunpack.c.h.b16 %v412
        %v451 = vunpack.c.l.b16 %v413
        %v452 = vunpack.c.h.b16 %v413
        %v453 = vunpack.c.l.b16 %v414
        %v454 = vunpack.c.h.b16 %v414
        %v455 = vunpack.c.l.b16 %v415
        %v456 = vunpack.c.h.b16 %v415
        %v457 = vunpack.c.l.b16 %v416
        %v458 = vunpack.c.h.b16 %v416
        %v459 = vunpack.c.l.b16 %v417
        %v460 = vunpack.c.h.b16 %v417
        %v461 = vunpack.c.l.b16 %v418
        %v462 = vunpack.c.h.b16 %v418
        %v463 = vunpack.c.l.b16 %v419
        %v464 = vunpack.c.h.b16 %v419
        %v465 = vunpack.c.l.b16 %v420
        %v466 = vunpack.c.h.b16 %v420
        %v467 = vunpack.c.l.b16 %v421
        %v468 = vunpack.c.h.b16 %v421
        %v469 = vunpack.c.l.b16 %v422
        %v470 = vunpack.c.h.b16 %v422
        %v471 = vpack.c.b16 %v441, %v439
        %v472 = vpack.c.b16 %v442, %v440
        %v473 = vpack.c.b16 %v445, %v443
        %v474 = vpack.c.b16 %v446, %v444
        %v475 = vpack.c.b16 %v449, %v447
        %v476 = vpack.c.b16 %v450, %v448
        %v477 = vpack.c.b16 %v453, %v451
        %v478 = vpack.c.b16 %v454, %v452
        %v479 = vpack.c.b16 %v457, %v455
        %v480 = vpack.c.b16 %v458, %v456
        %v481 = vpack.c.b16 %v461, %v459
        %v482 = vpack.c.b16 %v462, %v460
        %v483 = vpack.c.b16 %v465, %v463
        %v484 = vpack.c.b16 %v466, %v464
        %v485 = vpack.c.b16 %v469, %v467
        %v486 = vpack.c.b16 %v470, %v468
        %503 = vmatpush.bf16.msra.mxu0 %v485
        %504 = vmatpush.bf16.msra.mxu0 %v483
        %505 = vmatpush.bf16.msra.mxu0 %v481
        %506 = vmatpush.bf16.msra.mxu0 %v479
        %507 = vmatpush.bf16.msra.mxu0 %v477
        %508 = vmatpush.bf16.msra.mxu0 %v475
        %509 = vmatpush.bf16.msra.mxu0 %v473
        %510 = vmatpush.bf16.msra.mxu0 %v471
        %511 = vmatmul.bf16.gmra.mxu0 %v406
        %v512 = vpop.f32.mrf.mxu0
        %v513 = vadd.f32 0.0, %v512
        %v514 = vpop.f32.mrf.mxu0
        %515 = vdwg.mxu0
        %516 = vmatpush.bf16.msra.mxu0 %v486
        %517 = vmatpush.bf16.msra.mxu0 %v484
        %518 = vmatpush.bf16.msra.mxu0 %v482
        %519 = vmatpush.bf16.msra.mxu0 %v480
        %520 = vmatpush.bf16.msra.mxu0 %v478
        %521 = vmatpush.bf16.msra.mxu0 %v476
        %522 = vmatpush.bf16.msra.mxu0 %v474
        %523 = vmatpush.bf16.msra.mxu0 %v472
        %524 = vmatmul.bf16.gmra.mxu0 %v406
        %v525 = vpop.f32.mrf.mxu0
        %v526 = vadd.f32 0.0, %v525
        %v527 = vpop.f32.mrf.mxu0
        %528 = vdwg.mxu0
        %v531 = vrot.slane %v526, 7
        %vm532 = vcmask 1040384
        %v533 = vsel %vm532, %v513, %v531
        %v535 = vadd.f32 %v405, %v533
        %v536 = vlaneseq
        %vm537 = vcmp.ge.s32.totalorder %v536, 0
        %vm538 = vcmp.lt.s32.totalorder %v536, 256
        %vm539 = vmand %vm537, %vm538
        %540 = vst.msk [vmem:[#allocation2] sm:$0x3] %vm539, %v535
        %p541 = scmp.eq.s32.totalorder %s23, 1
        // Predicated region
        $region83: #{siglip_s2rgb_embed.25} parent=69 // pred_check
          %p542 = pneg %p541
        $region84: #{siglip_s2rgb_embed.25} parent=69 // pred_check_branch
          %544 = sbr.rel (%p542) target = $region86
        $region85: #{siglip_s2rgb_embed.25} parent=69 // pred_region
          %v545 = vld [vmem:[#allocation2] sm:$0x3]
          %v546 = vld [vmem:[%s3] sm:$0x3]
          %v547 = vadd.f32 %v545, %v546
          %v549 = vperm.slane %v547, 0
          %v550 = vperm.slane %v547, 1
          %v553 = vpack.c.bf16 %v550, %v549
          %v555 = vrot.slane %v553, 3
          %v558 = vsel %vm532, %v553, %v555
          %vm560 = vcmask 1040384
          %vm561 = vsmask.f32 256
          %vm562 = vmand %vm560, %vm561
          %vm563 = vcmask 1041409
          %vm564 = vsmask.f32 1280
          %vm565 = vmand %vm563, %vm564
          %vm566 = vmor %vm565, %vm562
          %v567 = vld [vmem:[%s324] sm:$0x3]
          %v568 = vsel %vm566, %v558, %v567
          %569 = vst [vmem:[%s324] sm:$0x3] %v568
        $region86: #{siglip_s2rgb_embed.25} parent=69 // pred_fallthru
          _
        %p570 = scmp.lt.s32.totalorder %s22, 1
        %s571 = scalar_select %p570, %s22, 1
        %s572 = smul.addr %s571, 2
        %s573 = scalar_lea.vmem %s4, %s572
        // Predicated region
        $region87: #{siglip_s2rgb_embed.25} parent=69 // pred_check
          %p574 = pneg %p151
        $region88: #{siglip_s2rgb_embed.25} parent=69 // pred_check_branch
          %576 = sbr.rel (%p574) target = $region90
        $region89: #{siglip_s2rgb_embed.25} parent=69 // pred_region
          _
        $region90: #{siglip_s2rgb_embed.25} parent=69 // pred_fallthru
          _
      $region70: #{siglip_s2rgb_embed.25} parent=5 // pred_fallthru
        _
      %p577 = scmp.le.s32.totalorder 2, %s13
      // Predicated region
      $region91: #{siglip_s2rgb_embed.25} parent=5 // pred_check
        %p578 = pneg %p577
      $region92: #{siglip_s2rgb_embed.25} parent=5 // pred_check_branch
        %580 = sbr.rel (%p578) target = $region94
      $region93: #{siglip_s2rgb_embed.25} parent=5 // pred_region
        %s581 = ssub.s32 %s13, 2
        // Predicated region
        $region95: #{siglip_s2rgb_embed.25} parent=93 // pred_check
          %p582 = pneg %p157
        $region96: #{siglip_s2rgb_embed.25} parent=93 // pred_check_branch
          %584 = sbr.rel (%p582) target = $region98
        $region97: #{siglip_s2rgb_embed.25} parent=93 // pred_region
          %p585 = scmp.lt.s32.totalorder %s24, 1
          %s586 = scalar_select %p585, %s24, 1
          %s587 = smul.addr %s586, 2
          %s588 = scalar_lea.vmem %s4, %s587
        $region98: #{siglip_s2rgb_embed.25} parent=93 // pred_fallthru
          _
      $region94: #{siglip_s2rgb_embed.25} parent=5 // pred_fallthru
        _
    $region6: #{siglip_s2rgb_embed.25} parent=1 // loop_footer
      %s17 = sadd.s32 1, %s13
    $region7: #{siglip_s2rgb_embed.25} parent=1 // loop_footer_branch
      %12 = sbr.rel target = $region3
    $region8: #{siglip_s2rgb_embed.25} parent=1 // loop_exit
      _
    %589 = vsyncpa [#allocation5], 1
    %s590 = scalar_lea.sflag [#allocation5], 1
    %591 = vsyncpa %s590, 1

// kernel: siglip_s2rgb_embed.26
$region0: #{siglip_s2rgb_embed.26}
  #allocation0 [shape = 'u32[]', space=smem, size = 0x4, offset = 0x4, fixed_abs, tag = 'smem constant byte address 0x4 - core index']
  #allocation1 [shape = 'u32[72,128]{1,0:T(1,128)}', space=vmem, size = 0x9000, scoped, tag = 'internal scratch']
  #allocation2 [shape = 'bf16[2,256]{1,0:T(2,128)(2,1)}', space=vmem, size = 0x400, scoped, tag = 'scratch operand']
  %s0 = inlined_call_operand.vmem [shape: bf16[2,256], index: 0, kind: input, shape index: {}]
  %s1 = inlined_call_operand.vmem [shape: f32[1,256], index: 1, kind: input, shape index: {}]
  %s2 = inlined_call_operand.vmem [shape: f32[1,256], index: 2, kind: input, shape index: {}]
  %s3 = inlined_call_operand.hbm [shape: bf16[256,1024], index: 3, kind: input, shape index: {}]
  %s4 = inlined_call_operand.vmem [shape: f32[1,1024], index: 4, kind: input, shape index: {}]
  %s5 = inlined_call_operand.vmem [shape: bf16[2,1024], index: 5, kind: output, shape index: {}]
  %s6 = sld [smem:[#allocation0]]
  $region61: #{siglip_s2rgb_embed.26} parent=0
    _
  %s8 = ssub.s32 1, %s6
  %s9 = scalar_select 0, %s8, %s6
  $region1: #{siglip_s2rgb_embed.26} parent=0
    #allocation3 [shape = 'u8[262144]{0}', space=vmem, size = 0x40000, scoped, tag = 'input window, operand 3']
    #allocation4 [shape = 's32[2]{0}', space=sflag, size = 0x8, scoped, tag = 'scoped memory for siglip_s2rgb_embed.26']
    %10 = vsyncpa [#allocation4], 0
    %s11 = scalar_lea.sflag [#allocation4], 1
    %12 = vsyncpa %s11, 0
    loop: start=0, step=1, limit=6
    $region2: #{siglip_s2rgb_embed.26} parent=1 // loop_pre_header
      _
    $region3: #{siglip_s2rgb_embed.26} parent=1 // loop_header
      %s14 = sphi 0, %s18
      %p15 = scmp.ge.s32.totalorder %s14, 6
      %s21 = sphi 0, %s33
      %s22 = sphi 0, %s29
      %s23 = sphi 0, %s21
      %s24 = sphi 0, %s22
      %s25 = sphi 0, %s23
      %s26 = sphi 0, %s24
      %s36 = sphi 0, %s38
      %s39 = sphi 0, %s36
      %s40 = sphi 0, %s39
      %s56 = sphi 0, %s40
      %s60 = sphi 0, %s60
      %s62 = sphi 0, %s60
      %s63 = sphi 0, %s62
      %s77 = sphi 0, %s63
      %s81 = sphi 0, %s81
      %s83 = sphi 0, %s81
      %s84 = sphi 0, %s83
      %s98 = sphi 0, %s84
      %s104 = sphi 0, %s106
      %s107 = sphi 0, %s104
      %s108 = sphi 0, %s107
      %s124 = sphi 0, %s108
      %s130 = sphi 0, %s132
      %s133 = sphi 0, %s130
      %s134 = sphi 0, %s133
      %s150 = sphi 0, %s134
      %s158 = sphi 0, %s160
      %s161 = sphi 0, %s158
      %s162 = sphi 0, %s161
      %s178 = sphi 0, %s162
    $region4: #{siglip_s2rgb_embed.26} parent=1 // loop_header_branch
      %17 = sbr.rel (%p15) target = $region8
    $region5: #{siglip_s2rgb_embed.26} parent=1 // loop_body
      %s19 = ssub.s32 %s14, 1
      %s20 = ssub.s32 %s14, 2
      %s27 = sadd.s32 1, %s22
      %p28 = scmp.ge.s32.totalorder %s27, 4
      %s29 = scalar_select %p28, 0, %s27
      %s30 = sadd.s32 1, %s21
      %s31 = scalar_select %p28, %s30, %s21
      %p32 = scmp.ge.s32.totalorder %s31, 1
      %s33 = scalar_select %p32, 0, %s31
      %s34 = ssub.s32 %s21, %s33
      %p35 = scmp.eq.s32.totalorder %s34, 0
      %s37 = sadd.s32 %s36, 1
      %s38 = scalar_select %p35, %s36, %s37
      %p41 = pneg %p35
      %p42 = scmp.eq.s32.totalorder %s14, 3
      %p43 = por %p41, %p42
      %p44 = scmp.ne.s32.totalorder %s36, %s39
      %p45 = scmp.eq.s32.totalorder %s14, 0
      %p46 = por %p44, %p45
      %p47 = scmp.ne.s32.totalorder %s36, %s39
      %p48 = scmp.eq.s32.totalorder %s19, 3
      %p49 = por %p47, %p48
      %p50 = scmp.ne.s32.totalorder %s39, %s40
      %p51 = scmp.eq.s32.totalorder %s19, 0
      %p52 = por %p50, %p51
      %p53 = scmp.ne.s32.totalorder %s39, %s40
      %p54 = scmp.eq.s32.totalorder %s20, 3
      %p55 = por %p53, %p54
      %p57 = scmp.ne.s32.totalorder %s40, %s56
      %p58 = scmp.eq.s32.totalorder %s20, 0
      %p59 = por %p57, %p58
      %s61 = sadd.s32 %s60, 1
      %p64 = scmp.eq.s32.totalorder %s14, 3
      %p65 = scmp.ne.s32.totalorder %s60, %s62
      %p66 = scmp.eq.s32.totalorder %s14, 0
      %p67 = por %p65, %p66
      %p68 = scmp.ne.s32.totalorder %s60, %s62
      %p69 = scmp.eq.s32.totalorder %s19, 3
      %p70 = por %p68, %p69
      %p71 = scmp.ne.s32.totalorder %s62, %s63
      %p72 = scmp.eq.s32.totalorder %s19, 0
      %p73 = por %p71, %p72
      %p74 = scmp.ne.s32.totalorder %s62, %s63
      %p75 = scmp.eq.s32.totalorder %s20, 3
      %p76 = por %p74, %p75
      %p78 = scmp.ne.s32.totalorder %s63, %s77
      %p79 = scmp.eq.s32.totalorder %s20, 0
      %p80 = por %p78, %p79
      %s82 = sadd.s32 %s81, 1
      %p85 = scmp.eq.s32.totalorder %s14, 3
      %p86 = scmp.ne.s32.totalorder %s81, %s83
      %p87 = scmp.eq.s32.totalorder %s14, 0
      %p88 = por %p86, %p87
      %p89 = scmp.ne.s32.totalorder %s81, %s83
      %p90 = scmp.eq.s32.totalorder %s19, 3
      %p91 = por %p89, %p90
      %p92 = scmp.ne.s32.totalorder %s83, %s84
      %p93 = scmp.eq.s32.totalorder %s19, 0
      %p94 = por %p92, %p93
      %p95 = scmp.ne.s32.totalorder %s83, %s84
      %p96 = scmp.eq.s32.totalorder %s20, 3
      %p97 = por %p95, %p96
      %p99 = scmp.ne.s32.totalorder %s84, %s98
      %p100 = scmp.eq.s32.totalorder %s20, 0
      %p101 = por %p99, %p100
      %s102 = ssub.s32 %s22, %s29
      %p103 = scmp.eq.s32.totalorder %s102, 0
      %s105 = sadd.s32 %s104, 1
      %s106 = scalar_select %p103, %s104, %s105
      %p109 = pneg %p103
      %p110 = scmp.eq.s32.totalorder %s14, 3
      %p111 = por %p109, %p110
      %p112 = scmp.ne.s32.totalorder %s104, %s107
      %p113 = scmp.eq.s32.totalorder %s14, 0
      %p114 = por %p112, %p113
      %p115 = scmp.ne.s32.totalorder %s104, %s107
      %p116 = scmp.eq.s32.totalorder %s19, 3
      %p117 = por %p115, %p116
      %p118 = scmp.ne.s32.totalorder %s107, %s108
      %p119 = scmp.eq.s32.totalorder %s19, 0
      %p120 = por %p118, %p119
      %p121 = scmp.ne.s32.totalorder %s107, %s108
      %p122 = scmp.eq.s32.totalorder %s20, 3
      %p123 = por %p121, %p122
      %p125 = scmp.ne.s32.totalorder %s108, %s124
      %p126 = scmp.eq.s32.totalorder %s20, 0
      %p127 = por %p125, %p126
      %s128 = ssub.s32 %s22, %s29
      %p129 = scmp.eq.s32.totalorder %s128, 0
      %s131 = sadd.s32 %s130, 1
      %s132 = scalar_select %p129, %s130, %s131
      %p135 = pneg %p129
      %p136 = scmp.eq.s32.totalorder %s14, 3
      %p137 = por %p135, %p136
      %p138 = scmp.ne.s32.totalorder %s130, %s133
      %p139 = scmp.eq.s32.totalorder %s14, 0
      %p140 = por %p138, %p139
      %p141 = scmp.ne.s32.totalorder %s130, %s133
      %p142 = scmp.eq.s32.totalorder %s19, 3
      %p143 = por %p141, %p142
      %p144 = scmp.ne.s32.totalorder %s133, %s134
      %p145 = scmp.eq.s32.totalorder %s19, 0
      %p146 = por %p144, %p145
      %p147 = scmp.ne.s32.totalorder %s133, %s134
      %p148 = scmp.eq.s32.totalorder %s20, 3
      %p149 = por %p147, %p148
      %p151 = scmp.ne.s32.totalorder %s134, %s150
      %p152 = scmp.eq.s32.totalorder %s20, 0
      %p153 = por %p151, %p152
      %s154 = ssub.s32 %s21, %s33
      %s155 = ssub.s32 %s22, %s29
      %s156 = sor.u32 %s154, %s155
      %p157 = scmp.eq.s32.totalorder %s156, 0
      %s159 = sadd.s32 %s158, 1
      %s160 = scalar_select %p157, %s158, %s159
      %p163 = pneg %p157
      %p164 = scmp.eq.s32.totalorder %s14, 3
      %p165 = por %p163, %p164
      %p166 = scmp.ne.s32.totalorder %s158, %s161
      %p167 = scmp.eq.s32.totalorder %s14, 0
      %p168 = por %p166, %p167
      %p169 = scmp.ne.s32.totalorder %s158, %s161
      %p170 = scmp.eq.s32.totalorder %s19, 3
      %p171 = por %p169, %p170
      %p172 = scmp.ne.s32.totalorder %s161, %s162
      %p173 = scmp.eq.s32.totalorder %s19, 0
      %p174 = por %p172, %p173
      %p175 = scmp.ne.s32.totalorder %s161, %s162
      %p176 = scmp.eq.s32.totalorder %s20, 3
      %p177 = por %p175, %p176
      %p179 = scmp.ne.s32.totalorder %s162, %s178
      %p180 = scmp.eq.s32.totalorder %s20, 0
      %p181 = por %p179, %p180
      %p182 = scmp.le.s32.totalorder 1, %s14
      %p183 = scmp.lt.s32.totalorder %s14, 5
      %p184 = pnand %p182, %p183
      %p185 = pneg %p184
      // Predicated region
      $region9: #{siglip_s2rgb_embed.26} parent=5 // pred_check
        _
      $region10: #{siglip_s2rgb_embed.26} parent=5 // pred_check_branch
        %187 = sbr.rel (%p184) target = $region12
      $region11: #{siglip_s2rgb_embed.26} parent=5 // pred_region
        %s188 = ssub.s32 %s14, 1
        // Predicated region
        $region13: #{siglip_s2rgb_embed.26} parent=11 // pred_check
          %p189 = pneg %p52
        $region14: #{siglip_s2rgb_embed.26} parent=11 // pred_check_branch
          %191 = sbr.rel (%p189) target = $region16
        $region15: #{siglip_s2rgb_embed.26} parent=11 // pred_region
          %p192 = scmp.lt.s32.totalorder %s23, 0
          %s193 = scalar_select %p192, %s23, 0
          %s194 = smul.addr %s193, 2
          %s195 = scalar_lea.vmem %s0, %s194
        $region16: #{siglip_s2rgb_embed.26} parent=11 // pred_fallthru
          _
        // Predicated region
        $region17: #{siglip_s2rgb_embed.26} parent=11 // pred_check
          %p196 = pneg %p73
        $region18: #{siglip_s2rgb_embed.26} parent=11 // pred_check_branch
          %198 = sbr.rel (%p196) target = $region20
        $region19: #{siglip_s2rgb_embed.26} parent=11 // pred_region
          _
        $region20: #{siglip_s2rgb_embed.26} parent=11 // pred_fallthru
          _
        // Predicated region
        $region21: #{siglip_s2rgb_embed.26} parent=11 // pred_check
          %p199 = pneg %p94
        $region22: #{siglip_s2rgb_embed.26} parent=11 // pred_check_branch
          %201 = sbr.rel (%p199) target = $region24
        $region23: #{siglip_s2rgb_embed.26} parent=11 // pred_region
          _
        $region24: #{siglip_s2rgb_embed.26} parent=11 // pred_fallthru
          _
      $region12: #{siglip_s2rgb_embed.26} parent=5 // pred_fallthru
        _
      %p202 = scmp.lt.s32.totalorder %s14, 4
      // Predicated region
      $region25: #{siglip_s2rgb_embed.26} parent=5 // pred_check
        %p203 = pneg %p202
      $region26: #{siglip_s2rgb_embed.26} parent=5 // pred_check_branch
        %205 = sbr.rel (%p203) target = $region28
      $region27: #{siglip_s2rgb_embed.26} parent=5 // pred_region
        // Predicated region
        $region29: #{siglip_s2rgb_embed.26} parent=27 // pred_check
          %p206 = pneg %p114
        $region30: #{siglip_s2rgb_embed.26} parent=27 // pred_check_branch
          %208 = sbr.rel (%p206) target = $region32
        $region31: #{siglip_s2rgb_embed.26} parent=27 // pred_region
          %s209 = sand.u32 %s104, 1
          %s210 = scalar_lea.sflag [#allocation4], %s209
          %s211 = sand.u32 %s104, 1
          %s212 = smul.addr %s211, 256
          %s213 = scalar_lea.vmem [#allocation3], %s212
          %s214 = smul.u32 2, %s22
          %216 = vsyncadd %s210, 0
          %s217 = smul.addr %s214, 4
          %s218 = scalar_lea.hbm %s3, %s217
          %s219 = sshll.u32 %s218, 4
          %s220 = int_to_ptr.hbm [resolvable:$true] %s219
          %s221 = sshll.u32 %s213, 4
          %s222 = int_to_ptr.vmem [resolvable:$true] %s221
          %227 = dma.hbm_to_vmem [thread:$0]  %s220, 4096, %s222, %s210, 512, 128, 8
        $region32: #{siglip_s2rgb_embed.26} parent=27 // pred_fallthru
          _
        // Predicated region
        $region33: #{siglip_s2rgb_embed.26} parent=27 // pred_check
          %p228 = pneg %p140
        $region34: #{siglip_s2rgb_embed.26} parent=27 // pred_check_branch
          %230 = sbr.rel (%p228) target = $region36
        $region35: #{siglip_s2rgb_embed.26} parent=27 // pred_region
          %s231 = smul.u32 2, %s22
          %p232 = scmp.lt.s32.totalorder %s231, 7
          %s233 = scalar_select %p232, %s231, 7
          %s234 = scalar_lea.vmem %s4, %s233
          %s235 = smul.u32 2, %s22
        $region36: #{siglip_s2rgb_embed.26} parent=27 // pred_fallthru
          _
      $region28: #{siglip_s2rgb_embed.26} parent=5 // pred_fallthru
        _
      %p236 = scmp.le.s32.totalorder 1, %s14
      %p237 = scmp.lt.s32.totalorder %s14, 5
      %p238 = pnand %p236, %p237
      %p239 = pneg %p238
      // Predicated region
      $region37: #{siglip_s2rgb_embed.26} parent=5 // pred_check
        _
      $region38: #{siglip_s2rgb_embed.26} parent=5 // pred_check_branch
        %241 = sbr.rel (%p238) target = $region40
      $region39: #{siglip_s2rgb_embed.26} parent=5 // pred_region
        %s242 = ssub.s32 %s14, 1
        %s243 = sand.u32 %s107, 1
        %s244 = scalar_lea.sflag [#allocation4], %s243
        %s245 = sand.u32 %s107, 1
        %s246 = smul.addr %s245, 256
        %s247 = scalar_lea.vmem [#allocation3], %s246
        // Predicated region
        $region41: #{siglip_s2rgb_embed.26} parent=39 // pred_check
          %p248 = pneg %p120
        $region42: #{siglip_s2rgb_embed.26} parent=39 // pred_check_branch
          %250 = sbr.rel (%p248) target = $region44
        $region43: #{siglip_s2rgb_embed.26} parent=39 // pred_region
          %252 = dma.done %s244, 4096
        $region44: #{siglip_s2rgb_embed.26} parent=39 // pred_fallthru
          _
        %p253 = scmp.lt.s32.totalorder %s23, 0
        %s254 = scalar_select %p253, %s23, 0
        %s255 = smul.addr %s254, 2
        %s256 = scalar_lea.vmem %s0, %s255
        %p257 = pneg %p52
        %p258 = pneg %p49
        %p259 = pneg %p73
        %p260 = pneg %p70
        %p261 = pneg %p94
        %p262 = pneg %p91
        %s263 = sand.u32 %s107, 1
        %s264 = scalar_lea.sflag [#allocation4], %s263
        %s265 = sand.u32 %s107, 1
        %s266 = smul.addr %s265, 256
        %s267 = scalar_lea.vmem [#allocation3], %s266
        %p268 = pneg %p120
        %p269 = pneg %p117
        %s270 = smul.u32 2, %s24
        %p271 = scmp.lt.s32.totalorder %s270, 7
        %s272 = scalar_select %p271, %s270, 7
        %s273 = scalar_lea.vmem %s4, %s272
        %p274 = pneg %p146
        %p275 = pneg %p143
        %p276 = pneg %p174
        %p277 = pneg %p171
        %s278 = smul.u32 2, %s24
        %p279 = scmp.lt.s32.totalorder %s23, 0
        %s280 = scalar_select %p279, %s23, 0
        %p281 = scmp.lt.s32.totalorder %s278, 7
        %s282 = scalar_select %p281, %s278, 7
        %s283 = smul.addr %s280, 8
        %s284 = sadd.s32 %s282, %s283
        %s285 = scalar_lea.vmem %s5, %s284
        %p286 = scmp.lt.s32.totalorder %s23, 0
        %s287 = scalar_select %p286, %s23, 0
        %s288 = smul.addr %s287, 2
        %s289 = scalar_lea.vmem %s0, %s288
        %s290 = smul.u32 2, %s24
        %s291 = smul.u32 2, %s24
        %p292 = scmp.lt.s32.totalorder %s291, 7
        %s293 = scalar_select %p292, %s291, 7
        %s294 = scalar_lea.vmem %s4, %s293
        %s295 = smul.u32 2, %s24
        %s296 = smul.u32 2, %s24
        %p297 = scmp.lt.s32.totalorder %s23, 0
        %s298 = scalar_select %p297, %s23, 0
        %p299 = scmp.lt.s32.totalorder %s296, 7
        %s300 = scalar_select %p299, %s296, 7
        %s301 = smul.addr %s298, 8
        %s302 = sadd.s32 %s300, %s301
        %s303 = scalar_lea.vmem %s5, %s302
        %s304 = smul.u32 2, %s24
        %p305 = scmp.eq.s32.totalorder %s24, 0
        // Predicated region
        $region45: #{siglip_s2rgb_embed.26} parent=39 // pred_check
          %p306 = pneg %p305
        $region46: #{siglip_s2rgb_embed.26} parent=39 // pred_check_branch
          %308 = sbr.rel (%p306) target = $region48
        $region47: #{siglip_s2rgb_embed.26} parent=39 // pred_region
          %v309 = vld [vmem:[%s289] sm:$0x3]
          %v310 = vunpack.c.l.bf16 %v309
          %312 = vst [vmem:[#allocation1] ss:$4 sm:$0xff] %v310
          %v313 = vld.sshfl [vmem:[#allocation1] sm:$0xff pattern:$0x73625140]
          %v314 = vld.sshfl [vmem:[#allocation1 + $0x8] sm:$0xff pattern:$0x73625140]
          %vm317 = vcmask 1041408
          %v318 = vsel %vm317, %v313, 0.0
          %v319 = vsel %vm317, %v314, 0.0
          %v320 = vadd.f32 %v318, %v319
          %321 = vadd.xlane.f32.xlu0 %v320
          %v322 = vpop.xlane.xlu0 %321
          %v323 = vrcp.pop 256.0
          %v324 = vmul.f32 256.0, %v323
          %v325 = vsub.f32 1.0, %v324
          %v326 = vmul.f32 %v323, %v325
          %v327 = vadd.f32 %v323, %v326
          %vm328 = vweird.f32 %v323
          %v329 = vsel %vm328, %v323, %v327
          %v330 = vmul.f32 %v322, %v329
          %v333 = vunpack.c.l.s4 269488144
          %v334 = vunpack.c.0.s8 %v333
          %v335 = vperm.slane %v330, %v334
          %v337 = vsub.f32 %v310, %v335
          %v338 = vmul.f32 %v337, %v337
          %340 = vst [vmem:[#allocation1] ss:$4 sm:$0xff] %v338
          %v341 = vld.sshfl [vmem:[#allocation1] sm:$0xff pattern:$0x73625140]
          %v342 = vld.sshfl [vmem:[#allocation1 + $0x8] sm:$0xff pattern:$0x73625140]
          %v345 = vsel %vm317, %v341, 0.0
          %v346 = vsel %vm317, %v342, 0.0
          %v347 = vadd.f32 %v345, %v346
          %348 = vadd.xlane.f32.xlu0 %v347
          %v349 = vpop.xlane.xlu0 %348
          %v350 = vmul.f32 %v349, %v329
          %v351 = vadd.f32 %v350, 1e-06
          %v352 = vrsqrt.pop %v351
          %v353 = vmul.f32 %v352, %v351
          %v354 = vmul.f32 %v353, %v352
          %v355 = vmul.f32 0.5, %v354
          %v356 = vsub.f32 1.5, %v355
          %v357 = vmul.f32 %v352, %v356
          %vm358 = vweird.f32 %v351
          %vm359 = vweird.f32 %v352
          %vm360 = vmor %vm358, %vm359
          %v361 = vsel %vm360, %v352, %v357
          %v364 = vunpack.c.l.s4 269488144
          %v365 = vunpack.c.0.s8 %v364
          %v366 = vperm.slane %v361, %v365
          %v368 = vmul.f32 %v337, %v366
          %v369 = vld [vmem:[%s1] sm:$0x3]
          %v371 = vperm.slane %v369, 0
          %v372 = vperm.slane %v369, 1
          %v373 = vrot.slane %v372, 6
          %v374 = vsel %vm317, %v371, %v373
          %v376 = vmul.f32 %v368, %v374
          %v377 = vld [vmem:[%s2] sm:$0x3]
          %v379 = vperm.slane %v377, 0
          %v380 = vperm.slane %v377, 1
          %v381 = vrot.slane %v380, 6
          %v382 = vsel %vm317, %v379, %v381
          %v384 = vadd.f32 %v376, %v382
          %386 = vst [vmem:[#allocation1] ss:$4 sm:$0xff] %v384
          %v387 = vld.sshfl [vmem:[#allocation1] sm:$0xff pattern:$0x73625140]
          %v388 = vld.sshfl [vmem:[#allocation1 + $0x8] sm:$0xff pattern:$0x73625140]
          %v391 = vpack.c.bf16 %v388, %v387
          %v393 = vrot.slane %v391, 3
          %vm394 = vcmask 1040384
          %v397 = vsel %vm394, %v391, %v393
          %399 = vst [vmem:[#allocation2] sm:$0x3] %v397
        $region48: #{siglip_s2rgb_embed.26} parent=39 // pred_fallthru
          _
        %v400 = vld [vmem:[#allocation2] sm:$0x3]
        %v401 = vld [vmem:[%s247] sm:$0xff]
        %v402 = vld [vmem:[%s247 + $0x8] sm:$0xff]
        %v403 = vld [vmem:[%s247 + $0x10] sm:$0xff]
        %v404 = vld [vmem:[%s247 + $0x18] sm:$0xff]
        %v405 = vld [vmem:[%s247 + $0x20] sm:$0xff]
        %v406 = vld [vmem:[%s247 + $0x28] sm:$0xff]
        %v407 = vld [vmem:[%s247 + $0x30] sm:$0xff]
        %v408 = vld [vmem:[%s247 + $0x38] sm:$0xff]
        %v409 = vld [vmem:[%s247 + $0x40] sm:$0xff]
        %v410 = vld [vmem:[%s247 + $0x48] sm:$0xff]
        %v411 = vld [vmem:[%s247 + $0x50] sm:$0xff]
        %v412 = vld [vmem:[%s247 + $0x58] sm:$0xff]
        %v413 = vld [vmem:[%s247 + $0x60] sm:$0xff]
        %v414 = vld [vmem:[%s247 + $0x68] sm:$0xff]
        %v415 = vld [vmem:[%s247 + $0x70] sm:$0xff]
        %v416 = vld [vmem:[%s247 + $0x78] sm:$0xff]
        %v417 = vld [vmem:[%s247 + $0x80] sm:$0xff]
        %v418 = vld [vmem:[%s247 + $0x88] sm:$0xff]
        %v419 = vld [vmem:[%s247 + $0x90] sm:$0xff]
        %v420 = vld [vmem:[%s247 + $0x98] sm:$0xff]
        %v421 = vld [vmem:[%s247 + $0xa0] sm:$0xff]
        %v422 = vld [vmem:[%s247 + $0xa8] sm:$0xff]
        %v423 = vld [vmem:[%s247 + $0xb0] sm:$0xff]
        %v424 = vld [vmem:[%s247 + $0xb8] sm:$0xff]
        %v425 = vld [vmem:[%s247 + $0xc0] sm:$0xff]
        %v426 = vld [vmem:[%s247 + $0xc8] sm:$0xff]
        %v427 = vld [vmem:[%s247 + $0xd0] sm:$0xff]
        %v428 = vld [vmem:[%s247 + $0xd8] sm:$0xff]
        %v429 = vld [vmem:[%s247 + $0xe0] sm:$0xff]
        %v430 = vld [vmem:[%s247 + $0xe8] sm:$0xff]
        %v431 = vld [vmem:[%s247 + $0xf0] sm:$0xff]
        %v432 = vld [vmem:[%s247 + $0xf8] sm:$0xff]
        %v433 = vld [vmem:[%s294] sm:$0x3]
        %v435 = vperm.slane %v433, 0
        %v436 = vperm.slane %v433, 1
        %440 = vst [vmem:[#allocation1] ss:$9 sm:$0xff] %v400
        %v441 = vld [vmem:[#allocation1] sm:$0xff]
        %v442 = vld [vmem:[#allocation1 + $0x9] sm:$0xff]
        %v477 = vunpack.c.l.b16 %v401
        %v478 = vunpack.c.h.b16 %v401
        %v479 = vunpack.c.l.b16 %v402
        %v480 = vunpack.c.h.b16 %v402
        %v481 = vunpack.c.l.b16 %v403
        %v482 = vunpack.c.h.b16 %v403
        %v483 = vunpack.c.l.b16 %v404
        %v484 = vunpack.c.h.b16 %v404
        %v485 = vunpack.c.l.b16 %v405
        %v486 = vunpack.c.h.b16 %v405
        %v487 = vunpack.c.l.b16 %v406
        %v488 = vunpack.c.h.b16 %v406
        %v489 = vunpack.c.l.b16 %v407
        %v490 = vunpack.c.h.b16 %v407
        %v491 = vunpack.c.l.b16 %v408
        %v492 = vunpack.c.h.b16 %v408
        %v493 = vunpack.c.l.b16 %v409
        %v494 = vunpack.c.h.b16 %v409
        %v495 = vunpack.c.l.b16 %v410
        %v496 = vunpack.c.h.b16 %v410
        %v497 = vunpack.c.l.b16 %v411
        %v498 = vunpack.c.h.b16 %v411
        %v499 = vunpack.c.l.b16 %v412
        %v500 = vunpack.c.h.b16 %v412
        %v501 = vunpack.c.l.b16 %v413
        %v502 = vunpack.c.h.b16 %v413
        %v503 = vunpack.c.l.b16 %v414
        %v504 = vunpack.c.h.b16 %v414
        %v505 = vunpack.c.l.b16 %v415
        %v506 = vunpack.c.h.b16 %v415
        %v507 = vunpack.c.l.b16 %v416
        %v508 = vunpack.c.h.b16 %v416
        %v509 = vunpack.c.l.b16 %v417
        %v510 = vunpack.c.h.b16 %v417
        %v511 = vunpack.c.l.b16 %v418
        %v512 = vunpack.c.h.b16 %v418
        %v513 = vunpack.c.l.b16 %v419
        %v514 = vunpack.c.h.b16 %v419
        %v515 = vunpack.c.l.b16 %v420
        %v516 = vunpack.c.h.b16 %v420
        %v517 = vunpack.c.l.b16 %v421
        %v518 = vunpack.c.h.b16 %v421
        %v519 = vunpack.c.l.b16 %v422
        %v520 = vunpack.c.h.b16 %v422
        %v521 = vunpack.c.l.b16 %v423
        %v522 = vunpack.c.h.b16 %v423
        %v523 = vunpack.c.l.b16 %v424
        %v524 = vunpack.c.h.b16 %v424
        %v525 = vunpack.c.l.b16 %v425
        %v526 = vunpack.c.h.b16 %v425
        %v527 = vunpack.c.l.b16 %v426
        %v528 = vunpack.c.h.b16 %v426
        %v529 = vunpack.c.l.b16 %v427
        %v530 = vunpack.c.h.b16 %v427
        %v531 = vunpack.c.l.b16 %v428
        %v532 = vunpack.c.h.b16 %v428
        %v533 = vunpack.c.l.b16 %v429
        %v534 = vunpack.c.h.b16 %v429
        %v535 = vunpack.c.l.b16 %v430
        %v536 = vunpack.c.h.b16 %v430
        %v537 = vunpack.c.l.b16 %v431
        %v538 = vunpack.c.h.b16 %v431
        %v539 = vunpack.c.l.b16 %v432
        %v540 = vunpack.c.h.b16 %v432
        %v541 = vpack.c.b16 %v479, %v477
        %v542 = vpack.c.b16 %v480, %v478
        %v543 = vpack.c.b16 %v483, %v481
        %v544 = vpack.c.b16 %v484, %v482
        %v545 = vpack.c.b16 %v487, %v485
        %v546 = vpack.c.b16 %v488, %v486
        %v547 = vpack.c.b16 %v491, %v489
        %v548 = vpack.c.b16 %v492, %v490
        %v549 = vpack.c.b16 %v495, %v493
        %v550 = vpack.c.b16 %v496, %v494
        %v551 = vpack.c.b16 %v499, %v497
        %v552 = vpack.c.b16 %v500, %v498
        %v553 = vpack.c.b16 %v503, %v501
        %v554 = vpack.c.b16 %v504, %v502
        %v555 = vpack.c.b16 %v507, %v505
        %v556 = vpack.c.b16 %v508, %v506
        %v557 = vpack.c.b16 %v511, %v509
        %v558 = vpack.c.b16 %v512, %v510
        %v559 = vpack.c.b16 %v515, %v513
        %v560 = vpack.c.b16 %v516, %v514
        %v561 = vpack.c.b16 %v519, %v517
        %v562 = vpack.c.b16 %v520, %v518
        %v563 = vpack.c.b16 %v523, %v521
        %v564 = vpack.c.b16 %v524, %v522
        %v565 = vpack.c.b16 %v527, %v525
        %v566 = vpack.c.b16 %v528, %v526
        %v567 = vpack.c.b16 %v531, %v529
        %v568 = vpack.c.b16 %v532, %v530
        %v569 = vpack.c.b16 %v535, %v533
        %v570 = vpack.c.b16 %v536, %v534
        %v571 = vpack.c.b16 %v539, %v537
        %v572 = vpack.c.b16 %v540, %v538
        %605 = vmatpush.bf16.msra.mxu0 %v555
        %606 = vmatpush.bf16.msra.mxu0 %v553
        %607 = vmatpush.bf16.msra.mxu0 %v551
        %608 = vmatpush.bf16.msra.mxu0 %v549
        %609 = vmatpush.bf16.msra.mxu0 %v547
        %610 = vmatpush.bf16.msra.mxu0 %v545
        %611 = vmatpush.bf16.msra.mxu0 %v543
        %612 = vmatpush.bf16.msra.mxu0 %v541
        %613 = vmatmul.bf16.gmra.mxu0 %v441
        %v614 = vpop.f32.mrf.mxu0
        %v615 = vadd.f32 %v435, %v614
        %v616 = vpop.f32.mrf.mxu0
        %617 = vdwg.mxu0
        %618 = vmatpush.bf16.msra.mxu0 %v571
        %619 = vmatpush.bf16.msra.mxu0 %v569
        %620 = vmatpush.bf16.msra.mxu0 %v567
        %621 = vmatpush.bf16.msra.mxu0 %v565
        %622 = vmatpush.bf16.msra.mxu0 %v563
        %623 = vmatpush.bf16.msra.mxu0 %v561
        %624 = vmatpush.bf16.msra.mxu0 %v559
        %625 = vmatpush.bf16.msra.mxu0 %v557
        %626 = vmatmul.bf16.gmra.mxu0 %v442
        %v627 = vpop.f32.mrf.mxu0
        %v628 = vadd.f32 %v615, %v627
        %v629 = vpop.f32.mrf.mxu0
        %630 = vdwg.mxu0
        %631 = vmatpush.bf16.msra.mxu0 %v556
        %632 = vmatpush.bf16.msra.mxu0 %v554
        %633 = vmatpush.bf16.msra.mxu0 %v552
        %634 = vmatpush.bf16.msra.mxu0 %v550
        %635 = vmatpush.bf16.msra.mxu0 %v548
        %636 = vmatpush.bf16.msra.mxu0 %v546
        %637 = vmatpush.bf16.msra.mxu0 %v544
        %638 = vmatpush.bf16.msra.mxu0 %v542
        %639 = vmatmul.bf16.gmra.mxu0 %v441
        %v640 = vpop.f32.mrf.mxu0
        %v641 = vadd.f32 %v436, %v640
        %v642 = vpop.f32.mrf.mxu0
        %643 = vdwg.mxu0
        %644 = vmatpush.bf16.msra.mxu0 %v572
        %645 = vmatpush.bf16.msra.mxu0 %v570
        %646 = vmatpush.bf16.msra.mxu0 %v568
        %647 = vmatpush.bf16.msra.mxu0 %v566
        %648 = vmatpush.bf16.msra.mxu0 %v564
        %649 = vmatpush.bf16.msra.mxu0 %v562
        %650 = vmatpush.bf16.msra.mxu0 %v560
        %651 = vmatpush.bf16.msra.mxu0 %v558
        %652 = vmatmul.bf16.gmra.mxu0 %v442
        %v653 = vpop.f32.mrf.mxu0
        %v654 = vadd.f32 %v641, %v653
        %v655 = vpop.f32.mrf.mxu0
        %656 = vdwg.mxu0
        %v657 = vmul.f32 %v628, %v628
        %v658 = vmul.f32 %v654, %v654
        %v659 = vmul.f32 %v628, %v657
        %v660 = vmul.f32 %v654, %v658
        %v661 = vmul.f32 %v659, 0.044715
        %v662 = vmul.f32 %v660, 0.044715
        %v663 = vadd.f32 %v628, %v661
        %v664 = vadd.f32 %v654, %v662
        %v665 = vmul.f32 %v663, 0.7978846
        %v666 = vmul.f32 %v664, 0.7978846
        %v667 = vtanh.pop %v665
        %v668 = vtanh.pop %v666
        %v669 = vadd.f32 %v667, 1.0
        %v670 = vadd.f32 %v668, 1.0
        %v671 = vmul.f32 %v669, 0.5
        %v672 = vmul.f32 %v670, 0.5
        %v673 = vmul.f32 %v628, %v671
        %v674 = vmul.f32 %v654, %v672
        %v675 = vpack.c.bf16 %v674, %v673
        %v677 = vrot.slane %v675, 3
        %vm678 = vcmask 1040384
        %v681 = vsel %vm678, %v675, %v677
        %683 = vst [vmem:[%s303] sm:$0x3] %v681
        %s684 = smul.u32 2, %s24
        %p685 = scmp.lt.s32.totalorder %s23, 0
        %s686 = scalar_select %p685, %s23, 0
        %p687 = scmp.lt.s32.totalorder %s684, 7
        %s688 = scalar_select %p687, %s684, 7
        %s689 = smul.addr %s686, 8
        %s690 = sadd.s32 %s688, %s689
        %s691 = scalar_lea.vmem %s5, %s690
        // Predicated region
        $region49: #{siglip_s2rgb_embed.26} parent=39 // pred_check
          %p692 = pneg %p171
        $region50: #{siglip_s2rgb_embed.26} parent=39 // pred_check_branch
          %694 = sbr.rel (%p692) target = $region52
        $region51: #{siglip_s2rgb_embed.26} parent=39 // pred_region
          %s695 = smul.u32 2, %s24
        $region52: #{siglip_s2rgb_embed.26} parent=39 // pred_fallthru
          _
      $region40: #{siglip_s2rgb_embed.26} parent=5 // pred_fallthru
        _
      %p696 = scmp.le.s32.totalorder 2, %s14
      // Predicated region
      $region53: #{siglip_s2rgb_embed.26} parent=5 // pred_check
        %p697 = pneg %p696
      $region54: #{siglip_s2rgb_embed.26} parent=5 // pred_check_branch
        %699 = sbr.rel (%p697) target = $region56
      $region55: #{siglip_s2rgb_embed.26} parent=5 // pred_region
        %s700 = ssub.s32 %s14, 2
        // Predicated region
        $region57: #{siglip_s2rgb_embed.26} parent=55 // pred_check
          %p701 = pneg %p177
        $region58: #{siglip_s2rgb_embed.26} parent=55 // pred_check_branch
          %703 = sbr.rel (%p701) target = $region60
        $region59: #{siglip_s2rgb_embed.26} parent=55 // pred_region
          %s704 = smul.u32 2, %s26
          %p705 = scmp.lt.s32.totalorder %s25, 0
          %s706 = scalar_select %p705, %s25, 0
          %p707 = scmp.lt.s32.totalorder %s704, 7
          %s708 = scalar_select %p707, %s704, 7
          %s709 = smul.addr %s706, 8
          %s710 = sadd.s32 %s708, %s709
          %s711 = scalar_lea.vmem %s5, %s710
        $region60: #{siglip_s2rgb_embed.26} parent=55 // pred_fallthru
          _
      $region56: #{siglip_s2rgb_embed.26} parent=5 // pred_fallthru
        _
    $region6: #{siglip_s2rgb_embed.26} parent=1 // loop_footer
      %s18 = sadd.s32 1, %s14
    $region7: #{siglip_s2rgb_embed.26} parent=1 // loop_footer_branch
      %13 = sbr.rel target = $region3
    $region8: #{siglip_s2rgb_embed.26} parent=1 // loop_exit
      _
    %712 = vsyncpa [#allocation4], 1
    %s713 = scalar_lea.sflag [#allocation4], 1
    %714 = vsyncpa %s713, 1

// kernel: siglip_s2rgb_embed.27
$region0: #{siglip_s2rgb_embed.27}
  #allocation0 [shape = 'u32[]', space=smem, size = 0x4, offset = 0x4, fixed_abs, tag = 'smem constant byte address 0x4 - core index']
  #allocation1 [shape = 'u32[72,128]{1,0:T(1,128)}', space=vmem, size = 0x9000, scoped, tag = 'internal scratch']
  #allocation2 [shape = 'f32[2,256]{1,0:T(2,128)}', space=vmem, size = 0x800, scoped, tag = 'scratch operand']
  %s0 = inlined_call_operand.vmem [shape: bf16[2,1024], index: 0, kind: input, shape index: {}]
  %s1 = inlined_call_operand.hbm [shape: bf16[1024,256], index: 1, kind: input, shape index: {}]
  %s2 = inlined_call_operand.vmem [shape: f32[1,256], index: 2, kind: input, shape index: {}]
  %s3 = inlined_call_operand.vmem [shape: bf16[2,256], index: 3, kind: input, shape index: {}]
  %s4 = inlined_call_operand.hbm [shape: f32[2,256], index: 4, kind: output, shape index: {}]
  %s5 = sld [smem:[#allocation0]]
  $region61: #{siglip_s2rgb_embed.27} parent=0
    _
  %s7 = ssub.s32 1, %s5
  %s8 = scalar_select 0, %s7, %s5
  $region1: #{siglip_s2rgb_embed.27} parent=0
    #allocation3 [shape = 'u8[524288]{0}', space=vmem, size = 0x80000, scoped, tag = 'input window, operand 1']
    #allocation4 [shape = 's32[2]{0}', space=sflag, size = 0x8, scoped, tag = 'scoped memory for siglip_s2rgb_embed.27']
    #allocation5 [shape = 's32[2]{0}', space=sflag, size = 0x8, scoped, tag = 'scoped memory for siglip_s2rgb_embed.27']
    #allocation6 [shape = 'u8[2048]{0}', space=vmem, size = 0x800, scoped, tag = 'output window, operand 0, single buffered']
    %9 = vsyncpa [#allocation4], 0
    %s10 = scalar_lea.sflag [#allocation4], 1
    %11 = vsyncpa %s10, 0
    %12 = vsyncpa [#allocation5], 0
    loop: start=0, step=1, limit=4
    $region2: #{siglip_s2rgb_embed.27} parent=1 // loop_pre_header
      _
    $region3: #{siglip_s2rgb_embed.27} parent=1 // loop_header
      %s14 = sphi 0, %s18
      %p15 = scmp.ge.s32.totalorder %s14, 4
      %s21 = sphi 0, %s40
      %s22 = sphi 0, %s36
      %s23 = sphi 0, %s32
      %s24 = sphi 0, %s21
      %s25 = sphi 0, %s22
      %s26 = sphi 0, %s23
      %s27 = sphi 0, %s24
      %s28 = sphi 0, %s25
      %s29 = sphi 0, %s26
      %s45 = sphi 0, %s47
      %s48 = sphi 0, %s45
      %s49 = sphi 0, %s48
      %s65 = sphi 0, %s49
      %s73 = sphi 0, %s75
      %s76 = sphi 0, %s73
      %s77 = sphi 0, %s76
      %s93 = sphi 0, %s77
      %s99 = sphi 0, %s101
      %s102 = sphi 0, %s99
      %s103 = sphi 0, %s102
      %s119 = sphi 0, %s103
      %s127 = sphi 0, %s129
      %s130 = sphi 0, %s127
      %s131 = sphi 0, %s130
      %s147 = sphi 0, %s131
      %s155 = sphi 0, %s157
      %s158 = sphi 0, %s155
      %s159 = sphi 0, %s158
      %s175 = sphi 0, %s159
    $region4: #{siglip_s2rgb_embed.27} parent=1 // loop_header_branch
      %17 = sbr.rel (%p15) target = $region8
    $region5: #{siglip_s2rgb_embed.27} parent=1 // loop_body
      %s19 = ssub.s32 %s14, 1
      %s20 = ssub.s32 %s14, 2
      %s30 = sadd.s32 1, %s23
      %p31 = scmp.ge.s32.totalorder %s30, 2
      %s32 = scalar_select %p31, 0, %s30
      %s33 = sadd.s32 1, %s22
      %s34 = scalar_select %p31, %s33, %s22
      %p35 = scmp.ge.s32.totalorder %s34, 1
      %s36 = scalar_select %p35, 0, %s34
      %s37 = sadd.s32 1, %s21
      %s38 = scalar_select %p35, %s37, %s21
      %p39 = scmp.ge.s32.totalorder %s38, 1
      %s40 = scalar_select %p39, 0, %s38
      %s41 = ssub.s32 %s21, %s40
      %s42 = ssub.s32 %s23, %s32
      %s43 = sor.u32 %s41, %s42
      %p44 = scmp.eq.s32.totalorder %s43, 0
      %s46 = sadd.s32 %s45, 1
      %s47 = scalar_select %p44, %s45, %s46
      %p50 = pneg %p44
      %p51 = scmp.eq.s32.totalorder %s14, 1
      %p52 = por %p50, %p51
      %p53 = scmp.ne.s32.totalorder %s45, %s48
      %p54 = scmp.eq.s32.totalorder %s14, 0
      %p55 = por %p53, %p54
      %p56 = scmp.ne.s32.totalorder %s45, %s48
      %p57 = scmp.eq.s32.totalorder %s19, 1
      %p58 = por %p56, %p57
      %p59 = scmp.ne.s32.totalorder %s48, %s49
      %p60 = scmp.eq.s32.totalorder %s19, 0
      %p61 = por %p59, %p60
      %p62 = scmp.ne.s32.totalorder %s48, %s49
      %p63 = scmp.eq.s32.totalorder %s20, 1
      %p64 = por %p62, %p63
      %p66 = scmp.ne.s32.totalorder %s49, %s65
      %p67 = scmp.eq.s32.totalorder %s20, 0
      %p68 = por %p66, %p67
      %s69 = ssub.s32 %s23, %s32
      %s70 = ssub.s32 %s22, %s36
      %s71 = sor.u32 %s69, %s70
      %p72 = scmp.eq.s32.totalorder %s71, 0
      %s74 = sadd.s32 %s73, 1
      %s75 = scalar_select %p72, %s73, %s74
      %p78 = pneg %p72
      %p79 = scmp.eq.s32.totalorder %s14, 1
      %p80 = por %p78, %p79
      %p81 = scmp.ne.s32.totalorder %s73, %s76
      %p82 = scmp.eq.s32.totalorder %s14, 0
      %p83 = por %p81, %p82
      %p84 = scmp.ne.s32.totalorder %s73, %s76
      %p85 = scmp.eq.s32.totalorder %s19, 1
      %p86 = por %p84, %p85
      %p87 = scmp.ne.s32.totalorder %s76, %s77
      %p88 = scmp.eq.s32.totalorder %s19, 0
      %p89 = por %p87, %p88
      %p90 = scmp.ne.s32.totalorder %s76, %s77
      %p91 = scmp.eq.s32.totalorder %s20, 1
      %p92 = por %p90, %p91
      %p94 = scmp.ne.s32.totalorder %s77, %s93
      %p95 = scmp.eq.s32.totalorder %s20, 0
      %p96 = por %p94, %p95
      %s97 = ssub.s32 %s22, %s36
      %p98 = scmp.eq.s32.totalorder %s97, 0
      %s100 = sadd.s32 %s99, 1
      %s101 = scalar_select %p98, %s99, %s100
      %p104 = pneg %p98
      %p105 = scmp.eq.s32.totalorder %s14, 1
      %p106 = por %p104, %p105
      %p107 = scmp.ne.s32.totalorder %s99, %s102
      %p108 = scmp.eq.s32.totalorder %s14, 0
      %p109 = por %p107, %p108
      %p110 = scmp.ne.s32.totalorder %s99, %s102
      %p111 = scmp.eq.s32.totalorder %s19, 1
      %p112 = por %p110, %p111
      %p113 = scmp.ne.s32.totalorder %s102, %s103
      %p114 = scmp.eq.s32.totalorder %s19, 0
      %p115 = por %p113, %p114
      %p116 = scmp.ne.s32.totalorder %s102, %s103
      %p117 = scmp.eq.s32.totalorder %s20, 1
      %p118 = por %p116, %p117
      %p120 = scmp.ne.s32.totalorder %s103, %s119
      %p121 = scmp.eq.s32.totalorder %s20, 0
      %p122 = por %p120, %p121
      %s123 = ssub.s32 %s21, %s40
      %s124 = ssub.s32 %s22, %s36
      %s125 = sor.u32 %s123, %s124
      %p126 = scmp.eq.s32.totalorder %s125, 0
      %s128 = sadd.s32 %s127, 1
      %s129 = scalar_select %p126, %s127, %s128
      %p132 = pneg %p126
      %p133 = scmp.eq.s32.totalorder %s14, 1
      %p134 = por %p132, %p133
      %p135 = scmp.ne.s32.totalorder %s127, %s130
      %p136 = scmp.eq.s32.totalorder %s14, 0
      %p137 = por %p135, %p136
      %p138 = scmp.ne.s32.totalorder %s127, %s130
      %p139 = scmp.eq.s32.totalorder %s19, 1
      %p140 = por %p138, %p139
      %p141 = scmp.ne.s32.totalorder %s130, %s131
      %p142 = scmp.eq.s32.totalorder %s19, 0
      %p143 = por %p141, %p142
      %p144 = scmp.ne.s32.totalorder %s130, %s131
      %p145 = scmp.eq.s32.totalorder %s20, 1
      %p146 = por %p144, %p145
      %p148 = scmp.ne.s32.totalorder %s131, %s147
      %p149 = scmp.eq.s32.totalorder %s20, 0
      %p150 = por %p148, %p149
      %s151 = ssub.s32 %s21, %s40
      %s152 = ssub.s32 %s22, %s36
      %s153 = sor.u32 %s151, %s152
      %p154 = scmp.eq.s32.totalorder %s153, 0
      %s156 = sadd.s32 %s155, 1
      %s157 = scalar_select %p154, %s155, %s156
      %p160 = pneg %p154
      %p161 = scmp.eq.s32.totalorder %s14, 1
      %p162 = por %p160, %p161
      %p163 = scmp.ne.s32.totalorder %s155, %s158
      %p164 = scmp.eq.s32.totalorder %s14, 0
      %p165 = por %p163, %p164
      %p166 = scmp.ne.s32.totalorder %s155, %s158
      %p167 = scmp.eq.s32.totalorder %s19, 1
      %p168 = por %p166, %p167
      %p169 = scmp.ne.s32.totalorder %s158, %s159
      %p170 = scmp.eq.s32.totalorder %s19, 0
      %p171 = por %p169, %p170
      %p172 = scmp.ne.s32.totalorder %s158, %s159
      %p173 = scmp.eq.s32.totalorder %s20, 1
      %p174 = por %p172, %p173
      %p176 = scmp.ne.s32.totalorder %s159, %s175
      %p177 = scmp.eq.s32.totalorder %s20, 0
      %p178 = por %p176, %p177
      %p179 = scmp.le.s32.totalorder 1, %s14
      %p180 = scmp.lt.s32.totalorder %s14, 3
      %p181 = pnand %p179, %p180
      %p182 = pneg %p181
      // Predicated region
      $region9: #{siglip_s2rgb_embed.27} parent=5 // pred_check
        _
      $region10: #{siglip_s2rgb_embed.27} parent=5 // pred_check_branch
        %184 = sbr.rel (%p181) target = $region12
      $region11: #{siglip_s2rgb_embed.27} parent=5 // pred_region
        %s185 = ssub.s32 %s14, 1
        // Predicated region
        $region13: #{siglip_s2rgb_embed.27} parent=11 // pred_check
          %p186 = pneg %p115
        $region14: #{siglip_s2rgb_embed.27} parent=11 // pred_check_branch
          %188 = sbr.rel (%p186) target = $region16
        $region15: #{siglip_s2rgb_embed.27} parent=11 // pred_region
          %s189 = smul.u32 2, %s25
          %p190 = scmp.lt.s32.totalorder %s189, 1
          %s191 = scalar_select %p190, %s189, 1
          %s192 = scalar_lea.vmem %s2, %s191
          %s193 = smul.u32 2, %s25
        $region16: #{siglip_s2rgb_embed.27} parent=11 // pred_fallthru
          _
        // Predicated region
        $region17: #{siglip_s2rgb_embed.27} parent=11 // pred_check
          %p194 = pneg %p143
        $region18: #{siglip_s2rgb_embed.27} parent=11 // pred_check_branch
          %196 = sbr.rel (%p194) target = $region20
        $region19: #{siglip_s2rgb_embed.27} parent=11 // pred_region
          %s197 = smul.u32 2, %s25
          %p198 = scmp.lt.s32.totalorder %s24, 0
          %s199 = scalar_select %p198, %s24, 0
          %p200 = scmp.lt.s32.totalorder %s197, 1
          %s201 = scalar_select %p200, %s197, 1
          %s202 = smul.addr %s199, 2
          %s203 = sadd.s32 %s201, %s202
          %s204 = scalar_lea.vmem %s3, %s203
          %s205 = smul.u32 2, %s25
        $region20: #{siglip_s2rgb_embed.27} parent=11 // pred_fallthru
          _
      $region12: #{siglip_s2rgb_embed.27} parent=5 // pred_fallthru
        _
      %p206 = scmp.lt.s32.totalorder %s14, 2
      // Predicated region
      $region21: #{siglip_s2rgb_embed.27} parent=5 // pred_check
        %p207 = pneg %p206
      $region22: #{siglip_s2rgb_embed.27} parent=5 // pred_check_branch
        %209 = sbr.rel (%p207) target = $region24
      $region23: #{siglip_s2rgb_embed.27} parent=5 // pred_region
        // Predicated region
        $region25: #{siglip_s2rgb_embed.27} parent=23 // pred_check
          %p210 = pneg %p55
        $region26: #{siglip_s2rgb_embed.27} parent=23 // pred_check_branch
          %212 = sbr.rel (%p210) target = $region28
        $region27: #{siglip_s2rgb_embed.27} parent=23 // pred_region
          %s213 = smul.u32 4, %s23
          %p214 = scmp.lt.s32.totalorder %s21, 0
          %s215 = scalar_select %p214, %s21, 0
          %p216 = scmp.lt.s32.totalorder %s213, 7
          %s217 = scalar_select %p216, %s213, 7
          %s218 = smul.addr %s215, 8
          %s219 = sadd.s32 %s217, %s218
          %s220 = scalar_lea.vmem %s0, %s219
          %s221 = smul.u32 4, %s23
        $region28: #{siglip_s2rgb_embed.27} parent=23 // pred_fallthru
          _
        // Predicated region
        $region29: #{siglip_s2rgb_embed.27} parent=23 // pred_check
          %p222 = pneg %p83
        $region30: #{siglip_s2rgb_embed.27} parent=23 // pred_check_branch
          %224 = sbr.rel (%p222) target = $region32
        $region31: #{siglip_s2rgb_embed.27} parent=23 // pred_region
          %s225 = sand.u32 %s73, 1
          %s226 = scalar_lea.sflag [#allocation4], %s225
          %s227 = sand.u32 %s73, 1
          %s228 = smul.addr %s227, 512
          %s229 = scalar_lea.vmem [#allocation3], %s228
          %s230 = smul.u32 64, %s23
          %s231 = smul.u32 2, %s22
          %233 = vsyncadd %s226, 0
          %s234 = smul.addr %s230, 2
          %s235 = sadd.s32 %s231, %s234
          %s236 = smul.addr %s235, 4
          %s237 = scalar_lea.hbm %s1, %s236
          %s238 = sshll.u32 %s237, 4
          %s239 = int_to_ptr.hbm [resolvable:$true] %s238
          %s240 = sshll.u32 %s229, 4
          %s241 = int_to_ptr.vmem [resolvable:$true] %s240
          %246 = dma.hbm_to_vmem [thread:$0]  %s239, 8192, %s241, %s226, 128, 128, 8
        $region32: #{siglip_s2rgb_embed.27} parent=23 // pred_fallthru
          _
      $region24: #{siglip_s2rgb_embed.27} parent=5 // pred_fallthru
        _
      %p247 = scmp.le.s32.totalorder 1, %s14
      %p248 = scmp.lt.s32.totalorder %s14, 3
      %p249 = pnand %p247, %p248
      %p250 = pneg %p249
      // Predicated region
      $region33: #{siglip_s2rgb_embed.27} parent=5 // pred_check
        _
      $region34: #{siglip_s2rgb_embed.27} parent=5 // pred_check_branch
        %252 = sbr.rel (%p249) target = $region36
      $region35: #{siglip_s2rgb_embed.27} parent=5 // pred_region
        %s253 = ssub.s32 %s14, 1
        %s254 = sand.u32 %s76, 1
        %s255 = scalar_lea.sflag [#allocation4], %s254
        %s256 = sand.u32 %s76, 1
        %s257 = smul.addr %s256, 512
        %s258 = scalar_lea.vmem [#allocation3], %s257
        // Predicated region
        $region37: #{siglip_s2rgb_embed.27} parent=35 // pred_check
          %p259 = pneg %p89
        $region38: #{siglip_s2rgb_embed.27} parent=35 // pred_check_branch
          %261 = sbr.rel (%p259) target = $region40
        $region39: #{siglip_s2rgb_embed.27} parent=35 // pred_region
          %263 = dma.done %s255, 8192
        $region40: #{siglip_s2rgb_embed.27} parent=35 // pred_fallthru
          _
        %s264 = smul.u32 4, %s26
        %p265 = scmp.lt.s32.totalorder %s24, 0
        %s266 = scalar_select %p265, %s24, 0
        %p267 = scmp.lt.s32.totalorder %s264, 7
        %s268 = scalar_select %p267, %s264, 7
        %s269 = smul.addr %s266, 8
        %s270 = sadd.s32 %s268, %s269
        %s271 = scalar_lea.vmem %s0, %s270
        %p272 = pneg %p61
        %p273 = pneg %p58
        %s274 = sand.u32 %s76, 1
        %s275 = scalar_lea.sflag [#allocation4], %s274
        %s276 = sand.u32 %s76, 1
        %s277 = smul.addr %s276, 512
        %s278 = scalar_lea.vmem [#allocation3], %s277
        %p279 = pneg %p89
        %p280 = pneg %p86
        %s281 = smul.u32 2, %s25
        %p282 = scmp.lt.s32.totalorder %s281, 1
        %s283 = scalar_select %p282, %s281, 1
        %s284 = scalar_lea.vmem %s2, %s283
        %p285 = pneg %p115
        %p286 = pneg %p112
        %s287 = smul.u32 2, %s25
        %p288 = scmp.lt.s32.totalorder %s24, 0
        %s289 = scalar_select %p288, %s24, 0
        %p290 = scmp.lt.s32.totalorder %s287, 1
        %s291 = scalar_select %p290, %s287, 1
        %s292 = smul.addr %s289, 2
        %s293 = sadd.s32 %s291, %s292
        %s294 = scalar_lea.vmem %s3, %s293
        %p295 = pneg %p143
        %p296 = pneg %p140
        %p297 = pneg %p171
        %p298 = pneg %p168
        %s299 = smul.u32 4, %s26
        %p300 = scmp.lt.s32.totalorder %s24, 0
        %s301 = scalar_select %p300, %s24, 0
        %p302 = scmp.lt.s32.totalorder %s299, 7
        %s303 = scalar_select %p302, %s299, 7
        %s304 = smul.addr %s301, 8
        %s305 = sadd.s32 %s303, %s304
        %s306 = scalar_lea.vmem %s0, %s305
        %s307 = smul.u32 4, %s26
        %s308 = smul.u32 64, %s26
        %s309 = smul.u32 2, %s25
        %s310 = smul.u32 2, %s25
        %p311 = scmp.lt.s32.totalorder %s310, 1
        %s312 = scalar_select %p311, %s310, 1
        %s313 = scalar_lea.vmem %s2, %s312
        %s314 = smul.u32 2, %s25
        %s315 = smul.u32 2, %s25
        %p316 = scmp.lt.s32.totalorder %s24, 0
        %s317 = scalar_select %p316, %s24, 0
        %p318 = scmp.lt.s32.totalorder %s315, 1
        %s319 = scalar_select %p318, %s315, 1
        %s320 = smul.addr %s317, 2
        %s321 = sadd.s32 %s319, %s320
        %s322 = scalar_lea.vmem %s3, %s321
        %s323 = smul.u32 2, %s25
        %s324 = smul.u32 2, %s25
        %p325 = scmp.eq.s32.totalorder %s26, 0
        // Predicated region
        $region41: #{siglip_s2rgb_embed.27} parent=35 // pred_check
          %p326 = pneg %p325
        $region42: #{siglip_s2rgb_embed.27} parent=35 // pred_check_branch
          %328 = sbr.rel (%p326) target = $region44
        $region43: #{siglip_s2rgb_embed.27} parent=35 // pred_region
          %329 = vst [vmem:[#allocation2] sm:$0xf] 0.0
        $region44: #{siglip_s2rgb_embed.27} parent=35 // pred_fallthru
          _
        %v330 = vld [vmem:[#allocation2] sm:$0xf]
        %v331 = vld [vmem:[%s306] sm:$0xf]
        %v332 = vld [vmem:[%s258] sm:$0xff]
        %v333 = vld [vmem:[%s258 + $0x8] sm:$0xff]
        %v334 = vld [vmem:[%s258 + $0x10] sm:$0xff]
        %v335 = vld [vmem:[%s258 + $0x18] sm:$0xff]
        %v336 = vld [vmem:[%s258 + $0x20] sm:$0xff]
        %v337 = vld [vmem:[%s258 + $0x28] sm:$0xff]
        %v338 = vld [vmem:[%s258 + $0x30] sm:$0xff]
        %v339 = vld [vmem:[%s258 + $0x38] sm:$0xff]
        %v340 = vld [vmem:[%s258 + $0x40] sm:$0xff]
        %v341 = vld [vmem:[%s258 + $0x48] sm:$0xff]
        %v342 = vld [vmem:[%s258 + $0x50] sm:$0xff]
        %v343 = vld [vmem:[%s258 + $0x58] sm:$0xff]
        %v344 = vld [vmem:[%s258 + $0x60] sm:$0xff]
        %v345 = vld [vmem:[%s258 + $0x68] sm:$0xff]
        %v346 = vld [vmem:[%s258 + $0x70] sm:$0xff]
        %v347 = vld [vmem:[%s258 + $0x78] sm:$0xff]
        %v348 = vld [vmem:[%s258 + $0x80] sm:$0xff]
        %v349 = vld [vmem:[%s258 + $0x88] sm:$0xff]
        %v350 = vld [vmem:[%s258 + $0x90] sm:$0xff]
        %v351 = vld [vmem:[%s258 + $0x98] sm:$0xff]
        %v352 = vld [vmem:[%s258 + $0xa0] sm:$0xff]
        %v353 = vld [vmem:[%s258 + $0xa8] sm:$0xff]
        %v354 = vld [vmem:[%s258 + $0xb0] sm:$0xff]
        %v355 = vld [vmem:[%s258 + $0xb8] sm:$0xff]
        %v356 = vld [vmem:[%s258 + $0xc0] sm:$0xff]
        %v357 = vld [vmem:[%s258 + $0xc8] sm:$0xff]
        %v358 = vld [vmem:[%s258 + $0xd0] sm:$0xff]
        %v359 = vld [vmem:[%s258 + $0xd8] sm:$0xff]
        %v360 = vld [vmem:[%s258 + $0xe0] sm:$0xff]
        %v361 = vld [vmem:[%s258 + $0xe8] sm:$0xff]
        %v362 = vld [vmem:[%s258 + $0xf0] sm:$0xff]
        %v363 = vld [vmem:[%s258 + $0xf8] sm:$0xff]
        %v364 = vld [vmem:[%s258 + $0x100] sm:$0xff]
        %v365 = vld [vmem:[%s258 + $0x108] sm:$0xff]
        %v366 = vld [vmem:[%s258 + $0x110] sm:$0xff]
        %v367 = vld [vmem:[%s258 + $0x118] sm:$0xff]
        %v368 = vld [vmem:[%s258 + $0x120] sm:$0xff]
        %v369 = vld [vmem:[%s258 + $0x128] sm:$0xff]
        %v370 = vld [vmem:[%s258 + $0x130] sm:$0xff]
        %v371 = vld [vmem:[%s258 + $0x138] sm:$0xff]
        %v372 = vld [vmem:[%s258 + $0x140] sm:$0xff]
        %v373 = vld [vmem:[%s258 + $0x148] sm:$0xff]
        %v374 = vld [vmem:[%s258 + $0x150] sm:$0xff]
        %v375 = vld [vmem:[%s258 + $0x158] sm:$0xff]
        %v376 = vld [vmem:[%s258 + $0x160] sm:$0xff]
        %v377 = vld [vmem:[%s258 + $0x168] sm:$0xff]
        %v378 = vld [vmem:[%s258 + $0x170] sm:$0xff]
        %v379 = vld [vmem:[%s258 + $0x178] sm:$0xff]
        %v380 = vld [vmem:[%s258 + $0x180] sm:$0xff]
        %v381 = vld [vmem:[%s258 + $0x188] sm:$0xff]
        %v382 = vld [vmem:[%s258 + $0x190] sm:$0xff]
        %v383 = vld [vmem:[%s258 + $0x198] sm:$0xff]
        %v384 = vld [vmem:[%s258 + $0x1a0] sm:$0xff]
        %v385 = vld [vmem:[%s258 + $0x1a8] sm:$0xff]
        %v386 = vld [vmem:[%s258 + $0x1b0] sm:$0xff]
        %v387 = vld [vmem:[%s258 + $0x1b8] sm:$0xff]
        %v388 = vld [vmem:[%s258 + $0x1c0] sm:$0xff]
        %v389 = vld [vmem:[%s258 + $0x1c8] sm:$0xff]
        %v390 = vld [vmem:[%s258 + $0x1d0] sm:$0xff]
        %v391 = vld [vmem:[%s258 + $0x1d8] sm:$0xff]
        %v392 = vld [vmem:[%s258 + $0x1e0] sm:$0xff]
        %v393 = vld [vmem:[%s258 + $0x1e8] sm:$0xff]
        %v394 = vld [vmem:[%s258 + $0x1f0] sm:$0xff]
        %v395 = vld [vmem:[%s258 + $0x1f8] sm:$0xff]
        %397 = vst [vmem:[#allocation1] ss:$9 sm:$0xff] %v331
        %v398 = vld [vmem:[#allocation1] sm:$0xff]
        %v399 = vld [vmem:[#allocation1 + $0x9] sm:$0xff]
        %v400 = vld [vmem:[#allocation1 + $0x12] sm:$0xff]
        %v401 = vld [vmem:[#allocation1 + $0x1b] sm:$0xff]
        %v470 = vunpack.c.l.b16 %v332
        %v471 = vunpack.c.h.b16 %v332
        %v472 = vunpack.c.l.b16 %v333
        %v473 = vunpack.c.h.b16 %v333
        %v474 = vunpack.c.l.b16 %v334
        %v475 = vunpack.c.h.b16 %v334
        %v476 = vunpack.c.l.b16 %v335
        %v477 = vunpack.c.h.b16 %v335
        %v478 = vunpack.c.l.b16 %v336
        %v479 = vunpack.c.h.b16 %v336
        %v480 = vunpack.c.l.b16 %v337
        %v481 = vunpack.c.h.b16 %v337
        %v482 = vunpack.c.l.b16 %v338
        %v483 = vunpack.c.h.b16 %v338
        %v484 = vunpack.c.l.b16 %v339
        %v485 = vunpack.c.h.b16 %v339
        %v486 = vunpack.c.l.b16 %v340
        %v487 = vunpack.c.h.b16 %v340
        %v488 = vunpack.c.l.b16 %v341
        %v489 = vunpack.c.h.b16 %v341
        %v490 = vunpack.c.l.b16 %v342
        %v491 = vunpack.c.h.b16 %v342
        %v492 = vunpack.c.l.b16 %v343
        %v493 = vunpack.c.h.b16 %v343
        %v494 = vunpack.c.l.b16 %v344
        %v495 = vunpack.c.h.b16 %v344
        %v496 = vunpack.c.l.b16 %v345
        %v497 = vunpack.c.h.b16 %v345
        %v498 = vunpack.c.l.b16 %v346
        %v499 = vunpack.c.h.b16 %v346
        %v500 = vunpack.c.l.b16 %v347
        %v501 = vunpack.c.h.b16 %v347
        %v502 = vunpack.c.l.b16 %v348
        %v503 = vunpack.c.h.b16 %v348
        %v504 = vunpack.c.l.b16 %v349
        %v505 = vunpack.c.h.b16 %v349
        %v506 = vunpack.c.l.b16 %v350
        %v507 = vunpack.c.h.b16 %v350
        %v508 = vunpack.c.l.b16 %v351
        %v509 = vunpack.c.h.b16 %v351
        %v510 = vunpack.c.l.b16 %v352
        %v511 = vunpack.c.h.b16 %v352
        %v512 = vunpack.c.l.b16 %v353
        %v513 = vunpack.c.h.b16 %v353
        %v514 = vunpack.c.l.b16 %v354
        %v515 = vunpack.c.h.b16 %v354
        %v516 = vunpack.c.l.b16 %v355
        %v517 = vunpack.c.h.b16 %v355
        %v518 = vunpack.c.l.b16 %v356
        %v519 = vunpack.c.h.b16 %v356
        %v520 = vunpack.c.l.b16 %v357
        %v521 = vunpack.c.h.b16 %v357
        %v522 = vunpack.c.l.b16 %v358
        %v523 = vunpack.c.h.b16 %v358
        %v524 = vunpack.c.l.b16 %v359
        %v525 = vunpack.c.h.b16 %v359
        %v526 = vunpack.c.l.b16 %v360
        %v527 = vunpack.c.h.b16 %v360
        %v528 = vunpack.c.l.b16 %v361
        %v529 = vunpack.c.h.b16 %v361
        %v530 = vunpack.c.l.b16 %v362
        %v531 = vunpack.c.h.b16 %v362
        %v532 = vunpack.c.l.b16 %v363
        %v533 = vunpack.c.h.b16 %v363
        %v534 = vunpack.c.l.b16 %v364
        %v535 = vunpack.c.h.b16 %v364
        %v536 = vunpack.c.l.b16 %v365
        %v537 = vunpack.c.h.b16 %v365
        %v538 = vunpack.c.l.b16 %v366
        %v539 = vunpack.c.h.b16 %v366
        %v540 = vunpack.c.l.b16 %v367
        %v541 = vunpack.c.h.b16 %v367
        %v542 = vunpack.c.l.b16 %v368
        %v543 = vunpack.c.h.b16 %v368
        %v544 = vunpack.c.l.b16 %v369
        %v545 = vunpack.c.h.b16 %v369
        %v546 = vunpack.c.l.b16 %v370
        %v547 = vunpack.c.h.b16 %v370
        %v548 = vunpack.c.l.b16 %v371
        %v549 = vunpack.c.h.b16 %v371
        %v550 = vunpack.c.l.b16 %v372
        %v551 = vunpack.c.h.b16 %v372
        %v552 = vunpack.c.l.b16 %v373
        %v553 = vunpack.c.h.b16 %v373
        %v554 = vunpack.c.l.b16 %v374
        %v555 = vunpack.c.h.b16 %v374
        %v556 = vunpack.c.l.b16 %v375
        %v557 = vunpack.c.h.b16 %v375
        %v558 = vunpack.c.l.b16 %v376
        %v559 = vunpack.c.h.b16 %v376
        %v560 = vunpack.c.l.b16 %v377
        %v561 = vunpack.c.h.b16 %v377
        %v562 = vunpack.c.l.b16 %v378
        %v563 = vunpack.c.h.b16 %v378
        %v564 = vunpack.c.l.b16 %v379
        %v565 = vunpack.c.h.b16 %v379
        %v566 = vunpack.c.l.b16 %v380
        %v567 = vunpack.c.h.b16 %v380
        %v568 = vunpack.c.l.b16 %v381
        %v569 = vunpack.c.h.b16 %v381
        %v570 = vunpack.c.l.b16 %v382
        %v571 = vunpack.c.h.b16 %v382
        %v572 = vunpack.c.l.b16 %v383
        %v573 = vunpack.c.h.b16 %v383
        %v574 = vunpack.c.l.b16 %v384
        %v575 = vunpack.c.h.b16 %v384
        %v576 = vunpack.c.l.b16 %v385
        %v577 = vunpack.c.h.b16 %v385
        %v578 = vunpack.c.l.b16 %v386
        %v579 = vunpack.c.h.b16 %v386
        %v580 = vunpack.c.l.b16 %v387
        %v581 = vunpack.c.h.b16 %v387
        %v582 = vunpack.c.l.b16 %v388
        %v583 = vunpack.c.h.b16 %v388
        %v584 = vunpack.c.l.b16 %v389
        %v585 = vunpack.c.h.b16 %v389
        %v586 = vunpack.c.l.b16 %v390
        %v587 = vunpack.c.h.b16 %v390
        %v588 = vunpack.c.l.b16 %v391
        %v589 = vunpack.c.h.b16 %v391
        %v590 = vunpack.c.l.b16 %v392
        %v591 = vunpack.c.h.b16 %v392
        %v592 = vunpack.c.l.b16 %v393
        %v593 = vunpack.c.h.b16 %v393
        %v594 = vunpack.c.l.b16 %v394
        %v595 = vunpack.c.h.b16 %v394
        %v596 = vunpack.c.l.b16 %v395
        %v597 = vunpack.c.h.b16 %v395
        %v598 = vpack.c.b16 %v472, %v470
        %v599 = vpack.c.b16 %v473, %v471
        %v600 = vpack.c.b16 %v476, %v474
        %v601 = vpack.c.b16 %v477, %v475
        %v602 = vpack.c.b16 %v480, %v478
        %v603 = vpack.c.b16 %v481, %v479
        %v604 = vpack.c.b16 %v484, %v482
        %v605 = vpack.c.b16 %v485, %v483
        %v606 = vpack.c.b16 %v488, %v486
        %v607 = vpack.c.b16 %v489, %v487
        %v608 = vpack.c.b16 %v492, %v490
        %v609 = vpack.c.b16 %v493, %v491
        %v610 = vpack.c.b16 %v496, %v494
        %v611 = vpack.c.b16 %v497, %v495
        %v612 = vpack.c.b16 %v500, %v498
        %v613 = vpack.c.b16 %v501, %v499
        %v614 = vpack.c.b16 %v504, %v502
        %v615 = vpack.c.b16 %v505, %v503
        %v616 = vpack.c.b16 %v508, %v506
        %v617 = vpack.c.b16 %v509, %v507
        %v618 = vpack.c.b16 %v512, %v510
        %v619 = vpack.c.b16 %v513, %v511
        %v620 = vpack.c.b16 %v516, %v514
        %v621 = vpack.c.b16 %v517, %v515
        %v622 = vpack.c.b16 %v520, %v518
        %v623 = vpack.c.b16 %v521, %v519
        %v624 = vpack.c.b16 %v524, %v522
        %v625 = vpack.c.b16 %v525, %v523
        %v626 = vpack.c.b16 %v528, %v526
        %v627 = vpack.c.b16 %v529, %v527
        %v628 = vpack.c.b16 %v532, %v530
        %v629 = vpack.c.b16 %v533, %v531
        %v630 = vpack.c.b16 %v536, %v534
        %v631 = vpack.c.b16 %v537, %v535
        %v632 = vpack.c.b16 %v540, %v538
        %v633 = vpack.c.b16 %v541, %v539
        %v634 = vpack.c.b16 %v544, %v542
        %v635 = vpack.c.b16 %v545, %v543
        %v636 = vpack.c.b16 %v548, %v546
        %v637 = vpack.c.b16 %v549, %v547
        %v638 = vpack.c.b16 %v552, %v550
        %v639 = vpack.c.b16 %v553, %v551
        %v640 = vpack.c.b16 %v556, %v554
        %v641 = vpack.c.b16 %v557, %v555
        %v642 = vpack.c.b16 %v560, %v558
        %v643 = vpack.c.b16 %v561, %v559
        %v644 = vpack.c.b16 %v564, %v562
        %v645 = vpack.c.b16 %v565, %v563
        %v646 = vpack.c.b16 %v568, %v566
        %v647 = vpack.c.b16 %v569, %v567
        %v648 = vpack.c.b16 %v572, %v570
        %v649 = vpack.c.b16 %v573, %v571
        %v650 = vpack.c.b16 %v576, %v574
        %v651 = vpack.c.b16 %v577, %v575
        %v652 = vpack.c.b16 %v580, %v578
        %v653 = vpack.c.b16 %v581, %v579
        %v654 = vpack.c.b16 %v584, %v582
        %v655 = vpack.c.b16 %v585, %v583
        %v656 = vpack.c.b16 %v588, %v586
        %v657 = vpack.c.b16 %v589, %v587
        %v658 = vpack.c.b16 %v592, %v590
        %v659 = vpack.c.b16 %v593, %v591
        %v660 = vpack.c.b16 %v596, %v594
        %v661 = vpack.c.b16 %v597, %v595
        %726 = vmatpush.bf16.msra.mxu0 %v612
        %727 = vmatpush.bf16.msra.mxu0 %v610
        %728 = vmatpush.bf16.msra.mxu0 %v608
        %729 = vmatpush.bf16.msra.mxu0 %v606
        %730 = vmatpush.bf16.msra.mxu0 %v604
        %731 = vmatpush.bf16.msra.mxu0 %v602
        %732 = vmatpush.bf16.msra.mxu0 %v600
        %733 = vmatpush.bf16.msra.mxu0 %v598
        %734 = vmatmul.bf16.gmra.mxu0 %v398
        %v735 = vpop.f32.mrf.mxu0
        %v736 = vadd.f32 0.0, %v735
        %v737 = vpop.f32.mrf.mxu0
        %738 = vdwg.mxu0
        %739 = vmatpush.bf16.msra.mxu0 %v628
        %740 = vmatpush.bf16.msra.mxu0 %v626
        %741 = vmatpush.bf16.msra.mxu0 %v624
        %742 = vmatpush.bf16.msra.mxu0 %v622
        %743 = vmatpush.bf16.msra.mxu0 %v620
        %744 = vmatpush.bf16.msra.mxu0 %v618
        %745 = vmatpush.bf16.msra.mxu0 %v616
        %746 = vmatpush.bf16.msra.mxu0 %v614
        %747 = vmatmul.bf16.gmra.mxu0 %v399
        %v748 = vpop.f32.mrf.mxu0
        %v749 = vadd.f32 %v736, %v748
        %v750 = vpop.f32.mrf.mxu0
        %751 = vdwg.mxu0
        %752 = vmatpush.bf16.msra.mxu0 %v644
        %753 = vmatpush.bf16.msra.mxu0 %v642
        %754 = vmatpush.bf16.msra.mxu0 %v640
        %755 = vmatpush.bf16.msra.mxu0 %v638
        %756 = vmatpush.bf16.msra.mxu0 %v636
        %757 = vmatpush.bf16.msra.mxu0 %v634
        %758 = vmatpush.bf16.msra.mxu0 %v632
        %759 = vmatpush.bf16.msra.mxu0 %v630
        %760 = vmatmul.bf16.gmra.mxu0 %v400
        %v761 = vpop.f32.mrf.mxu0
        %v762 = vadd.f32 %v749, %v761
        %v763 = vpop.f32.mrf.mxu0
        %764 = vdwg.mxu0
        %765 = vmatpush.bf16.msra.mxu0 %v660
        %766 = vmatpush.bf16.msra.mxu0 %v658
        %767 = vmatpush.bf16.msra.mxu0 %v656
        %768 = vmatpush.bf16.msra.mxu0 %v654
        %769 = vmatpush.bf16.msra.mxu0 %v652
        %770 = vmatpush.bf16.msra.mxu0 %v650
        %771 = vmatpush.bf16.msra.mxu0 %v648
        %772 = vmatpush.bf16.msra.mxu0 %v646
        %773 = vmatmul.bf16.gmra.mxu0 %v401
        %v774 = vpop.f32.mrf.mxu0
        %v775 = vadd.f32 %v762, %v774
        %v776 = vpop.f32.mrf.mxu0
        %777 = vdwg.mxu0
        %778 = vmatpush.bf16.msra.mxu0 %v613
        %779 = vmatpush.bf16.msra.mxu0 %v611
        %780 = vmatpush.bf16.msra.mxu0 %v609
        %781 = vmatpush.bf16.msra.mxu0 %v607
        %782 = vmatpush.bf16.msra.mxu0 %v605
        %783 = vmatpush.bf16.msra.mxu0 %v603
        %784 = vmatpush.bf16.msra.mxu0 %v601
        %785 = vmatpush.bf16.msra.mxu0 %v599
        %786 = vmatmul.bf16.gmra.mxu0 %v398
        %v787 = vpop.f32.mrf.mxu0
        %v788 = vadd.f32 0.0, %v787
        %v789 = vpop.f32.mrf.mxu0
        %790 = vdwg.mxu0
        %791 = vmatpush.bf16.msra.mxu0 %v629
        %792 = vmatpush.bf16.msra.mxu0 %v627
        %793 = vmatpush.bf16.msra.mxu0 %v625
        %794 = vmatpush.bf16.msra.mxu0 %v623
        %795 = vmatpush.bf16.msra.mxu0 %v621
        %796 = vmatpush.bf16.msra.mxu0 %v619
        %797 = vmatpush.bf16.msra.mxu0 %v617
        %798 = vmatpush.bf16.msra.mxu0 %v615
        %799 = vmatmul.bf16.gmra.mxu0 %v399
        %v800 = vpop.f32.mrf.mxu0
        %v801 = vadd.f32 %v788, %v800
        %v802 = vpop.f32.mrf.mxu0
        %803 = vdwg.mxu0
        %804 = vmatpush.bf16.msra.mxu0 %v645
        %805 = vmatpush.bf16.msra.mxu0 %v643
        %806 = vmatpush.bf16.msra.mxu0 %v641
        %807 = vmatpush.bf16.msra.mxu0 %v639
        %808 = vmatpush.bf16.msra.mxu0 %v637
        %809 = vmatpush.bf16.msra.mxu0 %v635
        %810 = vmatpush.bf16.msra.mxu0 %v633
        %811 = vmatpush.bf16.msra.mxu0 %v631
        %812 = vmatmul.bf16.gmra.mxu0 %v400
        %v813 = vpop.f32.mrf.mxu0
        %v814 = vadd.f32 %v801, %v813
        %v815 = vpop.f32.mrf.mxu0
        %816 = vdwg.mxu0
        %817 = vmatpush.bf16.msra.mxu0 %v661
        %818 = vmatpush.bf16.msra.mxu0 %v659
        %819 = vmatpush.bf16.msra.mxu0 %v657
        %820 = vmatpush.bf16.msra.mxu0 %v655
        %821 = vmatpush.bf16.msra.mxu0 %v653
        %822 = vmatpush.bf16.msra.mxu0 %v651
        %823 = vmatpush.bf16.msra.mxu0 %v649
        %824 = vmatpush.bf16.msra.mxu0 %v647
        %825 = vmatmul.bf16.gmra.mxu0 %v401
        %v826 = vpop.f32.mrf.mxu0
        %v827 = vadd.f32 %v814, %v826
        %v828 = vpop.f32.mrf.mxu0
        %829 = vdwg.mxu0
        %v832 = vrot.slane %v827, 6
        %vm833 = vcmask 1041408
        %v834 = vsel %vm833, %v775, %v832
        %v836 = vadd.f32 %v330, %v834
        %837 = vst [vmem:[#allocation2] sm:$0xf] %v836
        %p838 = scmp.eq.s32.totalorder %s26, 1
        // Predicated region
        $region45: #{siglip_s2rgb_embed.27} parent=35 // pred_check
          %p839 = pneg %p838
        $region46: #{siglip_s2rgb_embed.27} parent=35 // pred_check_branch
          %841 = sbr.rel (%p839) target = $region48
        $region47: #{siglip_s2rgb_embed.27} parent=35 // pred_region
          %v842 = vld [vmem:[#allocation2] sm:$0xf]
          %v843 = vld [vmem:[%s313] sm:$0x3]
          %v845 = vperm.slane %v843, 0
          %v846 = vperm.slane %v843, 1
          %v847 = vrot.slane %v846, 6
          %v848 = vsel %vm833, %v845, %v847
          %v850 = vadd.f32 %v842, %v848
          %v851 = vld [vmem:[%s322] sm:$0x3]
          %v852 = vunpack.c.l.bf16 %v851
          %v853 = vadd.f32 %v850, %v852
          %854 = vst [vmem:[#allocation6] sm:$0xf] %v853
        $region48: #{siglip_s2rgb_embed.27} parent=35 // pred_fallthru
          _
        // Predicated region
        $region49: #{siglip_s2rgb_embed.27} parent=35 // pred_check
          %p855 = pneg %p168
        $region50: #{siglip_s2rgb_embed.27} parent=35 // pred_check_branch
          %857 = sbr.rel (%p855) target = $region52
        $region51: #{siglip_s2rgb_embed.27} parent=35 // pred_region
          %s858 = smul.u32 2, %s25
          %860 = vsyncadd [#allocation5], 0
          %s861 = smul.addr %s24, 2
          %s862 = sadd.s32 %s858, %s861
          %s863 = smul.addr %s862, 2
          %s864 = scalar_lea.hbm %s4, %s863
          %s866 = sshll.u32 [#allocation6], 4
          %s867 = int_to_ptr.vmem [resolvable:$true] %s866
          %s868 = sshll.u32 %s864, 4
          %s869 = int_to_ptr.hbm [resolvable:$true] %s868
          %871 = dma.vmem_to_hbm [thread:$0]  %s867, 64, %s869, [#allocation5]
        $region52: #{siglip_s2rgb_embed.27} parent=35 // pred_fallthru
          _
        // Predicated region
        $region53: #{siglip_s2rgb_embed.27} parent=35 // pred_check
          %p872 = pneg %p168
        $region54: #{siglip_s2rgb_embed.27} parent=35 // pred_check_branch
          %874 = sbr.rel (%p872) target = $region56
        $region55: #{siglip_s2rgb_embed.27} parent=35 // pred_region
          %876 = dma.done [#allocation5], 64
        $region56: #{siglip_s2rgb_embed.27} parent=35 // pred_fallthru
          _
      $region36: #{siglip_s2rgb_embed.27} parent=5 // pred_fallthru
        _
      %p877 = scmp.le.s32.totalorder 2, %s14
      // Predicated region
      $region57: #{siglip_s2rgb_embed.27} parent=5 // pred_check
        %p878 = pneg %p877
      $region58: #{siglip_s2rgb_embed.27} parent=5 // pred_check_branch
        %880 = sbr.rel (%p878) target = $region60
      $region59: #{siglip_s2rgb_embed.27} parent=5 // pred_region
        %s881 = ssub.s32 %s14, 2
      $region60: #{siglip_s2rgb_embed.27} parent=5 // pred_fallthru
        _
    $region6: #{siglip_s2rgb_embed.27} parent=1 // loop_footer
      %s18 = sadd.s32 1, %s14
    $region7: #{siglip_s2rgb_embed.27} parent=1 // loop_footer_branch
      %13 = sbr.rel target = $region3
    $region8: #{siglip_s2rgb_embed.27} parent=1 // loop_exit
      _
    %882 = vsyncpa [#allocation4], 1
    %s883 = scalar_lea.sflag [#allocation4], 1
    %884 = vsyncpa %s883, 1
    %885 = vsyncpa [#allocation5], 1
    %s886 = scalar_lea.sflag [#allocation5], 1
    %887 = vsyncpa %s886, 1

</llo_original>
